<compile_context>
chip_gen: v7x
topology: tpu7x:2x2x1
jax: 0.10.0
libtpu: 0.0.40
codegen_flags: <defaults>
</compile_context>

<pallas_src>
import jax
import jax.numpy as jnp
from jax.experimental import pallas as pl
from jax.experimental.pallas import tpu as pltpu


def _round_up(x, m):
    return ((x + m - 1) // m) * m


def _hadamard_kernel(r_ref, m2_ref, wt_ref, out_ref):
    # r_ref:  (TE*K, I)  R[e,k,i] = sum_s sph[e,s,k] * rbf_W1[e,i,s]
    # m2_ref: (TE, K, C) scattered triplet embeddings
    # wt_ref: (I, C)     weight[:, 0, :].T
    # out_ref:(TE, C)
    TE, K, C = m2_ref.shape

    # P[(e,k), c] = sum_i R[e,k,i] * wt[i,c] — single MXU matmul,
    # bf16 operands straight in, f32 accumulation.
    p = jnp.dot(r_ref[...], wt_ref[...], preferred_element_type=jnp.float32)

    # out[e,c] = sum_k m2[e,k,c] * P[e,k,c] — Hadamard + K-deep sublane reduce.
    # Elementwise kept in f32 (no bf16 VALU on v5e; accumulation must be f32 anyway).
    had = m2_ref[...].astype(jnp.float32) * p.reshape(TE, K, C)
    out_ref[...] = jnp.sum(had, axis=1).astype(out_ref.dtype)


def efficient_interaction_hadamard(rbf_W1, sph, m, id_reduce, Kidx, weight,
                                   *, edge_tile=512,
                                   compute_dtype=jnp.bfloat16):
    """rbf_W1: (nEdges, I, Sph), sph: (nEdges, Sph, Kmax), m: (nTriplets, C),
    weight: (C, 1, I). Returns (nEdges, C)."""
    nEdges, emb_size_interm, _Sph = rbf_W1.shape
    # Static Kmax: GemNet builds sph with max(Kidx)+1 columns, so sph.shape[2]
    # equals the module's dynamic Kmax. (JAX needs a static shape here.)
    Kmax = sph.shape[2]
    emb_size = m.shape[1]
    out_dtype = m.dtype

    if Kmax == 0:
        return jnp.zeros((nEdges, emb_size), out_dtype)

    # Data-dependent scatter stays in JAX glue. (id_reduce, Kidx) pairs are unique
    # in GemNet, so last-write-wins (torch) and unspecified-winner (JAX) coincide.
    # TODO(synk): fuse this scatter into the kernel via scalar-prefetched per-edge
    # triplet offsets + manual DMA gather to avoid the HBM zero-init/scatter/re-read.
    m2 = jnp.zeros((nEdges, Kmax, emb_size), compute_dtype)
    m2 = m2.at[id_reduce, Kidx].set(m.astype(compute_dtype))

    # R[e,k,i] = sum_s sph[e,s,k] * rbf_W1[e,i,s].  Tiny contraction over Sph done
    # in the wrapper: this removes all per-k VPU/XLU work from the kernel and makes
    # its operands lane-friendly.
    r = jnp.einsum('esk,eis->eki', sph, rbf_W1).astype(compute_dtype)   # (nE, K, I)

    wt = jnp.transpose(weight[:, 0, :], (1, 0)).astype(compute_dtype)   # (I, C)

    # --- edge tiling --------------------------------------------------------
    edge_tile = max(8, min(_round_up(edge_tile, 8), _round_up(nEdges, 8)))
    # Keep at least 2 grid steps so the edge axis can shard across both v7x TCs.
    if _round_up(nEdges, edge_tile) // edge_tile < 2 and nEdges > 8:
        edge_tile = max(8, _round_up((nEdges + 1) // 2, 8))
    nE_pad = _round_up(nEdges, edge_tile)
    pad = nE_pad - nEdges
    if pad:
        r = jnp.pad(r, ((0, pad), (0, 0), (0, 0)))
        m2 = jnp.pad(m2, ((0, pad), (0, 0), (0, 0)))

    # Pre-flatten R to (nE_pad*Kmax, I): the MXU matmul consumes it as-is (no
    # in-kernel relayout); the flatten itself is a free bitcast in XLA.
    r2 = r.reshape(nE_pad * Kmax, emb_size_interm)

    grid = (nE_pad // edge_tile,)

    out = pl.pallas_call(
        _hadamard_kernel,
        out_shape=jax.ShapeDtypeStruct((nE_pad, emb_size), out_dtype),
        grid_spec=pltpu.PrefetchScalarGridSpec(
            num_scalar_prefetch=0,
            grid=grid,
            in_specs=[
                pl.BlockSpec((edge_tile * Kmax, emb_size_interm),
                             lambda e: (e, 0)),
                pl.BlockSpec((edge_tile, Kmax, emb_size),
                             lambda e: (e, 0, 0)),
                pl.BlockSpec((emb_size_interm, emb_size),
                             lambda e: (0, 0)),
            ],
            out_specs=pl.BlockSpec((edge_tile, emb_size), lambda e: (e, 0)),
        ),
        compiler_params=pltpu.CompilerParams(
            dimension_semantics=("parallel",),
            vmem_limit_bytes=48 * 1024 * 1024,
        ),
    )(r2, m2, wt)

    return out[:nEdges] if pad else out


def _reference(rbf_W1, sph, m, id_reduce, Kidx, weight):
    # Pure-JAX transcription of EfficientInteractionHadamard.forward.
    nEdges = rbf_W1.shape[0]
    Kmax = sph.shape[2]
    emb_size = m.shape[1]
    m2 = jnp.zeros((nEdges, Kmax, emb_size), m.dtype).at[id_reduce, Kidx].set(m)
    sum_k = jnp.matmul(sph, m2)                        # (nE, Sph, C)
    rbf_W1_sum_k = jnp.matmul(rbf_W1, sum_k)           # (nE, I, C)
    m_ca = jnp.matmul(weight, jnp.transpose(rbf_W1_sum_k, (2, 1, 0)))[:, 0]  # (C, nE)
    return jnp.transpose(m_ca, (1, 0))                 # (nE, C)


if __name__ == "__main__":
    # Small, module-consistent shapes (GemNet-like: emb_size=128 keeps the output
    # lane-dense; nEdges=1024 gives a 2-step grid at the default edge_tile=512).
    emb_size = 128         # edge embedding size (C)
    emb_size_interm = 16   # intermediate / down-projection size (I)
    Sph = 8                # spherical basis size
    Kmax = 8               # max neighbors per edge
    nEdges = 1024
    nTriplets = nEdges * Kmax   # every (edge, k) slot filled; all pairs unique

    key = jax.random.PRNGKey(0)
    k1, k2, k3, k4 = jax.random.split(key, 4)

    rbf_W1 = jax.random.normal(k1, (nEdges, emb_size_interm, Sph), jnp.float32)
    sph = jax.random.normal(k2, (nEdges, Sph, Kmax), jnp.float32)
    m = jax.random.normal(k3, (nTriplets, emb_size), jnp.float32)

    # Unique (id_reduce, Kidx) pairs with max(Kidx)+1 == Kmax, as in GemNet.
    t = jnp.arange(nTriplets, dtype=jnp.int32)
    id_reduce = t // Kmax
    Kidx = t % Kmax

    # TODO(synk): exact he_orthogonal_init not reproduced; scaled normal stand-in.
    weight = jax.random.normal(
        k4, (emb_size, 1, emb_size_interm), jnp.float32
    ) / jnp.sqrt(float(emb_size_interm))

    ref = jax.block_until_ready(_reference(rbf_W1, sph, m, id_reduce, Kidx, weight))
    ref_scale = float(jnp.max(jnp.abs(ref))) + 1e-6

    # f32 streaming path: tight check (differences only from reassociated summation
    # order / matmul rounding on both sides).
    out_f32 = efficient_interaction_hadamard(
        rbf_W1, sph, m, id_reduce, Kidx, weight, compute_dtype=jnp.float32)
    out_f32 = jax.block_until_ready(out_f32)
    assert out_f32.shape == (nEdges, emb_size)
    rel_f32 = float(jnp.max(jnp.abs(out_f32 - ref))) / ref_scale
    assert rel_f32 < 2e-2, rel_f32

    # bf16 streaming path (perf default): extra error is bf16 input rounding only.
    out_bf16 = efficient_interaction_hadamard(
        rbf_W1, sph, m, id_reduce, Kidx, weight)
    out_bf16 = jax.block_until_ready(out_bf16)
    assert out_bf16.shape == (nEdges, emb_size)
    rel_bf16 = float(jnp.max(jnp.abs(out_bf16 - ref))) / ref_scale
    assert rel_bf16 < 5e-2, rel_bf16

    print("KERNEL_OK")
</pallas_src>

<mosaic_0001>
module attributes {stable_mosaic.version = 11 : i64} {
  func.func @_hadamard_kernel(%arg0: i32, %arg1: memref<4096x16xf32, #tpu.memory_space<vmem>>, %arg2: memref<512x8x128xf32, #tpu.memory_space<vmem>>, %arg3: memref<16x128xf32, #tpu.memory_space<vmem>>, %arg4: memref<512x128xf32, #tpu.memory_space<vmem>>) attributes {dimension_semantics = [#tpu.dimension_semantics<parallel>], iteration_bounds = array<i64: 2>, scalar_prefetch = 0 : i64, scratch_operands = 0 : i64, tpu.core_type = #tpu.core_type<tc>, window_params = [{transform_indices = @transform_0, window_bounds = array<i64: 4096, 16>}, {transform_indices = @transform_1, window_bounds = array<i64: 512, 8, 128>}, {pipeline_mode = #tpu.pipeline_mode<synchronous>, transform_indices = @transform_2, window_bounds = array<i64: 16, 128>}, {transform_indices = @transform_3, window_bounds = array<i64: 512, 128>}]} {
    %c0 = arith.constant 0 : index
    %c0_0 = arith.constant 0 : index
    %0 = vector.load %arg1[%c0, %c0_0] : memref<4096x16xf32, #tpu.memory_space<vmem>>, vector<4096x16xf32>
    %c0_1 = arith.constant 0 : index
    %c0_2 = arith.constant 0 : index
    %1 = vector.load %arg3[%c0_1, %c0_2] : memref<16x128xf32, #tpu.memory_space<vmem>>, vector<16x128xf32>
    %cst = arith.constant dense<0.000000e+00> : vector<4096x128xf32>
    %2 = tpu.matmul %0, %1, %cst {dimension_numbers = #tpu.dot_dimension_numbers<[1], [0], [0], [1], [0, 0, 1, 1], [], []>} : vector<4096x16xf32>, vector<16x128xf32>, vector<4096x128xf32> -> vector<4096x128xf32>
    %c0_3 = arith.constant 0 : index
    %c0_4 = arith.constant 0 : index
    %c0_5 = arith.constant 0 : index
    %3 = vector.load %arg2[%c0_3, %c0_4, %c0_5] : memref<512x8x128xf32, #tpu.memory_space<vmem>>, vector<512x8x128xf32>
    %4 = vector.shape_cast %2 : vector<4096x128xf32> to vector<512x8x128xf32>
    %5 = arith.mulf %3, %4 : vector<512x8x128xf32>
    %cst_6 = arith.constant dense<0.000000e+00> : vector<512x128xf32>
    %6 = vector.multi_reduction <add>, %5, %cst_6 [1] : vector<512x8x128xf32> to vector<512x128xf32>
    %c0_7 = arith.constant 0 : index
    %c0_8 = arith.constant 0 : index
    %7 = vector.load %arg4[%c0_7, %c0_8] : memref<512x128xf32, #tpu.memory_space<vmem>>, vector<512x128xf32>
    tpu.vector_store %arg4[%c0_7, %c0_8], %6 {strides = array<i32>} : memref<512x128xf32, #tpu.memory_space<vmem>>, vector<512x128xf32>,
    return
  }
  func.func @transform_0(%arg0: i32) -> (i32, i32) {
    %c0_i32 = arith.constant 0 : i32
    %c0_i32_0 = arith.constant 0 : i32
    return %arg0, %c0_i32 : i32, i32
  }
  func.func @transform_1(%arg0: i32) -> (i32, i32, i32) {
    %c0_i32 = arith.constant 0 : i32
    %c0_i32_0 = arith.constant 0 : i32
    %c0_i32_1 = arith.constant 0 : i32
    return %arg0, %c0_i32, %c0_i32_0 : i32, i32, i32
  }
  func.func @transform_2(%arg0: i32) -> (i32, i32) {
    %c0_i32 = arith.constant 0 : i32
    %c0_i32_0 = arith.constant 0 : i32
    %c0_i32_1 = arith.constant 0 : i32
    return %c0_i32, %c0_i32_0 : i32, i32
  }
  func.func @transform_3(%arg0: i32) -> (i32, i32) {
    %c0_i32 = arith.constant 0 : i32
    %c0_i32_0 = arith.constant 0 : i32
    return %arg0, %c0_i32 : i32, i32
  }
}

</mosaic_0001>

<llo_original>
// kernel: tpu_custom_call.1
$region0: #{tpu_custom_call.1}
  #allocation0 [shape = 'u32[]', space=smem, size = 0x4, offset = 0x4, fixed_abs, tag = 'smem constant byte address 0x4 - core index']
  #allocation1 [shape = 'u32[144,128]{1,0:T(1,128)}', space=vmem, size = 0x12000, scoped, tag = 'internal scratch']
  %s0 = inlined_call_operand.vmem [shape: f32[8192,16], index: 0, kind: input, shape index: {}]
  %s1 = inlined_call_operand.vmem [shape: f32[1024,8,128], index: 1, kind: input, shape index: {}]
  %s2 = inlined_call_operand.vmem [shape: f32[16,128], index: 2, kind: input, shape index: {}]
  %s3 = inlined_call_operand.hbm [shape: f32[1024,128], index: 3, kind: output, shape index: {}]
  %s4 = sld [smem:[#allocation0]]
  $region45: #{tpu_custom_call.1} parent=0
    _
  %s6 = ssub.s32 1, %s4
  %s7 = scalar_select 0, %s6, %s4
  $region1: #{tpu_custom_call.1} parent=0
    #allocation2 [shape = 'u8[524288]{0}', space=vmem, size = 0x80000, scoped, tag = 'output window, operand 0']
    #allocation3 [shape = 's32[2]{0}', space=sflag, size = 0x8, scoped, tag = 'scoped memory for tpu_custom_call.1']
    %8 = vsyncpa [#allocation3], 0
    %s9 = scalar_lea.sflag [#allocation3], 1
    %10 = vsyncpa %s9, 0
    loop: start=0, step=1, limit=4
    $region2: #{tpu_custom_call.1} parent=1 // loop_pre_header
      _
    $region3: #{tpu_custom_call.1} parent=1 // loop_header
      %s12 = sphi 0, %s16
      %p13 = scmp.ge.s32.totalorder %s12, 4
      %s22 = sphi 0, %s24
      %s25 = sphi 0, %s22
      %s26 = sphi 0, %s25
      %s42 = sphi 0, %s26
      %s48 = sphi 0, %s50
      %s51 = sphi 0, %s48
      %s52 = sphi 0, %s51
      %s68 = sphi 0, %s52
      %s72 = sphi 0, %s72
      %s74 = sphi 0, %s72
      %s75 = sphi 0, %s74
      %s89 = sphi 0, %s75
      %s95 = sphi 0, %s97
      %s98 = sphi 0, %s95
      %s99 = sphi 0, %s98
      %s115 = sphi 0, %s99
    $region4: #{tpu_custom_call.1} parent=1 // loop_header_branch
      %15 = sbr.rel (%p13) target = $region8
    $region5: #{tpu_custom_call.1} parent=1 // loop_body
      %s17 = ssub.s32 %s12, 1
      %s18 = ssub.s32 %s12, 2
      %s19 = sadd.s32 %s12, 1
      %s20 = ssub.s32 %s12, %s19
      %p21 = scmp.eq.s32.totalorder %s20, 0
      %s23 = sadd.s32 %s22, 1
      %s24 = scalar_select %p21, %s22, %s23
      %p27 = pneg %p21
      %p28 = scmp.eq.s32.totalorder %s12, 1
      %p29 = por %p27, %p28
      %p30 = scmp.ne.s32.totalorder %s22, %s25
      %p31 = scmp.eq.s32.totalorder %s12, 0
      %p32 = por %p30, %p31
      %p33 = scmp.ne.s32.totalorder %s22, %s25
      %p34 = scmp.eq.s32.totalorder %s17, 1
      %p35 = por %p33, %p34
      %p36 = scmp.ne.s32.totalorder %s25, %s26
      %p37 = scmp.eq.s32.totalorder %s17, 0
      %p38 = por %p36, %p37
      %p39 = scmp.ne.s32.totalorder %s25, %s26
      %p40 = scmp.eq.s32.totalorder %s18, 1
      %p41 = por %p39, %p40
      %p43 = scmp.ne.s32.totalorder %s26, %s42
      %p44 = scmp.eq.s32.totalorder %s18, 0
      %p45 = por %p43, %p44
      %s46 = ssub.s32 %s12, %s19
      %p47 = scmp.eq.s32.totalorder %s46, 0
      %s49 = sadd.s32 %s48, 1
      %s50 = scalar_select %p47, %s48, %s49
      %p53 = pneg %p47
      %p54 = scmp.eq.s32.totalorder %s12, 1
      %p55 = por %p53, %p54
      %p56 = scmp.ne.s32.totalorder %s48, %s51
      %p57 = scmp.eq.s32.totalorder %s12, 0
      %p58 = por %p56, %p57
      %p59 = scmp.ne.s32.totalorder %s48, %s51
      %p60 = scmp.eq.s32.totalorder %s17, 1
      %p61 = por %p59, %p60
      %p62 = scmp.ne.s32.totalorder %s51, %s52
      %p63 = scmp.eq.s32.totalorder %s17, 0
      %p64 = por %p62, %p63
      %p65 = scmp.ne.s32.totalorder %s51, %s52
      %p66 = scmp.eq.s32.totalorder %s18, 1
      %p67 = por %p65, %p66
      %p69 = scmp.ne.s32.totalorder %s52, %s68
      %p70 = scmp.eq.s32.totalorder %s18, 0
      %p71 = por %p69, %p70
      %s73 = sadd.s32 %s72, 1
      %p76 = scmp.eq.s32.totalorder %s12, 1
      %p77 = scmp.ne.s32.totalorder %s72, %s74
      %p78 = scmp.eq.s32.totalorder %s12, 0
      %p79 = por %p77, %p78
      %p80 = scmp.ne.s32.totalorder %s72, %s74
      %p81 = scmp.eq.s32.totalorder %s17, 1
      %p82 = por %p80, %p81
      %p83 = scmp.ne.s32.totalorder %s74, %s75
      %p84 = scmp.eq.s32.totalorder %s17, 0
      %p85 = por %p83, %p84
      %p86 = scmp.ne.s32.totalorder %s74, %s75
      %p87 = scmp.eq.s32.totalorder %s18, 1
      %p88 = por %p86, %p87
      %p90 = scmp.ne.s32.totalorder %s75, %s89
      %p91 = scmp.eq.s32.totalorder %s18, 0
      %p92 = por %p90, %p91
      %s93 = ssub.s32 %s12, %s19
      %p94 = scmp.eq.s32.totalorder %s93, 0
      %s96 = sadd.s32 %s95, 1
      %s97 = scalar_select %p94, %s95, %s96
      %p100 = pneg %p94
      %p101 = scmp.eq.s32.totalorder %s12, 1
      %p102 = por %p100, %p101
      %p103 = scmp.ne.s32.totalorder %s95, %s98
      %p104 = scmp.eq.s32.totalorder %s12, 0
      %p105 = por %p103, %p104
      %p106 = scmp.ne.s32.totalorder %s95, %s98
      %p107 = scmp.eq.s32.totalorder %s17, 1
      %p108 = por %p106, %p107
      %p109 = scmp.ne.s32.totalorder %s98, %s99
      %p110 = scmp.eq.s32.totalorder %s17, 0
      %p111 = por %p109, %p110
      %p112 = scmp.ne.s32.totalorder %s98, %s99
      %p113 = scmp.eq.s32.totalorder %s18, 1
      %p114 = por %p112, %p113
      %p116 = scmp.ne.s32.totalorder %s99, %s115
      %p117 = scmp.eq.s32.totalorder %s18, 0
      %p118 = por %p116, %p117
      %p119 = scmp.le.s32.totalorder 1, %s12
      %p120 = scmp.lt.s32.totalorder %s12, 3
      %p121 = pnand %p119, %p120
      %p122 = pneg %p121
      // Predicated region
      $region9: #{tpu_custom_call.1} parent=5 // pred_check
        _
      $region10: #{tpu_custom_call.1} parent=5 // pred_check_branch
        %124 = sbr.rel (%p121) target = $region12
      $region11: #{tpu_custom_call.1} parent=5 // pred_region
        %s125 = ssub.s32 %s12, 1
        // Predicated region
        $region13: #{tpu_custom_call.1} parent=11 // pred_check
          %p126 = pneg %p85
        $region14: #{tpu_custom_call.1} parent=11 // pred_check_branch
          %128 = sbr.rel (%p126) target = $region16
        $region15: #{tpu_custom_call.1} parent=11 // pred_region
          _
        $region16: #{tpu_custom_call.1} parent=11 // pred_fallthru
          _
      $region12: #{tpu_custom_call.1} parent=5 // pred_fallthru
        _
      %p129 = scmp.lt.s32.totalorder %s12, 2
      // Predicated region
      $region17: #{tpu_custom_call.1} parent=5 // pred_check
        %p130 = pneg %p129
      $region18: #{tpu_custom_call.1} parent=5 // pred_check_branch
        %132 = sbr.rel (%p130) target = $region20
      $region19: #{tpu_custom_call.1} parent=5 // pred_region
        // Predicated region
        $region21: #{tpu_custom_call.1} parent=19 // pred_check
          %p133 = pneg %p32
        $region22: #{tpu_custom_call.1} parent=19 // pred_check_branch
          %135 = sbr.rel (%p133) target = $region24
        $region23: #{tpu_custom_call.1} parent=19 // pred_region
          %s136 = smul.u32 512, %s12
          %p137 = scmp.lt.s32.totalorder %s136, 1023
          %s138 = scalar_select %p137, %s136, 1023
          %s139 = smul.addr %s138, 8
          %s140 = scalar_lea.vmem %s0, %s139
          %s141 = smul.u32 512, %s12
        $region24: #{tpu_custom_call.1} parent=19 // pred_fallthru
          _
        // Predicated region
        $region25: #{tpu_custom_call.1} parent=19 // pred_check
          %p142 = pneg %p58
        $region26: #{tpu_custom_call.1} parent=19 // pred_check_branch
          %144 = sbr.rel (%p142) target = $region28
        $region27: #{tpu_custom_call.1} parent=19 // pred_region
          %s145 = smul.u32 512, %s12
          %p146 = scmp.lt.s32.totalorder %s145, 1023
          %s147 = scalar_select %p146, %s145, 1023
          %s148 = smul.addr %s147, 8
          %s149 = scalar_lea.vmem %s1, %s148
          %s150 = smul.u32 512, %s12
        $region28: #{tpu_custom_call.1} parent=19 // pred_fallthru
          _
      $region20: #{tpu_custom_call.1} parent=5 // pred_fallthru
        _
      %p151 = scmp.le.s32.totalorder 1, %s12
      %p152 = scmp.lt.s32.totalorder %s12, 3
      %p153 = pnand %p151, %p152
      %p154 = pneg %p153
      // Predicated region
      $region29: #{tpu_custom_call.1} parent=5 // pred_check
        _
      $region30: #{tpu_custom_call.1} parent=5 // pred_check_branch
        %156 = sbr.rel (%p153) target = $region32
      $region31: #{tpu_custom_call.1} parent=5 // pred_region
        %s157 = ssub.s32 %s12, 1
        %s158 = smul.u32 512, %s17
        %p159 = scmp.lt.s32.totalorder %s158, 1023
        %s160 = scalar_select %p159, %s158, 1023
        %s161 = smul.addr %s160, 8
        %s162 = scalar_lea.vmem %s0, %s161
        %p163 = pneg %p38
        %p164 = pneg %p35
        %s165 = smul.u32 512, %s17
        %p166 = scmp.lt.s32.totalorder %s165, 1023
        %s167 = scalar_select %p166, %s165, 1023
        %s168 = smul.addr %s167, 8
        %s169 = scalar_lea.vmem %s1, %s168
        %p170 = pneg %p64
        %p171 = pneg %p61
        %p172 = pneg %p85
        %p173 = pneg %p82
        %p174 = pneg %p111
        %p175 = pneg %p108
        %s176 = sand.u32 %s98, 1
        %s177 = scalar_lea.sflag [#allocation3], %s176
        %s178 = sand.u32 %s98, 1
        %s179 = smul.addr %s178, 512
        %s180 = scalar_lea.vmem [#allocation2], %s179
        %s181 = smul.u32 512, %s17
        %p182 = scmp.lt.s32.totalorder %s181, 1023
        %s183 = scalar_select %p182, %s181, 1023
        %s184 = smul.addr %s183, 8
        %s185 = scalar_lea.vmem %s0, %s184
        %s186 = smul.u32 512, %s17
        %s187 = smul.u32 512, %s17
        %p188 = scmp.lt.s32.totalorder %s187, 1023
        %s189 = scalar_select %p188, %s187, 1023
        %s190 = smul.addr %s189, 8
        %s191 = scalar_lea.vmem %s1, %s190
        %s192 = smul.u32 512, %s17
        %s193 = smul.u32 64, %s17
        %v194 = vld [vmem:[%s185] sm:$0xff]
        %v195 = vld [vmem:[%s185 + $0x8] sm:$0xff]
        %v196 = vld [vmem:[%s185 + $0x10] sm:$0xff]
        %v197 = vld [vmem:[%s185 + $0x18] sm:$0xff]
        %v198 = vld [vmem:[%s185 + $0x20] sm:$0xff]
        %v199 = vld [vmem:[%s185 + $0x28] sm:$0xff]
        %v200 = vld [vmem:[%s185 + $0x30] sm:$0xff]
        %v201 = vld [vmem:[%s185 + $0x38] sm:$0xff]
        %v202 = vld [vmem:[%s185 + $0x40] sm:$0xff]
        %v203 = vld [vmem:[%s185 + $0x48] sm:$0xff]
        %v204 = vld [vmem:[%s185 + $0x50] sm:$0xff]
        %v205 = vld [vmem:[%s185 + $0x58] sm:$0xff]
        %v206 = vld [vmem:[%s185 + $0x60] sm:$0xff]
        %v207 = vld [vmem:[%s185 + $0x68] sm:$0xff]
        %v208 = vld [vmem:[%s185 + $0x70] sm:$0xff]
        %v209 = vld [vmem:[%s185 + $0x78] sm:$0xff]
        %v210 = vld [vmem:[%s185 + $0x80] sm:$0xff]
        %v211 = vld [vmem:[%s185 + $0x88] sm:$0xff]
        %v212 = vld [vmem:[%s185 + $0x90] sm:$0xff]
        %v213 = vld [vmem:[%s185 + $0x98] sm:$0xff]
        %v214 = vld [vmem:[%s185 + $0xa0] sm:$0xff]
        %v215 = vld [vmem:[%s185 + $0xa8] sm:$0xff]
        %v216 = vld [vmem:[%s185 + $0xb0] sm:$0xff]
        %v217 = vld [vmem:[%s185 + $0xb8] sm:$0xff]
        %v218 = vld [vmem:[%s185 + $0xc0] sm:$0xff]
        %v219 = vld [vmem:[%s185 + $0xc8] sm:$0xff]
        %v220 = vld [vmem:[%s185 + $0xd0] sm:$0xff]
        %v221 = vld [vmem:[%s185 + $0xd8] sm:$0xff]
        %v222 = vld [vmem:[%s185 + $0xe0] sm:$0xff]
        %v223 = vld [vmem:[%s185 + $0xe8] sm:$0xff]
        %v224 = vld [vmem:[%s185 + $0xf0] sm:$0xff]
        %v225 = vld [vmem:[%s185 + $0xf8] sm:$0xff]
        %v226 = vld [vmem:[%s185 + $0x100] sm:$0xff]
        %v227 = vld [vmem:[%s185 + $0x108] sm:$0xff]
        %v228 = vld [vmem:[%s185 + $0x110] sm:$0xff]
        %v229 = vld [vmem:[%s185 + $0x118] sm:$0xff]
        %v230 = vld [vmem:[%s185 + $0x120] sm:$0xff]
        %v231 = vld [vmem:[%s185 + $0x128] sm:$0xff]
        %v232 = vld [vmem:[%s185 + $0x130] sm:$0xff]
        %v233 = vld [vmem:[%s185 + $0x138] sm:$0xff]
        %v234 = vld [vmem:[%s185 + $0x140] sm:$0xff]
        %v235 = vld [vmem:[%s185 + $0x148] sm:$0xff]
        %v236 = vld [vmem:[%s185 + $0x150] sm:$0xff]
        %v237 = vld [vmem:[%s185 + $0x158] sm:$0xff]
        %v238 = vld [vmem:[%s185 + $0x160] sm:$0xff]
        %v239 = vld [vmem:[%s185 + $0x168] sm:$0xff]
        %v240 = vld [vmem:[%s185 + $0x170] sm:$0xff]
        %v241 = vld [vmem:[%s185 + $0x178] sm:$0xff]
        %v242 = vld [vmem:[%s185 + $0x180] sm:$0xff]
        %v243 = vld [vmem:[%s185 + $0x188] sm:$0xff]
        %v244 = vld [vmem:[%s185 + $0x190] sm:$0xff]
        %v245 = vld [vmem:[%s185 + $0x198] sm:$0xff]
        %v246 = vld [vmem:[%s185 + $0x1a0] sm:$0xff]
        %v247 = vld [vmem:[%s185 + $0x1a8] sm:$0xff]
        %v248 = vld [vmem:[%s185 + $0x1b0] sm:$0xff]
        %v249 = vld [vmem:[%s185 + $0x1b8] sm:$0xff]
        %v250 = vld [vmem:[%s185 + $0x1c0] sm:$0xff]
        %v251 = vld [vmem:[%s185 + $0x1c8] sm:$0xff]
        %v252 = vld [vmem:[%s185 + $0x1d0] sm:$0xff]
        %v253 = vld [vmem:[%s185 + $0x1d8] sm:$0xff]
        %v254 = vld [vmem:[%s185 + $0x1e0] sm:$0xff]
        %v255 = vld [vmem:[%s185 + $0x1e8] sm:$0xff]
        %v256 = vld [vmem:[%s185 + $0x1f0] sm:$0xff]
        %v257 = vld [vmem:[%s185 + $0x1f8] sm:$0xff]
        %v258 = vld [vmem:[%s185 + $0x200] sm:$0xff]
        %v259 = vld [vmem:[%s185 + $0x208] sm:$0xff]
        %v260 = vld [vmem:[%s185 + $0x210] sm:$0xff]
        %v261 = vld [vmem:[%s185 + $0x218] sm:$0xff]
        %v262 = vld [vmem:[%s185 + $0x220] sm:$0xff]
        %v263 = vld [vmem:[%s185 + $0x228] sm:$0xff]
        %v264 = vld [vmem:[%s185 + $0x230] sm:$0xff]
        %v265 = vld [vmem:[%s185 + $0x238] sm:$0xff]
        %v266 = vld [vmem:[%s185 + $0x240] sm:$0xff]
        %v267 = vld [vmem:[%s185 + $0x248] sm:$0xff]
        %v268 = vld [vmem:[%s185 + $0x250] sm:$0xff]
        %v269 = vld [vmem:[%s185 + $0x258] sm:$0xff]
        %v270 = vld [vmem:[%s185 + $0x260] sm:$0xff]
        %v271 = vld [vmem:[%s185 + $0x268] sm:$0xff]
        %v272 = vld [vmem:[%s185 + $0x270] sm:$0xff]
        %v273 = vld [vmem:[%s185 + $0x278] sm:$0xff]
        %v274 = vld [vmem:[%s185 + $0x280] sm:$0xff]
        %v275 = vld [vmem:[%s185 + $0x288] sm:$0xff]
        %v276 = vld [vmem:[%s185 + $0x290] sm:$0xff]
        %v277 = vld [vmem:[%s185 + $0x298] sm:$0xff]
        %v278 = vld [vmem:[%s185 + $0x2a0] sm:$0xff]
        %v279 = vld [vmem:[%s185 + $0x2a8] sm:$0xff]
        %v280 = vld [vmem:[%s185 + $0x2b0] sm:$0xff]
        %v281 = vld [vmem:[%s185 + $0x2b8] sm:$0xff]
        %v282 = vld [vmem:[%s185 + $0x2c0] sm:$0xff]
        %v283 = vld [vmem:[%s185 + $0x2c8] sm:$0xff]
        %v284 = vld [vmem:[%s185 + $0x2d0] sm:$0xff]
        %v285 = vld [vmem:[%s185 + $0x2d8] sm:$0xff]
        %v286 = vld [vmem:[%s185 + $0x2e0] sm:$0xff]
        %v287 = vld [vmem:[%s185 + $0x2e8] sm:$0xff]
        %v288 = vld [vmem:[%s185 + $0x2f0] sm:$0xff]
        %v289 = vld [vmem:[%s185 + $0x2f8] sm:$0xff]
        %v290 = vld [vmem:[%s185 + $0x300] sm:$0xff]
        %v291 = vld [vmem:[%s185 + $0x308] sm:$0xff]
        %v292 = vld [vmem:[%s185 + $0x310] sm:$0xff]
        %v293 = vld [vmem:[%s185 + $0x318] sm:$0xff]
        %v294 = vld [vmem:[%s185 + $0x320] sm:$0xff]
        %v295 = vld [vmem:[%s185 + $0x328] sm:$0xff]
        %v296 = vld [vmem:[%s185 + $0x330] sm:$0xff]
        %v297 = vld [vmem:[%s185 + $0x338] sm:$0xff]
        %v298 = vld [vmem:[%s185 + $0x340] sm:$0xff]
        %v299 = vld [vmem:[%s185 + $0x348] sm:$0xff]
        %v300 = vld [vmem:[%s185 + $0x350] sm:$0xff]
        %v301 = vld [vmem:[%s185 + $0x358] sm:$0xff]
        %v302 = vld [vmem:[%s185 + $0x360] sm:$0xff]
        %v303 = vld [vmem:[%s185 + $0x368] sm:$0xff]
        %v304 = vld [vmem:[%s185 + $0x370] sm:$0xff]
        %v305 = vld [vmem:[%s185 + $0x378] sm:$0xff]
        %v306 = vld [vmem:[%s185 + $0x380] sm:$0xff]
        %v307 = vld [vmem:[%s185 + $0x388] sm:$0xff]
        %v308 = vld [vmem:[%s185 + $0x390] sm:$0xff]
        %v309 = vld [vmem:[%s185 + $0x398] sm:$0xff]
        %v310 = vld [vmem:[%s185 + $0x3a0] sm:$0xff]
        %v311 = vld [vmem:[%s185 + $0x3a8] sm:$0xff]
        %v312 = vld [vmem:[%s185 + $0x3b0] sm:$0xff]
        %v313 = vld [vmem:[%s185 + $0x3b8] sm:$0xff]
        %v314 = vld [vmem:[%s185 + $0x3c0] sm:$0xff]
        %v315 = vld [vmem:[%s185 + $0x3c8] sm:$0xff]
        %v316 = vld [vmem:[%s185 + $0x3d0] sm:$0xff]
        %v317 = vld [vmem:[%s185 + $0x3d8] sm:$0xff]
        %v318 = vld [vmem:[%s185 + $0x3e0] sm:$0xff]
        %v319 = vld [vmem:[%s185 + $0x3e8] sm:$0xff]
        %v320 = vld [vmem:[%s185 + $0x3f0] sm:$0xff]
        %v321 = vld [vmem:[%s185 + $0x3f8] sm:$0xff]
        %v322 = vld [vmem:[%s185 + $0x400] sm:$0xff]
        %v323 = vld [vmem:[%s185 + $0x408] sm:$0xff]
        %v324 = vld [vmem:[%s185 + $0x410] sm:$0xff]
        %v325 = vld [vmem:[%s185 + $0x418] sm:$0xff]
        %v326 = vld [vmem:[%s185 + $0x420] sm:$0xff]
        %v327 = vld [vmem:[%s185 + $0x428] sm:$0xff]
        %v328 = vld [vmem:[%s185 + $0x430] sm:$0xff]
        %v329 = vld [vmem:[%s185 + $0x438] sm:$0xff]
        %v330 = vld [vmem:[%s185 + $0x440] sm:$0xff]
        %v331 = vld [vmem:[%s185 + $0x448] sm:$0xff]
        %v332 = vld [vmem:[%s185 + $0x450] sm:$0xff]
        %v333 = vld [vmem:[%s185 + $0x458] sm:$0xff]
        %v334 = vld [vmem:[%s185 + $0x460] sm:$0xff]
        %v335 = vld [vmem:[%s185 + $0x468] sm:$0xff]
        %v336 = vld [vmem:[%s185 + $0x470] sm:$0xff]
        %v337 = vld [vmem:[%s185 + $0x478] sm:$0xff]
        %v338 = vld [vmem:[%s185 + $0x480] sm:$0xff]
        %v339 = vld [vmem:[%s185 + $0x488] sm:$0xff]
        %v340 = vld [vmem:[%s185 + $0x490] sm:$0xff]
        %v341 = vld [vmem:[%s185 + $0x498] sm:$0xff]
        %v342 = vld [vmem:[%s185 + $0x4a0] sm:$0xff]
        %v343 = vld [vmem:[%s185 + $0x4a8] sm:$0xff]
        %v344 = vld [vmem:[%s185 + $0x4b0] sm:$0xff]
        %v345 = vld [vmem:[%s185 + $0x4b8] sm:$0xff]
        %v346 = vld [vmem:[%s185 + $0x4c0] sm:$0xff]
        %v347 = vld [vmem:[%s185 + $0x4c8] sm:$0xff]
        %v348 = vld [vmem:[%s185 + $0x4d0] sm:$0xff]
        %v349 = vld [vmem:[%s185 + $0x4d8] sm:$0xff]
        %v350 = vld [vmem:[%s185 + $0x4e0] sm:$0xff]
        %v351 = vld [vmem:[%s185 + $0x4e8] sm:$0xff]
        %v352 = vld [vmem:[%s185 + $0x4f0] sm:$0xff]
        %v353 = vld [vmem:[%s185 + $0x4f8] sm:$0xff]
        %v354 = vld [vmem:[%s185 + $0x500] sm:$0xff]
        %v355 = vld [vmem:[%s185 + $0x508] sm:$0xff]
        %v356 = vld [vmem:[%s185 + $0x510] sm:$0xff]
        %v357 = vld [vmem:[%s185 + $0x518] sm:$0xff]
        %v358 = vld [vmem:[%s185 + $0x520] sm:$0xff]
        %v359 = vld [vmem:[%s185 + $0x528] sm:$0xff]
        %v360 = vld [vmem:[%s185 + $0x530] sm:$0xff]
        %v361 = vld [vmem:[%s185 + $0x538] sm:$0xff]
        %v362 = vld [vmem:[%s185 + $0x540] sm:$0xff]
        %v363 = vld [vmem:[%s185 + $0x548] sm:$0xff]
        %v364 = vld [vmem:[%s185 + $0x550] sm:$0xff]
        %v365 = vld [vmem:[%s185 + $0x558] sm:$0xff]
        %v366 = vld [vmem:[%s185 + $0x560] sm:$0xff]
        %v367 = vld [vmem:[%s185 + $0x568] sm:$0xff]
        %v368 = vld [vmem:[%s185 + $0x570] sm:$0xff]
        %v369 = vld [vmem:[%s185 + $0x578] sm:$0xff]
        %v370 = vld [vmem:[%s185 + $0x580] sm:$0xff]
        %v371 = vld [vmem:[%s185 + $0x588] sm:$0xff]
        %v372 = vld [vmem:[%s185 + $0x590] sm:$0xff]
        %v373 = vld [vmem:[%s185 + $0x598] sm:$0xff]
        %v374 = vld [vmem:[%s185 + $0x5a0] sm:$0xff]
        %v375 = vld [vmem:[%s185 + $0x5a8] sm:$0xff]
        %v376 = vld [vmem:[%s185 + $0x5b0] sm:$0xff]
        %v377 = vld [vmem:[%s185 + $0x5b8] sm:$0xff]
        %v378 = vld [vmem:[%s185 + $0x5c0] sm:$0xff]
        %v379 = vld [vmem:[%s185 + $0x5c8] sm:$0xff]
        %v380 = vld [vmem:[%s185 + $0x5d0] sm:$0xff]
        %v381 = vld [vmem:[%s185 + $0x5d8] sm:$0xff]
        %v382 = vld [vmem:[%s185 + $0x5e0] sm:$0xff]
        %v383 = vld [vmem:[%s185 + $0x5e8] sm:$0xff]
        %v384 = vld [vmem:[%s185 + $0x5f0] sm:$0xff]
        %v385 = vld [vmem:[%s185 + $0x5f8] sm:$0xff]
        %v386 = vld [vmem:[%s185 + $0x600] sm:$0xff]
        %v387 = vld [vmem:[%s185 + $0x608] sm:$0xff]
        %v388 = vld [vmem:[%s185 + $0x610] sm:$0xff]
        %v389 = vld [vmem:[%s185 + $0x618] sm:$0xff]
        %v390 = vld [vmem:[%s185 + $0x620] sm:$0xff]
        %v391 = vld [vmem:[%s185 + $0x628] sm:$0xff]
        %v392 = vld [vmem:[%s185 + $0x630] sm:$0xff]
        %v393 = vld [vmem:[%s185 + $0x638] sm:$0xff]
        %v394 = vld [vmem:[%s185 + $0x640] sm:$0xff]
        %v395 = vld [vmem:[%s185 + $0x648] sm:$0xff]
        %v396 = vld [vmem:[%s185 + $0x650] sm:$0xff]
        %v397 = vld [vmem:[%s185 + $0x658] sm:$0xff]
        %v398 = vld [vmem:[%s185 + $0x660] sm:$0xff]
        %v399 = vld [vmem:[%s185 + $0x668] sm:$0xff]
        %v400 = vld [vmem:[%s185 + $0x670] sm:$0xff]
        %v401 = vld [vmem:[%s185 + $0x678] sm:$0xff]
        %v402 = vld [vmem:[%s185 + $0x680] sm:$0xff]
        %v403 = vld [vmem:[%s185 + $0x688] sm:$0xff]
        %v404 = vld [vmem:[%s185 + $0x690] sm:$0xff]
        %v405 = vld [vmem:[%s185 + $0x698] sm:$0xff]
        %v406 = vld [vmem:[%s185 + $0x6a0] sm:$0xff]
        %v407 = vld [vmem:[%s185 + $0x6a8] sm:$0xff]
        %v408 = vld [vmem:[%s185 + $0x6b0] sm:$0xff]
        %v409 = vld [vmem:[%s185 + $0x6b8] sm:$0xff]
        %v410 = vld [vmem:[%s185 + $0x6c0] sm:$0xff]
        %v411 = vld [vmem:[%s185 + $0x6c8] sm:$0xff]
        %v412 = vld [vmem:[%s185 + $0x6d0] sm:$0xff]
        %v413 = vld [vmem:[%s185 + $0x6d8] sm:$0xff]
        %v414 = vld [vmem:[%s185 + $0x6e0] sm:$0xff]
        %v415 = vld [vmem:[%s185 + $0x6e8] sm:$0xff]
        %v416 = vld [vmem:[%s185 + $0x6f0] sm:$0xff]
        %v417 = vld [vmem:[%s185 + $0x6f8] sm:$0xff]
        %v418 = vld [vmem:[%s185 + $0x700] sm:$0xff]
        %v419 = vld [vmem:[%s185 + $0x708] sm:$0xff]
        %v420 = vld [vmem:[%s185 + $0x710] sm:$0xff]
        %v421 = vld [vmem:[%s185 + $0x718] sm:$0xff]
        %v422 = vld [vmem:[%s185 + $0x720] sm:$0xff]
        %v423 = vld [vmem:[%s185 + $0x728] sm:$0xff]
        %v424 = vld [vmem:[%s185 + $0x730] sm:$0xff]
        %v425 = vld [vmem:[%s185 + $0x738] sm:$0xff]
        %v426 = vld [vmem:[%s185 + $0x740] sm:$0xff]
        %v427 = vld [vmem:[%s185 + $0x748] sm:$0xff]
        %v428 = vld [vmem:[%s185 + $0x750] sm:$0xff]
        %v429 = vld [vmem:[%s185 + $0x758] sm:$0xff]
        %v430 = vld [vmem:[%s185 + $0x760] sm:$0xff]
        %v431 = vld [vmem:[%s185 + $0x768] sm:$0xff]
        %v432 = vld [vmem:[%s185 + $0x770] sm:$0xff]
        %v433 = vld [vmem:[%s185 + $0x778] sm:$0xff]
        %v434 = vld [vmem:[%s185 + $0x780] sm:$0xff]
        %v435 = vld [vmem:[%s185 + $0x788] sm:$0xff]
        %v436 = vld [vmem:[%s185 + $0x790] sm:$0xff]
        %v437 = vld [vmem:[%s185 + $0x798] sm:$0xff]
        %v438 = vld [vmem:[%s185 + $0x7a0] sm:$0xff]
        %v439 = vld [vmem:[%s185 + $0x7a8] sm:$0xff]
        %v440 = vld [vmem:[%s185 + $0x7b0] sm:$0xff]
        %v441 = vld [vmem:[%s185 + $0x7b8] sm:$0xff]
        %v442 = vld [vmem:[%s185 + $0x7c0] sm:$0xff]
        %v443 = vld [vmem:[%s185 + $0x7c8] sm:$0xff]
        %v444 = vld [vmem:[%s185 + $0x7d0] sm:$0xff]
        %v445 = vld [vmem:[%s185 + $0x7d8] sm:$0xff]
        %v446 = vld [vmem:[%s185 + $0x7e0] sm:$0xff]
        %v447 = vld [vmem:[%s185 + $0x7e8] sm:$0xff]
        %v448 = vld [vmem:[%s185 + $0x7f0] sm:$0xff]
        %v449 = vld [vmem:[%s185 + $0x7f8] sm:$0xff]
        %v450 = vld [vmem:[%s185 + $0x800] sm:$0xff]
        %v451 = vld [vmem:[%s185 + $0x808] sm:$0xff]
        %v452 = vld [vmem:[%s185 + $0x810] sm:$0xff]
        %v453 = vld [vmem:[%s185 + $0x818] sm:$0xff]
        %v454 = vld [vmem:[%s185 + $0x820] sm:$0xff]
        %v455 = vld [vmem:[%s185 + $0x828] sm:$0xff]
        %v456 = vld [vmem:[%s185 + $0x830] sm:$0xff]
        %v457 = vld [vmem:[%s185 + $0x838] sm:$0xff]
        %v458 = vld [vmem:[%s185 + $0x840] sm:$0xff]
        %v459 = vld [vmem:[%s185 + $0x848] sm:$0xff]
        %v460 = vld [vmem:[%s185 + $0x850] sm:$0xff]
        %v461 = vld [vmem:[%s185 + $0x858] sm:$0xff]
        %v462 = vld [vmem:[%s185 + $0x860] sm:$0xff]
        %v463 = vld [vmem:[%s185 + $0x868] sm:$0xff]
        %v464 = vld [vmem:[%s185 + $0x870] sm:$0xff]
        %v465 = vld [vmem:[%s185 + $0x878] sm:$0xff]
        %v466 = vld [vmem:[%s185 + $0x880] sm:$0xff]
        %v467 = vld [vmem:[%s185 + $0x888] sm:$0xff]
        %v468 = vld [vmem:[%s185 + $0x890] sm:$0xff]
        %v469 = vld [vmem:[%s185 + $0x898] sm:$0xff]
        %v470 = vld [vmem:[%s185 + $0x8a0] sm:$0xff]
        %v471 = vld [vmem:[%s185 + $0x8a8] sm:$0xff]
        %v472 = vld [vmem:[%s185 + $0x8b0] sm:$0xff]
        %v473 = vld [vmem:[%s185 + $0x8b8] sm:$0xff]
        %v474 = vld [vmem:[%s185 + $0x8c0] sm:$0xff]
        %v475 = vld [vmem:[%s185 + $0x8c8] sm:$0xff]
        %v476 = vld [vmem:[%s185 + $0x8d0] sm:$0xff]
        %v477 = vld [vmem:[%s185 + $0x8d8] sm:$0xff]
        %v478 = vld [vmem:[%s185 + $0x8e0] sm:$0xff]
        %v479 = vld [vmem:[%s185 + $0x8e8] sm:$0xff]
        %v480 = vld [vmem:[%s185 + $0x8f0] sm:$0xff]
        %v481 = vld [vmem:[%s185 + $0x8f8] sm:$0xff]
        %v482 = vld [vmem:[%s185 + $0x900] sm:$0xff]
        %v483 = vld [vmem:[%s185 + $0x908] sm:$0xff]
        %v484 = vld [vmem:[%s185 + $0x910] sm:$0xff]
        %v485 = vld [vmem:[%s185 + $0x918] sm:$0xff]
        %v486 = vld [vmem:[%s185 + $0x920] sm:$0xff]
        %v487 = vld [vmem:[%s185 + $0x928] sm:$0xff]
        %v488 = vld [vmem:[%s185 + $0x930] sm:$0xff]
        %v489 = vld [vmem:[%s185 + $0x938] sm:$0xff]
        %v490 = vld [vmem:[%s185 + $0x940] sm:$0xff]
        %v491 = vld [vmem:[%s185 + $0x948] sm:$0xff]
        %v492 = vld [vmem:[%s185 + $0x950] sm:$0xff]
        %v493 = vld [vmem:[%s185 + $0x958] sm:$0xff]
        %v494 = vld [vmem:[%s185 + $0x960] sm:$0xff]
        %v495 = vld [vmem:[%s185 + $0x968] sm:$0xff]
        %v496 = vld [vmem:[%s185 + $0x970] sm:$0xff]
        %v497 = vld [vmem:[%s185 + $0x978] sm:$0xff]
        %v498 = vld [vmem:[%s185 + $0x980] sm:$0xff]
        %v499 = vld [vmem:[%s185 + $0x988] sm:$0xff]
        %v500 = vld [vmem:[%s185 + $0x990] sm:$0xff]
        %v501 = vld [vmem:[%s185 + $0x998] sm:$0xff]
        %v502 = vld [vmem:[%s185 + $0x9a0] sm:$0xff]
        %v503 = vld [vmem:[%s185 + $0x9a8] sm:$0xff]
        %v504 = vld [vmem:[%s185 + $0x9b0] sm:$0xff]
        %v505 = vld [vmem:[%s185 + $0x9b8] sm:$0xff]
        %v506 = vld [vmem:[%s185 + $0x9c0] sm:$0xff]
        %v507 = vld [vmem:[%s185 + $0x9c8] sm:$0xff]
        %v508 = vld [vmem:[%s185 + $0x9d0] sm:$0xff]
        %v509 = vld [vmem:[%s185 + $0x9d8] sm:$0xff]
        %v510 = vld [vmem:[%s185 + $0x9e0] sm:$0xff]
        %v511 = vld [vmem:[%s185 + $0x9e8] sm:$0xff]
        %v512 = vld [vmem:[%s185 + $0x9f0] sm:$0xff]
        %v513 = vld [vmem:[%s185 + $0x9f8] sm:$0xff]
        %v514 = vld [vmem:[%s185 + $0xa00] sm:$0xff]
        %v515 = vld [vmem:[%s185 + $0xa08] sm:$0xff]
        %v516 = vld [vmem:[%s185 + $0xa10] sm:$0xff]
        %v517 = vld [vmem:[%s185 + $0xa18] sm:$0xff]
        %v518 = vld [vmem:[%s185 + $0xa20] sm:$0xff]
        %v519 = vld [vmem:[%s185 + $0xa28] sm:$0xff]
        %v520 = vld [vmem:[%s185 + $0xa30] sm:$0xff]
        %v521 = vld [vmem:[%s185 + $0xa38] sm:$0xff]
        %v522 = vld [vmem:[%s185 + $0xa40] sm:$0xff]
        %v523 = vld [vmem:[%s185 + $0xa48] sm:$0xff]
        %v524 = vld [vmem:[%s185 + $0xa50] sm:$0xff]
        %v525 = vld [vmem:[%s185 + $0xa58] sm:$0xff]
        %v526 = vld [vmem:[%s185 + $0xa60] sm:$0xff]
        %v527 = vld [vmem:[%s185 + $0xa68] sm:$0xff]
        %v528 = vld [vmem:[%s185 + $0xa70] sm:$0xff]
        %v529 = vld [vmem:[%s185 + $0xa78] sm:$0xff]
        %v530 = vld [vmem:[%s185 + $0xa80] sm:$0xff]
        %v531 = vld [vmem:[%s185 + $0xa88] sm:$0xff]
        %v532 = vld [vmem:[%s185 + $0xa90] sm:$0xff]
        %v533 = vld [vmem:[%s185 + $0xa98] sm:$0xff]
        %v534 = vld [vmem:[%s185 + $0xaa0] sm:$0xff]
        %v535 = vld [vmem:[%s185 + $0xaa8] sm:$0xff]
        %v536 = vld [vmem:[%s185 + $0xab0] sm:$0xff]
        %v537 = vld [vmem:[%s185 + $0xab8] sm:$0xff]
        %v538 = vld [vmem:[%s185 + $0xac0] sm:$0xff]
        %v539 = vld [vmem:[%s185 + $0xac8] sm:$0xff]
        %v540 = vld [vmem:[%s185 + $0xad0] sm:$0xff]
        %v541 = vld [vmem:[%s185 + $0xad8] sm:$0xff]
        %v542 = vld [vmem:[%s185 + $0xae0] sm:$0xff]
        %v543 = vld [vmem:[%s185 + $0xae8] sm:$0xff]
        %v544 = vld [vmem:[%s185 + $0xaf0] sm:$0xff]
        %v545 = vld [vmem:[%s185 + $0xaf8] sm:$0xff]
        %v546 = vld [vmem:[%s185 + $0xb00] sm:$0xff]
        %v547 = vld [vmem:[%s185 + $0xb08] sm:$0xff]
        %v548 = vld [vmem:[%s185 + $0xb10] sm:$0xff]
        %v549 = vld [vmem:[%s185 + $0xb18] sm:$0xff]
        %v550 = vld [vmem:[%s185 + $0xb20] sm:$0xff]
        %v551 = vld [vmem:[%s185 + $0xb28] sm:$0xff]
        %v552 = vld [vmem:[%s185 + $0xb30] sm:$0xff]
        %v553 = vld [vmem:[%s185 + $0xb38] sm:$0xff]
        %v554 = vld [vmem:[%s185 + $0xb40] sm:$0xff]
        %v555 = vld [vmem:[%s185 + $0xb48] sm:$0xff]
        %v556 = vld [vmem:[%s185 + $0xb50] sm:$0xff]
        %v557 = vld [vmem:[%s185 + $0xb58] sm:$0xff]
        %v558 = vld [vmem:[%s185 + $0xb60] sm:$0xff]
        %v559 = vld [vmem:[%s185 + $0xb68] sm:$0xff]
        %v560 = vld [vmem:[%s185 + $0xb70] sm:$0xff]
        %v561 = vld [vmem:[%s185 + $0xb78] sm:$0xff]
        %v562 = vld [vmem:[%s185 + $0xb80] sm:$0xff]
        %v563 = vld [vmem:[%s185 + $0xb88] sm:$0xff]
        %v564 = vld [vmem:[%s185 + $0xb90] sm:$0xff]
        %v565 = vld [vmem:[%s185 + $0xb98] sm:$0xff]
        %v566 = vld [vmem:[%s185 + $0xba0] sm:$0xff]
        %v567 = vld [vmem:[%s185 + $0xba8] sm:$0xff]
        %v568 = vld [vmem:[%s185 + $0xbb0] sm:$0xff]
        %v569 = vld [vmem:[%s185 + $0xbb8] sm:$0xff]
        %v570 = vld [vmem:[%s185 + $0xbc0] sm:$0xff]
        %v571 = vld [vmem:[%s185 + $0xbc8] sm:$0xff]
        %v572 = vld [vmem:[%s185 + $0xbd0] sm:$0xff]
        %v573 = vld [vmem:[%s185 + $0xbd8] sm:$0xff]
        %v574 = vld [vmem:[%s185 + $0xbe0] sm:$0xff]
        %v575 = vld [vmem:[%s185 + $0xbe8] sm:$0xff]
        %v576 = vld [vmem:[%s185 + $0xbf0] sm:$0xff]
        %v577 = vld [vmem:[%s185 + $0xbf8] sm:$0xff]
        %v578 = vld [vmem:[%s185 + $0xc00] sm:$0xff]
        %v579 = vld [vmem:[%s185 + $0xc08] sm:$0xff]
        %v580 = vld [vmem:[%s185 + $0xc10] sm:$0xff]
        %v581 = vld [vmem:[%s185 + $0xc18] sm:$0xff]
        %v582 = vld [vmem:[%s185 + $0xc20] sm:$0xff]
        %v583 = vld [vmem:[%s185 + $0xc28] sm:$0xff]
        %v584 = vld [vmem:[%s185 + $0xc30] sm:$0xff]
        %v585 = vld [vmem:[%s185 + $0xc38] sm:$0xff]
        %v586 = vld [vmem:[%s185 + $0xc40] sm:$0xff]
        %v587 = vld [vmem:[%s185 + $0xc48] sm:$0xff]
        %v588 = vld [vmem:[%s185 + $0xc50] sm:$0xff]
        %v589 = vld [vmem:[%s185 + $0xc58] sm:$0xff]
        %v590 = vld [vmem:[%s185 + $0xc60] sm:$0xff]
        %v591 = vld [vmem:[%s185 + $0xc68] sm:$0xff]
        %v592 = vld [vmem:[%s185 + $0xc70] sm:$0xff]
        %v593 = vld [vmem:[%s185 + $0xc78] sm:$0xff]
        %v594 = vld [vmem:[%s185 + $0xc80] sm:$0xff]
        %v595 = vld [vmem:[%s185 + $0xc88] sm:$0xff]
        %v596 = vld [vmem:[%s185 + $0xc90] sm:$0xff]
        %v597 = vld [vmem:[%s185 + $0xc98] sm:$0xff]
        %v598 = vld [vmem:[%s185 + $0xca0] sm:$0xff]
        %v599 = vld [vmem:[%s185 + $0xca8] sm:$0xff]
        %v600 = vld [vmem:[%s185 + $0xcb0] sm:$0xff]
        %v601 = vld [vmem:[%s185 + $0xcb8] sm:$0xff]
        %v602 = vld [vmem:[%s185 + $0xcc0] sm:$0xff]
        %v603 = vld [vmem:[%s185 + $0xcc8] sm:$0xff]
        %v604 = vld [vmem:[%s185 + $0xcd0] sm:$0xff]
        %v605 = vld [vmem:[%s185 + $0xcd8] sm:$0xff]
        %v606 = vld [vmem:[%s185 + $0xce0] sm:$0xff]
        %v607 = vld [vmem:[%s185 + $0xce8] sm:$0xff]
        %v608 = vld [vmem:[%s185 + $0xcf0] sm:$0xff]
        %v609 = vld [vmem:[%s185 + $0xcf8] sm:$0xff]
        %v610 = vld [vmem:[%s185 + $0xd00] sm:$0xff]
        %v611 = vld [vmem:[%s185 + $0xd08] sm:$0xff]
        %v612 = vld [vmem:[%s185 + $0xd10] sm:$0xff]
        %v613 = vld [vmem:[%s185 + $0xd18] sm:$0xff]
        %v614 = vld [vmem:[%s185 + $0xd20] sm:$0xff]
        %v615 = vld [vmem:[%s185 + $0xd28] sm:$0xff]
        %v616 = vld [vmem:[%s185 + $0xd30] sm:$0xff]
        %v617 = vld [vmem:[%s185 + $0xd38] sm:$0xff]
        %v618 = vld [vmem:[%s185 + $0xd40] sm:$0xff]
        %v619 = vld [vmem:[%s185 + $0xd48] sm:$0xff]
        %v620 = vld [vmem:[%s185 + $0xd50] sm:$0xff]
        %v621 = vld [vmem:[%s185 + $0xd58] sm:$0xff]
        %v622 = vld [vmem:[%s185 + $0xd60] sm:$0xff]
        %v623 = vld [vmem:[%s185 + $0xd68] sm:$0xff]
        %v624 = vld [vmem:[%s185 + $0xd70] sm:$0xff]
        %v625 = vld [vmem:[%s185 + $0xd78] sm:$0xff]
        %v626 = vld [vmem:[%s185 + $0xd80] sm:$0xff]
        %v627 = vld [vmem:[%s185 + $0xd88] sm:$0xff]
        %v628 = vld [vmem:[%s185 + $0xd90] sm:$0xff]
        %v629 = vld [vmem:[%s185 + $0xd98] sm:$0xff]
        %v630 = vld [vmem:[%s185 + $0xda0] sm:$0xff]
        %v631 = vld [vmem:[%s185 + $0xda8] sm:$0xff]
        %v632 = vld [vmem:[%s185 + $0xdb0] sm:$0xff]
        %v633 = vld [vmem:[%s185 + $0xdb8] sm:$0xff]
        %v634 = vld [vmem:[%s185 + $0xdc0] sm:$0xff]
        %v635 = vld [vmem:[%s185 + $0xdc8] sm:$0xff]
        %v636 = vld [vmem:[%s185 + $0xdd0] sm:$0xff]
        %v637 = vld [vmem:[%s185 + $0xdd8] sm:$0xff]
        %v638 = vld [vmem:[%s185 + $0xde0] sm:$0xff]
        %v639 = vld [vmem:[%s185 + $0xde8] sm:$0xff]
        %v640 = vld [vmem:[%s185 + $0xdf0] sm:$0xff]
        %v641 = vld [vmem:[%s185 + $0xdf8] sm:$0xff]
        %v642 = vld [vmem:[%s185 + $0xe00] sm:$0xff]
        %v643 = vld [vmem:[%s185 + $0xe08] sm:$0xff]
        %v644 = vld [vmem:[%s185 + $0xe10] sm:$0xff]
        %v645 = vld [vmem:[%s185 + $0xe18] sm:$0xff]
        %v646 = vld [vmem:[%s185 + $0xe20] sm:$0xff]
        %v647 = vld [vmem:[%s185 + $0xe28] sm:$0xff]
        %v648 = vld [vmem:[%s185 + $0xe30] sm:$0xff]
        %v649 = vld [vmem:[%s185 + $0xe38] sm:$0xff]
        %v650 = vld [vmem:[%s185 + $0xe40] sm:$0xff]
        %v651 = vld [vmem:[%s185 + $0xe48] sm:$0xff]
        %v652 = vld [vmem:[%s185 + $0xe50] sm:$0xff]
        %v653 = vld [vmem:[%s185 + $0xe58] sm:$0xff]
        %v654 = vld [vmem:[%s185 + $0xe60] sm:$0xff]
        %v655 = vld [vmem:[%s185 + $0xe68] sm:$0xff]
        %v656 = vld [vmem:[%s185 + $0xe70] sm:$0xff]
        %v657 = vld [vmem:[%s185 + $0xe78] sm:$0xff]
        %v658 = vld [vmem:[%s185 + $0xe80] sm:$0xff]
        %v659 = vld [vmem:[%s185 + $0xe88] sm:$0xff]
        %v660 = vld [vmem:[%s185 + $0xe90] sm:$0xff]
        %v661 = vld [vmem:[%s185 + $0xe98] sm:$0xff]
        %v662 = vld [vmem:[%s185 + $0xea0] sm:$0xff]
        %v663 = vld [vmem:[%s185 + $0xea8] sm:$0xff]
        %v664 = vld [vmem:[%s185 + $0xeb0] sm:$0xff]
        %v665 = vld [vmem:[%s185 + $0xeb8] sm:$0xff]
        %v666 = vld [vmem:[%s185 + $0xec0] sm:$0xff]
        %v667 = vld [vmem:[%s185 + $0xec8] sm:$0xff]
        %v668 = vld [vmem:[%s185 + $0xed0] sm:$0xff]
        %v669 = vld [vmem:[%s185 + $0xed8] sm:$0xff]
        %v670 = vld [vmem:[%s185 + $0xee0] sm:$0xff]
        %v671 = vld [vmem:[%s185 + $0xee8] sm:$0xff]
        %v672 = vld [vmem:[%s185 + $0xef0] sm:$0xff]
        %v673 = vld [vmem:[%s185 + $0xef8] sm:$0xff]
        %v674 = vld [vmem:[%s185 + $0xf00] sm:$0xff]
        %v675 = vld [vmem:[%s185 + $0xf08] sm:$0xff]
        %v676 = vld [vmem:[%s185 + $0xf10] sm:$0xff]
        %v677 = vld [vmem:[%s185 + $0xf18] sm:$0xff]
        %v678 = vld [vmem:[%s185 + $0xf20] sm:$0xff]
        %v679 = vld [vmem:[%s185 + $0xf28] sm:$0xff]
        %v680 = vld [vmem:[%s185 + $0xf30] sm:$0xff]
        %v681 = vld [vmem:[%s185 + $0xf38] sm:$0xff]
        %v682 = vld [vmem:[%s185 + $0xf40] sm:$0xff]
        %v683 = vld [vmem:[%s185 + $0xf48] sm:$0xff]
        %v684 = vld [vmem:[%s185 + $0xf50] sm:$0xff]
        %v685 = vld [vmem:[%s185 + $0xf58] sm:$0xff]
        %v686 = vld [vmem:[%s185 + $0xf60] sm:$0xff]
        %v687 = vld [vmem:[%s185 + $0xf68] sm:$0xff]
        %v688 = vld [vmem:[%s185 + $0xf70] sm:$0xff]
        %v689 = vld [vmem:[%s185 + $0xf78] sm:$0xff]
        %v690 = vld [vmem:[%s185 + $0xf80] sm:$0xff]
        %v691 = vld [vmem:[%s185 + $0xf88] sm:$0xff]
        %v692 = vld [vmem:[%s185 + $0xf90] sm:$0xff]
        %v693 = vld [vmem:[%s185 + $0xf98] sm:$0xff]
        %v694 = vld [vmem:[%s185 + $0xfa0] sm:$0xff]
        %v695 = vld [vmem:[%s185 + $0xfa8] sm:$0xff]
        %v696 = vld [vmem:[%s185 + $0xfb0] sm:$0xff]
        %v697 = vld [vmem:[%s185 + $0xfb8] sm:$0xff]
        %v698 = vld [vmem:[%s185 + $0xfc0] sm:$0xff]
        %v699 = vld [vmem:[%s185 + $0xfc8] sm:$0xff]
        %v700 = vld [vmem:[%s185 + $0xfd0] sm:$0xff]
        %v701 = vld [vmem:[%s185 + $0xfd8] sm:$0xff]
        %v702 = vld [vmem:[%s185 + $0xfe0] sm:$0xff]
        %v703 = vld [vmem:[%s185 + $0xfe8] sm:$0xff]
        %v704 = vld [vmem:[%s185 + $0xff0] sm:$0xff]
        %v705 = vld [vmem:[%s185 + $0xff8] sm:$0xff]
        %v706 = vld [vmem:[%s2] sm:$0xff]
        %v707 = vld [vmem:[%s2 + $0x8] sm:$0xff]
        %vm708 = vcmask 130048
        %v710 = vsel %vm708, %v194, 0
        %v713 = vsel %vm708, %v195, 0
        %v716 = vsel %vm708, %v196, 0
        %v719 = vsel %vm708, %v197, 0
        %v722 = vsel %vm708, %v198, 0
        %v725 = vsel %vm708, %v199, 0
        %v728 = vsel %vm708, %v200, 0
        %v731 = vsel %vm708, %v201, 0
        %v734 = vsel %vm708, %v202, 0
        %v737 = vsel %vm708, %v203, 0
        %v740 = vsel %vm708, %v204, 0
        %v743 = vsel %vm708, %v205, 0
        %v746 = vsel %vm708, %v206, 0
        %v749 = vsel %vm708, %v207, 0
        %v752 = vsel %vm708, %v208, 0
        %v755 = vsel %vm708, %v209, 0
        %v758 = vsel %vm708, %v210, 0
        %v761 = vsel %vm708, %v211, 0
        %v764 = vsel %vm708, %v212, 0
        %v767 = vsel %vm708, %v213, 0
        %v770 = vsel %vm708, %v214, 0
        %v773 = vsel %vm708, %v215, 0
        %v776 = vsel %vm708, %v216, 0
        %v779 = vsel %vm708, %v217, 0
        %v782 = vsel %vm708, %v218, 0
        %v785 = vsel %vm708, %v219, 0
        %v788 = vsel %vm708, %v220, 0
        %v791 = vsel %vm708, %v221, 0
        %v794 = vsel %vm708, %v222, 0
        %v797 = vsel %vm708, %v223, 0
        %v800 = vsel %vm708, %v224, 0
        %v803 = vsel %vm708, %v225, 0
        %v806 = vsel %vm708, %v226, 0
        %v809 = vsel %vm708, %v227, 0
        %v812 = vsel %vm708, %v228, 0
        %v815 = vsel %vm708, %v229, 0
        %v818 = vsel %vm708, %v230, 0
        %v821 = vsel %vm708, %v231, 0
        %v824 = vsel %vm708, %v232, 0
        %v827 = vsel %vm708, %v233, 0
        %v830 = vsel %vm708, %v234, 0
        %v833 = vsel %vm708, %v235, 0
        %v836 = vsel %vm708, %v236, 0
        %v839 = vsel %vm708, %v237, 0
        %v842 = vsel %vm708, %v238, 0
        %v845 = vsel %vm708, %v239, 0
        %v848 = vsel %vm708, %v240, 0
        %v851 = vsel %vm708, %v241, 0
        %v854 = vsel %vm708, %v242, 0
        %v857 = vsel %vm708, %v243, 0
        %v860 = vsel %vm708, %v244, 0
        %v863 = vsel %vm708, %v245, 0
        %v866 = vsel %vm708, %v246, 0
        %v869 = vsel %vm708, %v247, 0
        %v872 = vsel %vm708, %v248, 0
        %v875 = vsel %vm708, %v249, 0
        %v878 = vsel %vm708, %v250, 0
        %v881 = vsel %vm708, %v251, 0
        %v884 = vsel %vm708, %v252, 0
        %v887 = vsel %vm708, %v253, 0
        %v890 = vsel %vm708, %v254, 0
        %v893 = vsel %vm708, %v255, 0
        %v896 = vsel %vm708, %v256, 0
        %v899 = vsel %vm708, %v257, 0
        %v902 = vsel %vm708, %v258, 0
        %v905 = vsel %vm708, %v259, 0
        %v908 = vsel %vm708, %v260, 0
        %v911 = vsel %vm708, %v261, 0
        %v914 = vsel %vm708, %v262, 0
        %v917 = vsel %vm708, %v263, 0
        %v920 = vsel %vm708, %v264, 0
        %v923 = vsel %vm708, %v265, 0
        %v926 = vsel %vm708, %v266, 0
        %v929 = vsel %vm708, %v267, 0
        %v932 = vsel %vm708, %v268, 0
        %v935 = vsel %vm708, %v269, 0
        %v938 = vsel %vm708, %v270, 0
        %v941 = vsel %vm708, %v271, 0
        %v944 = vsel %vm708, %v272, 0
        %v947 = vsel %vm708, %v273, 0
        %v950 = vsel %vm708, %v274, 0
        %v953 = vsel %vm708, %v275, 0
        %v956 = vsel %vm708, %v276, 0
        %v959 = vsel %vm708, %v277, 0
        %v962 = vsel %vm708, %v278, 0
        %v965 = vsel %vm708, %v279, 0
        %v968 = vsel %vm708, %v280, 0
        %v971 = vsel %vm708, %v281, 0
        %v974 = vsel %vm708, %v282, 0
        %v977 = vsel %vm708, %v283, 0
        %v980 = vsel %vm708, %v284, 0
        %v983 = vsel %vm708, %v285, 0
        %v986 = vsel %vm708, %v286, 0
        %v989 = vsel %vm708, %v287, 0
        %v992 = vsel %vm708, %v288, 0
        %v995 = vsel %vm708, %v289, 0
        %v998 = vsel %vm708, %v290, 0
        %v1001 = vsel %vm708, %v291, 0
        %v1004 = vsel %vm708, %v292, 0
        %v1007 = vsel %vm708, %v293, 0
        %v1010 = vsel %vm708, %v294, 0
        %v1013 = vsel %vm708, %v295, 0
        %v1016 = vsel %vm708, %v296, 0
        %v1019 = vsel %vm708, %v297, 0
        %v1022 = vsel %vm708, %v298, 0
        %v1025 = vsel %vm708, %v299, 0
        %v1028 = vsel %vm708, %v300, 0
        %v1031 = vsel %vm708, %v301, 0
        %v1034 = vsel %vm708, %v302, 0
        %v1037 = vsel %vm708, %v303, 0
        %v1040 = vsel %vm708, %v304, 0
        %v1043 = vsel %vm708, %v305, 0
        %v1046 = vsel %vm708, %v306, 0
        %v1049 = vsel %vm708, %v307, 0
        %v1052 = vsel %vm708, %v308, 0
        %v1055 = vsel %vm708, %v309, 0
        %v1058 = vsel %vm708, %v310, 0
        %v1061 = vsel %vm708, %v311, 0
        %v1064 = vsel %vm708, %v312, 0
        %v1067 = vsel %vm708, %v313, 0
        %v1070 = vsel %vm708, %v314, 0
        %v1073 = vsel %vm708, %v315, 0
        %v1076 = vsel %vm708, %v316, 0
        %v1079 = vsel %vm708, %v317, 0
        %v1082 = vsel %vm708, %v318, 0
        %v1085 = vsel %vm708, %v319, 0
        %v1088 = vsel %vm708, %v320, 0
        %v1091 = vsel %vm708, %v321, 0
        %v1094 = vsel %vm708, %v322, 0
        %v1097 = vsel %vm708, %v323, 0
        %v1100 = vsel %vm708, %v324, 0
        %v1103 = vsel %vm708, %v325, 0
        %v1106 = vsel %vm708, %v326, 0
        %v1109 = vsel %vm708, %v327, 0
        %v1112 = vsel %vm708, %v328, 0
        %v1115 = vsel %vm708, %v329, 0
        %v1118 = vsel %vm708, %v330, 0
        %v1121 = vsel %vm708, %v331, 0
        %v1124 = vsel %vm708, %v332, 0
        %v1127 = vsel %vm708, %v333, 0
        %v1130 = vsel %vm708, %v334, 0
        %v1133 = vsel %vm708, %v335, 0
        %v1136 = vsel %vm708, %v336, 0
        %v1139 = vsel %vm708, %v337, 0
        %v1142 = vsel %vm708, %v338, 0
        %v1145 = vsel %vm708, %v339, 0
        %v1148 = vsel %vm708, %v340, 0
        %v1151 = vsel %vm708, %v341, 0
        %v1154 = vsel %vm708, %v342, 0
        %v1157 = vsel %vm708, %v343, 0
        %v1160 = vsel %vm708, %v344, 0
        %v1163 = vsel %vm708, %v345, 0
        %v1166 = vsel %vm708, %v346, 0
        %v1169 = vsel %vm708, %v347, 0
        %v1172 = vsel %vm708, %v348, 0
        %v1175 = vsel %vm708, %v349, 0
        %v1178 = vsel %vm708, %v350, 0
        %v1181 = vsel %vm708, %v351, 0
        %v1184 = vsel %vm708, %v352, 0
        %v1187 = vsel %vm708, %v353, 0
        %v1190 = vsel %vm708, %v354, 0
        %v1193 = vsel %vm708, %v355, 0
        %v1196 = vsel %vm708, %v356, 0
        %v1199 = vsel %vm708, %v357, 0
        %v1202 = vsel %vm708, %v358, 0
        %v1205 = vsel %vm708, %v359, 0
        %v1208 = vsel %vm708, %v360, 0
        %v1211 = vsel %vm708, %v361, 0
        %v1214 = vsel %vm708, %v362, 0
        %v1217 = vsel %vm708, %v363, 0
        %v1220 = vsel %vm708, %v364, 0
        %v1223 = vsel %vm708, %v365, 0
        %v1226 = vsel %vm708, %v366, 0
        %v1229 = vsel %vm708, %v367, 0
        %v1232 = vsel %vm708, %v368, 0
        %v1235 = vsel %vm708, %v369, 0
        %v1238 = vsel %vm708, %v370, 0
        %v1241 = vsel %vm708, %v371, 0
        %v1244 = vsel %vm708, %v372, 0
        %v1247 = vsel %vm708, %v373, 0
        %v1250 = vsel %vm708, %v374, 0
        %v1253 = vsel %vm708, %v375, 0
        %v1256 = vsel %vm708, %v376, 0
        %v1259 = vsel %vm708, %v377, 0
        %v1262 = vsel %vm708, %v378, 0
        %v1265 = vsel %vm708, %v379, 0
        %v1268 = vsel %vm708, %v380, 0
        %v1271 = vsel %vm708, %v381, 0
        %v1274 = vsel %vm708, %v382, 0
        %v1277 = vsel %vm708, %v383, 0
        %v1280 = vsel %vm708, %v384, 0
        %v1283 = vsel %vm708, %v385, 0
        %v1286 = vsel %vm708, %v386, 0
        %v1289 = vsel %vm708, %v387, 0
        %v1292 = vsel %vm708, %v388, 0
        %v1295 = vsel %vm708, %v389, 0
        %v1298 = vsel %vm708, %v390, 0
        %v1301 = vsel %vm708, %v391, 0
        %v1304 = vsel %vm708, %v392, 0
        %v1307 = vsel %vm708, %v393, 0
        %v1310 = vsel %vm708, %v394, 0
        %v1313 = vsel %vm708, %v395, 0
        %v1316 = vsel %vm708, %v396, 0
        %v1319 = vsel %vm708, %v397, 0
        %v1322 = vsel %vm708, %v398, 0
        %v1325 = vsel %vm708, %v399, 0
        %v1328 = vsel %vm708, %v400, 0
        %v1331 = vsel %vm708, %v401, 0
        %v1334 = vsel %vm708, %v402, 0
        %v1337 = vsel %vm708, %v403, 0
        %v1340 = vsel %vm708, %v404, 0
        %v1343 = vsel %vm708, %v405, 0
        %v1346 = vsel %vm708, %v406, 0
        %v1349 = vsel %vm708, %v407, 0
        %v1352 = vsel %vm708, %v408, 0
        %v1355 = vsel %vm708, %v409, 0
        %v1358 = vsel %vm708, %v410, 0
        %v1361 = vsel %vm708, %v411, 0
        %v1364 = vsel %vm708, %v412, 0
        %v1367 = vsel %vm708, %v413, 0
        %v1370 = vsel %vm708, %v414, 0
        %v1373 = vsel %vm708, %v415, 0
        %v1376 = vsel %vm708, %v416, 0
        %v1379 = vsel %vm708, %v417, 0
        %v1382 = vsel %vm708, %v418, 0
        %v1385 = vsel %vm708, %v419, 0
        %v1388 = vsel %vm708, %v420, 0
        %v1391 = vsel %vm708, %v421, 0
        %v1394 = vsel %vm708, %v422, 0
        %v1397 = vsel %vm708, %v423, 0
        %v1400 = vsel %vm708, %v424, 0
        %v1403 = vsel %vm708, %v425, 0
        %v1406 = vsel %vm708, %v426, 0
        %v1409 = vsel %vm708, %v427, 0
        %v1412 = vsel %vm708, %v428, 0
        %v1415 = vsel %vm708, %v429, 0
        %v1418 = vsel %vm708, %v430, 0
        %v1421 = vsel %vm708, %v431, 0
        %v1424 = vsel %vm708, %v432, 0
        %v1427 = vsel %vm708, %v433, 0
        %v1430 = vsel %vm708, %v434, 0
        %v1433 = vsel %vm708, %v435, 0
        %v1436 = vsel %vm708, %v436, 0
        %v1439 = vsel %vm708, %v437, 0
        %v1442 = vsel %vm708, %v438, 0
        %v1445 = vsel %vm708, %v439, 0
        %v1448 = vsel %vm708, %v440, 0
        %v1451 = vsel %vm708, %v441, 0
        %v1454 = vsel %vm708, %v442, 0
        %v1457 = vsel %vm708, %v443, 0
        %v1460 = vsel %vm708, %v444, 0
        %v1463 = vsel %vm708, %v445, 0
        %v1466 = vsel %vm708, %v446, 0
        %v1469 = vsel %vm708, %v447, 0
        %v1472 = vsel %vm708, %v448, 0
        %v1475 = vsel %vm708, %v449, 0
        %v1478 = vsel %vm708, %v450, 0
        %v1481 = vsel %vm708, %v451, 0
        %v1484 = vsel %vm708, %v452, 0
        %v1487 = vsel %vm708, %v453, 0
        %v1490 = vsel %vm708, %v454, 0
        %v1493 = vsel %vm708, %v455, 0
        %v1496 = vsel %vm708, %v456, 0
        %v1499 = vsel %vm708, %v457, 0
        %v1502 = vsel %vm708, %v458, 0
        %v1505 = vsel %vm708, %v459, 0
        %v1508 = vsel %vm708, %v460, 0
        %v1511 = vsel %vm708, %v461, 0
        %v1514 = vsel %vm708, %v462, 0
        %v1517 = vsel %vm708, %v463, 0
        %v1520 = vsel %vm708, %v464, 0
        %v1523 = vsel %vm708, %v465, 0
        %v1526 = vsel %vm708, %v466, 0
        %v1529 = vsel %vm708, %v467, 0
        %v1532 = vsel %vm708, %v468, 0
        %v1535 = vsel %vm708, %v469, 0
        %v1538 = vsel %vm708, %v470, 0
        %v1541 = vsel %vm708, %v471, 0
        %v1544 = vsel %vm708, %v472, 0
        %v1547 = vsel %vm708, %v473, 0
        %v1550 = vsel %vm708, %v474, 0
        %v1553 = vsel %vm708, %v475, 0
        %v1556 = vsel %vm708, %v476, 0
        %v1559 = vsel %vm708, %v477, 0
        %v1562 = vsel %vm708, %v478, 0
        %v1565 = vsel %vm708, %v479, 0
        %v1568 = vsel %vm708, %v480, 0
        %v1571 = vsel %vm708, %v481, 0
        %v1574 = vsel %vm708, %v482, 0
        %v1577 = vsel %vm708, %v483, 0
        %v1580 = vsel %vm708, %v484, 0
        %v1583 = vsel %vm708, %v485, 0
        %v1586 = vsel %vm708, %v486, 0
        %v1589 = vsel %vm708, %v487, 0
        %v1592 = vsel %vm708, %v488, 0
        %v1595 = vsel %vm708, %v489, 0
        %v1598 = vsel %vm708, %v490, 0
        %v1601 = vsel %vm708, %v491, 0
        %v1604 = vsel %vm708, %v492, 0
        %v1607 = vsel %vm708, %v493, 0
        %v1610 = vsel %vm708, %v494, 0
        %v1613 = vsel %vm708, %v495, 0
        %v1616 = vsel %vm708, %v496, 0
        %v1619 = vsel %vm708, %v497, 0
        %v1622 = vsel %vm708, %v498, 0
        %v1625 = vsel %vm708, %v499, 0
        %v1628 = vsel %vm708, %v500, 0
        %v1631 = vsel %vm708, %v501, 0
        %v1634 = vsel %vm708, %v502, 0
        %v1637 = vsel %vm708, %v503, 0
        %v1640 = vsel %vm708, %v504, 0
        %v1643 = vsel %vm708, %v505, 0
        %v1646 = vsel %vm708, %v506, 0
        %v1649 = vsel %vm708, %v507, 0
        %v1652 = vsel %vm708, %v508, 0
        %v1655 = vsel %vm708, %v509, 0
        %v1658 = vsel %vm708, %v510, 0
        %v1661 = vsel %vm708, %v511, 0
        %v1664 = vsel %vm708, %v512, 0
        %v1667 = vsel %vm708, %v513, 0
        %v1670 = vsel %vm708, %v514, 0
        %v1673 = vsel %vm708, %v515, 0
        %v1676 = vsel %vm708, %v516, 0
        %v1679 = vsel %vm708, %v517, 0
        %v1682 = vsel %vm708, %v518, 0
        %v1685 = vsel %vm708, %v519, 0
        %v1688 = vsel %vm708, %v520, 0
        %v1691 = vsel %vm708, %v521, 0
        %v1694 = vsel %vm708, %v522, 0
        %v1697 = vsel %vm708, %v523, 0
        %v1700 = vsel %vm708, %v524, 0
        %v1703 = vsel %vm708, %v525, 0
        %v1706 = vsel %vm708, %v526, 0
        %v1709 = vsel %vm708, %v527, 0
        %v1712 = vsel %vm708, %v528, 0
        %v1715 = vsel %vm708, %v529, 0
        %v1718 = vsel %vm708, %v530, 0
        %v1721 = vsel %vm708, %v531, 0
        %v1724 = vsel %vm708, %v532, 0
        %v1727 = vsel %vm708, %v533, 0
        %v1730 = vsel %vm708, %v534, 0
        %v1733 = vsel %vm708, %v535, 0
        %v1736 = vsel %vm708, %v536, 0
        %v1739 = vsel %vm708, %v537, 0
        %v1742 = vsel %vm708, %v538, 0
        %v1745 = vsel %vm708, %v539, 0
        %v1748 = vsel %vm708, %v540, 0
        %v1751 = vsel %vm708, %v541, 0
        %v1754 = vsel %vm708, %v542, 0
        %v1757 = vsel %vm708, %v543, 0
        %v1760 = vsel %vm708, %v544, 0
        %v1763 = vsel %vm708, %v545, 0
        %v1766 = vsel %vm708, %v546, 0
        %v1769 = vsel %vm708, %v547, 0
        %v1772 = vsel %vm708, %v548, 0
        %v1775 = vsel %vm708, %v549, 0
        %v1778 = vsel %vm708, %v550, 0
        %v1781 = vsel %vm708, %v551, 0
        %v1784 = vsel %vm708, %v552, 0
        %v1787 = vsel %vm708, %v553, 0
        %v1790 = vsel %vm708, %v554, 0
        %v1793 = vsel %vm708, %v555, 0
        %v1796 = vsel %vm708, %v556, 0
        %v1799 = vsel %vm708, %v557, 0
        %v1802 = vsel %vm708, %v558, 0
        %v1805 = vsel %vm708, %v559, 0
        %v1808 = vsel %vm708, %v560, 0
        %v1811 = vsel %vm708, %v561, 0
        %v1814 = vsel %vm708, %v562, 0
        %v1817 = vsel %vm708, %v563, 0
        %v1820 = vsel %vm708, %v564, 0
        %v1823 = vsel %vm708, %v565, 0
        %v1826 = vsel %vm708, %v566, 0
        %v1829 = vsel %vm708, %v567, 0
        %v1832 = vsel %vm708, %v568, 0
        %v1835 = vsel %vm708, %v569, 0
        %v1838 = vsel %vm708, %v570, 0
        %v1841 = vsel %vm708, %v571, 0
        %v1844 = vsel %vm708, %v572, 0
        %v1847 = vsel %vm708, %v573, 0
        %v1850 = vsel %vm708, %v574, 0
        %v1853 = vsel %vm708, %v575, 0
        %v1856 = vsel %vm708, %v576, 0
        %v1859 = vsel %vm708, %v577, 0
        %v1862 = vsel %vm708, %v578, 0
        %v1865 = vsel %vm708, %v579, 0
        %v1868 = vsel %vm708, %v580, 0
        %v1871 = vsel %vm708, %v581, 0
        %v1874 = vsel %vm708, %v582, 0
        %v1877 = vsel %vm708, %v583, 0
        %v1880 = vsel %vm708, %v584, 0
        %v1883 = vsel %vm708, %v585, 0
        %v1886 = vsel %vm708, %v586, 0
        %v1889 = vsel %vm708, %v587, 0
        %v1892 = vsel %vm708, %v588, 0
        %v1895 = vsel %vm708, %v589, 0
        %v1898 = vsel %vm708, %v590, 0
        %v1901 = vsel %vm708, %v591, 0
        %v1904 = vsel %vm708, %v592, 0
        %v1907 = vsel %vm708, %v593, 0
        %v1910 = vsel %vm708, %v594, 0
        %v1913 = vsel %vm708, %v595, 0
        %v1916 = vsel %vm708, %v596, 0
        %v1919 = vsel %vm708, %v597, 0
        %v1922 = vsel %vm708, %v598, 0
        %v1925 = vsel %vm708, %v599, 0
        %v1928 = vsel %vm708, %v600, 0
        %v1931 = vsel %vm708, %v601, 0
        %v1934 = vsel %vm708, %v602, 0
        %v1937 = vsel %vm708, %v603, 0
        %v1940 = vsel %vm708, %v604, 0
        %v1943 = vsel %vm708, %v605, 0
        %v1946 = vsel %vm708, %v606, 0
        %v1949 = vsel %vm708, %v607, 0
        %v1952 = vsel %vm708, %v608, 0
        %v1955 = vsel %vm708, %v609, 0
        %v1958 = vsel %vm708, %v610, 0
        %v1961 = vsel %vm708, %v611, 0
        %v1964 = vsel %vm708, %v612, 0
        %v1967 = vsel %vm708, %v613, 0
        %v1970 = vsel %vm708, %v614, 0
        %v1973 = vsel %vm708, %v615, 0
        %v1976 = vsel %vm708, %v616, 0
        %v1979 = vsel %vm708, %v617, 0
        %v1982 = vsel %vm708, %v618, 0
        %v1985 = vsel %vm708, %v619, 0
        %v1988 = vsel %vm708, %v620, 0
        %v1991 = vsel %vm708, %v621, 0
        %v1994 = vsel %vm708, %v622, 0
        %v1997 = vsel %vm708, %v623, 0
        %v2000 = vsel %vm708, %v624, 0
        %v2003 = vsel %vm708, %v625, 0
        %v2006 = vsel %vm708, %v626, 0
        %v2009 = vsel %vm708, %v627, 0
        %v2012 = vsel %vm708, %v628, 0
        %v2015 = vsel %vm708, %v629, 0
        %v2018 = vsel %vm708, %v630, 0
        %v2021 = vsel %vm708, %v631, 0
        %v2024 = vsel %vm708, %v632, 0
        %v2027 = vsel %vm708, %v633, 0
        %v2030 = vsel %vm708, %v634, 0
        %v2033 = vsel %vm708, %v635, 0
        %v2036 = vsel %vm708, %v636, 0
        %v2039 = vsel %vm708, %v637, 0
        %v2042 = vsel %vm708, %v638, 0
        %v2045 = vsel %vm708, %v639, 0
        %v2048 = vsel %vm708, %v640, 0
        %v2051 = vsel %vm708, %v641, 0
        %v2054 = vsel %vm708, %v642, 0
        %v2057 = vsel %vm708, %v643, 0
        %v2060 = vsel %vm708, %v644, 0
        %v2063 = vsel %vm708, %v645, 0
        %v2066 = vsel %vm708, %v646, 0
        %v2069 = vsel %vm708, %v647, 0
        %v2072 = vsel %vm708, %v648, 0
        %v2075 = vsel %vm708, %v649, 0
        %v2078 = vsel %vm708, %v650, 0
        %v2081 = vsel %vm708, %v651, 0
        %v2084 = vsel %vm708, %v652, 0
        %v2087 = vsel %vm708, %v653, 0
        %v2090 = vsel %vm708, %v654, 0
        %v2093 = vsel %vm708, %v655, 0
        %v2096 = vsel %vm708, %v656, 0
        %v2099 = vsel %vm708, %v657, 0
        %v2102 = vsel %vm708, %v658, 0
        %v2105 = vsel %vm708, %v659, 0
        %v2108 = vsel %vm708, %v660, 0
        %v2111 = vsel %vm708, %v661, 0
        %v2114 = vsel %vm708, %v662, 0
        %v2117 = vsel %vm708, %v663, 0
        %v2120 = vsel %vm708, %v664, 0
        %v2123 = vsel %vm708, %v665, 0
        %v2126 = vsel %vm708, %v666, 0
        %v2129 = vsel %vm708, %v667, 0
        %v2132 = vsel %vm708, %v668, 0
        %v2135 = vsel %vm708, %v669, 0
        %v2138 = vsel %vm708, %v670, 0
        %v2141 = vsel %vm708, %v671, 0
        %v2144 = vsel %vm708, %v672, 0
        %v2147 = vsel %vm708, %v673, 0
        %v2150 = vsel %vm708, %v674, 0
        %v2153 = vsel %vm708, %v675, 0
        %v2156 = vsel %vm708, %v676, 0
        %v2159 = vsel %vm708, %v677, 0
        %v2162 = vsel %vm708, %v678, 0
        %v2165 = vsel %vm708, %v679, 0
        %v2168 = vsel %vm708, %v680, 0
        %v2171 = vsel %vm708, %v681, 0
        %v2174 = vsel %vm708, %v682, 0
        %v2177 = vsel %vm708, %v683, 0
        %v2180 = vsel %vm708, %v684, 0
        %v2183 = vsel %vm708, %v685, 0
        %v2186 = vsel %vm708, %v686, 0
        %v2189 = vsel %vm708, %v687, 0
        %v2192 = vsel %vm708, %v688, 0
        %v2195 = vsel %vm708, %v689, 0
        %v2198 = vsel %vm708, %v690, 0
        %v2201 = vsel %vm708, %v691, 0
        %v2204 = vsel %vm708, %v692, 0
        %v2207 = vsel %vm708, %v693, 0
        %v2210 = vsel %vm708, %v694, 0
        %v2213 = vsel %vm708, %v695, 0
        %v2216 = vsel %vm708, %v696, 0
        %v2219 = vsel %vm708, %v697, 0
        %v2222 = vsel %vm708, %v698, 0
        %v2225 = vsel %vm708, %v699, 0
        %v2228 = vsel %vm708, %v700, 0
        %v2231 = vsel %vm708, %v701, 0
        %v2234 = vsel %vm708, %v702, 0
        %v2237 = vsel %vm708, %v703, 0
        %v2240 = vsel %vm708, %v704, 0
        %v2243 = vsel %vm708, %v705, 0
        %2245 = vmatprep.subr.mxu0 0.0
        %2246 = vmatpush1.msra.mxu0 %v706
        %2247 = vmatprep.subr.mxu0 0.0
        %2248 = vmatpush1.msra.mxu0 %v707
        %2249 = vmatprep.subr.mxu0 0.0
        %2250 = vmatpush1.msra.mxu0 0.0
        %2251 = vmatprep.subr.mxu0 0.0
        %2252 = vmatpush1.msra.mxu0 0.0
        %2253 = vmatprep.subr.mxu0 0.0
        %2254 = vmatpush1.msra.mxu0 0.0
        %2255 = vmatprep.subr.mxu0 0.0
        %2256 = vmatpush1.msra.mxu0 0.0
        %2257 = vmatprep.subr.mxu0 0.0
        %2258 = vmatpush1.msra.mxu0 0.0
        %2259 = vmatprep.subr.mxu0 0.0
        %2260 = vmatpush1.msra.mxu0 0.0
        %2261 = vmatprep.subr.mxu0 0.0
        %2262 = vmatpush1.msra.mxu0 0.0
        %2263 = vmatprep.subr.mxu0 0.0
        %2264 = vmatpush1.msra.mxu0 0.0
        %2265 = vmatprep.subr.mxu0 0.0
        %2266 = vmatpush1.msra.mxu0 0.0
        %2267 = vmatprep.subr.mxu0 0.0
        %2268 = vmatpush1.msra.mxu0 0.0
        %2269 = vmatprep.subr.mxu0 0.0
        %2270 = vmatpush1.msra.mxu0 0.0
        %2271 = vmatprep.subr.mxu0 0.0
        %2272 = vmatpush1.msra.mxu0 0.0
        %2273 = vmatprep.subr.mxu0 0.0
        %2274 = vmatpush1.msra.mxu0 0.0
        %2275 = vmatprep.subr.mxu0 0.0
        %2276 = vmatpush1.msra.mxu0 0.0
        %2277 = vmatprep.subr.mxu0 0.0
        %2278 = vmatpush1.msra.mxu0 0.0
        %2279 = vmatprep.subr.mxu0 0.0
        %2280 = vmatpush1.msra.mxu0 0.0
        %2281 = vmatprep.subr.mxu0 0.0
        %2282 = vmatpush1.msra.mxu0 0.0
        %2283 = vmatprep.subr.mxu0 0.0
        %2284 = vmatpush1.msra.mxu0 0.0
        %2285 = vmatprep.subr.mxu0 0.0
        %2286 = vmatpush1.msra.mxu0 0.0
        %2287 = vmatprep.subr.mxu0 0.0
        %2288 = vmatpush1.msra.mxu0 0.0
        %2289 = vmatprep.subr.mxu0 0.0
        %2290 = vmatpush1.msra.mxu0 0.0
        %2291 = vmatprep.subr.mxu0 0.0
        %2292 = vmatpush1.msra.mxu0 0.0
        %2293 = vmatprep.subr.mxu0 0.0
        %2294 = vmatpush1.msra.mxu0 0.0
        %2295 = vmatprep.subr.mxu0 0.0
        %2296 = vmatpush1.msra.mxu0 0.0
        %2297 = vmatprep.subr.mxu0 0.0
        %2298 = vmatpush1.msra.mxu0 0.0
        %2299 = vmatprep.subr.mxu0 0.0
        %2300 = vmatpush1.msra.mxu0 0.0
        %2301 = vmatprep.subr.mxu0 0.0
        %2302 = vmatpush1.msra.mxu0 0.0
        %2303 = vmatprep.subr.mxu0 0.0
        %2304 = vmatpush1.msra.mxu0 0.0
        %2305 = vmatprep.subr.mxu0 0.0
        %2306 = vmatpush1.msra.mxu0 0.0
        %2307 = vmatprep.subr.mxu0 0.0
        %2308 = vmatpush1.msra.mxu0 0.0
        %2309 = vmatprep.mubr.f32.mxu0 0.0
        %2310 = vmatmul.mubr.f32.gmra.mrb[0].mxu0 %v710
        %v2311 = vpop.f32.mrb[0].mxu0
        %v2312 = vadd.f32 0.0, %v2311
        %v2313 = vpop.f32.mrb[0].mxu0
        %2314 = vmatprep.mubr.f32.mxu0 0.0
        %2315 = vmatmul.mubr.f32.gmra.mrb[0].mxu0 %v713
        %v2316 = vpop.f32.mrb[0].mxu0
        %v2317 = vadd.f32 0.0, %v2316
        %v2318 = vpop.f32.mrb[0].mxu0
        %2319 = vmatprep.mubr.f32.mxu0 0.0
        %2320 = vmatmul.mubr.f32.gmra.mrb[0].mxu0 %v716
        %v2321 = vpop.f32.mrb[0].mxu0
        %v2322 = vadd.f32 0.0, %v2321
        %v2323 = vpop.f32.mrb[0].mxu0
        %2324 = vmatprep.mubr.f32.mxu0 0.0
        %2325 = vmatmul.mubr.f32.gmra.mrb[0].mxu0 %v719
        %v2326 = vpop.f32.mrb[0].mxu0
        %v2327 = vadd.f32 0.0, %v2326
        %v2328 = vpop.f32.mrb[0].mxu0
        %2329 = vmatprep.mubr.f32.mxu0 0.0
        %2330 = vmatmul.mubr.f32.gmra.mrb[0].mxu0 %v722
        %v2331 = vpop.f32.mrb[0].mxu0
        %v2332 = vadd.f32 0.0, %v2331
        %v2333 = vpop.f32.mrb[0].mxu0
        %2334 = vmatprep.mubr.f32.mxu0 0.0
        %2335 = vmatmul.mubr.f32.gmra.mrb[0].mxu0 %v725
        %v2336 = vpop.f32.mrb[0].mxu0
        %v2337 = vadd.f32 0.0, %v2336
        %v2338 = vpop.f32.mrb[0].mxu0
        %2339 = vmatprep.mubr.f32.mxu0 0.0
        %2340 = vmatmul.mubr.f32.gmra.mrb[0].mxu0 %v728
        %v2341 = vpop.f32.mrb[0].mxu0
        %v2342 = vadd.f32 0.0, %v2341
        %v2343 = vpop.f32.mrb[0].mxu0
        %2344 = vmatprep.mubr.f32.mxu0 0.0
        %2345 = vmatmul.mubr.f32.gmra.mrb[0].mxu0 %v731
        %v2346 = vpop.f32.mrb[0].mxu0
        %v2347 = vadd.f32 0.0, %v2346
        %v2348 = vpop.f32.mrb[0].mxu0
        %2349 = vmatprep.mubr.f32.mxu0 0.0
        %2350 = vmatmul.mubr.f32.gmra.mrb[0].mxu0 %v734
        %v2351 = vpop.f32.mrb[0].mxu0
        %v2352 = vadd.f32 0.0, %v2351
        %v2353 = vpop.f32.mrb[0].mxu0
        %2354 = vmatprep.mubr.f32.mxu0 0.0
        %2355 = vmatmul.mubr.f32.gmra.mrb[0].mxu0 %v737
        %v2356 = vpop.f32.mrb[0].mxu0
        %v2357 = vadd.f32 0.0, %v2356
        %v2358 = vpop.f32.mrb[0].mxu0
        %2359 = vmatprep.mubr.f32.mxu0 0.0
        %2360 = vmatmul.mubr.f32.gmra.mrb[0].mxu0 %v740
        %v2361 = vpop.f32.mrb[0].mxu0
        %v2362 = vadd.f32 0.0, %v2361
        %v2363 = vpop.f32.mrb[0].mxu0
        %2364 = vmatprep.mubr.f32.mxu0 0.0
        %2365 = vmatmul.mubr.f32.gmra.mrb[0].mxu0 %v743
        %v2366 = vpop.f32.mrb[0].mxu0
        %v2367 = vadd.f32 0.0, %v2366
        %v2368 = vpop.f32.mrb[0].mxu0
        %2369 = vmatprep.mubr.f32.mxu0 0.0
        %2370 = vmatmul.mubr.f32.gmra.mrb[0].mxu0 %v746
        %v2371 = vpop.f32.mrb[0].mxu0
        %v2372 = vadd.f32 0.0, %v2371
        %v2373 = vpop.f32.mrb[0].mxu0
        %2374 = vmatprep.mubr.f32.mxu0 0.0
        %2375 = vmatmul.mubr.f32.gmra.mrb[0].mxu0 %v749
        %v2376 = vpop.f32.mrb[0].mxu0
        %v2377 = vadd.f32 0.0, %v2376
        %v2378 = vpop.f32.mrb[0].mxu0
        %2379 = vmatprep.mubr.f32.mxu0 0.0
        %2380 = vmatmul.mubr.f32.gmra.mrb[0].mxu0 %v752
        %v2381 = vpop.f32.mrb[0].mxu0
        %v2382 = vadd.f32 0.0, %v2381
        %v2383 = vpop.f32.mrb[0].mxu0
        %2384 = vmatprep.mubr.f32.mxu0 0.0
        %2385 = vmatmul.mubr.f32.gmra.mrb[0].mxu0 %v755
        %v2386 = vpop.f32.mrb[0].mxu0
        %v2387 = vadd.f32 0.0, %v2386
        %v2388 = vpop.f32.mrb[0].mxu0
        %2389 = vmatprep.mubr.f32.mxu0 0.0
        %2390 = vmatmul.mubr.f32.gmra.mrb[0].mxu0 %v758
        %v2391 = vpop.f32.mrb[0].mxu0
        %v2392 = vadd.f32 0.0, %v2391
        %v2393 = vpop.f32.mrb[0].mxu0
        %2394 = vmatprep.mubr.f32.mxu0 0.0
        %2395 = vmatmul.mubr.f32.gmra.mrb[0].mxu0 %v761
        %v2396 = vpop.f32.mrb[0].mxu0
        %v2397 = vadd.f32 0.0, %v2396
        %v2398 = vpop.f32.mrb[0].mxu0
        %2399 = vmatprep.mubr.f32.mxu0 0.0
        %2400 = vmatmul.mubr.f32.gmra.mrb[0].mxu0 %v764
        %v2401 = vpop.f32.mrb[0].mxu0
        %v2402 = vadd.f32 0.0, %v2401
        %v2403 = vpop.f32.mrb[0].mxu0
        %2404 = vmatprep.mubr.f32.mxu0 0.0
        %2405 = vmatmul.mubr.f32.gmra.mrb[0].mxu0 %v767
        %v2406 = vpop.f32.mrb[0].mxu0
        %v2407 = vadd.f32 0.0, %v2406
        %v2408 = vpop.f32.mrb[0].mxu0
        %2409 = vmatprep.mubr.f32.mxu0 0.0
        %2410 = vmatmul.mubr.f32.gmra.mrb[0].mxu0 %v770
        %v2411 = vpop.f32.mrb[0].mxu0
        %v2412 = vadd.f32 0.0, %v2411
        %v2413 = vpop.f32.mrb[0].mxu0
        %2414 = vmatprep.mubr.f32.mxu0 0.0
        %2415 = vmatmul.mubr.f32.gmra.mrb[0].mxu0 %v773
        %v2416 = vpop.f32.mrb[0].mxu0
        %v2417 = vadd.f32 0.0, %v2416
        %v2418 = vpop.f32.mrb[0].mxu0
        %2419 = vmatprep.mubr.f32.mxu0 0.0
        %2420 = vmatmul.mubr.f32.gmra.mrb[0].mxu0 %v776
        %v2421 = vpop.f32.mrb[0].mxu0
        %v2422 = vadd.f32 0.0, %v2421
        %v2423 = vpop.f32.mrb[0].mxu0
        %2424 = vmatprep.mubr.f32.mxu0 0.0
        %2425 = vmatmul.mubr.f32.gmra.mrb[0].mxu0 %v779
        %v2426 = vpop.f32.mrb[0].mxu0
        %v2427 = vadd.f32 0.0, %v2426
        %v2428 = vpop.f32.mrb[0].mxu0
        %2429 = vmatprep.mubr.f32.mxu0 0.0
        %2430 = vmatmul.mubr.f32.gmra.mrb[0].mxu0 %v782
        %v2431 = vpop.f32.mrb[0].mxu0
        %v2432 = vadd.f32 0.0, %v2431
        %v2433 = vpop.f32.mrb[0].mxu0
        %2434 = vmatprep.mubr.f32.mxu0 0.0
        %2435 = vmatmul.mubr.f32.gmra.mrb[0].mxu0 %v785
        %v2436 = vpop.f32.mrb[0].mxu0
        %v2437 = vadd.f32 0.0, %v2436
        %v2438 = vpop.f32.mrb[0].mxu0
        %2439 = vmatprep.mubr.f32.mxu0 0.0
        %2440 = vmatmul.mubr.f32.gmra.mrb[0].mxu0 %v788
        %v2441 = vpop.f32.mrb[0].mxu0
        %v2442 = vadd.f32 0.0, %v2441
        %v2443 = vpop.f32.mrb[0].mxu0
        %2444 = vmatprep.mubr.f32.mxu0 0.0
        %2445 = vmatmul.mubr.f32.gmra.mrb[0].mxu0 %v791
        %v2446 = vpop.f32.mrb[0].mxu0
        %v2447 = vadd.f32 0.0, %v2446
        %v2448 = vpop.f32.mrb[0].mxu0
        %2449 = vmatprep.mubr.f32.mxu0 0.0
        %2450 = vmatmul.mubr.f32.gmra.mrb[0].mxu0 %v794
        %v2451 = vpop.f32.mrb[0].mxu0
        %v2452 = vadd.f32 0.0, %v2451
        %v2453 = vpop.f32.mrb[0].mxu0
        %2454 = vmatprep.mubr.f32.mxu0 0.0
        %2455 = vmatmul.mubr.f32.gmra.mrb[0].mxu0 %v797
        %v2456 = vpop.f32.mrb[0].mxu0
        %v2457 = vadd.f32 0.0, %v2456
        %v2458 = vpop.f32.mrb[0].mxu0
        %2459 = vmatprep.mubr.f32.mxu0 0.0
        %2460 = vmatmul.mubr.f32.gmra.mrb[0].mxu0 %v800
        %v2461 = vpop.f32.mrb[0].mxu0
        %v2462 = vadd.f32 0.0, %v2461
        %v2463 = vpop.f32.mrb[0].mxu0
        %2464 = vmatprep.mubr.f32.mxu0 0.0
        %2465 = vmatmul.mubr.f32.gmra.mrb[0].mxu0 %v803
        %v2466 = vpop.f32.mrb[0].mxu0
        %v2467 = vadd.f32 0.0, %v2466
        %v2468 = vpop.f32.mrb[0].mxu0
        %2469 = vmatprep.mubr.f32.mxu0 0.0
        %2470 = vmatmul.mubr.f32.gmra.mrb[0].mxu0 %v806
        %v2471 = vpop.f32.mrb[0].mxu0
        %v2472 = vadd.f32 0.0, %v2471
        %v2473 = vpop.f32.mrb[0].mxu0
        %2474 = vmatprep.mubr.f32.mxu0 0.0
        %2475 = vmatmul.mubr.f32.gmra.mrb[0].mxu0 %v809
        %v2476 = vpop.f32.mrb[0].mxu0
        %v2477 = vadd.f32 0.0, %v2476
        %v2478 = vpop.f32.mrb[0].mxu0
        %2479 = vmatprep.mubr.f32.mxu0 0.0
        %2480 = vmatmul.mubr.f32.gmra.mrb[0].mxu0 %v812
        %v2481 = vpop.f32.mrb[0].mxu0
        %v2482 = vadd.f32 0.0, %v2481
        %v2483 = vpop.f32.mrb[0].mxu0
        %2484 = vmatprep.mubr.f32.mxu0 0.0
        %2485 = vmatmul.mubr.f32.gmra.mrb[0].mxu0 %v815
        %v2486 = vpop.f32.mrb[0].mxu0
        %v2487 = vadd.f32 0.0, %v2486
        %v2488 = vpop.f32.mrb[0].mxu0
        %2489 = vmatprep.mubr.f32.mxu0 0.0
        %2490 = vmatmul.mubr.f32.gmra.mrb[0].mxu0 %v818
        %v2491 = vpop.f32.mrb[0].mxu0
        %v2492 = vadd.f32 0.0, %v2491
        %v2493 = vpop.f32.mrb[0].mxu0
        %2494 = vmatprep.mubr.f32.mxu0 0.0
        %2495 = vmatmul.mubr.f32.gmra.mrb[0].mxu0 %v821
        %v2496 = vpop.f32.mrb[0].mxu0
        %v2497 = vadd.f32 0.0, %v2496
        %v2498 = vpop.f32.mrb[0].mxu0
        %2499 = vmatprep.mubr.f32.mxu0 0.0
        %2500 = vmatmul.mubr.f32.gmra.mrb[0].mxu0 %v824
        %v2501 = vpop.f32.mrb[0].mxu0
        %v2502 = vadd.f32 0.0, %v2501
        %v2503 = vpop.f32.mrb[0].mxu0
        %2504 = vmatprep.mubr.f32.mxu0 0.0
        %2505 = vmatmul.mubr.f32.gmra.mrb[0].mxu0 %v827
        %v2506 = vpop.f32.mrb[0].mxu0
        %v2507 = vadd.f32 0.0, %v2506
        %v2508 = vpop.f32.mrb[0].mxu0
        %2509 = vmatprep.mubr.f32.mxu0 0.0
        %2510 = vmatmul.mubr.f32.gmra.mrb[0].mxu0 %v830
        %v2511 = vpop.f32.mrb[0].mxu0
        %v2512 = vadd.f32 0.0, %v2511
        %v2513 = vpop.f32.mrb[0].mxu0
        %2514 = vmatprep.mubr.f32.mxu0 0.0
        %2515 = vmatmul.mubr.f32.gmra.mrb[0].mxu0 %v833
        %v2516 = vpop.f32.mrb[0].mxu0
        %v2517 = vadd.f32 0.0, %v2516
        %v2518 = vpop.f32.mrb[0].mxu0
        %2519 = vmatprep.mubr.f32.mxu0 0.0
        %2520 = vmatmul.mubr.f32.gmra.mrb[0].mxu0 %v836
        %v2521 = vpop.f32.mrb[0].mxu0
        %v2522 = vadd.f32 0.0, %v2521
        %v2523 = vpop.f32.mrb[0].mxu0
        %2524 = vmatprep.mubr.f32.mxu0 0.0
        %2525 = vmatmul.mubr.f32.gmra.mrb[0].mxu0 %v839
        %v2526 = vpop.f32.mrb[0].mxu0
        %v2527 = vadd.f32 0.0, %v2526
        %v2528 = vpop.f32.mrb[0].mxu0
        %2529 = vmatprep.mubr.f32.mxu0 0.0
        %2530 = vmatmul.mubr.f32.gmra.mrb[0].mxu0 %v842
        %v2531 = vpop.f32.mrb[0].mxu0
        %v2532 = vadd.f32 0.0, %v2531
        %v2533 = vpop.f32.mrb[0].mxu0
        %2534 = vmatprep.mubr.f32.mxu0 0.0
        %2535 = vmatmul.mubr.f32.gmra.mrb[0].mxu0 %v845
        %v2536 = vpop.f32.mrb[0].mxu0
        %v2537 = vadd.f32 0.0, %v2536
        %v2538 = vpop.f32.mrb[0].mxu0
        %2539 = vmatprep.mubr.f32.mxu0 0.0
        %2540 = vmatmul.mubr.f32.gmra.mrb[0].mxu0 %v848
        %v2541 = vpop.f32.mrb[0].mxu0
        %v2542 = vadd.f32 0.0, %v2541
        %v2543 = vpop.f32.mrb[0].mxu0
        %2544 = vmatprep.mubr.f32.mxu0 0.0
        %2545 = vmatmul.mubr.f32.gmra.mrb[0].mxu0 %v851
        %v2546 = vpop.f32.mrb[0].mxu0
        %v2547 = vadd.f32 0.0, %v2546
        %v2548 = vpop.f32.mrb[0].mxu0
        %2549 = vmatprep.mubr.f32.mxu0 0.0
        %2550 = vmatmul.mubr.f32.gmra.mrb[0].mxu0 %v854
        %v2551 = vpop.f32.mrb[0].mxu0
        %v2552 = vadd.f32 0.0, %v2551
        %v2553 = vpop.f32.mrb[0].mxu0
        %2554 = vmatprep.mubr.f32.mxu0 0.0
        %2555 = vmatmul.mubr.f32.gmra.mrb[0].mxu0 %v857
        %v2556 = vpop.f32.mrb[0].mxu0
        %v2557 = vadd.f32 0.0, %v2556
        %v2558 = vpop.f32.mrb[0].mxu0
        %2559 = vmatprep.mubr.f32.mxu0 0.0
        %2560 = vmatmul.mubr.f32.gmra.mrb[0].mxu0 %v860
        %v2561 = vpop.f32.mrb[0].mxu0
        %v2562 = vadd.f32 0.0, %v2561
        %v2563 = vpop.f32.mrb[0].mxu0
        %2564 = vmatprep.mubr.f32.mxu0 0.0
        %2565 = vmatmul.mubr.f32.gmra.mrb[0].mxu0 %v863
        %v2566 = vpop.f32.mrb[0].mxu0
        %v2567 = vadd.f32 0.0, %v2566
        %v2568 = vpop.f32.mrb[0].mxu0
        %2569 = vmatprep.mubr.f32.mxu0 0.0
        %2570 = vmatmul.mubr.f32.gmra.mrb[0].mxu0 %v866
        %v2571 = vpop.f32.mrb[0].mxu0
        %v2572 = vadd.f32 0.0, %v2571
        %v2573 = vpop.f32.mrb[0].mxu0
        %2574 = vmatprep.mubr.f32.mxu0 0.0
        %2575 = vmatmul.mubr.f32.gmra.mrb[0].mxu0 %v869
        %v2576 = vpop.f32.mrb[0].mxu0
        %v2577 = vadd.f32 0.0, %v2576
        %v2578 = vpop.f32.mrb[0].mxu0
        %2579 = vmatprep.mubr.f32.mxu0 0.0
        %2580 = vmatmul.mubr.f32.gmra.mrb[0].mxu0 %v872
        %v2581 = vpop.f32.mrb[0].mxu0
        %v2582 = vadd.f32 0.0, %v2581
        %v2583 = vpop.f32.mrb[0].mxu0
        %2584 = vmatprep.mubr.f32.mxu0 0.0
        %2585 = vmatmul.mubr.f32.gmra.mrb[0].mxu0 %v875
        %v2586 = vpop.f32.mrb[0].mxu0
        %v2587 = vadd.f32 0.0, %v2586
        %v2588 = vpop.f32.mrb[0].mxu0
        %2589 = vmatprep.mubr.f32.mxu0 0.0
        %2590 = vmatmul.mubr.f32.gmra.mrb[0].mxu0 %v878
        %v2591 = vpop.f32.mrb[0].mxu0
        %v2592 = vadd.f32 0.0, %v2591
        %v2593 = vpop.f32.mrb[0].mxu0
        %2594 = vmatprep.mubr.f32.mxu0 0.0
        %2595 = vmatmul.mubr.f32.gmra.mrb[0].mxu0 %v881
        %v2596 = vpop.f32.mrb[0].mxu0
        %v2597 = vadd.f32 0.0, %v2596
        %v2598 = vpop.f32.mrb[0].mxu0
        %2599 = vmatprep.mubr.f32.mxu0 0.0
        %2600 = vmatmul.mubr.f32.gmra.mrb[0].mxu0 %v884
        %v2601 = vpop.f32.mrb[0].mxu0
        %v2602 = vadd.f32 0.0, %v2601
        %v2603 = vpop.f32.mrb[0].mxu0
        %2604 = vmatprep.mubr.f32.mxu0 0.0
        %2605 = vmatmul.mubr.f32.gmra.mrb[0].mxu0 %v887
        %v2606 = vpop.f32.mrb[0].mxu0
        %v2607 = vadd.f32 0.0, %v2606
        %v2608 = vpop.f32.mrb[0].mxu0
        %2609 = vmatprep.mubr.f32.mxu0 0.0
        %2610 = vmatmul.mubr.f32.gmra.mrb[0].mxu0 %v890
        %v2611 = vpop.f32.mrb[0].mxu0
        %v2612 = vadd.f32 0.0, %v2611
        %v2613 = vpop.f32.mrb[0].mxu0
        %2614 = vmatprep.mubr.f32.mxu0 0.0
        %2615 = vmatmul.mubr.f32.gmra.mrb[0].mxu0 %v893
        %v2616 = vpop.f32.mrb[0].mxu0
        %v2617 = vadd.f32 0.0, %v2616
        %v2618 = vpop.f32.mrb[0].mxu0
        %2619 = vmatprep.mubr.f32.mxu0 0.0
        %2620 = vmatmul.mubr.f32.gmra.mrb[0].mxu0 %v896
        %v2621 = vpop.f32.mrb[0].mxu0
        %v2622 = vadd.f32 0.0, %v2621
        %v2623 = vpop.f32.mrb[0].mxu0
        %2624 = vmatprep.mubr.f32.mxu0 0.0
        %2625 = vmatmul.mubr.f32.gmra.mrb[0].mxu0 %v899
        %v2626 = vpop.f32.mrb[0].mxu0
        %v2627 = vadd.f32 0.0, %v2626
        %v2628 = vpop.f32.mrb[0].mxu0
        %2629 = vmatprep.mubr.f32.mxu0 0.0
        %2630 = vmatmul.mubr.f32.gmra.mrb[0].mxu0 %v902
        %v2631 = vpop.f32.mrb[0].mxu0
        %v2632 = vadd.f32 0.0, %v2631
        %v2633 = vpop.f32.mrb[0].mxu0
        %2634 = vmatprep.mubr.f32.mxu0 0.0
        %2635 = vmatmul.mubr.f32.gmra.mrb[0].mxu0 %v905
        %v2636 = vpop.f32.mrb[0].mxu0
        %v2637 = vadd.f32 0.0, %v2636
        %v2638 = vpop.f32.mrb[0].mxu0
        %2639 = vmatprep.mubr.f32.mxu0 0.0
        %2640 = vmatmul.mubr.f32.gmra.mrb[0].mxu0 %v908
        %v2641 = vpop.f32.mrb[0].mxu0
        %v2642 = vadd.f32 0.0, %v2641
        %v2643 = vpop.f32.mrb[0].mxu0
        %2644 = vmatprep.mubr.f32.mxu0 0.0
        %2645 = vmatmul.mubr.f32.gmra.mrb[0].mxu0 %v911
        %v2646 = vpop.f32.mrb[0].mxu0
        %v2647 = vadd.f32 0.0, %v2646
        %v2648 = vpop.f32.mrb[0].mxu0
        %2649 = vmatprep.mubr.f32.mxu0 0.0
        %2650 = vmatmul.mubr.f32.gmra.mrb[0].mxu0 %v914
        %v2651 = vpop.f32.mrb[0].mxu0
        %v2652 = vadd.f32 0.0, %v2651
        %v2653 = vpop.f32.mrb[0].mxu0
        %2654 = vmatprep.mubr.f32.mxu0 0.0
        %2655 = vmatmul.mubr.f32.gmra.mrb[0].mxu0 %v917
        %v2656 = vpop.f32.mrb[0].mxu0
        %v2657 = vadd.f32 0.0, %v2656
        %v2658 = vpop.f32.mrb[0].mxu0
        %2659 = vmatprep.mubr.f32.mxu0 0.0
        %2660 = vmatmul.mubr.f32.gmra.mrb[0].mxu0 %v920
        %v2661 = vpop.f32.mrb[0].mxu0
        %v2662 = vadd.f32 0.0, %v2661
        %v2663 = vpop.f32.mrb[0].mxu0
        %2664 = vmatprep.mubr.f32.mxu0 0.0
        %2665 = vmatmul.mubr.f32.gmra.mrb[0].mxu0 %v923
        %v2666 = vpop.f32.mrb[0].mxu0
        %v2667 = vadd.f32 0.0, %v2666
        %v2668 = vpop.f32.mrb[0].mxu0
        %2669 = vmatprep.mubr.f32.mxu0 0.0
        %2670 = vmatmul.mubr.f32.gmra.mrb[0].mxu0 %v926
        %v2671 = vpop.f32.mrb[0].mxu0
        %v2672 = vadd.f32 0.0, %v2671
        %v2673 = vpop.f32.mrb[0].mxu0
        %2674 = vmatprep.mubr.f32.mxu0 0.0
        %2675 = vmatmul.mubr.f32.gmra.mrb[0].mxu0 %v929
        %v2676 = vpop.f32.mrb[0].mxu0
        %v2677 = vadd.f32 0.0, %v2676
        %v2678 = vpop.f32.mrb[0].mxu0
        %2679 = vmatprep.mubr.f32.mxu0 0.0
        %2680 = vmatmul.mubr.f32.gmra.mrb[0].mxu0 %v932
        %v2681 = vpop.f32.mrb[0].mxu0
        %v2682 = vadd.f32 0.0, %v2681
        %v2683 = vpop.f32.mrb[0].mxu0
        %2684 = vmatprep.mubr.f32.mxu0 0.0
        %2685 = vmatmul.mubr.f32.gmra.mrb[0].mxu0 %v935
        %v2686 = vpop.f32.mrb[0].mxu0
        %v2687 = vadd.f32 0.0, %v2686
        %v2688 = vpop.f32.mrb[0].mxu0
        %2689 = vmatprep.mubr.f32.mxu0 0.0
        %2690 = vmatmul.mubr.f32.gmra.mrb[0].mxu0 %v938
        %v2691 = vpop.f32.mrb[0].mxu0
        %v2692 = vadd.f32 0.0, %v2691
        %v2693 = vpop.f32.mrb[0].mxu0
        %2694 = vmatprep.mubr.f32.mxu0 0.0
        %2695 = vmatmul.mubr.f32.gmra.mrb[0].mxu0 %v941
        %v2696 = vpop.f32.mrb[0].mxu0
        %v2697 = vadd.f32 0.0, %v2696
        %v2698 = vpop.f32.mrb[0].mxu0
        %2699 = vmatprep.mubr.f32.mxu0 0.0
        %2700 = vmatmul.mubr.f32.gmra.mrb[0].mxu0 %v944
        %v2701 = vpop.f32.mrb[0].mxu0
        %v2702 = vadd.f32 0.0, %v2701
        %v2703 = vpop.f32.mrb[0].mxu0
        %2704 = vmatprep.mubr.f32.mxu0 0.0
        %2705 = vmatmul.mubr.f32.gmra.mrb[0].mxu0 %v947
        %v2706 = vpop.f32.mrb[0].mxu0
        %v2707 = vadd.f32 0.0, %v2706
        %v2708 = vpop.f32.mrb[0].mxu0
        %2709 = vmatprep.mubr.f32.mxu0 0.0
        %2710 = vmatmul.mubr.f32.gmra.mrb[0].mxu0 %v950
        %v2711 = vpop.f32.mrb[0].mxu0
        %v2712 = vadd.f32 0.0, %v2711
        %v2713 = vpop.f32.mrb[0].mxu0
        %2714 = vmatprep.mubr.f32.mxu0 0.0
        %2715 = vmatmul.mubr.f32.gmra.mrb[0].mxu0 %v953
        %v2716 = vpop.f32.mrb[0].mxu0
        %v2717 = vadd.f32 0.0, %v2716
        %v2718 = vpop.f32.mrb[0].mxu0
        %2719 = vmatprep.mubr.f32.mxu0 0.0
        %2720 = vmatmul.mubr.f32.gmra.mrb[0].mxu0 %v956
        %v2721 = vpop.f32.mrb[0].mxu0
        %v2722 = vadd.f32 0.0, %v2721
        %v2723 = vpop.f32.mrb[0].mxu0
        %2724 = vmatprep.mubr.f32.mxu0 0.0
        %2725 = vmatmul.mubr.f32.gmra.mrb[0].mxu0 %v959
        %v2726 = vpop.f32.mrb[0].mxu0
        %v2727 = vadd.f32 0.0, %v2726
        %v2728 = vpop.f32.mrb[0].mxu0
        %2729 = vmatprep.mubr.f32.mxu0 0.0
        %2730 = vmatmul.mubr.f32.gmra.mrb[0].mxu0 %v962
        %v2731 = vpop.f32.mrb[0].mxu0
        %v2732 = vadd.f32 0.0, %v2731
        %v2733 = vpop.f32.mrb[0].mxu0
        %2734 = vmatprep.mubr.f32.mxu0 0.0
        %2735 = vmatmul.mubr.f32.gmra.mrb[0].mxu0 %v965
        %v2736 = vpop.f32.mrb[0].mxu0
        %v2737 = vadd.f32 0.0, %v2736
        %v2738 = vpop.f32.mrb[0].mxu0
        %2739 = vmatprep.mubr.f32.mxu0 0.0
        %2740 = vmatmul.mubr.f32.gmra.mrb[0].mxu0 %v968
        %v2741 = vpop.f32.mrb[0].mxu0
        %v2742 = vadd.f32 0.0, %v2741
        %v2743 = vpop.f32.mrb[0].mxu0
        %2744 = vmatprep.mubr.f32.mxu0 0.0
        %2745 = vmatmul.mubr.f32.gmra.mrb[0].mxu0 %v971
        %v2746 = vpop.f32.mrb[0].mxu0
        %v2747 = vadd.f32 0.0, %v2746
        %v2748 = vpop.f32.mrb[0].mxu0
        %2749 = vmatprep.mubr.f32.mxu0 0.0
        %2750 = vmatmul.mubr.f32.gmra.mrb[0].mxu0 %v974
        %v2751 = vpop.f32.mrb[0].mxu0
        %v2752 = vadd.f32 0.0, %v2751
        %v2753 = vpop.f32.mrb[0].mxu0
        %2754 = vmatprep.mubr.f32.mxu0 0.0
        %2755 = vmatmul.mubr.f32.gmra.mrb[0].mxu0 %v977
        %v2756 = vpop.f32.mrb[0].mxu0
        %v2757 = vadd.f32 0.0, %v2756
        %v2758 = vpop.f32.mrb[0].mxu0
        %2759 = vmatprep.mubr.f32.mxu0 0.0
        %2760 = vmatmul.mubr.f32.gmra.mrb[0].mxu0 %v980
        %v2761 = vpop.f32.mrb[0].mxu0
        %v2762 = vadd.f32 0.0, %v2761
        %v2763 = vpop.f32.mrb[0].mxu0
        %2764 = vmatprep.mubr.f32.mxu0 0.0
        %2765 = vmatmul.mubr.f32.gmra.mrb[0].mxu0 %v983
        %v2766 = vpop.f32.mrb[0].mxu0
        %v2767 = vadd.f32 0.0, %v2766
        %v2768 = vpop.f32.mrb[0].mxu0
        %2769 = vmatprep.mubr.f32.mxu0 0.0
        %2770 = vmatmul.mubr.f32.gmra.mrb[0].mxu0 %v986
        %v2771 = vpop.f32.mrb[0].mxu0
        %v2772 = vadd.f32 0.0, %v2771
        %v2773 = vpop.f32.mrb[0].mxu0
        %2774 = vmatprep.mubr.f32.mxu0 0.0
        %2775 = vmatmul.mubr.f32.gmra.mrb[0].mxu0 %v989
        %v2776 = vpop.f32.mrb[0].mxu0
        %v2777 = vadd.f32 0.0, %v2776
        %v2778 = vpop.f32.mrb[0].mxu0
        %2779 = vmatprep.mubr.f32.mxu0 0.0
        %2780 = vmatmul.mubr.f32.gmra.mrb[0].mxu0 %v992
        %v2781 = vpop.f32.mrb[0].mxu0
        %v2782 = vadd.f32 0.0, %v2781
        %v2783 = vpop.f32.mrb[0].mxu0
        %2784 = vmatprep.mubr.f32.mxu0 0.0
        %2785 = vmatmul.mubr.f32.gmra.mrb[0].mxu0 %v995
        %v2786 = vpop.f32.mrb[0].mxu0
        %v2787 = vadd.f32 0.0, %v2786
        %v2788 = vpop.f32.mrb[0].mxu0
        %2789 = vmatprep.mubr.f32.mxu0 0.0
        %2790 = vmatmul.mubr.f32.gmra.mrb[0].mxu0 %v998
        %v2791 = vpop.f32.mrb[0].mxu0
        %v2792 = vadd.f32 0.0, %v2791
        %v2793 = vpop.f32.mrb[0].mxu0
        %2794 = vmatprep.mubr.f32.mxu0 0.0
        %2795 = vmatmul.mubr.f32.gmra.mrb[0].mxu0 %v1001
        %v2796 = vpop.f32.mrb[0].mxu0
        %v2797 = vadd.f32 0.0, %v2796
        %v2798 = vpop.f32.mrb[0].mxu0
        %2799 = vmatprep.mubr.f32.mxu0 0.0
        %2800 = vmatmul.mubr.f32.gmra.mrb[0].mxu0 %v1004
        %v2801 = vpop.f32.mrb[0].mxu0
        %v2802 = vadd.f32 0.0, %v2801
        %v2803 = vpop.f32.mrb[0].mxu0
        %2804 = vmatprep.mubr.f32.mxu0 0.0
        %2805 = vmatmul.mubr.f32.gmra.mrb[0].mxu0 %v1007
        %v2806 = vpop.f32.mrb[0].mxu0
        %v2807 = vadd.f32 0.0, %v2806
        %v2808 = vpop.f32.mrb[0].mxu0
        %2809 = vmatprep.mubr.f32.mxu0 0.0
        %2810 = vmatmul.mubr.f32.gmra.mrb[0].mxu0 %v1010
        %v2811 = vpop.f32.mrb[0].mxu0
        %v2812 = vadd.f32 0.0, %v2811
        %v2813 = vpop.f32.mrb[0].mxu0
        %2814 = vmatprep.mubr.f32.mxu0 0.0
        %2815 = vmatmul.mubr.f32.gmra.mrb[0].mxu0 %v1013
        %v2816 = vpop.f32.mrb[0].mxu0
        %v2817 = vadd.f32 0.0, %v2816
        %v2818 = vpop.f32.mrb[0].mxu0
        %2819 = vmatprep.mubr.f32.mxu0 0.0
        %2820 = vmatmul.mubr.f32.gmra.mrb[0].mxu0 %v1016
        %v2821 = vpop.f32.mrb[0].mxu0
        %v2822 = vadd.f32 0.0, %v2821
        %v2823 = vpop.f32.mrb[0].mxu0
        %2824 = vmatprep.mubr.f32.mxu0 0.0
        %2825 = vmatmul.mubr.f32.gmra.mrb[0].mxu0 %v1019
        %v2826 = vpop.f32.mrb[0].mxu0
        %v2827 = vadd.f32 0.0, %v2826
        %v2828 = vpop.f32.mrb[0].mxu0
        %2829 = vmatprep.mubr.f32.mxu0 0.0
        %2830 = vmatmul.mubr.f32.gmra.mrb[0].mxu0 %v1022
        %v2831 = vpop.f32.mrb[0].mxu0
        %v2832 = vadd.f32 0.0, %v2831
        %v2833 = vpop.f32.mrb[0].mxu0
        %2834 = vmatprep.mubr.f32.mxu0 0.0
        %2835 = vmatmul.mubr.f32.gmra.mrb[0].mxu0 %v1025
        %v2836 = vpop.f32.mrb[0].mxu0
        %v2837 = vadd.f32 0.0, %v2836
        %v2838 = vpop.f32.mrb[0].mxu0
        %2839 = vmatprep.mubr.f32.mxu0 0.0
        %2840 = vmatmul.mubr.f32.gmra.mrb[0].mxu0 %v1028
        %v2841 = vpop.f32.mrb[0].mxu0
        %v2842 = vadd.f32 0.0, %v2841
        %v2843 = vpop.f32.mrb[0].mxu0
        %2844 = vmatprep.mubr.f32.mxu0 0.0
        %2845 = vmatmul.mubr.f32.gmra.mrb[0].mxu0 %v1031
        %v2846 = vpop.f32.mrb[0].mxu0
        %v2847 = vadd.f32 0.0, %v2846
        %v2848 = vpop.f32.mrb[0].mxu0
        %2849 = vmatprep.mubr.f32.mxu0 0.0
        %2850 = vmatmul.mubr.f32.gmra.mrb[0].mxu0 %v1034
        %v2851 = vpop.f32.mrb[0].mxu0
        %v2852 = vadd.f32 0.0, %v2851
        %v2853 = vpop.f32.mrb[0].mxu0
        %2854 = vmatprep.mubr.f32.mxu0 0.0
        %2855 = vmatmul.mubr.f32.gmra.mrb[0].mxu0 %v1037
        %v2856 = vpop.f32.mrb[0].mxu0
        %v2857 = vadd.f32 0.0, %v2856
        %v2858 = vpop.f32.mrb[0].mxu0
        %2859 = vmatprep.mubr.f32.mxu0 0.0
        %2860 = vmatmul.mubr.f32.gmra.mrb[0].mxu0 %v1040
        %v2861 = vpop.f32.mrb[0].mxu0
        %v2862 = vadd.f32 0.0, %v2861
        %v2863 = vpop.f32.mrb[0].mxu0
        %2864 = vmatprep.mubr.f32.mxu0 0.0
        %2865 = vmatmul.mubr.f32.gmra.mrb[0].mxu0 %v1043
        %v2866 = vpop.f32.mrb[0].mxu0
        %v2867 = vadd.f32 0.0, %v2866
        %v2868 = vpop.f32.mrb[0].mxu0
        %2869 = vmatprep.mubr.f32.mxu0 0.0
        %2870 = vmatmul.mubr.f32.gmra.mrb[0].mxu0 %v1046
        %v2871 = vpop.f32.mrb[0].mxu0
        %v2872 = vadd.f32 0.0, %v2871
        %v2873 = vpop.f32.mrb[0].mxu0
        %2874 = vmatprep.mubr.f32.mxu0 0.0
        %2875 = vmatmul.mubr.f32.gmra.mrb[0].mxu0 %v1049
        %v2876 = vpop.f32.mrb[0].mxu0
        %v2877 = vadd.f32 0.0, %v2876
        %v2878 = vpop.f32.mrb[0].mxu0
        %2879 = vmatprep.mubr.f32.mxu0 0.0
        %2880 = vmatmul.mubr.f32.gmra.mrb[0].mxu0 %v1052
        %v2881 = vpop.f32.mrb[0].mxu0
        %v2882 = vadd.f32 0.0, %v2881
        %v2883 = vpop.f32.mrb[0].mxu0
        %2884 = vmatprep.mubr.f32.mxu0 0.0
        %2885 = vmatmul.mubr.f32.gmra.mrb[0].mxu0 %v1055
        %v2886 = vpop.f32.mrb[0].mxu0
        %v2887 = vadd.f32 0.0, %v2886
        %v2888 = vpop.f32.mrb[0].mxu0
        %2889 = vmatprep.mubr.f32.mxu0 0.0
        %2890 = vmatmul.mubr.f32.gmra.mrb[0].mxu0 %v1058
        %v2891 = vpop.f32.mrb[0].mxu0
        %v2892 = vadd.f32 0.0, %v2891
        %v2893 = vpop.f32.mrb[0].mxu0
        %2894 = vmatprep.mubr.f32.mxu0 0.0
        %2895 = vmatmul.mubr.f32.gmra.mrb[0].mxu0 %v1061
        %v2896 = vpop.f32.mrb[0].mxu0
        %v2897 = vadd.f32 0.0, %v2896
        %v2898 = vpop.f32.mrb[0].mxu0
        %2899 = vmatprep.mubr.f32.mxu0 0.0
        %2900 = vmatmul.mubr.f32.gmra.mrb[0].mxu0 %v1064
        %v2901 = vpop.f32.mrb[0].mxu0
        %v2902 = vadd.f32 0.0, %v2901
        %v2903 = vpop.f32.mrb[0].mxu0
        %2904 = vmatprep.mubr.f32.mxu0 0.0
        %2905 = vmatmul.mubr.f32.gmra.mrb[0].mxu0 %v1067
        %v2906 = vpop.f32.mrb[0].mxu0
        %v2907 = vadd.f32 0.0, %v2906
        %v2908 = vpop.f32.mrb[0].mxu0
        %2909 = vmatprep.mubr.f32.mxu0 0.0
        %2910 = vmatmul.mubr.f32.gmra.mrb[0].mxu0 %v1070
        %v2911 = vpop.f32.mrb[0].mxu0
        %v2912 = vadd.f32 0.0, %v2911
        %v2913 = vpop.f32.mrb[0].mxu0
        %2914 = vmatprep.mubr.f32.mxu0 0.0
        %2915 = vmatmul.mubr.f32.gmra.mrb[0].mxu0 %v1073
        %v2916 = vpop.f32.mrb[0].mxu0
        %v2917 = vadd.f32 0.0, %v2916
        %v2918 = vpop.f32.mrb[0].mxu0
        %2919 = vmatprep.mubr.f32.mxu0 0.0
        %2920 = vmatmul.mubr.f32.gmra.mrb[0].mxu0 %v1076
        %v2921 = vpop.f32.mrb[0].mxu0
        %v2922 = vadd.f32 0.0, %v2921
        %v2923 = vpop.f32.mrb[0].mxu0
        %2924 = vmatprep.mubr.f32.mxu0 0.0
        %2925 = vmatmul.mubr.f32.gmra.mrb[0].mxu0 %v1079
        %v2926 = vpop.f32.mrb[0].mxu0
        %v2927 = vadd.f32 0.0, %v2926
        %v2928 = vpop.f32.mrb[0].mxu0
        %2929 = vmatprep.mubr.f32.mxu0 0.0
        %2930 = vmatmul.mubr.f32.gmra.mrb[0].mxu0 %v1082
        %v2931 = vpop.f32.mrb[0].mxu0
        %v2932 = vadd.f32 0.0, %v2931
        %v2933 = vpop.f32.mrb[0].mxu0
        %2934 = vmatprep.mubr.f32.mxu0 0.0
        %2935 = vmatmul.mubr.f32.gmra.mrb[0].mxu0 %v1085
        %v2936 = vpop.f32.mrb[0].mxu0
        %v2937 = vadd.f32 0.0, %v2936
        %v2938 = vpop.f32.mrb[0].mxu0
        %2939 = vmatprep.mubr.f32.mxu0 0.0
        %2940 = vmatmul.mubr.f32.gmra.mrb[0].mxu0 %v1088
        %v2941 = vpop.f32.mrb[0].mxu0
        %v2942 = vadd.f32 0.0, %v2941
        %v2943 = vpop.f32.mrb[0].mxu0
        %2944 = vmatprep.mubr.f32.mxu0 0.0
        %2945 = vmatmul.mubr.f32.gmra.mrb[0].mxu0 %v1091
        %v2946 = vpop.f32.mrb[0].mxu0
        %v2947 = vadd.f32 0.0, %v2946
        %v2948 = vpop.f32.mrb[0].mxu0
        %2949 = vmatprep.mubr.f32.mxu0 0.0
        %2950 = vmatmul.mubr.f32.gmra.mrb[0].mxu0 %v1094
        %v2951 = vpop.f32.mrb[0].mxu0
        %v2952 = vadd.f32 0.0, %v2951
        %v2953 = vpop.f32.mrb[0].mxu0
        %2954 = vmatprep.mubr.f32.mxu0 0.0
        %2955 = vmatmul.mubr.f32.gmra.mrb[0].mxu0 %v1097
        %v2956 = vpop.f32.mrb[0].mxu0
        %v2957 = vadd.f32 0.0, %v2956
        %v2958 = vpop.f32.mrb[0].mxu0
        %2959 = vmatprep.mubr.f32.mxu0 0.0
        %2960 = vmatmul.mubr.f32.gmra.mrb[0].mxu0 %v1100
        %v2961 = vpop.f32.mrb[0].mxu0
        %v2962 = vadd.f32 0.0, %v2961
        %v2963 = vpop.f32.mrb[0].mxu0
        %2964 = vmatprep.mubr.f32.mxu0 0.0
        %2965 = vmatmul.mubr.f32.gmra.mrb[0].mxu0 %v1103
        %v2966 = vpop.f32.mrb[0].mxu0
        %v2967 = vadd.f32 0.0, %v2966
        %v2968 = vpop.f32.mrb[0].mxu0
        %2969 = vmatprep.mubr.f32.mxu0 0.0
        %2970 = vmatmul.mubr.f32.gmra.mrb[0].mxu0 %v1106
        %v2971 = vpop.f32.mrb[0].mxu0
        %v2972 = vadd.f32 0.0, %v2971
        %v2973 = vpop.f32.mrb[0].mxu0
        %2974 = vmatprep.mubr.f32.mxu0 0.0
        %2975 = vmatmul.mubr.f32.gmra.mrb[0].mxu0 %v1109
        %v2976 = vpop.f32.mrb[0].mxu0
        %v2977 = vadd.f32 0.0, %v2976
        %v2978 = vpop.f32.mrb[0].mxu0
        %2979 = vmatprep.mubr.f32.mxu0 0.0
        %2980 = vmatmul.mubr.f32.gmra.mrb[0].mxu0 %v1112
        %v2981 = vpop.f32.mrb[0].mxu0
        %v2982 = vadd.f32 0.0, %v2981
        %v2983 = vpop.f32.mrb[0].mxu0
        %2984 = vmatprep.mubr.f32.mxu0 0.0
        %2985 = vmatmul.mubr.f32.gmra.mrb[0].mxu0 %v1115
        %v2986 = vpop.f32.mrb[0].mxu0
        %v2987 = vadd.f32 0.0, %v2986
        %v2988 = vpop.f32.mrb[0].mxu0
        %2989 = vmatprep.mubr.f32.mxu0 0.0
        %2990 = vmatmul.mubr.f32.gmra.mrb[0].mxu0 %v1118
        %v2991 = vpop.f32.mrb[0].mxu0
        %v2992 = vadd.f32 0.0, %v2991
        %v2993 = vpop.f32.mrb[0].mxu0
        %2994 = vmatprep.mubr.f32.mxu0 0.0
        %2995 = vmatmul.mubr.f32.gmra.mrb[0].mxu0 %v1121
        %v2996 = vpop.f32.mrb[0].mxu0
        %v2997 = vadd.f32 0.0, %v2996
        %v2998 = vpop.f32.mrb[0].mxu0
        %2999 = vmatprep.mubr.f32.mxu0 0.0
        %3000 = vmatmul.mubr.f32.gmra.mrb[0].mxu0 %v1124
        %v3001 = vpop.f32.mrb[0].mxu0
        %v3002 = vadd.f32 0.0, %v3001
        %v3003 = vpop.f32.mrb[0].mxu0
        %3004 = vmatprep.mubr.f32.mxu0 0.0
        %3005 = vmatmul.mubr.f32.gmra.mrb[0].mxu0 %v1127
        %v3006 = vpop.f32.mrb[0].mxu0
        %v3007 = vadd.f32 0.0, %v3006
        %v3008 = vpop.f32.mrb[0].mxu0
        %3009 = vmatprep.mubr.f32.mxu0 0.0
        %3010 = vmatmul.mubr.f32.gmra.mrb[0].mxu0 %v1130
        %v3011 = vpop.f32.mrb[0].mxu0
        %v3012 = vadd.f32 0.0, %v3011
        %v3013 = vpop.f32.mrb[0].mxu0
        %3014 = vmatprep.mubr.f32.mxu0 0.0
        %3015 = vmatmul.mubr.f32.gmra.mrb[0].mxu0 %v1133
        %v3016 = vpop.f32.mrb[0].mxu0
        %v3017 = vadd.f32 0.0, %v3016
        %v3018 = vpop.f32.mrb[0].mxu0
        %3019 = vmatprep.mubr.f32.mxu0 0.0
        %3020 = vmatmul.mubr.f32.gmra.mrb[0].mxu0 %v1136
        %v3021 = vpop.f32.mrb[0].mxu0
        %v3022 = vadd.f32 0.0, %v3021
        %v3023 = vpop.f32.mrb[0].mxu0
        %3024 = vmatprep.mubr.f32.mxu0 0.0
        %3025 = vmatmul.mubr.f32.gmra.mrb[0].mxu0 %v1139
        %v3026 = vpop.f32.mrb[0].mxu0
        %v3027 = vadd.f32 0.0, %v3026
        %v3028 = vpop.f32.mrb[0].mxu0
        %3029 = vmatprep.mubr.f32.mxu0 0.0
        %3030 = vmatmul.mubr.f32.gmra.mrb[0].mxu0 %v1142
        %v3031 = vpop.f32.mrb[0].mxu0
        %v3032 = vadd.f32 0.0, %v3031
        %v3033 = vpop.f32.mrb[0].mxu0
        %3034 = vmatprep.mubr.f32.mxu0 0.0
        %3035 = vmatmul.mubr.f32.gmra.mrb[0].mxu0 %v1145
        %v3036 = vpop.f32.mrb[0].mxu0
        %v3037 = vadd.f32 0.0, %v3036
        %v3038 = vpop.f32.mrb[0].mxu0
        %3039 = vmatprep.mubr.f32.mxu0 0.0
        %3040 = vmatmul.mubr.f32.gmra.mrb[0].mxu0 %v1148
        %v3041 = vpop.f32.mrb[0].mxu0
        %v3042 = vadd.f32 0.0, %v3041
        %v3043 = vpop.f32.mrb[0].mxu0
        %3044 = vmatprep.mubr.f32.mxu0 0.0
        %3045 = vmatmul.mubr.f32.gmra.mrb[0].mxu0 %v1151
        %v3046 = vpop.f32.mrb[0].mxu0
        %v3047 = vadd.f32 0.0, %v3046
        %v3048 = vpop.f32.mrb[0].mxu0
        %3049 = vmatprep.mubr.f32.mxu0 0.0
        %3050 = vmatmul.mubr.f32.gmra.mrb[0].mxu0 %v1154
        %v3051 = vpop.f32.mrb[0].mxu0
        %v3052 = vadd.f32 0.0, %v3051
        %v3053 = vpop.f32.mrb[0].mxu0
        %3054 = vmatprep.mubr.f32.mxu0 0.0
        %3055 = vmatmul.mubr.f32.gmra.mrb[0].mxu0 %v1157
        %v3056 = vpop.f32.mrb[0].mxu0
        %v3057 = vadd.f32 0.0, %v3056
        %v3058 = vpop.f32.mrb[0].mxu0
        %3059 = vmatprep.mubr.f32.mxu0 0.0
        %3060 = vmatmul.mubr.f32.gmra.mrb[0].mxu0 %v1160
        %v3061 = vpop.f32.mrb[0].mxu0
        %v3062 = vadd.f32 0.0, %v3061
        %v3063 = vpop.f32.mrb[0].mxu0
        %3064 = vmatprep.mubr.f32.mxu0 0.0
        %3065 = vmatmul.mubr.f32.gmra.mrb[0].mxu0 %v1163
        %v3066 = vpop.f32.mrb[0].mxu0
        %v3067 = vadd.f32 0.0, %v3066
        %v3068 = vpop.f32.mrb[0].mxu0
        %3069 = vmatprep.mubr.f32.mxu0 0.0
        %3070 = vmatmul.mubr.f32.gmra.mrb[0].mxu0 %v1166
        %v3071 = vpop.f32.mrb[0].mxu0
        %v3072 = vadd.f32 0.0, %v3071
        %v3073 = vpop.f32.mrb[0].mxu0
        %3074 = vmatprep.mubr.f32.mxu0 0.0
        %3075 = vmatmul.mubr.f32.gmra.mrb[0].mxu0 %v1169
        %v3076 = vpop.f32.mrb[0].mxu0
        %v3077 = vadd.f32 0.0, %v3076
        %v3078 = vpop.f32.mrb[0].mxu0
        %3079 = vmatprep.mubr.f32.mxu0 0.0
        %3080 = vmatmul.mubr.f32.gmra.mrb[0].mxu0 %v1172
        %v3081 = vpop.f32.mrb[0].mxu0
        %v3082 = vadd.f32 0.0, %v3081
        %v3083 = vpop.f32.mrb[0].mxu0
        %3084 = vmatprep.mubr.f32.mxu0 0.0
        %3085 = vmatmul.mubr.f32.gmra.mrb[0].mxu0 %v1175
        %v3086 = vpop.f32.mrb[0].mxu0
        %v3087 = vadd.f32 0.0, %v3086
        %v3088 = vpop.f32.mrb[0].mxu0
        %3089 = vmatprep.mubr.f32.mxu0 0.0
        %3090 = vmatmul.mubr.f32.gmra.mrb[0].mxu0 %v1178
        %v3091 = vpop.f32.mrb[0].mxu0
        %v3092 = vadd.f32 0.0, %v3091
        %v3093 = vpop.f32.mrb[0].mxu0
        %3094 = vmatprep.mubr.f32.mxu0 0.0
        %3095 = vmatmul.mubr.f32.gmra.mrb[0].mxu0 %v1181
        %v3096 = vpop.f32.mrb[0].mxu0
        %v3097 = vadd.f32 0.0, %v3096
        %v3098 = vpop.f32.mrb[0].mxu0
        %3099 = vmatprep.mubr.f32.mxu0 0.0
        %3100 = vmatmul.mubr.f32.gmra.mrb[0].mxu0 %v1184
        %v3101 = vpop.f32.mrb[0].mxu0
        %v3102 = vadd.f32 0.0, %v3101
        %v3103 = vpop.f32.mrb[0].mxu0
        %3104 = vmatprep.mubr.f32.mxu0 0.0
        %3105 = vmatmul.mubr.f32.gmra.mrb[0].mxu0 %v1187
        %v3106 = vpop.f32.mrb[0].mxu0
        %v3107 = vadd.f32 0.0, %v3106
        %v3108 = vpop.f32.mrb[0].mxu0
        %3109 = vmatprep.mubr.f32.mxu0 0.0
        %3110 = vmatmul.mubr.f32.gmra.mrb[0].mxu0 %v1190
        %v3111 = vpop.f32.mrb[0].mxu0
        %v3112 = vadd.f32 0.0, %v3111
        %v3113 = vpop.f32.mrb[0].mxu0
        %3114 = vmatprep.mubr.f32.mxu0 0.0
        %3115 = vmatmul.mubr.f32.gmra.mrb[0].mxu0 %v1193
        %v3116 = vpop.f32.mrb[0].mxu0
        %v3117 = vadd.f32 0.0, %v3116
        %v3118 = vpop.f32.mrb[0].mxu0
        %3119 = vmatprep.mubr.f32.mxu0 0.0
        %3120 = vmatmul.mubr.f32.gmra.mrb[0].mxu0 %v1196
        %v3121 = vpop.f32.mrb[0].mxu0
        %v3122 = vadd.f32 0.0, %v3121
        %v3123 = vpop.f32.mrb[0].mxu0
        %3124 = vmatprep.mubr.f32.mxu0 0.0
        %3125 = vmatmul.mubr.f32.gmra.mrb[0].mxu0 %v1199
        %v3126 = vpop.f32.mrb[0].mxu0
        %v3127 = vadd.f32 0.0, %v3126
        %v3128 = vpop.f32.mrb[0].mxu0
        %3129 = vmatprep.mubr.f32.mxu0 0.0
        %3130 = vmatmul.mubr.f32.gmra.mrb[0].mxu0 %v1202
        %v3131 = vpop.f32.mrb[0].mxu0
        %v3132 = vadd.f32 0.0, %v3131
        %v3133 = vpop.f32.mrb[0].mxu0
        %3134 = vmatprep.mubr.f32.mxu0 0.0
        %3135 = vmatmul.mubr.f32.gmra.mrb[0].mxu0 %v1205
        %v3136 = vpop.f32.mrb[0].mxu0
        %v3137 = vadd.f32 0.0, %v3136
        %v3138 = vpop.f32.mrb[0].mxu0
        %3139 = vmatprep.mubr.f32.mxu0 0.0
        %3140 = vmatmul.mubr.f32.gmra.mrb[0].mxu0 %v1208
        %v3141 = vpop.f32.mrb[0].mxu0
        %v3142 = vadd.f32 0.0, %v3141
        %v3143 = vpop.f32.mrb[0].mxu0
        %3144 = vmatprep.mubr.f32.mxu0 0.0
        %3145 = vmatmul.mubr.f32.gmra.mrb[0].mxu0 %v1211
        %v3146 = vpop.f32.mrb[0].mxu0
        %v3147 = vadd.f32 0.0, %v3146
        %v3148 = vpop.f32.mrb[0].mxu0
        %3149 = vmatprep.mubr.f32.mxu0 0.0
        %3150 = vmatmul.mubr.f32.gmra.mrb[0].mxu0 %v1214
        %v3151 = vpop.f32.mrb[0].mxu0
        %v3152 = vadd.f32 0.0, %v3151
        %v3153 = vpop.f32.mrb[0].mxu0
        %3154 = vmatprep.mubr.f32.mxu0 0.0
        %3155 = vmatmul.mubr.f32.gmra.mrb[0].mxu0 %v1217
        %v3156 = vpop.f32.mrb[0].mxu0
        %v3157 = vadd.f32 0.0, %v3156
        %v3158 = vpop.f32.mrb[0].mxu0
        %3159 = vmatprep.mubr.f32.mxu0 0.0
        %3160 = vmatmul.mubr.f32.gmra.mrb[0].mxu0 %v1220
        %v3161 = vpop.f32.mrb[0].mxu0
        %v3162 = vadd.f32 0.0, %v3161
        %v3163 = vpop.f32.mrb[0].mxu0
        %3164 = vmatprep.mubr.f32.mxu0 0.0
        %3165 = vmatmul.mubr.f32.gmra.mrb[0].mxu0 %v1223
        %v3166 = vpop.f32.mrb[0].mxu0
        %v3167 = vadd.f32 0.0, %v3166
        %v3168 = vpop.f32.mrb[0].mxu0
        %3169 = vmatprep.mubr.f32.mxu0 0.0
        %3170 = vmatmul.mubr.f32.gmra.mrb[0].mxu0 %v1226
        %v3171 = vpop.f32.mrb[0].mxu0
        %v3172 = vadd.f32 0.0, %v3171
        %v3173 = vpop.f32.mrb[0].mxu0
        %3174 = vmatprep.mubr.f32.mxu0 0.0
        %3175 = vmatmul.mubr.f32.gmra.mrb[0].mxu0 %v1229
        %v3176 = vpop.f32.mrb[0].mxu0
        %v3177 = vadd.f32 0.0, %v3176
        %v3178 = vpop.f32.mrb[0].mxu0
        %3179 = vmatprep.mubr.f32.mxu0 0.0
        %3180 = vmatmul.mubr.f32.gmra.mrb[0].mxu0 %v1232
        %v3181 = vpop.f32.mrb[0].mxu0
        %v3182 = vadd.f32 0.0, %v3181
        %v3183 = vpop.f32.mrb[0].mxu0
        %3184 = vmatprep.mubr.f32.mxu0 0.0
        %3185 = vmatmul.mubr.f32.gmra.mrb[0].mxu0 %v1235
        %v3186 = vpop.f32.mrb[0].mxu0
        %v3187 = vadd.f32 0.0, %v3186
        %v3188 = vpop.f32.mrb[0].mxu0
        %3189 = vmatprep.mubr.f32.mxu0 0.0
        %3190 = vmatmul.mubr.f32.gmra.mrb[0].mxu0 %v1238
        %v3191 = vpop.f32.mrb[0].mxu0
        %v3192 = vadd.f32 0.0, %v3191
        %v3193 = vpop.f32.mrb[0].mxu0
        %3194 = vmatprep.mubr.f32.mxu0 0.0
        %3195 = vmatmul.mubr.f32.gmra.mrb[0].mxu0 %v1241
        %v3196 = vpop.f32.mrb[0].mxu0
        %v3197 = vadd.f32 0.0, %v3196
        %v3198 = vpop.f32.mrb[0].mxu0
        %3199 = vmatprep.mubr.f32.mxu0 0.0
        %3200 = vmatmul.mubr.f32.gmra.mrb[0].mxu0 %v1244
        %v3201 = vpop.f32.mrb[0].mxu0
        %v3202 = vadd.f32 0.0, %v3201
        %v3203 = vpop.f32.mrb[0].mxu0
        %3204 = vmatprep.mubr.f32.mxu0 0.0
        %3205 = vmatmul.mubr.f32.gmra.mrb[0].mxu0 %v1247
        %v3206 = vpop.f32.mrb[0].mxu0
        %v3207 = vadd.f32 0.0, %v3206
        %v3208 = vpop.f32.mrb[0].mxu0
        %3209 = vmatprep.mubr.f32.mxu0 0.0
        %3210 = vmatmul.mubr.f32.gmra.mrb[0].mxu0 %v1250
        %v3211 = vpop.f32.mrb[0].mxu0
        %v3212 = vadd.f32 0.0, %v3211
        %v3213 = vpop.f32.mrb[0].mxu0
        %3214 = vmatprep.mubr.f32.mxu0 0.0
        %3215 = vmatmul.mubr.f32.gmra.mrb[0].mxu0 %v1253
        %v3216 = vpop.f32.mrb[0].mxu0
        %v3217 = vadd.f32 0.0, %v3216
        %v3218 = vpop.f32.mrb[0].mxu0
        %3219 = vmatprep.mubr.f32.mxu0 0.0
        %3220 = vmatmul.mubr.f32.gmra.mrb[0].mxu0 %v1256
        %v3221 = vpop.f32.mrb[0].mxu0
        %v3222 = vadd.f32 0.0, %v3221
        %v3223 = vpop.f32.mrb[0].mxu0
        %3224 = vmatprep.mubr.f32.mxu0 0.0
        %3225 = vmatmul.mubr.f32.gmra.mrb[0].mxu0 %v1259
        %v3226 = vpop.f32.mrb[0].mxu0
        %v3227 = vadd.f32 0.0, %v3226
        %v3228 = vpop.f32.mrb[0].mxu0
        %3229 = vmatprep.mubr.f32.mxu0 0.0
        %3230 = vmatmul.mubr.f32.gmra.mrb[0].mxu0 %v1262
        %v3231 = vpop.f32.mrb[0].mxu0
        %v3232 = vadd.f32 0.0, %v3231
        %v3233 = vpop.f32.mrb[0].mxu0
        %3234 = vmatprep.mubr.f32.mxu0 0.0
        %3235 = vmatmul.mubr.f32.gmra.mrb[0].mxu0 %v1265
        %v3236 = vpop.f32.mrb[0].mxu0
        %v3237 = vadd.f32 0.0, %v3236
        %v3238 = vpop.f32.mrb[0].mxu0
        %3239 = vmatprep.mubr.f32.mxu0 0.0
        %3240 = vmatmul.mubr.f32.gmra.mrb[0].mxu0 %v1268
        %v3241 = vpop.f32.mrb[0].mxu0
        %v3242 = vadd.f32 0.0, %v3241
        %v3243 = vpop.f32.mrb[0].mxu0
        %3244 = vmatprep.mubr.f32.mxu0 0.0
        %3245 = vmatmul.mubr.f32.gmra.mrb[0].mxu0 %v1271
        %v3246 = vpop.f32.mrb[0].mxu0
        %v3247 = vadd.f32 0.0, %v3246
        %v3248 = vpop.f32.mrb[0].mxu0
        %3249 = vmatprep.mubr.f32.mxu0 0.0
        %3250 = vmatmul.mubr.f32.gmra.mrb[0].mxu0 %v1274
        %v3251 = vpop.f32.mrb[0].mxu0
        %v3252 = vadd.f32 0.0, %v3251
        %v3253 = vpop.f32.mrb[0].mxu0
        %3254 = vmatprep.mubr.f32.mxu0 0.0
        %3255 = vmatmul.mubr.f32.gmra.mrb[0].mxu0 %v1277
        %v3256 = vpop.f32.mrb[0].mxu0
        %v3257 = vadd.f32 0.0, %v3256
        %v3258 = vpop.f32.mrb[0].mxu0
        %3259 = vmatprep.mubr.f32.mxu0 0.0
        %3260 = vmatmul.mubr.f32.gmra.mrb[0].mxu0 %v1280
        %v3261 = vpop.f32.mrb[0].mxu0
        %v3262 = vadd.f32 0.0, %v3261
        %v3263 = vpop.f32.mrb[0].mxu0
        %3264 = vmatprep.mubr.f32.mxu0 0.0
        %3265 = vmatmul.mubr.f32.gmra.mrb[0].mxu0 %v1283
        %v3266 = vpop.f32.mrb[0].mxu0
        %v3267 = vadd.f32 0.0, %v3266
        %v3268 = vpop.f32.mrb[0].mxu0
        %3269 = vmatprep.mubr.f32.mxu0 0.0
        %3270 = vmatmul.mubr.f32.gmra.mrb[0].mxu0 %v1286
        %v3271 = vpop.f32.mrb[0].mxu0
        %v3272 = vadd.f32 0.0, %v3271
        %v3273 = vpop.f32.mrb[0].mxu0
        %3274 = vmatprep.mubr.f32.mxu0 0.0
        %3275 = vmatmul.mubr.f32.gmra.mrb[0].mxu0 %v1289
        %v3276 = vpop.f32.mrb[0].mxu0
        %v3277 = vadd.f32 0.0, %v3276
        %v3278 = vpop.f32.mrb[0].mxu0
        %3279 = vmatprep.mubr.f32.mxu0 0.0
        %3280 = vmatmul.mubr.f32.gmra.mrb[0].mxu0 %v1292
        %v3281 = vpop.f32.mrb[0].mxu0
        %v3282 = vadd.f32 0.0, %v3281
        %v3283 = vpop.f32.mrb[0].mxu0
        %3284 = vmatprep.mubr.f32.mxu0 0.0
        %3285 = vmatmul.mubr.f32.gmra.mrb[0].mxu0 %v1295
        %v3286 = vpop.f32.mrb[0].mxu0
        %v3287 = vadd.f32 0.0, %v3286
        %v3288 = vpop.f32.mrb[0].mxu0
        %3289 = vmatprep.mubr.f32.mxu0 0.0
        %3290 = vmatmul.mubr.f32.gmra.mrb[0].mxu0 %v1298
        %v3291 = vpop.f32.mrb[0].mxu0
        %v3292 = vadd.f32 0.0, %v3291
        %v3293 = vpop.f32.mrb[0].mxu0
        %3294 = vmatprep.mubr.f32.mxu0 0.0
        %3295 = vmatmul.mubr.f32.gmra.mrb[0].mxu0 %v1301
        %v3296 = vpop.f32.mrb[0].mxu0
        %v3297 = vadd.f32 0.0, %v3296
        %v3298 = vpop.f32.mrb[0].mxu0
        %3299 = vmatprep.mubr.f32.mxu0 0.0
        %3300 = vmatmul.mubr.f32.gmra.mrb[0].mxu0 %v1304
        %v3301 = vpop.f32.mrb[0].mxu0
        %v3302 = vadd.f32 0.0, %v3301
        %v3303 = vpop.f32.mrb[0].mxu0
        %3304 = vmatprep.mubr.f32.mxu0 0.0
        %3305 = vmatmul.mubr.f32.gmra.mrb[0].mxu0 %v1307
        %v3306 = vpop.f32.mrb[0].mxu0
        %v3307 = vadd.f32 0.0, %v3306
        %v3308 = vpop.f32.mrb[0].mxu0
        %3309 = vmatprep.mubr.f32.mxu0 0.0
        %3310 = vmatmul.mubr.f32.gmra.mrb[0].mxu0 %v1310
        %v3311 = vpop.f32.mrb[0].mxu0
        %v3312 = vadd.f32 0.0, %v3311
        %v3313 = vpop.f32.mrb[0].mxu0
        %3314 = vmatprep.mubr.f32.mxu0 0.0
        %3315 = vmatmul.mubr.f32.gmra.mrb[0].mxu0 %v1313
        %v3316 = vpop.f32.mrb[0].mxu0
        %v3317 = vadd.f32 0.0, %v3316
        %v3318 = vpop.f32.mrb[0].mxu0
        %3319 = vmatprep.mubr.f32.mxu0 0.0
        %3320 = vmatmul.mubr.f32.gmra.mrb[0].mxu0 %v1316
        %v3321 = vpop.f32.mrb[0].mxu0
        %v3322 = vadd.f32 0.0, %v3321
        %v3323 = vpop.f32.mrb[0].mxu0
        %3324 = vmatprep.mubr.f32.mxu0 0.0
        %3325 = vmatmul.mubr.f32.gmra.mrb[0].mxu0 %v1319
        %v3326 = vpop.f32.mrb[0].mxu0
        %v3327 = vadd.f32 0.0, %v3326
        %v3328 = vpop.f32.mrb[0].mxu0
        %3329 = vmatprep.mubr.f32.mxu0 0.0
        %3330 = vmatmul.mubr.f32.gmra.mrb[0].mxu0 %v1322
        %v3331 = vpop.f32.mrb[0].mxu0
        %v3332 = vadd.f32 0.0, %v3331
        %v3333 = vpop.f32.mrb[0].mxu0
        %3334 = vmatprep.mubr.f32.mxu0 0.0
        %3335 = vmatmul.mubr.f32.gmra.mrb[0].mxu0 %v1325
        %v3336 = vpop.f32.mrb[0].mxu0
        %v3337 = vadd.f32 0.0, %v3336
        %v3338 = vpop.f32.mrb[0].mxu0
        %3339 = vmatprep.mubr.f32.mxu0 0.0
        %3340 = vmatmul.mubr.f32.gmra.mrb[0].mxu0 %v1328
        %v3341 = vpop.f32.mrb[0].mxu0
        %v3342 = vadd.f32 0.0, %v3341
        %v3343 = vpop.f32.mrb[0].mxu0
        %3344 = vmatprep.mubr.f32.mxu0 0.0
        %3345 = vmatmul.mubr.f32.gmra.mrb[0].mxu0 %v1331
        %v3346 = vpop.f32.mrb[0].mxu0
        %v3347 = vadd.f32 0.0, %v3346
        %v3348 = vpop.f32.mrb[0].mxu0
        %3349 = vmatprep.mubr.f32.mxu0 0.0
        %3350 = vmatmul.mubr.f32.gmra.mrb[0].mxu0 %v1334
        %v3351 = vpop.f32.mrb[0].mxu0
        %v3352 = vadd.f32 0.0, %v3351
        %v3353 = vpop.f32.mrb[0].mxu0
        %3354 = vmatprep.mubr.f32.mxu0 0.0
        %3355 = vmatmul.mubr.f32.gmra.mrb[0].mxu0 %v1337
        %v3356 = vpop.f32.mrb[0].mxu0
        %v3357 = vadd.f32 0.0, %v3356
        %v3358 = vpop.f32.mrb[0].mxu0
        %3359 = vmatprep.mubr.f32.mxu0 0.0
        %3360 = vmatmul.mubr.f32.gmra.mrb[0].mxu0 %v1340
        %v3361 = vpop.f32.mrb[0].mxu0
        %v3362 = vadd.f32 0.0, %v3361
        %v3363 = vpop.f32.mrb[0].mxu0
        %3364 = vmatprep.mubr.f32.mxu0 0.0
        %3365 = vmatmul.mubr.f32.gmra.mrb[0].mxu0 %v1343
        %v3366 = vpop.f32.mrb[0].mxu0
        %v3367 = vadd.f32 0.0, %v3366
        %v3368 = vpop.f32.mrb[0].mxu0
        %3369 = vmatprep.mubr.f32.mxu0 0.0
        %3370 = vmatmul.mubr.f32.gmra.mrb[0].mxu0 %v1346
        %v3371 = vpop.f32.mrb[0].mxu0
        %v3372 = vadd.f32 0.0, %v3371
        %v3373 = vpop.f32.mrb[0].mxu0
        %3374 = vmatprep.mubr.f32.mxu0 0.0
        %3375 = vmatmul.mubr.f32.gmra.mrb[0].mxu0 %v1349
        %v3376 = vpop.f32.mrb[0].mxu0
        %v3377 = vadd.f32 0.0, %v3376
        %v3378 = vpop.f32.mrb[0].mxu0
        %3379 = vmatprep.mubr.f32.mxu0 0.0
        %3380 = vmatmul.mubr.f32.gmra.mrb[0].mxu0 %v1352
        %v3381 = vpop.f32.mrb[0].mxu0
        %v3382 = vadd.f32 0.0, %v3381
        %v3383 = vpop.f32.mrb[0].mxu0
        %3384 = vmatprep.mubr.f32.mxu0 0.0
        %3385 = vmatmul.mubr.f32.gmra.mrb[0].mxu0 %v1355
        %v3386 = vpop.f32.mrb[0].mxu0
        %v3387 = vadd.f32 0.0, %v3386
        %v3388 = vpop.f32.mrb[0].mxu0
        %3389 = vmatprep.mubr.f32.mxu0 0.0
        %3390 = vmatmul.mubr.f32.gmra.mrb[0].mxu0 %v1358
        %v3391 = vpop.f32.mrb[0].mxu0
        %v3392 = vadd.f32 0.0, %v3391
        %v3393 = vpop.f32.mrb[0].mxu0
        %3394 = vmatprep.mubr.f32.mxu0 0.0
        %3395 = vmatmul.mubr.f32.gmra.mrb[0].mxu0 %v1361
        %v3396 = vpop.f32.mrb[0].mxu0
        %v3397 = vadd.f32 0.0, %v3396
        %v3398 = vpop.f32.mrb[0].mxu0
        %3399 = vmatprep.mubr.f32.mxu0 0.0
        %3400 = vmatmul.mubr.f32.gmra.mrb[0].mxu0 %v1364
        %v3401 = vpop.f32.mrb[0].mxu0
        %v3402 = vadd.f32 0.0, %v3401
        %v3403 = vpop.f32.mrb[0].mxu0
        %3404 = vmatprep.mubr.f32.mxu0 0.0
        %3405 = vmatmul.mubr.f32.gmra.mrb[0].mxu0 %v1367
        %v3406 = vpop.f32.mrb[0].mxu0
        %v3407 = vadd.f32 0.0, %v3406
        %v3408 = vpop.f32.mrb[0].mxu0
        %3409 = vmatprep.mubr.f32.mxu0 0.0
        %3410 = vmatmul.mubr.f32.gmra.mrb[0].mxu0 %v1370
        %v3411 = vpop.f32.mrb[0].mxu0
        %v3412 = vadd.f32 0.0, %v3411
        %v3413 = vpop.f32.mrb[0].mxu0
        %3414 = vmatprep.mubr.f32.mxu0 0.0
        %3415 = vmatmul.mubr.f32.gmra.mrb[0].mxu0 %v1373
        %v3416 = vpop.f32.mrb[0].mxu0
        %v3417 = vadd.f32 0.0, %v3416
        %v3418 = vpop.f32.mrb[0].mxu0
        %3419 = vmatprep.mubr.f32.mxu0 0.0
        %3420 = vmatmul.mubr.f32.gmra.mrb[0].mxu0 %v1376
        %v3421 = vpop.f32.mrb[0].mxu0
        %v3422 = vadd.f32 0.0, %v3421
        %v3423 = vpop.f32.mrb[0].mxu0
        %3424 = vmatprep.mubr.f32.mxu0 0.0
        %3425 = vmatmul.mubr.f32.gmra.mrb[0].mxu0 %v1379
        %v3426 = vpop.f32.mrb[0].mxu0
        %v3427 = vadd.f32 0.0, %v3426
        %v3428 = vpop.f32.mrb[0].mxu0
        %3429 = vmatprep.mubr.f32.mxu0 0.0
        %3430 = vmatmul.mubr.f32.gmra.mrb[0].mxu0 %v1382
        %v3431 = vpop.f32.mrb[0].mxu0
        %v3432 = vadd.f32 0.0, %v3431
        %v3433 = vpop.f32.mrb[0].mxu0
        %3434 = vmatprep.mubr.f32.mxu0 0.0
        %3435 = vmatmul.mubr.f32.gmra.mrb[0].mxu0 %v1385
        %v3436 = vpop.f32.mrb[0].mxu0
        %v3437 = vadd.f32 0.0, %v3436
        %v3438 = vpop.f32.mrb[0].mxu0
        %3439 = vmatprep.mubr.f32.mxu0 0.0
        %3440 = vmatmul.mubr.f32.gmra.mrb[0].mxu0 %v1388
        %v3441 = vpop.f32.mrb[0].mxu0
        %v3442 = vadd.f32 0.0, %v3441
        %v3443 = vpop.f32.mrb[0].mxu0
        %3444 = vmatprep.mubr.f32.mxu0 0.0
        %3445 = vmatmul.mubr.f32.gmra.mrb[0].mxu0 %v1391
        %v3446 = vpop.f32.mrb[0].mxu0
        %v3447 = vadd.f32 0.0, %v3446
        %v3448 = vpop.f32.mrb[0].mxu0
        %3449 = vmatprep.mubr.f32.mxu0 0.0
        %3450 = vmatmul.mubr.f32.gmra.mrb[0].mxu0 %v1394
        %v3451 = vpop.f32.mrb[0].mxu0
        %v3452 = vadd.f32 0.0, %v3451
        %v3453 = vpop.f32.mrb[0].mxu0
        %3454 = vmatprep.mubr.f32.mxu0 0.0
        %3455 = vmatmul.mubr.f32.gmra.mrb[0].mxu0 %v1397
        %v3456 = vpop.f32.mrb[0].mxu0
        %v3457 = vadd.f32 0.0, %v3456
        %v3458 = vpop.f32.mrb[0].mxu0
        %3459 = vmatprep.mubr.f32.mxu0 0.0
        %3460 = vmatmul.mubr.f32.gmra.mrb[0].mxu0 %v1400
        %v3461 = vpop.f32.mrb[0].mxu0
        %v3462 = vadd.f32 0.0, %v3461
        %v3463 = vpop.f32.mrb[0].mxu0
        %3464 = vmatprep.mubr.f32.mxu0 0.0
        %3465 = vmatmul.mubr.f32.gmra.mrb[0].mxu0 %v1403
        %v3466 = vpop.f32.mrb[0].mxu0
        %v3467 = vadd.f32 0.0, %v3466
        %v3468 = vpop.f32.mrb[0].mxu0
        %3469 = vmatprep.mubr.f32.mxu0 0.0
        %3470 = vmatmul.mubr.f32.gmra.mrb[0].mxu0 %v1406
        %v3471 = vpop.f32.mrb[0].mxu0
        %v3472 = vadd.f32 0.0, %v3471
        %v3473 = vpop.f32.mrb[0].mxu0
        %3474 = vmatprep.mubr.f32.mxu0 0.0
        %3475 = vmatmul.mubr.f32.gmra.mrb[0].mxu0 %v1409
        %v3476 = vpop.f32.mrb[0].mxu0
        %v3477 = vadd.f32 0.0, %v3476
        %v3478 = vpop.f32.mrb[0].mxu0
        %3479 = vmatprep.mubr.f32.mxu0 0.0
        %3480 = vmatmul.mubr.f32.gmra.mrb[0].mxu0 %v1412
        %v3481 = vpop.f32.mrb[0].mxu0
        %v3482 = vadd.f32 0.0, %v3481
        %v3483 = vpop.f32.mrb[0].mxu0
        %3484 = vmatprep.mubr.f32.mxu0 0.0
        %3485 = vmatmul.mubr.f32.gmra.mrb[0].mxu0 %v1415
        %v3486 = vpop.f32.mrb[0].mxu0
        %v3487 = vadd.f32 0.0, %v3486
        %v3488 = vpop.f32.mrb[0].mxu0
        %3489 = vmatprep.mubr.f32.mxu0 0.0
        %3490 = vmatmul.mubr.f32.gmra.mrb[0].mxu0 %v1418
        %v3491 = vpop.f32.mrb[0].mxu0
        %v3492 = vadd.f32 0.0, %v3491
        %v3493 = vpop.f32.mrb[0].mxu0
        %3494 = vmatprep.mubr.f32.mxu0 0.0
        %3495 = vmatmul.mubr.f32.gmra.mrb[0].mxu0 %v1421
        %v3496 = vpop.f32.mrb[0].mxu0
        %v3497 = vadd.f32 0.0, %v3496
        %v3498 = vpop.f32.mrb[0].mxu0
        %3499 = vmatprep.mubr.f32.mxu0 0.0
        %3500 = vmatmul.mubr.f32.gmra.mrb[0].mxu0 %v1424
        %v3501 = vpop.f32.mrb[0].mxu0
        %v3502 = vadd.f32 0.0, %v3501
        %v3503 = vpop.f32.mrb[0].mxu0
        %3504 = vmatprep.mubr.f32.mxu0 0.0
        %3505 = vmatmul.mubr.f32.gmra.mrb[0].mxu0 %v1427
        %v3506 = vpop.f32.mrb[0].mxu0
        %v3507 = vadd.f32 0.0, %v3506
        %v3508 = vpop.f32.mrb[0].mxu0
        %3509 = vmatprep.mubr.f32.mxu0 0.0
        %3510 = vmatmul.mubr.f32.gmra.mrb[0].mxu0 %v1430
        %v3511 = vpop.f32.mrb[0].mxu0
        %v3512 = vadd.f32 0.0, %v3511
        %v3513 = vpop.f32.mrb[0].mxu0
        %3514 = vmatprep.mubr.f32.mxu0 0.0
        %3515 = vmatmul.mubr.f32.gmra.mrb[0].mxu0 %v1433
        %v3516 = vpop.f32.mrb[0].mxu0
        %v3517 = vadd.f32 0.0, %v3516
        %v3518 = vpop.f32.mrb[0].mxu0
        %3519 = vmatprep.mubr.f32.mxu0 0.0
        %3520 = vmatmul.mubr.f32.gmra.mrb[0].mxu0 %v1436
        %v3521 = vpop.f32.mrb[0].mxu0
        %v3522 = vadd.f32 0.0, %v3521
        %v3523 = vpop.f32.mrb[0].mxu0
        %3524 = vmatprep.mubr.f32.mxu0 0.0
        %3525 = vmatmul.mubr.f32.gmra.mrb[0].mxu0 %v1439
        %v3526 = vpop.f32.mrb[0].mxu0
        %v3527 = vadd.f32 0.0, %v3526
        %v3528 = vpop.f32.mrb[0].mxu0
        %3529 = vmatprep.mubr.f32.mxu0 0.0
        %3530 = vmatmul.mubr.f32.gmra.mrb[0].mxu0 %v1442
        %v3531 = vpop.f32.mrb[0].mxu0
        %v3532 = vadd.f32 0.0, %v3531
        %v3533 = vpop.f32.mrb[0].mxu0
        %3534 = vmatprep.mubr.f32.mxu0 0.0
        %3535 = vmatmul.mubr.f32.gmra.mrb[0].mxu0 %v1445
        %v3536 = vpop.f32.mrb[0].mxu0
        %v3537 = vadd.f32 0.0, %v3536
        %v3538 = vpop.f32.mrb[0].mxu0
        %3539 = vmatprep.mubr.f32.mxu0 0.0
        %3540 = vmatmul.mubr.f32.gmra.mrb[0].mxu0 %v1448
        %v3541 = vpop.f32.mrb[0].mxu0
        %v3542 = vadd.f32 0.0, %v3541
        %v3543 = vpop.f32.mrb[0].mxu0
        %3544 = vmatprep.mubr.f32.mxu0 0.0
        %3545 = vmatmul.mubr.f32.gmra.mrb[0].mxu0 %v1451
        %v3546 = vpop.f32.mrb[0].mxu0
        %v3547 = vadd.f32 0.0, %v3546
        %v3548 = vpop.f32.mrb[0].mxu0
        %3549 = vmatprep.mubr.f32.mxu0 0.0
        %3550 = vmatmul.mubr.f32.gmra.mrb[0].mxu0 %v1454
        %v3551 = vpop.f32.mrb[0].mxu0
        %v3552 = vadd.f32 0.0, %v3551
        %v3553 = vpop.f32.mrb[0].mxu0
        %3554 = vmatprep.mubr.f32.mxu0 0.0
        %3555 = vmatmul.mubr.f32.gmra.mrb[0].mxu0 %v1457
        %v3556 = vpop.f32.mrb[0].mxu0
        %v3557 = vadd.f32 0.0, %v3556
        %v3558 = vpop.f32.mrb[0].mxu0
        %3559 = vmatprep.mubr.f32.mxu0 0.0
        %3560 = vmatmul.mubr.f32.gmra.mrb[0].mxu0 %v1460
        %v3561 = vpop.f32.mrb[0].mxu0
        %v3562 = vadd.f32 0.0, %v3561
        %v3563 = vpop.f32.mrb[0].mxu0
        %3564 = vmatprep.mubr.f32.mxu0 0.0
        %3565 = vmatmul.mubr.f32.gmra.mrb[0].mxu0 %v1463
        %v3566 = vpop.f32.mrb[0].mxu0
        %v3567 = vadd.f32 0.0, %v3566
        %v3568 = vpop.f32.mrb[0].mxu0
        %3569 = vmatprep.mubr.f32.mxu0 0.0
        %3570 = vmatmul.mubr.f32.gmra.mrb[0].mxu0 %v1466
        %v3571 = vpop.f32.mrb[0].mxu0
        %v3572 = vadd.f32 0.0, %v3571
        %v3573 = vpop.f32.mrb[0].mxu0
        %3574 = vmatprep.mubr.f32.mxu0 0.0
        %3575 = vmatmul.mubr.f32.gmra.mrb[0].mxu0 %v1469
        %v3576 = vpop.f32.mrb[0].mxu0
        %v3577 = vadd.f32 0.0, %v3576
        %v3578 = vpop.f32.mrb[0].mxu0
        %3579 = vmatprep.mubr.f32.mxu0 0.0
        %3580 = vmatmul.mubr.f32.gmra.mrb[0].mxu0 %v1472
        %v3581 = vpop.f32.mrb[0].mxu0
        %v3582 = vadd.f32 0.0, %v3581
        %v3583 = vpop.f32.mrb[0].mxu0
        %3584 = vmatprep.mubr.f32.mxu0 0.0
        %3585 = vmatmul.mubr.f32.gmra.mrb[0].mxu0 %v1475
        %v3586 = vpop.f32.mrb[0].mxu0
        %v3587 = vadd.f32 0.0, %v3586
        %v3588 = vpop.f32.mrb[0].mxu0
        %3589 = vmatprep.mubr.f32.mxu0 0.0
        %3590 = vmatmul.mubr.f32.gmra.mrb[0].mxu0 %v1478
        %v3591 = vpop.f32.mrb[0].mxu0
        %v3592 = vadd.f32 0.0, %v3591
        %v3593 = vpop.f32.mrb[0].mxu0
        %3594 = vmatprep.mubr.f32.mxu0 0.0
        %3595 = vmatmul.mubr.f32.gmra.mrb[0].mxu0 %v1481
        %v3596 = vpop.f32.mrb[0].mxu0
        %v3597 = vadd.f32 0.0, %v3596
        %v3598 = vpop.f32.mrb[0].mxu0
        %3599 = vmatprep.mubr.f32.mxu0 0.0
        %3600 = vmatmul.mubr.f32.gmra.mrb[0].mxu0 %v1484
        %v3601 = vpop.f32.mrb[0].mxu0
        %v3602 = vadd.f32 0.0, %v3601
        %v3603 = vpop.f32.mrb[0].mxu0
        %3604 = vmatprep.mubr.f32.mxu0 0.0
        %3605 = vmatmul.mubr.f32.gmra.mrb[0].mxu0 %v1487
        %v3606 = vpop.f32.mrb[0].mxu0
        %v3607 = vadd.f32 0.0, %v3606
        %v3608 = vpop.f32.mrb[0].mxu0
        %3609 = vmatprep.mubr.f32.mxu0 0.0
        %3610 = vmatmul.mubr.f32.gmra.mrb[0].mxu0 %v1490
        %v3611 = vpop.f32.mrb[0].mxu0
        %v3612 = vadd.f32 0.0, %v3611
        %v3613 = vpop.f32.mrb[0].mxu0
        %3614 = vmatprep.mubr.f32.mxu0 0.0
        %3615 = vmatmul.mubr.f32.gmra.mrb[0].mxu0 %v1493
        %v3616 = vpop.f32.mrb[0].mxu0
        %v3617 = vadd.f32 0.0, %v3616
        %v3618 = vpop.f32.mrb[0].mxu0
        %3619 = vmatprep.mubr.f32.mxu0 0.0
        %3620 = vmatmul.mubr.f32.gmra.mrb[0].mxu0 %v1496
        %v3621 = vpop.f32.mrb[0].mxu0
        %v3622 = vadd.f32 0.0, %v3621
        %v3623 = vpop.f32.mrb[0].mxu0
        %3624 = vmatprep.mubr.f32.mxu0 0.0
        %3625 = vmatmul.mubr.f32.gmra.mrb[0].mxu0 %v1499
        %v3626 = vpop.f32.mrb[0].mxu0
        %v3627 = vadd.f32 0.0, %v3626
        %v3628 = vpop.f32.mrb[0].mxu0
        %3629 = vmatprep.mubr.f32.mxu0 0.0
        %3630 = vmatmul.mubr.f32.gmra.mrb[0].mxu0 %v1502
        %v3631 = vpop.f32.mrb[0].mxu0
        %v3632 = vadd.f32 0.0, %v3631
        %v3633 = vpop.f32.mrb[0].mxu0
        %3634 = vmatprep.mubr.f32.mxu0 0.0
        %3635 = vmatmul.mubr.f32.gmra.mrb[0].mxu0 %v1505
        %v3636 = vpop.f32.mrb[0].mxu0
        %v3637 = vadd.f32 0.0, %v3636
        %v3638 = vpop.f32.mrb[0].mxu0
        %3639 = vmatprep.mubr.f32.mxu0 0.0
        %3640 = vmatmul.mubr.f32.gmra.mrb[0].mxu0 %v1508
        %v3641 = vpop.f32.mrb[0].mxu0
        %v3642 = vadd.f32 0.0, %v3641
        %v3643 = vpop.f32.mrb[0].mxu0
        %3644 = vmatprep.mubr.f32.mxu0 0.0
        %3645 = vmatmul.mubr.f32.gmra.mrb[0].mxu0 %v1511
        %v3646 = vpop.f32.mrb[0].mxu0
        %v3647 = vadd.f32 0.0, %v3646
        %v3648 = vpop.f32.mrb[0].mxu0
        %3649 = vmatprep.mubr.f32.mxu0 0.0
        %3650 = vmatmul.mubr.f32.gmra.mrb[0].mxu0 %v1514
        %v3651 = vpop.f32.mrb[0].mxu0
        %v3652 = vadd.f32 0.0, %v3651
        %v3653 = vpop.f32.mrb[0].mxu0
        %3654 = vmatprep.mubr.f32.mxu0 0.0
        %3655 = vmatmul.mubr.f32.gmra.mrb[0].mxu0 %v1517
        %v3656 = vpop.f32.mrb[0].mxu0
        %v3657 = vadd.f32 0.0, %v3656
        %v3658 = vpop.f32.mrb[0].mxu0
        %3659 = vmatprep.mubr.f32.mxu0 0.0
        %3660 = vmatmul.mubr.f32.gmra.mrb[0].mxu0 %v1520
        %v3661 = vpop.f32.mrb[0].mxu0
        %v3662 = vadd.f32 0.0, %v3661
        %v3663 = vpop.f32.mrb[0].mxu0
        %3664 = vmatprep.mubr.f32.mxu0 0.0
        %3665 = vmatmul.mubr.f32.gmra.mrb[0].mxu0 %v1523
        %v3666 = vpop.f32.mrb[0].mxu0
        %v3667 = vadd.f32 0.0, %v3666
        %v3668 = vpop.f32.mrb[0].mxu0
        %3669 = vmatprep.mubr.f32.mxu0 0.0
        %3670 = vmatmul.mubr.f32.gmra.mrb[0].mxu0 %v1526
        %v3671 = vpop.f32.mrb[0].mxu0
        %v3672 = vadd.f32 0.0, %v3671
        %v3673 = vpop.f32.mrb[0].mxu0
        %3674 = vmatprep.mubr.f32.mxu0 0.0
        %3675 = vmatmul.mubr.f32.gmra.mrb[0].mxu0 %v1529
        %v3676 = vpop.f32.mrb[0].mxu0
        %v3677 = vadd.f32 0.0, %v3676
        %v3678 = vpop.f32.mrb[0].mxu0
        %3679 = vmatprep.mubr.f32.mxu0 0.0
        %3680 = vmatmul.mubr.f32.gmra.mrb[0].mxu0 %v1532
        %v3681 = vpop.f32.mrb[0].mxu0
        %v3682 = vadd.f32 0.0, %v3681
        %v3683 = vpop.f32.mrb[0].mxu0
        %3684 = vmatprep.mubr.f32.mxu0 0.0
        %3685 = vmatmul.mubr.f32.gmra.mrb[0].mxu0 %v1535
        %v3686 = vpop.f32.mrb[0].mxu0
        %v3687 = vadd.f32 0.0, %v3686
        %v3688 = vpop.f32.mrb[0].mxu0
        %3689 = vmatprep.mubr.f32.mxu0 0.0
        %3690 = vmatmul.mubr.f32.gmra.mrb[0].mxu0 %v1538
        %v3691 = vpop.f32.mrb[0].mxu0
        %v3692 = vadd.f32 0.0, %v3691
        %v3693 = vpop.f32.mrb[0].mxu0
        %3694 = vmatprep.mubr.f32.mxu0 0.0
        %3695 = vmatmul.mubr.f32.gmra.mrb[0].mxu0 %v1541
        %v3696 = vpop.f32.mrb[0].mxu0
        %v3697 = vadd.f32 0.0, %v3696
        %v3698 = vpop.f32.mrb[0].mxu0
        %3699 = vmatprep.mubr.f32.mxu0 0.0
        %3700 = vmatmul.mubr.f32.gmra.mrb[0].mxu0 %v1544
        %v3701 = vpop.f32.mrb[0].mxu0
        %v3702 = vadd.f32 0.0, %v3701
        %v3703 = vpop.f32.mrb[0].mxu0
        %3704 = vmatprep.mubr.f32.mxu0 0.0
        %3705 = vmatmul.mubr.f32.gmra.mrb[0].mxu0 %v1547
        %v3706 = vpop.f32.mrb[0].mxu0
        %v3707 = vadd.f32 0.0, %v3706
        %v3708 = vpop.f32.mrb[0].mxu0
        %3709 = vmatprep.mubr.f32.mxu0 0.0
        %3710 = vmatmul.mubr.f32.gmra.mrb[0].mxu0 %v1550
        %v3711 = vpop.f32.mrb[0].mxu0
        %v3712 = vadd.f32 0.0, %v3711
        %v3713 = vpop.f32.mrb[0].mxu0
        %3714 = vmatprep.mubr.f32.mxu0 0.0
        %3715 = vmatmul.mubr.f32.gmra.mrb[0].mxu0 %v1553
        %v3716 = vpop.f32.mrb[0].mxu0
        %v3717 = vadd.f32 0.0, %v3716
        %v3718 = vpop.f32.mrb[0].mxu0
        %3719 = vmatprep.mubr.f32.mxu0 0.0
        %3720 = vmatmul.mubr.f32.gmra.mrb[0].mxu0 %v1556
        %v3721 = vpop.f32.mrb[0].mxu0
        %v3722 = vadd.f32 0.0, %v3721
        %v3723 = vpop.f32.mrb[0].mxu0
        %3724 = vmatprep.mubr.f32.mxu0 0.0
        %3725 = vmatmul.mubr.f32.gmra.mrb[0].mxu0 %v1559
        %v3726 = vpop.f32.mrb[0].mxu0
        %v3727 = vadd.f32 0.0, %v3726
        %v3728 = vpop.f32.mrb[0].mxu0
        %3729 = vmatprep.mubr.f32.mxu0 0.0
        %3730 = vmatmul.mubr.f32.gmra.mrb[0].mxu0 %v1562
        %v3731 = vpop.f32.mrb[0].mxu0
        %v3732 = vadd.f32 0.0, %v3731
        %v3733 = vpop.f32.mrb[0].mxu0
        %3734 = vmatprep.mubr.f32.mxu0 0.0
        %3735 = vmatmul.mubr.f32.gmra.mrb[0].mxu0 %v1565
        %v3736 = vpop.f32.mrb[0].mxu0
        %v3737 = vadd.f32 0.0, %v3736
        %v3738 = vpop.f32.mrb[0].mxu0
        %3739 = vmatprep.mubr.f32.mxu0 0.0
        %3740 = vmatmul.mubr.f32.gmra.mrb[0].mxu0 %v1568
        %v3741 = vpop.f32.mrb[0].mxu0
        %v3742 = vadd.f32 0.0, %v3741
        %v3743 = vpop.f32.mrb[0].mxu0
        %3744 = vmatprep.mubr.f32.mxu0 0.0
        %3745 = vmatmul.mubr.f32.gmra.mrb[0].mxu0 %v1571
        %v3746 = vpop.f32.mrb[0].mxu0
        %v3747 = vadd.f32 0.0, %v3746
        %v3748 = vpop.f32.mrb[0].mxu0
        %3749 = vmatprep.mubr.f32.mxu0 0.0
        %3750 = vmatmul.mubr.f32.gmra.mrb[0].mxu0 %v1574
        %v3751 = vpop.f32.mrb[0].mxu0
        %v3752 = vadd.f32 0.0, %v3751
        %v3753 = vpop.f32.mrb[0].mxu0
        %3754 = vmatprep.mubr.f32.mxu0 0.0
        %3755 = vmatmul.mubr.f32.gmra.mrb[0].mxu0 %v1577
        %v3756 = vpop.f32.mrb[0].mxu0
        %v3757 = vadd.f32 0.0, %v3756
        %v3758 = vpop.f32.mrb[0].mxu0
        %3759 = vmatprep.mubr.f32.mxu0 0.0
        %3760 = vmatmul.mubr.f32.gmra.mrb[0].mxu0 %v1580
        %v3761 = vpop.f32.mrb[0].mxu0
        %v3762 = vadd.f32 0.0, %v3761
        %v3763 = vpop.f32.mrb[0].mxu0
        %3764 = vmatprep.mubr.f32.mxu0 0.0
        %3765 = vmatmul.mubr.f32.gmra.mrb[0].mxu0 %v1583
        %v3766 = vpop.f32.mrb[0].mxu0
        %v3767 = vadd.f32 0.0, %v3766
        %v3768 = vpop.f32.mrb[0].mxu0
        %3769 = vmatprep.mubr.f32.mxu0 0.0
        %3770 = vmatmul.mubr.f32.gmra.mrb[0].mxu0 %v1586
        %v3771 = vpop.f32.mrb[0].mxu0
        %v3772 = vadd.f32 0.0, %v3771
        %v3773 = vpop.f32.mrb[0].mxu0
        %3774 = vmatprep.mubr.f32.mxu0 0.0
        %3775 = vmatmul.mubr.f32.gmra.mrb[0].mxu0 %v1589
        %v3776 = vpop.f32.mrb[0].mxu0
        %v3777 = vadd.f32 0.0, %v3776
        %v3778 = vpop.f32.mrb[0].mxu0
        %3779 = vmatprep.mubr.f32.mxu0 0.0
        %3780 = vmatmul.mubr.f32.gmra.mrb[0].mxu0 %v1592
        %v3781 = vpop.f32.mrb[0].mxu0
        %v3782 = vadd.f32 0.0, %v3781
        %v3783 = vpop.f32.mrb[0].mxu0
        %3784 = vmatprep.mubr.f32.mxu0 0.0
        %3785 = vmatmul.mubr.f32.gmra.mrb[0].mxu0 %v1595
        %v3786 = vpop.f32.mrb[0].mxu0
        %v3787 = vadd.f32 0.0, %v3786
        %v3788 = vpop.f32.mrb[0].mxu0
        %3789 = vmatprep.mubr.f32.mxu0 0.0
        %3790 = vmatmul.mubr.f32.gmra.mrb[0].mxu0 %v1598
        %v3791 = vpop.f32.mrb[0].mxu0
        %v3792 = vadd.f32 0.0, %v3791
        %v3793 = vpop.f32.mrb[0].mxu0
        %3794 = vmatprep.mubr.f32.mxu0 0.0
        %3795 = vmatmul.mubr.f32.gmra.mrb[0].mxu0 %v1601
        %v3796 = vpop.f32.mrb[0].mxu0
        %v3797 = vadd.f32 0.0, %v3796
        %v3798 = vpop.f32.mrb[0].mxu0
        %3799 = vmatprep.mubr.f32.mxu0 0.0
        %3800 = vmatmul.mubr.f32.gmra.mrb[0].mxu0 %v1604
        %v3801 = vpop.f32.mrb[0].mxu0
        %v3802 = vadd.f32 0.0, %v3801
        %v3803 = vpop.f32.mrb[0].mxu0
        %3804 = vmatprep.mubr.f32.mxu0 0.0
        %3805 = vmatmul.mubr.f32.gmra.mrb[0].mxu0 %v1607
        %v3806 = vpop.f32.mrb[0].mxu0
        %v3807 = vadd.f32 0.0, %v3806
        %v3808 = vpop.f32.mrb[0].mxu0
        %3809 = vmatprep.mubr.f32.mxu0 0.0
        %3810 = vmatmul.mubr.f32.gmra.mrb[0].mxu0 %v1610
        %v3811 = vpop.f32.mrb[0].mxu0
        %v3812 = vadd.f32 0.0, %v3811
        %v3813 = vpop.f32.mrb[0].mxu0
        %3814 = vmatprep.mubr.f32.mxu0 0.0
        %3815 = vmatmul.mubr.f32.gmra.mrb[0].mxu0 %v1613
        %v3816 = vpop.f32.mrb[0].mxu0
        %v3817 = vadd.f32 0.0, %v3816
        %v3818 = vpop.f32.mrb[0].mxu0
        %3819 = vmatprep.mubr.f32.mxu0 0.0
        %3820 = vmatmul.mubr.f32.gmra.mrb[0].mxu0 %v1616
        %v3821 = vpop.f32.mrb[0].mxu0
        %v3822 = vadd.f32 0.0, %v3821
        %v3823 = vpop.f32.mrb[0].mxu0
        %3824 = vmatprep.mubr.f32.mxu0 0.0
        %3825 = vmatmul.mubr.f32.gmra.mrb[0].mxu0 %v1619
        %v3826 = vpop.f32.mrb[0].mxu0
        %v3827 = vadd.f32 0.0, %v3826
        %v3828 = vpop.f32.mrb[0].mxu0
        %3829 = vmatprep.mubr.f32.mxu0 0.0
        %3830 = vmatmul.mubr.f32.gmra.mrb[0].mxu0 %v1622
        %v3831 = vpop.f32.mrb[0].mxu0
        %v3832 = vadd.f32 0.0, %v3831
        %v3833 = vpop.f32.mrb[0].mxu0
        %3834 = vmatprep.mubr.f32.mxu0 0.0
        %3835 = vmatmul.mubr.f32.gmra.mrb[0].mxu0 %v1625
        %v3836 = vpop.f32.mrb[0].mxu0
        %v3837 = vadd.f32 0.0, %v3836
        %v3838 = vpop.f32.mrb[0].mxu0
        %3839 = vmatprep.mubr.f32.mxu0 0.0
        %3840 = vmatmul.mubr.f32.gmra.mrb[0].mxu0 %v1628
        %v3841 = vpop.f32.mrb[0].mxu0
        %v3842 = vadd.f32 0.0, %v3841
        %v3843 = vpop.f32.mrb[0].mxu0
        %3844 = vmatprep.mubr.f32.mxu0 0.0
        %3845 = vmatmul.mubr.f32.gmra.mrb[0].mxu0 %v1631
        %v3846 = vpop.f32.mrb[0].mxu0
        %v3847 = vadd.f32 0.0, %v3846
        %v3848 = vpop.f32.mrb[0].mxu0
        %3849 = vmatprep.mubr.f32.mxu0 0.0
        %3850 = vmatmul.mubr.f32.gmra.mrb[0].mxu0 %v1634
        %v3851 = vpop.f32.mrb[0].mxu0
        %v3852 = vadd.f32 0.0, %v3851
        %v3853 = vpop.f32.mrb[0].mxu0
        %3854 = vmatprep.mubr.f32.mxu0 0.0
        %3855 = vmatmul.mubr.f32.gmra.mrb[0].mxu0 %v1637
        %v3856 = vpop.f32.mrb[0].mxu0
        %v3857 = vadd.f32 0.0, %v3856
        %v3858 = vpop.f32.mrb[0].mxu0
        %3859 = vmatprep.mubr.f32.mxu0 0.0
        %3860 = vmatmul.mubr.f32.gmra.mrb[0].mxu0 %v1640
        %v3861 = vpop.f32.mrb[0].mxu0
        %v3862 = vadd.f32 0.0, %v3861
        %v3863 = vpop.f32.mrb[0].mxu0
        %3864 = vmatprep.mubr.f32.mxu0 0.0
        %3865 = vmatmul.mubr.f32.gmra.mrb[0].mxu0 %v1643
        %v3866 = vpop.f32.mrb[0].mxu0
        %v3867 = vadd.f32 0.0, %v3866
        %v3868 = vpop.f32.mrb[0].mxu0
        %3869 = vmatprep.mubr.f32.mxu0 0.0
        %3870 = vmatmul.mubr.f32.gmra.mrb[0].mxu0 %v1646
        %v3871 = vpop.f32.mrb[0].mxu0
        %v3872 = vadd.f32 0.0, %v3871
        %v3873 = vpop.f32.mrb[0].mxu0
        %3874 = vmatprep.mubr.f32.mxu0 0.0
        %3875 = vmatmul.mubr.f32.gmra.mrb[0].mxu0 %v1649
        %v3876 = vpop.f32.mrb[0].mxu0
        %v3877 = vadd.f32 0.0, %v3876
        %v3878 = vpop.f32.mrb[0].mxu0
        %3879 = vmatprep.mubr.f32.mxu0 0.0
        %3880 = vmatmul.mubr.f32.gmra.mrb[0].mxu0 %v1652
        %v3881 = vpop.f32.mrb[0].mxu0
        %v3882 = vadd.f32 0.0, %v3881
        %v3883 = vpop.f32.mrb[0].mxu0
        %3884 = vmatprep.mubr.f32.mxu0 0.0
        %3885 = vmatmul.mubr.f32.gmra.mrb[0].mxu0 %v1655
        %v3886 = vpop.f32.mrb[0].mxu0
        %v3887 = vadd.f32 0.0, %v3886
        %v3888 = vpop.f32.mrb[0].mxu0
        %3889 = vmatprep.mubr.f32.mxu0 0.0
        %3890 = vmatmul.mubr.f32.gmra.mrb[0].mxu0 %v1658
        %v3891 = vpop.f32.mrb[0].mxu0
        %v3892 = vadd.f32 0.0, %v3891
        %v3893 = vpop.f32.mrb[0].mxu0
        %3894 = vmatprep.mubr.f32.mxu0 0.0
        %3895 = vmatmul.mubr.f32.gmra.mrb[0].mxu0 %v1661
        %v3896 = vpop.f32.mrb[0].mxu0
        %v3897 = vadd.f32 0.0, %v3896
        %v3898 = vpop.f32.mrb[0].mxu0
        %3899 = vmatprep.mubr.f32.mxu0 0.0
        %3900 = vmatmul.mubr.f32.gmra.mrb[0].mxu0 %v1664
        %v3901 = vpop.f32.mrb[0].mxu0
        %v3902 = vadd.f32 0.0, %v3901
        %v3903 = vpop.f32.mrb[0].mxu0
        %3904 = vmatprep.mubr.f32.mxu0 0.0
        %3905 = vmatmul.mubr.f32.gmra.mrb[0].mxu0 %v1667
        %v3906 = vpop.f32.mrb[0].mxu0
        %v3907 = vadd.f32 0.0, %v3906
        %v3908 = vpop.f32.mrb[0].mxu0
        %3909 = vmatprep.mubr.f32.mxu0 0.0
        %3910 = vmatmul.mubr.f32.gmra.mrb[0].mxu0 %v1670
        %v3911 = vpop.f32.mrb[0].mxu0
        %v3912 = vadd.f32 0.0, %v3911
        %v3913 = vpop.f32.mrb[0].mxu0
        %3914 = vmatprep.mubr.f32.mxu0 0.0
        %3915 = vmatmul.mubr.f32.gmra.mrb[0].mxu0 %v1673
        %v3916 = vpop.f32.mrb[0].mxu0
        %v3917 = vadd.f32 0.0, %v3916
        %v3918 = vpop.f32.mrb[0].mxu0
        %3919 = vmatprep.mubr.f32.mxu0 0.0
        %3920 = vmatmul.mubr.f32.gmra.mrb[0].mxu0 %v1676
        %v3921 = vpop.f32.mrb[0].mxu0
        %v3922 = vadd.f32 0.0, %v3921
        %v3923 = vpop.f32.mrb[0].mxu0
        %3924 = vmatprep.mubr.f32.mxu0 0.0
        %3925 = vmatmul.mubr.f32.gmra.mrb[0].mxu0 %v1679
        %v3926 = vpop.f32.mrb[0].mxu0
        %v3927 = vadd.f32 0.0, %v3926
        %v3928 = vpop.f32.mrb[0].mxu0
        %3929 = vmatprep.mubr.f32.mxu0 0.0
        %3930 = vmatmul.mubr.f32.gmra.mrb[0].mxu0 %v1682
        %v3931 = vpop.f32.mrb[0].mxu0
        %v3932 = vadd.f32 0.0, %v3931
        %v3933 = vpop.f32.mrb[0].mxu0
        %3934 = vmatprep.mubr.f32.mxu0 0.0
        %3935 = vmatmul.mubr.f32.gmra.mrb[0].mxu0 %v1685
        %v3936 = vpop.f32.mrb[0].mxu0
        %v3937 = vadd.f32 0.0, %v3936
        %v3938 = vpop.f32.mrb[0].mxu0
        %3939 = vmatprep.mubr.f32.mxu0 0.0
        %3940 = vmatmul.mubr.f32.gmra.mrb[0].mxu0 %v1688
        %v3941 = vpop.f32.mrb[0].mxu0
        %v3942 = vadd.f32 0.0, %v3941
        %v3943 = vpop.f32.mrb[0].mxu0
        %3944 = vmatprep.mubr.f32.mxu0 0.0
        %3945 = vmatmul.mubr.f32.gmra.mrb[0].mxu0 %v1691
        %v3946 = vpop.f32.mrb[0].mxu0
        %v3947 = vadd.f32 0.0, %v3946
        %v3948 = vpop.f32.mrb[0].mxu0
        %3949 = vmatprep.mubr.f32.mxu0 0.0
        %3950 = vmatmul.mubr.f32.gmra.mrb[0].mxu0 %v1694
        %v3951 = vpop.f32.mrb[0].mxu0
        %v3952 = vadd.f32 0.0, %v3951
        %v3953 = vpop.f32.mrb[0].mxu0
        %3954 = vmatprep.mubr.f32.mxu0 0.0
        %3955 = vmatmul.mubr.f32.gmra.mrb[0].mxu0 %v1697
        %v3956 = vpop.f32.mrb[0].mxu0
        %v3957 = vadd.f32 0.0, %v3956
        %v3958 = vpop.f32.mrb[0].mxu0
        %3959 = vmatprep.mubr.f32.mxu0 0.0
        %3960 = vmatmul.mubr.f32.gmra.mrb[0].mxu0 %v1700
        %v3961 = vpop.f32.mrb[0].mxu0
        %v3962 = vadd.f32 0.0, %v3961
        %v3963 = vpop.f32.mrb[0].mxu0
        %3964 = vmatprep.mubr.f32.mxu0 0.0
        %3965 = vmatmul.mubr.f32.gmra.mrb[0].mxu0 %v1703
        %v3966 = vpop.f32.mrb[0].mxu0
        %v3967 = vadd.f32 0.0, %v3966
        %v3968 = vpop.f32.mrb[0].mxu0
        %3969 = vmatprep.mubr.f32.mxu0 0.0
        %3970 = vmatmul.mubr.f32.gmra.mrb[0].mxu0 %v1706
        %v3971 = vpop.f32.mrb[0].mxu0
        %v3972 = vadd.f32 0.0, %v3971
        %v3973 = vpop.f32.mrb[0].mxu0
        %3974 = vmatprep.mubr.f32.mxu0 0.0
        %3975 = vmatmul.mubr.f32.gmra.mrb[0].mxu0 %v1709
        %v3976 = vpop.f32.mrb[0].mxu0
        %v3977 = vadd.f32 0.0, %v3976
        %v3978 = vpop.f32.mrb[0].mxu0
        %3979 = vmatprep.mubr.f32.mxu0 0.0
        %3980 = vmatmul.mubr.f32.gmra.mrb[0].mxu0 %v1712
        %v3981 = vpop.f32.mrb[0].mxu0
        %v3982 = vadd.f32 0.0, %v3981
        %v3983 = vpop.f32.mrb[0].mxu0
        %3984 = vmatprep.mubr.f32.mxu0 0.0
        %3985 = vmatmul.mubr.f32.gmra.mrb[0].mxu0 %v1715
        %v3986 = vpop.f32.mrb[0].mxu0
        %v3987 = vadd.f32 0.0, %v3986
        %v3988 = vpop.f32.mrb[0].mxu0
        %3989 = vmatprep.mubr.f32.mxu0 0.0
        %3990 = vmatmul.mubr.f32.gmra.mrb[0].mxu0 %v1718
        %v3991 = vpop.f32.mrb[0].mxu0
        %v3992 = vadd.f32 0.0, %v3991
        %v3993 = vpop.f32.mrb[0].mxu0
        %3994 = vmatprep.mubr.f32.mxu0 0.0
        %3995 = vmatmul.mubr.f32.gmra.mrb[0].mxu0 %v1721
        %v3996 = vpop.f32.mrb[0].mxu0
        %v3997 = vadd.f32 0.0, %v3996
        %v3998 = vpop.f32.mrb[0].mxu0
        %3999 = vmatprep.mubr.f32.mxu0 0.0
        %4000 = vmatmul.mubr.f32.gmra.mrb[0].mxu0 %v1724
        %v4001 = vpop.f32.mrb[0].mxu0
        %v4002 = vadd.f32 0.0, %v4001
        %v4003 = vpop.f32.mrb[0].mxu0
        %4004 = vmatprep.mubr.f32.mxu0 0.0
        %4005 = vmatmul.mubr.f32.gmra.mrb[0].mxu0 %v1727
        %v4006 = vpop.f32.mrb[0].mxu0
        %v4007 = vadd.f32 0.0, %v4006
        %v4008 = vpop.f32.mrb[0].mxu0
        %4009 = vmatprep.mubr.f32.mxu0 0.0
        %4010 = vmatmul.mubr.f32.gmra.mrb[0].mxu0 %v1730
        %v4011 = vpop.f32.mrb[0].mxu0
        %v4012 = vadd.f32 0.0, %v4011
        %v4013 = vpop.f32.mrb[0].mxu0
        %4014 = vmatprep.mubr.f32.mxu0 0.0
        %4015 = vmatmul.mubr.f32.gmra.mrb[0].mxu0 %v1733
        %v4016 = vpop.f32.mrb[0].mxu0
        %v4017 = vadd.f32 0.0, %v4016
        %v4018 = vpop.f32.mrb[0].mxu0
        %4019 = vmatprep.mubr.f32.mxu0 0.0
        %4020 = vmatmul.mubr.f32.gmra.mrb[0].mxu0 %v1736
        %v4021 = vpop.f32.mrb[0].mxu0
        %v4022 = vadd.f32 0.0, %v4021
        %v4023 = vpop.f32.mrb[0].mxu0
        %4024 = vmatprep.mubr.f32.mxu0 0.0
        %4025 = vmatmul.mubr.f32.gmra.mrb[0].mxu0 %v1739
        %v4026 = vpop.f32.mrb[0].mxu0
        %v4027 = vadd.f32 0.0, %v4026
        %v4028 = vpop.f32.mrb[0].mxu0
        %4029 = vmatprep.mubr.f32.mxu0 0.0
        %4030 = vmatmul.mubr.f32.gmra.mrb[0].mxu0 %v1742
        %v4031 = vpop.f32.mrb[0].mxu0
        %v4032 = vadd.f32 0.0, %v4031
        %v4033 = vpop.f32.mrb[0].mxu0
        %4034 = vmatprep.mubr.f32.mxu0 0.0
        %4035 = vmatmul.mubr.f32.gmra.mrb[0].mxu0 %v1745
        %v4036 = vpop.f32.mrb[0].mxu0
        %v4037 = vadd.f32 0.0, %v4036
        %v4038 = vpop.f32.mrb[0].mxu0
        %4039 = vmatprep.mubr.f32.mxu0 0.0
        %4040 = vmatmul.mubr.f32.gmra.mrb[0].mxu0 %v1748
        %v4041 = vpop.f32.mrb[0].mxu0
        %v4042 = vadd.f32 0.0, %v4041
        %v4043 = vpop.f32.mrb[0].mxu0
        %4044 = vmatprep.mubr.f32.mxu0 0.0
        %4045 = vmatmul.mubr.f32.gmra.mrb[0].mxu0 %v1751
        %v4046 = vpop.f32.mrb[0].mxu0
        %v4047 = vadd.f32 0.0, %v4046
        %v4048 = vpop.f32.mrb[0].mxu0
        %4049 = vmatprep.mubr.f32.mxu0 0.0
        %4050 = vmatmul.mubr.f32.gmra.mrb[0].mxu0 %v1754
        %v4051 = vpop.f32.mrb[0].mxu0
        %v4052 = vadd.f32 0.0, %v4051
        %v4053 = vpop.f32.mrb[0].mxu0
        %4054 = vmatprep.mubr.f32.mxu0 0.0
        %4055 = vmatmul.mubr.f32.gmra.mrb[0].mxu0 %v1757
        %v4056 = vpop.f32.mrb[0].mxu0
        %v4057 = vadd.f32 0.0, %v4056
        %v4058 = vpop.f32.mrb[0].mxu0
        %4059 = vmatprep.mubr.f32.mxu0 0.0
        %4060 = vmatmul.mubr.f32.gmra.mrb[0].mxu0 %v1760
        %v4061 = vpop.f32.mrb[0].mxu0
        %v4062 = vadd.f32 0.0, %v4061
        %v4063 = vpop.f32.mrb[0].mxu0
        %4064 = vmatprep.mubr.f32.mxu0 0.0
        %4065 = vmatmul.mubr.f32.gmra.mrb[0].mxu0 %v1763
        %v4066 = vpop.f32.mrb[0].mxu0
        %v4067 = vadd.f32 0.0, %v4066
        %v4068 = vpop.f32.mrb[0].mxu0
        %4069 = vmatprep.mubr.f32.mxu0 0.0
        %4070 = vmatmul.mubr.f32.gmra.mrb[0].mxu0 %v1766
        %v4071 = vpop.f32.mrb[0].mxu0
        %v4072 = vadd.f32 0.0, %v4071
        %v4073 = vpop.f32.mrb[0].mxu0
        %4074 = vmatprep.mubr.f32.mxu0 0.0
        %4075 = vmatmul.mubr.f32.gmra.mrb[0].mxu0 %v1769
        %v4076 = vpop.f32.mrb[0].mxu0
        %v4077 = vadd.f32 0.0, %v4076
        %v4078 = vpop.f32.mrb[0].mxu0
        %4079 = vmatprep.mubr.f32.mxu0 0.0
        %4080 = vmatmul.mubr.f32.gmra.mrb[0].mxu0 %v1772
        %v4081 = vpop.f32.mrb[0].mxu0
        %v4082 = vadd.f32 0.0, %v4081
        %v4083 = vpop.f32.mrb[0].mxu0
        %4084 = vmatprep.mubr.f32.mxu0 0.0
        %4085 = vmatmul.mubr.f32.gmra.mrb[0].mxu0 %v1775
        %v4086 = vpop.f32.mrb[0].mxu0
        %v4087 = vadd.f32 0.0, %v4086
        %v4088 = vpop.f32.mrb[0].mxu0
        %4089 = vmatprep.mubr.f32.mxu0 0.0
        %4090 = vmatmul.mubr.f32.gmra.mrb[0].mxu0 %v1778
        %v4091 = vpop.f32.mrb[0].mxu0
        %v4092 = vadd.f32 0.0, %v4091
        %v4093 = vpop.f32.mrb[0].mxu0
        %4094 = vmatprep.mubr.f32.mxu0 0.0
        %4095 = vmatmul.mubr.f32.gmra.mrb[0].mxu0 %v1781
        %v4096 = vpop.f32.mrb[0].mxu0
        %v4097 = vadd.f32 0.0, %v4096
        %v4098 = vpop.f32.mrb[0].mxu0
        %4099 = vmatprep.mubr.f32.mxu0 0.0
        %4100 = vmatmul.mubr.f32.gmra.mrb[0].mxu0 %v1784
        %v4101 = vpop.f32.mrb[0].mxu0
        %v4102 = vadd.f32 0.0, %v4101
        %v4103 = vpop.f32.mrb[0].mxu0
        %4104 = vmatprep.mubr.f32.mxu0 0.0
        %4105 = vmatmul.mubr.f32.gmra.mrb[0].mxu0 %v1787
        %v4106 = vpop.f32.mrb[0].mxu0
        %v4107 = vadd.f32 0.0, %v4106
        %v4108 = vpop.f32.mrb[0].mxu0
        %4109 = vmatprep.mubr.f32.mxu0 0.0
        %4110 = vmatmul.mubr.f32.gmra.mrb[0].mxu0 %v1790
        %v4111 = vpop.f32.mrb[0].mxu0
        %v4112 = vadd.f32 0.0, %v4111
        %v4113 = vpop.f32.mrb[0].mxu0
        %4114 = vmatprep.mubr.f32.mxu0 0.0
        %4115 = vmatmul.mubr.f32.gmra.mrb[0].mxu0 %v1793
        %v4116 = vpop.f32.mrb[0].mxu0
        %v4117 = vadd.f32 0.0, %v4116
        %v4118 = vpop.f32.mrb[0].mxu0
        %4119 = vmatprep.mubr.f32.mxu0 0.0
        %4120 = vmatmul.mubr.f32.gmra.mrb[0].mxu0 %v1796
        %v4121 = vpop.f32.mrb[0].mxu0
        %v4122 = vadd.f32 0.0, %v4121
        %v4123 = vpop.f32.mrb[0].mxu0
        %4124 = vmatprep.mubr.f32.mxu0 0.0
        %4125 = vmatmul.mubr.f32.gmra.mrb[0].mxu0 %v1799
        %v4126 = vpop.f32.mrb[0].mxu0
        %v4127 = vadd.f32 0.0, %v4126
        %v4128 = vpop.f32.mrb[0].mxu0
        %4129 = vmatprep.mubr.f32.mxu0 0.0
        %4130 = vmatmul.mubr.f32.gmra.mrb[0].mxu0 %v1802
        %v4131 = vpop.f32.mrb[0].mxu0
        %v4132 = vadd.f32 0.0, %v4131
        %v4133 = vpop.f32.mrb[0].mxu0
        %4134 = vmatprep.mubr.f32.mxu0 0.0
        %4135 = vmatmul.mubr.f32.gmra.mrb[0].mxu0 %v1805
        %v4136 = vpop.f32.mrb[0].mxu0
        %v4137 = vadd.f32 0.0, %v4136
        %v4138 = vpop.f32.mrb[0].mxu0
        %4139 = vmatprep.mubr.f32.mxu0 0.0
        %4140 = vmatmul.mubr.f32.gmra.mrb[0].mxu0 %v1808
        %v4141 = vpop.f32.mrb[0].mxu0
        %v4142 = vadd.f32 0.0, %v4141
        %v4143 = vpop.f32.mrb[0].mxu0
        %4144 = vmatprep.mubr.f32.mxu0 0.0
        %4145 = vmatmul.mubr.f32.gmra.mrb[0].mxu0 %v1811
        %v4146 = vpop.f32.mrb[0].mxu0
        %v4147 = vadd.f32 0.0, %v4146
        %v4148 = vpop.f32.mrb[0].mxu0
        %4149 = vmatprep.mubr.f32.mxu0 0.0
        %4150 = vmatmul.mubr.f32.gmra.mrb[0].mxu0 %v1814
        %v4151 = vpop.f32.mrb[0].mxu0
        %v4152 = vadd.f32 0.0, %v4151
        %v4153 = vpop.f32.mrb[0].mxu0
        %4154 = vmatprep.mubr.f32.mxu0 0.0
        %4155 = vmatmul.mubr.f32.gmra.mrb[0].mxu0 %v1817
        %v4156 = vpop.f32.mrb[0].mxu0
        %v4157 = vadd.f32 0.0, %v4156
        %v4158 = vpop.f32.mrb[0].mxu0
        %4159 = vmatprep.mubr.f32.mxu0 0.0
        %4160 = vmatmul.mubr.f32.gmra.mrb[0].mxu0 %v1820
        %v4161 = vpop.f32.mrb[0].mxu0
        %v4162 = vadd.f32 0.0, %v4161
        %v4163 = vpop.f32.mrb[0].mxu0
        %4164 = vmatprep.mubr.f32.mxu0 0.0
        %4165 = vmatmul.mubr.f32.gmra.mrb[0].mxu0 %v1823
        %v4166 = vpop.f32.mrb[0].mxu0
        %v4167 = vadd.f32 0.0, %v4166
        %v4168 = vpop.f32.mrb[0].mxu0
        %4169 = vmatprep.mubr.f32.mxu0 0.0
        %4170 = vmatmul.mubr.f32.gmra.mrb[0].mxu0 %v1826
        %v4171 = vpop.f32.mrb[0].mxu0
        %v4172 = vadd.f32 0.0, %v4171
        %v4173 = vpop.f32.mrb[0].mxu0
        %4174 = vmatprep.mubr.f32.mxu0 0.0
        %4175 = vmatmul.mubr.f32.gmra.mrb[0].mxu0 %v1829
        %v4176 = vpop.f32.mrb[0].mxu0
        %v4177 = vadd.f32 0.0, %v4176
        %v4178 = vpop.f32.mrb[0].mxu0
        %4179 = vmatprep.mubr.f32.mxu0 0.0
        %4180 = vmatmul.mubr.f32.gmra.mrb[0].mxu0 %v1832
        %v4181 = vpop.f32.mrb[0].mxu0
        %v4182 = vadd.f32 0.0, %v4181
        %v4183 = vpop.f32.mrb[0].mxu0
        %4184 = vmatprep.mubr.f32.mxu0 0.0
        %4185 = vmatmul.mubr.f32.gmra.mrb[0].mxu0 %v1835
        %v4186 = vpop.f32.mrb[0].mxu0
        %v4187 = vadd.f32 0.0, %v4186
        %v4188 = vpop.f32.mrb[0].mxu0
        %4189 = vmatprep.mubr.f32.mxu0 0.0
        %4190 = vmatmul.mubr.f32.gmra.mrb[0].mxu0 %v1838
        %v4191 = vpop.f32.mrb[0].mxu0
        %v4192 = vadd.f32 0.0, %v4191
        %v4193 = vpop.f32.mrb[0].mxu0
        %4194 = vmatprep.mubr.f32.mxu0 0.0
        %4195 = vmatmul.mubr.f32.gmra.mrb[0].mxu0 %v1841
        %v4196 = vpop.f32.mrb[0].mxu0
        %v4197 = vadd.f32 0.0, %v4196
        %v4198 = vpop.f32.mrb[0].mxu0
        %4199 = vmatprep.mubr.f32.mxu0 0.0
        %4200 = vmatmul.mubr.f32.gmra.mrb[0].mxu0 %v1844
        %v4201 = vpop.f32.mrb[0].mxu0
        %v4202 = vadd.f32 0.0, %v4201
        %v4203 = vpop.f32.mrb[0].mxu0
        %4204 = vmatprep.mubr.f32.mxu0 0.0
        %4205 = vmatmul.mubr.f32.gmra.mrb[0].mxu0 %v1847
        %v4206 = vpop.f32.mrb[0].mxu0
        %v4207 = vadd.f32 0.0, %v4206
        %v4208 = vpop.f32.mrb[0].mxu0
        %4209 = vmatprep.mubr.f32.mxu0 0.0
        %4210 = vmatmul.mubr.f32.gmra.mrb[0].mxu0 %v1850
        %v4211 = vpop.f32.mrb[0].mxu0
        %v4212 = vadd.f32 0.0, %v4211
        %v4213 = vpop.f32.mrb[0].mxu0
        %4214 = vmatprep.mubr.f32.mxu0 0.0
        %4215 = vmatmul.mubr.f32.gmra.mrb[0].mxu0 %v1853
        %v4216 = vpop.f32.mrb[0].mxu0
        %v4217 = vadd.f32 0.0, %v4216
        %v4218 = vpop.f32.mrb[0].mxu0
        %4219 = vmatprep.mubr.f32.mxu0 0.0
        %4220 = vmatmul.mubr.f32.gmra.mrb[0].mxu0 %v1856
        %v4221 = vpop.f32.mrb[0].mxu0
        %v4222 = vadd.f32 0.0, %v4221
        %v4223 = vpop.f32.mrb[0].mxu0
        %4224 = vmatprep.mubr.f32.mxu0 0.0
        %4225 = vmatmul.mubr.f32.gmra.mrb[0].mxu0 %v1859
        %v4226 = vpop.f32.mrb[0].mxu0
        %v4227 = vadd.f32 0.0, %v4226
        %v4228 = vpop.f32.mrb[0].mxu0
        %4229 = vmatprep.mubr.f32.mxu0 0.0
        %4230 = vmatmul.mubr.f32.gmra.mrb[0].mxu0 %v1862
        %v4231 = vpop.f32.mrb[0].mxu0
        %v4232 = vadd.f32 0.0, %v4231
        %v4233 = vpop.f32.mrb[0].mxu0
        %4234 = vmatprep.mubr.f32.mxu0 0.0
        %4235 = vmatmul.mubr.f32.gmra.mrb[0].mxu0 %v1865
        %v4236 = vpop.f32.mrb[0].mxu0
        %v4237 = vadd.f32 0.0, %v4236
        %v4238 = vpop.f32.mrb[0].mxu0
        %4239 = vmatprep.mubr.f32.mxu0 0.0
        %4240 = vmatmul.mubr.f32.gmra.mrb[0].mxu0 %v1868
        %v4241 = vpop.f32.mrb[0].mxu0
        %v4242 = vadd.f32 0.0, %v4241
        %v4243 = vpop.f32.mrb[0].mxu0
        %4244 = vmatprep.mubr.f32.mxu0 0.0
        %4245 = vmatmul.mubr.f32.gmra.mrb[0].mxu0 %v1871
        %v4246 = vpop.f32.mrb[0].mxu0
        %v4247 = vadd.f32 0.0, %v4246
        %v4248 = vpop.f32.mrb[0].mxu0
        %4249 = vmatprep.mubr.f32.mxu0 0.0
        %4250 = vmatmul.mubr.f32.gmra.mrb[0].mxu0 %v1874
        %v4251 = vpop.f32.mrb[0].mxu0
        %v4252 = vadd.f32 0.0, %v4251
        %v4253 = vpop.f32.mrb[0].mxu0
        %4254 = vmatprep.mubr.f32.mxu0 0.0
        %4255 = vmatmul.mubr.f32.gmra.mrb[0].mxu0 %v1877
        %v4256 = vpop.f32.mrb[0].mxu0
        %v4257 = vadd.f32 0.0, %v4256
        %v4258 = vpop.f32.mrb[0].mxu0
        %4259 = vmatprep.mubr.f32.mxu0 0.0
        %4260 = vmatmul.mubr.f32.gmra.mrb[0].mxu0 %v1880
        %v4261 = vpop.f32.mrb[0].mxu0
        %v4262 = vadd.f32 0.0, %v4261
        %v4263 = vpop.f32.mrb[0].mxu0
        %4264 = vmatprep.mubr.f32.mxu0 0.0
        %4265 = vmatmul.mubr.f32.gmra.mrb[0].mxu0 %v1883
        %v4266 = vpop.f32.mrb[0].mxu0
        %v4267 = vadd.f32 0.0, %v4266
        %v4268 = vpop.f32.mrb[0].mxu0
        %4269 = vmatprep.mubr.f32.mxu0 0.0
        %4270 = vmatmul.mubr.f32.gmra.mrb[0].mxu0 %v1886
        %v4271 = vpop.f32.mrb[0].mxu0
        %v4272 = vadd.f32 0.0, %v4271
        %v4273 = vpop.f32.mrb[0].mxu0
        %4274 = vmatprep.mubr.f32.mxu0 0.0
        %4275 = vmatmul.mubr.f32.gmra.mrb[0].mxu0 %v1889
        %v4276 = vpop.f32.mrb[0].mxu0
        %v4277 = vadd.f32 0.0, %v4276
        %v4278 = vpop.f32.mrb[0].mxu0
        %4279 = vmatprep.mubr.f32.mxu0 0.0
        %4280 = vmatmul.mubr.f32.gmra.mrb[0].mxu0 %v1892
        %v4281 = vpop.f32.mrb[0].mxu0
        %v4282 = vadd.f32 0.0, %v4281
        %v4283 = vpop.f32.mrb[0].mxu0
        %4284 = vmatprep.mubr.f32.mxu0 0.0
        %4285 = vmatmul.mubr.f32.gmra.mrb[0].mxu0 %v1895
        %v4286 = vpop.f32.mrb[0].mxu0
        %v4287 = vadd.f32 0.0, %v4286
        %v4288 = vpop.f32.mrb[0].mxu0
        %4289 = vmatprep.mubr.f32.mxu0 0.0
        %4290 = vmatmul.mubr.f32.gmra.mrb[0].mxu0 %v1898
        %v4291 = vpop.f32.mrb[0].mxu0
        %v4292 = vadd.f32 0.0, %v4291
        %v4293 = vpop.f32.mrb[0].mxu0
        %4294 = vmatprep.mubr.f32.mxu0 0.0
        %4295 = vmatmul.mubr.f32.gmra.mrb[0].mxu0 %v1901
        %v4296 = vpop.f32.mrb[0].mxu0
        %v4297 = vadd.f32 0.0, %v4296
        %v4298 = vpop.f32.mrb[0].mxu0
        %4299 = vmatprep.mubr.f32.mxu0 0.0
        %4300 = vmatmul.mubr.f32.gmra.mrb[0].mxu0 %v1904
        %v4301 = vpop.f32.mrb[0].mxu0
        %v4302 = vadd.f32 0.0, %v4301
        %v4303 = vpop.f32.mrb[0].mxu0
        %4304 = vmatprep.mubr.f32.mxu0 0.0
        %4305 = vmatmul.mubr.f32.gmra.mrb[0].mxu0 %v1907
        %v4306 = vpop.f32.mrb[0].mxu0
        %v4307 = vadd.f32 0.0, %v4306
        %v4308 = vpop.f32.mrb[0].mxu0
        %4309 = vmatprep.mubr.f32.mxu0 0.0
        %4310 = vmatmul.mubr.f32.gmra.mrb[0].mxu0 %v1910
        %v4311 = vpop.f32.mrb[0].mxu0
        %v4312 = vadd.f32 0.0, %v4311
        %v4313 = vpop.f32.mrb[0].mxu0
        %4314 = vmatprep.mubr.f32.mxu0 0.0
        %4315 = vmatmul.mubr.f32.gmra.mrb[0].mxu0 %v1913
        %v4316 = vpop.f32.mrb[0].mxu0
        %v4317 = vadd.f32 0.0, %v4316
        %v4318 = vpop.f32.mrb[0].mxu0
        %4319 = vmatprep.mubr.f32.mxu0 0.0
        %4320 = vmatmul.mubr.f32.gmra.mrb[0].mxu0 %v1916
        %v4321 = vpop.f32.mrb[0].mxu0
        %v4322 = vadd.f32 0.0, %v4321
        %v4323 = vpop.f32.mrb[0].mxu0
        %4324 = vmatprep.mubr.f32.mxu0 0.0
        %4325 = vmatmul.mubr.f32.gmra.mrb[0].mxu0 %v1919
        %v4326 = vpop.f32.mrb[0].mxu0
        %v4327 = vadd.f32 0.0, %v4326
        %v4328 = vpop.f32.mrb[0].mxu0
        %4329 = vmatprep.mubr.f32.mxu0 0.0
        %4330 = vmatmul.mubr.f32.gmra.mrb[0].mxu0 %v1922
        %v4331 = vpop.f32.mrb[0].mxu0
        %v4332 = vadd.f32 0.0, %v4331
        %v4333 = vpop.f32.mrb[0].mxu0
        %4334 = vmatprep.mubr.f32.mxu0 0.0
        %4335 = vmatmul.mubr.f32.gmra.mrb[0].mxu0 %v1925
        %v4336 = vpop.f32.mrb[0].mxu0
        %v4337 = vadd.f32 0.0, %v4336
        %v4338 = vpop.f32.mrb[0].mxu0
        %4339 = vmatprep.mubr.f32.mxu0 0.0
        %4340 = vmatmul.mubr.f32.gmra.mrb[0].mxu0 %v1928
        %v4341 = vpop.f32.mrb[0].mxu0
        %v4342 = vadd.f32 0.0, %v4341
        %v4343 = vpop.f32.mrb[0].mxu0
        %4344 = vmatprep.mubr.f32.mxu0 0.0
        %4345 = vmatmul.mubr.f32.gmra.mrb[0].mxu0 %v1931
        %v4346 = vpop.f32.mrb[0].mxu0
        %v4347 = vadd.f32 0.0, %v4346
        %v4348 = vpop.f32.mrb[0].mxu0
        %4349 = vmatprep.mubr.f32.mxu0 0.0
        %4350 = vmatmul.mubr.f32.gmra.mrb[0].mxu0 %v1934
        %v4351 = vpop.f32.mrb[0].mxu0
        %v4352 = vadd.f32 0.0, %v4351
        %v4353 = vpop.f32.mrb[0].mxu0
        %4354 = vmatprep.mubr.f32.mxu0 0.0
        %4355 = vmatmul.mubr.f32.gmra.mrb[0].mxu0 %v1937
        %v4356 = vpop.f32.mrb[0].mxu0
        %v4357 = vadd.f32 0.0, %v4356
        %v4358 = vpop.f32.mrb[0].mxu0
        %4359 = vmatprep.mubr.f32.mxu0 0.0
        %4360 = vmatmul.mubr.f32.gmra.mrb[0].mxu0 %v1940
        %v4361 = vpop.f32.mrb[0].mxu0
        %v4362 = vadd.f32 0.0, %v4361
        %v4363 = vpop.f32.mrb[0].mxu0
        %4364 = vmatprep.mubr.f32.mxu0 0.0
        %4365 = vmatmul.mubr.f32.gmra.mrb[0].mxu0 %v1943
        %v4366 = vpop.f32.mrb[0].mxu0
        %v4367 = vadd.f32 0.0, %v4366
        %v4368 = vpop.f32.mrb[0].mxu0
        %4369 = vmatprep.mubr.f32.mxu0 0.0
        %4370 = vmatmul.mubr.f32.gmra.mrb[0].mxu0 %v1946
        %v4371 = vpop.f32.mrb[0].mxu0
        %v4372 = vadd.f32 0.0, %v4371
        %v4373 = vpop.f32.mrb[0].mxu0
        %4374 = vmatprep.mubr.f32.mxu0 0.0
        %4375 = vmatmul.mubr.f32.gmra.mrb[0].mxu0 %v1949
        %v4376 = vpop.f32.mrb[0].mxu0
        %v4377 = vadd.f32 0.0, %v4376
        %v4378 = vpop.f32.mrb[0].mxu0
        %4379 = vmatprep.mubr.f32.mxu0 0.0
        %4380 = vmatmul.mubr.f32.gmra.mrb[0].mxu0 %v1952
        %v4381 = vpop.f32.mrb[0].mxu0
        %v4382 = vadd.f32 0.0, %v4381
        %v4383 = vpop.f32.mrb[0].mxu0
        %4384 = vmatprep.mubr.f32.mxu0 0.0
        %4385 = vmatmul.mubr.f32.gmra.mrb[0].mxu0 %v1955
        %v4386 = vpop.f32.mrb[0].mxu0
        %v4387 = vadd.f32 0.0, %v4386
        %v4388 = vpop.f32.mrb[0].mxu0
        %4389 = vmatprep.mubr.f32.mxu0 0.0
        %4390 = vmatmul.mubr.f32.gmra.mrb[0].mxu0 %v1958
        %v4391 = vpop.f32.mrb[0].mxu0
        %v4392 = vadd.f32 0.0, %v4391
        %v4393 = vpop.f32.mrb[0].mxu0
        %4394 = vmatprep.mubr.f32.mxu0 0.0
        %4395 = vmatmul.mubr.f32.gmra.mrb[0].mxu0 %v1961
        %v4396 = vpop.f32.mrb[0].mxu0
        %v4397 = vadd.f32 0.0, %v4396
        %v4398 = vpop.f32.mrb[0].mxu0
        %4399 = vmatprep.mubr.f32.mxu0 0.0
        %4400 = vmatmul.mubr.f32.gmra.mrb[0].mxu0 %v1964
        %v4401 = vpop.f32.mrb[0].mxu0
        %v4402 = vadd.f32 0.0, %v4401
        %v4403 = vpop.f32.mrb[0].mxu0
        %4404 = vmatprep.mubr.f32.mxu0 0.0
        %4405 = vmatmul.mubr.f32.gmra.mrb[0].mxu0 %v1967
        %v4406 = vpop.f32.mrb[0].mxu0
        %v4407 = vadd.f32 0.0, %v4406
        %v4408 = vpop.f32.mrb[0].mxu0
        %4409 = vmatprep.mubr.f32.mxu0 0.0
        %4410 = vmatmul.mubr.f32.gmra.mrb[0].mxu0 %v1970
        %v4411 = vpop.f32.mrb[0].mxu0
        %v4412 = vadd.f32 0.0, %v4411
        %v4413 = vpop.f32.mrb[0].mxu0
        %4414 = vmatprep.mubr.f32.mxu0 0.0
        %4415 = vmatmul.mubr.f32.gmra.mrb[0].mxu0 %v1973
        %v4416 = vpop.f32.mrb[0].mxu0
        %v4417 = vadd.f32 0.0, %v4416
        %v4418 = vpop.f32.mrb[0].mxu0
        %4419 = vmatprep.mubr.f32.mxu0 0.0
        %4420 = vmatmul.mubr.f32.gmra.mrb[0].mxu0 %v1976
        %v4421 = vpop.f32.mrb[0].mxu0
        %v4422 = vadd.f32 0.0, %v4421
        %v4423 = vpop.f32.mrb[0].mxu0
        %4424 = vmatprep.mubr.f32.mxu0 0.0
        %4425 = vmatmul.mubr.f32.gmra.mrb[0].mxu0 %v1979
        %v4426 = vpop.f32.mrb[0].mxu0
        %v4427 = vadd.f32 0.0, %v4426
        %v4428 = vpop.f32.mrb[0].mxu0
        %4429 = vmatprep.mubr.f32.mxu0 0.0
        %4430 = vmatmul.mubr.f32.gmra.mrb[0].mxu0 %v1982
        %v4431 = vpop.f32.mrb[0].mxu0
        %v4432 = vadd.f32 0.0, %v4431
        %v4433 = vpop.f32.mrb[0].mxu0
        %4434 = vmatprep.mubr.f32.mxu0 0.0
        %4435 = vmatmul.mubr.f32.gmra.mrb[0].mxu0 %v1985
        %v4436 = vpop.f32.mrb[0].mxu0
        %v4437 = vadd.f32 0.0, %v4436
        %v4438 = vpop.f32.mrb[0].mxu0
        %4439 = vmatprep.mubr.f32.mxu0 0.0
        %4440 = vmatmul.mubr.f32.gmra.mrb[0].mxu0 %v1988
        %v4441 = vpop.f32.mrb[0].mxu0
        %v4442 = vadd.f32 0.0, %v4441
        %v4443 = vpop.f32.mrb[0].mxu0
        %4444 = vmatprep.mubr.f32.mxu0 0.0
        %4445 = vmatmul.mubr.f32.gmra.mrb[0].mxu0 %v1991
        %v4446 = vpop.f32.mrb[0].mxu0
        %v4447 = vadd.f32 0.0, %v4446
        %v4448 = vpop.f32.mrb[0].mxu0
        %4449 = vmatprep.mubr.f32.mxu0 0.0
        %4450 = vmatmul.mubr.f32.gmra.mrb[0].mxu0 %v1994
        %v4451 = vpop.f32.mrb[0].mxu0
        %v4452 = vadd.f32 0.0, %v4451
        %v4453 = vpop.f32.mrb[0].mxu0
        %4454 = vmatprep.mubr.f32.mxu0 0.0
        %4455 = vmatmul.mubr.f32.gmra.mrb[0].mxu0 %v1997
        %v4456 = vpop.f32.mrb[0].mxu0
        %v4457 = vadd.f32 0.0, %v4456
        %v4458 = vpop.f32.mrb[0].mxu0
        %4459 = vmatprep.mubr.f32.mxu0 0.0
        %4460 = vmatmul.mubr.f32.gmra.mrb[0].mxu0 %v2000
        %v4461 = vpop.f32.mrb[0].mxu0
        %v4462 = vadd.f32 0.0, %v4461
        %v4463 = vpop.f32.mrb[0].mxu0
        %4464 = vmatprep.mubr.f32.mxu0 0.0
        %4465 = vmatmul.mubr.f32.gmra.mrb[0].mxu0 %v2003
        %v4466 = vpop.f32.mrb[0].mxu0
        %v4467 = vadd.f32 0.0, %v4466
        %v4468 = vpop.f32.mrb[0].mxu0
        %4469 = vmatprep.mubr.f32.mxu0 0.0
        %4470 = vmatmul.mubr.f32.gmra.mrb[0].mxu0 %v2006
        %v4471 = vpop.f32.mrb[0].mxu0
        %v4472 = vadd.f32 0.0, %v4471
        %v4473 = vpop.f32.mrb[0].mxu0
        %4474 = vmatprep.mubr.f32.mxu0 0.0
        %4475 = vmatmul.mubr.f32.gmra.mrb[0].mxu0 %v2009
        %v4476 = vpop.f32.mrb[0].mxu0
        %v4477 = vadd.f32 0.0, %v4476
        %v4478 = vpop.f32.mrb[0].mxu0
        %4479 = vmatprep.mubr.f32.mxu0 0.0
        %4480 = vmatmul.mubr.f32.gmra.mrb[0].mxu0 %v2012
        %v4481 = vpop.f32.mrb[0].mxu0
        %v4482 = vadd.f32 0.0, %v4481
        %v4483 = vpop.f32.mrb[0].mxu0
        %4484 = vmatprep.mubr.f32.mxu0 0.0
        %4485 = vmatmul.mubr.f32.gmra.mrb[0].mxu0 %v2015
        %v4486 = vpop.f32.mrb[0].mxu0
        %v4487 = vadd.f32 0.0, %v4486
        %v4488 = vpop.f32.mrb[0].mxu0
        %4489 = vmatprep.mubr.f32.mxu0 0.0
        %4490 = vmatmul.mubr.f32.gmra.mrb[0].mxu0 %v2018
        %v4491 = vpop.f32.mrb[0].mxu0
        %v4492 = vadd.f32 0.0, %v4491
        %v4493 = vpop.f32.mrb[0].mxu0
        %4494 = vmatprep.mubr.f32.mxu0 0.0
        %4495 = vmatmul.mubr.f32.gmra.mrb[0].mxu0 %v2021
        %v4496 = vpop.f32.mrb[0].mxu0
        %v4497 = vadd.f32 0.0, %v4496
        %v4498 = vpop.f32.mrb[0].mxu0
        %4499 = vmatprep.mubr.f32.mxu0 0.0
        %4500 = vmatmul.mubr.f32.gmra.mrb[0].mxu0 %v2024
        %v4501 = vpop.f32.mrb[0].mxu0
        %v4502 = vadd.f32 0.0, %v4501
        %v4503 = vpop.f32.mrb[0].mxu0
        %4504 = vmatprep.mubr.f32.mxu0 0.0
        %4505 = vmatmul.mubr.f32.gmra.mrb[0].mxu0 %v2027
        %v4506 = vpop.f32.mrb[0].mxu0
        %v4507 = vadd.f32 0.0, %v4506
        %v4508 = vpop.f32.mrb[0].mxu0
        %4509 = vmatprep.mubr.f32.mxu0 0.0
        %4510 = vmatmul.mubr.f32.gmra.mrb[0].mxu0 %v2030
        %v4511 = vpop.f32.mrb[0].mxu0
        %v4512 = vadd.f32 0.0, %v4511
        %v4513 = vpop.f32.mrb[0].mxu0
        %4514 = vmatprep.mubr.f32.mxu0 0.0
        %4515 = vmatmul.mubr.f32.gmra.mrb[0].mxu0 %v2033
        %v4516 = vpop.f32.mrb[0].mxu0
        %v4517 = vadd.f32 0.0, %v4516
        %v4518 = vpop.f32.mrb[0].mxu0
        %4519 = vmatprep.mubr.f32.mxu0 0.0
        %4520 = vmatmul.mubr.f32.gmra.mrb[0].mxu0 %v2036
        %v4521 = vpop.f32.mrb[0].mxu0
        %v4522 = vadd.f32 0.0, %v4521
        %v4523 = vpop.f32.mrb[0].mxu0
        %4524 = vmatprep.mubr.f32.mxu0 0.0
        %4525 = vmatmul.mubr.f32.gmra.mrb[0].mxu0 %v2039
        %v4526 = vpop.f32.mrb[0].mxu0
        %v4527 = vadd.f32 0.0, %v4526
        %v4528 = vpop.f32.mrb[0].mxu0
        %4529 = vmatprep.mubr.f32.mxu0 0.0
        %4530 = vmatmul.mubr.f32.gmra.mrb[0].mxu0 %v2042
        %v4531 = vpop.f32.mrb[0].mxu0
        %v4532 = vadd.f32 0.0, %v4531
        %v4533 = vpop.f32.mrb[0].mxu0
        %4534 = vmatprep.mubr.f32.mxu0 0.0
        %4535 = vmatmul.mubr.f32.gmra.mrb[0].mxu0 %v2045
        %v4536 = vpop.f32.mrb[0].mxu0
        %v4537 = vadd.f32 0.0, %v4536
        %v4538 = vpop.f32.mrb[0].mxu0
        %4539 = vmatprep.mubr.f32.mxu0 0.0
        %4540 = vmatmul.mubr.f32.gmra.mrb[0].mxu0 %v2048
        %v4541 = vpop.f32.mrb[0].mxu0
        %v4542 = vadd.f32 0.0, %v4541
        %v4543 = vpop.f32.mrb[0].mxu0
        %4544 = vmatprep.mubr.f32.mxu0 0.0
        %4545 = vmatmul.mubr.f32.gmra.mrb[0].mxu0 %v2051
        %v4546 = vpop.f32.mrb[0].mxu0
        %v4547 = vadd.f32 0.0, %v4546
        %v4548 = vpop.f32.mrb[0].mxu0
        %4549 = vmatprep.mubr.f32.mxu0 0.0
        %4550 = vmatmul.mubr.f32.gmra.mrb[0].mxu0 %v2054
        %v4551 = vpop.f32.mrb[0].mxu0
        %v4552 = vadd.f32 0.0, %v4551
        %v4553 = vpop.f32.mrb[0].mxu0
        %4554 = vmatprep.mubr.f32.mxu0 0.0
        %4555 = vmatmul.mubr.f32.gmra.mrb[0].mxu0 %v2057
        %v4556 = vpop.f32.mrb[0].mxu0
        %v4557 = vadd.f32 0.0, %v4556
        %v4558 = vpop.f32.mrb[0].mxu0
        %4559 = vmatprep.mubr.f32.mxu0 0.0
        %4560 = vmatmul.mubr.f32.gmra.mrb[0].mxu0 %v2060
        %v4561 = vpop.f32.mrb[0].mxu0
        %v4562 = vadd.f32 0.0, %v4561
        %v4563 = vpop.f32.mrb[0].mxu0
        %4564 = vmatprep.mubr.f32.mxu0 0.0
        %4565 = vmatmul.mubr.f32.gmra.mrb[0].mxu0 %v2063
        %v4566 = vpop.f32.mrb[0].mxu0
        %v4567 = vadd.f32 0.0, %v4566
        %v4568 = vpop.f32.mrb[0].mxu0
        %4569 = vmatprep.mubr.f32.mxu0 0.0
        %4570 = vmatmul.mubr.f32.gmra.mrb[0].mxu0 %v2066
        %v4571 = vpop.f32.mrb[0].mxu0
        %v4572 = vadd.f32 0.0, %v4571
        %v4573 = vpop.f32.mrb[0].mxu0
        %4574 = vmatprep.mubr.f32.mxu0 0.0
        %4575 = vmatmul.mubr.f32.gmra.mrb[0].mxu0 %v2069
        %v4576 = vpop.f32.mrb[0].mxu0
        %v4577 = vadd.f32 0.0, %v4576
        %v4578 = vpop.f32.mrb[0].mxu0
        %4579 = vmatprep.mubr.f32.mxu0 0.0
        %4580 = vmatmul.mubr.f32.gmra.mrb[0].mxu0 %v2072
        %v4581 = vpop.f32.mrb[0].mxu0
        %v4582 = vadd.f32 0.0, %v4581
        %v4583 = vpop.f32.mrb[0].mxu0
        %4584 = vmatprep.mubr.f32.mxu0 0.0
        %4585 = vmatmul.mubr.f32.gmra.mrb[0].mxu0 %v2075
        %v4586 = vpop.f32.mrb[0].mxu0
        %v4587 = vadd.f32 0.0, %v4586
        %v4588 = vpop.f32.mrb[0].mxu0
        %4589 = vmatprep.mubr.f32.mxu0 0.0
        %4590 = vmatmul.mubr.f32.gmra.mrb[0].mxu0 %v2078
        %v4591 = vpop.f32.mrb[0].mxu0
        %v4592 = vadd.f32 0.0, %v4591
        %v4593 = vpop.f32.mrb[0].mxu0
        %4594 = vmatprep.mubr.f32.mxu0 0.0
        %4595 = vmatmul.mubr.f32.gmra.mrb[0].mxu0 %v2081
        %v4596 = vpop.f32.mrb[0].mxu0
        %v4597 = vadd.f32 0.0, %v4596
        %v4598 = vpop.f32.mrb[0].mxu0
        %4599 = vmatprep.mubr.f32.mxu0 0.0
        %4600 = vmatmul.mubr.f32.gmra.mrb[0].mxu0 %v2084
        %v4601 = vpop.f32.mrb[0].mxu0
        %v4602 = vadd.f32 0.0, %v4601
        %v4603 = vpop.f32.mrb[0].mxu0
        %4604 = vmatprep.mubr.f32.mxu0 0.0
        %4605 = vmatmul.mubr.f32.gmra.mrb[0].mxu0 %v2087
        %v4606 = vpop.f32.mrb[0].mxu0
        %v4607 = vadd.f32 0.0, %v4606
        %v4608 = vpop.f32.mrb[0].mxu0
        %4609 = vmatprep.mubr.f32.mxu0 0.0
        %4610 = vmatmul.mubr.f32.gmra.mrb[0].mxu0 %v2090
        %v4611 = vpop.f32.mrb[0].mxu0
        %v4612 = vadd.f32 0.0, %v4611
        %v4613 = vpop.f32.mrb[0].mxu0
        %4614 = vmatprep.mubr.f32.mxu0 0.0
        %4615 = vmatmul.mubr.f32.gmra.mrb[0].mxu0 %v2093
        %v4616 = vpop.f32.mrb[0].mxu0
        %v4617 = vadd.f32 0.0, %v4616
        %v4618 = vpop.f32.mrb[0].mxu0
        %4619 = vmatprep.mubr.f32.mxu0 0.0
        %4620 = vmatmul.mubr.f32.gmra.mrb[0].mxu0 %v2096
        %v4621 = vpop.f32.mrb[0].mxu0
        %v4622 = vadd.f32 0.0, %v4621
        %v4623 = vpop.f32.mrb[0].mxu0
        %4624 = vmatprep.mubr.f32.mxu0 0.0
        %4625 = vmatmul.mubr.f32.gmra.mrb[0].mxu0 %v2099
        %v4626 = vpop.f32.mrb[0].mxu0
        %v4627 = vadd.f32 0.0, %v4626
        %v4628 = vpop.f32.mrb[0].mxu0
        %4629 = vmatprep.mubr.f32.mxu0 0.0
        %4630 = vmatmul.mubr.f32.gmra.mrb[0].mxu0 %v2102
        %v4631 = vpop.f32.mrb[0].mxu0
        %v4632 = vadd.f32 0.0, %v4631
        %v4633 = vpop.f32.mrb[0].mxu0
        %4634 = vmatprep.mubr.f32.mxu0 0.0
        %4635 = vmatmul.mubr.f32.gmra.mrb[0].mxu0 %v2105
        %v4636 = vpop.f32.mrb[0].mxu0
        %v4637 = vadd.f32 0.0, %v4636
        %v4638 = vpop.f32.mrb[0].mxu0
        %4639 = vmatprep.mubr.f32.mxu0 0.0
        %4640 = vmatmul.mubr.f32.gmra.mrb[0].mxu0 %v2108
        %v4641 = vpop.f32.mrb[0].mxu0
        %v4642 = vadd.f32 0.0, %v4641
        %v4643 = vpop.f32.mrb[0].mxu0
        %4644 = vmatprep.mubr.f32.mxu0 0.0
        %4645 = vmatmul.mubr.f32.gmra.mrb[0].mxu0 %v2111
        %v4646 = vpop.f32.mrb[0].mxu0
        %v4647 = vadd.f32 0.0, %v4646
        %v4648 = vpop.f32.mrb[0].mxu0
        %4649 = vmatprep.mubr.f32.mxu0 0.0
        %4650 = vmatmul.mubr.f32.gmra.mrb[0].mxu0 %v2114
        %v4651 = vpop.f32.mrb[0].mxu0
        %v4652 = vadd.f32 0.0, %v4651
        %v4653 = vpop.f32.mrb[0].mxu0
        %4654 = vmatprep.mubr.f32.mxu0 0.0
        %4655 = vmatmul.mubr.f32.gmra.mrb[0].mxu0 %v2117
        %v4656 = vpop.f32.mrb[0].mxu0
        %v4657 = vadd.f32 0.0, %v4656
        %v4658 = vpop.f32.mrb[0].mxu0
        %4659 = vmatprep.mubr.f32.mxu0 0.0
        %4660 = vmatmul.mubr.f32.gmra.mrb[0].mxu0 %v2120
        %v4661 = vpop.f32.mrb[0].mxu0
        %v4662 = vadd.f32 0.0, %v4661
        %v4663 = vpop.f32.mrb[0].mxu0
        %4664 = vmatprep.mubr.f32.mxu0 0.0
        %4665 = vmatmul.mubr.f32.gmra.mrb[0].mxu0 %v2123
        %v4666 = vpop.f32.mrb[0].mxu0
        %v4667 = vadd.f32 0.0, %v4666
        %v4668 = vpop.f32.mrb[0].mxu0
        %4669 = vmatprep.mubr.f32.mxu0 0.0
        %4670 = vmatmul.mubr.f32.gmra.mrb[0].mxu0 %v2126
        %v4671 = vpop.f32.mrb[0].mxu0
        %v4672 = vadd.f32 0.0, %v4671
        %v4673 = vpop.f32.mrb[0].mxu0
        %4674 = vmatprep.mubr.f32.mxu0 0.0
        %4675 = vmatmul.mubr.f32.gmra.mrb[0].mxu0 %v2129
        %v4676 = vpop.f32.mrb[0].mxu0
        %v4677 = vadd.f32 0.0, %v4676
        %v4678 = vpop.f32.mrb[0].mxu0
        %4679 = vmatprep.mubr.f32.mxu0 0.0
        %4680 = vmatmul.mubr.f32.gmra.mrb[0].mxu0 %v2132
        %v4681 = vpop.f32.mrb[0].mxu0
        %v4682 = vadd.f32 0.0, %v4681
        %v4683 = vpop.f32.mrb[0].mxu0
        %4684 = vmatprep.mubr.f32.mxu0 0.0
        %4685 = vmatmul.mubr.f32.gmra.mrb[0].mxu0 %v2135
        %v4686 = vpop.f32.mrb[0].mxu0
        %v4687 = vadd.f32 0.0, %v4686
        %v4688 = vpop.f32.mrb[0].mxu0
        %4689 = vmatprep.mubr.f32.mxu0 0.0
        %4690 = vmatmul.mubr.f32.gmra.mrb[0].mxu0 %v2138
        %v4691 = vpop.f32.mrb[0].mxu0
        %v4692 = vadd.f32 0.0, %v4691
        %v4693 = vpop.f32.mrb[0].mxu0
        %4694 = vmatprep.mubr.f32.mxu0 0.0
        %4695 = vmatmul.mubr.f32.gmra.mrb[0].mxu0 %v2141
        %v4696 = vpop.f32.mrb[0].mxu0
        %v4697 = vadd.f32 0.0, %v4696
        %v4698 = vpop.f32.mrb[0].mxu0
        %4699 = vmatprep.mubr.f32.mxu0 0.0
        %4700 = vmatmul.mubr.f32.gmra.mrb[0].mxu0 %v2144
        %v4701 = vpop.f32.mrb[0].mxu0
        %v4702 = vadd.f32 0.0, %v4701
        %v4703 = vpop.f32.mrb[0].mxu0
        %4704 = vmatprep.mubr.f32.mxu0 0.0
        %4705 = vmatmul.mubr.f32.gmra.mrb[0].mxu0 %v2147
        %v4706 = vpop.f32.mrb[0].mxu0
        %v4707 = vadd.f32 0.0, %v4706
        %v4708 = vpop.f32.mrb[0].mxu0
        %4709 = vmatprep.mubr.f32.mxu0 0.0
        %4710 = vmatmul.mubr.f32.gmra.mrb[0].mxu0 %v2150
        %v4711 = vpop.f32.mrb[0].mxu0
        %v4712 = vadd.f32 0.0, %v4711
        %v4713 = vpop.f32.mrb[0].mxu0
        %4714 = vmatprep.mubr.f32.mxu0 0.0
        %4715 = vmatmul.mubr.f32.gmra.mrb[0].mxu0 %v2153
        %v4716 = vpop.f32.mrb[0].mxu0
        %v4717 = vadd.f32 0.0, %v4716
        %v4718 = vpop.f32.mrb[0].mxu0
        %4719 = vmatprep.mubr.f32.mxu0 0.0
        %4720 = vmatmul.mubr.f32.gmra.mrb[0].mxu0 %v2156
        %v4721 = vpop.f32.mrb[0].mxu0
        %v4722 = vadd.f32 0.0, %v4721
        %v4723 = vpop.f32.mrb[0].mxu0
        %4724 = vmatprep.mubr.f32.mxu0 0.0
        %4725 = vmatmul.mubr.f32.gmra.mrb[0].mxu0 %v2159
        %v4726 = vpop.f32.mrb[0].mxu0
        %v4727 = vadd.f32 0.0, %v4726
        %v4728 = vpop.f32.mrb[0].mxu0
        %4729 = vmatprep.mubr.f32.mxu0 0.0
        %4730 = vmatmul.mubr.f32.gmra.mrb[0].mxu0 %v2162
        %v4731 = vpop.f32.mrb[0].mxu0
        %v4732 = vadd.f32 0.0, %v4731
        %v4733 = vpop.f32.mrb[0].mxu0
        %4734 = vmatprep.mubr.f32.mxu0 0.0
        %4735 = vmatmul.mubr.f32.gmra.mrb[0].mxu0 %v2165
        %v4736 = vpop.f32.mrb[0].mxu0
        %v4737 = vadd.f32 0.0, %v4736
        %v4738 = vpop.f32.mrb[0].mxu0
        %4739 = vmatprep.mubr.f32.mxu0 0.0
        %4740 = vmatmul.mubr.f32.gmra.mrb[0].mxu0 %v2168
        %v4741 = vpop.f32.mrb[0].mxu0
        %v4742 = vadd.f32 0.0, %v4741
        %v4743 = vpop.f32.mrb[0].mxu0
        %4744 = vmatprep.mubr.f32.mxu0 0.0
        %4745 = vmatmul.mubr.f32.gmra.mrb[0].mxu0 %v2171
        %v4746 = vpop.f32.mrb[0].mxu0
        %v4747 = vadd.f32 0.0, %v4746
        %v4748 = vpop.f32.mrb[0].mxu0
        %4749 = vmatprep.mubr.f32.mxu0 0.0
        %4750 = vmatmul.mubr.f32.gmra.mrb[0].mxu0 %v2174
        %v4751 = vpop.f32.mrb[0].mxu0
        %v4752 = vadd.f32 0.0, %v4751
        %v4753 = vpop.f32.mrb[0].mxu0
        %4754 = vmatprep.mubr.f32.mxu0 0.0
        %4755 = vmatmul.mubr.f32.gmra.mrb[0].mxu0 %v2177
        %v4756 = vpop.f32.mrb[0].mxu0
        %v4757 = vadd.f32 0.0, %v4756
        %v4758 = vpop.f32.mrb[0].mxu0
        %4759 = vmatprep.mubr.f32.mxu0 0.0
        %4760 = vmatmul.mubr.f32.gmra.mrb[0].mxu0 %v2180
        %v4761 = vpop.f32.mrb[0].mxu0
        %v4762 = vadd.f32 0.0, %v4761
        %v4763 = vpop.f32.mrb[0].mxu0
        %4764 = vmatprep.mubr.f32.mxu0 0.0
        %4765 = vmatmul.mubr.f32.gmra.mrb[0].mxu0 %v2183
        %v4766 = vpop.f32.mrb[0].mxu0
        %v4767 = vadd.f32 0.0, %v4766
        %v4768 = vpop.f32.mrb[0].mxu0
        %4769 = vmatprep.mubr.f32.mxu0 0.0
        %4770 = vmatmul.mubr.f32.gmra.mrb[0].mxu0 %v2186
        %v4771 = vpop.f32.mrb[0].mxu0
        %v4772 = vadd.f32 0.0, %v4771
        %v4773 = vpop.f32.mrb[0].mxu0
        %4774 = vmatprep.mubr.f32.mxu0 0.0
        %4775 = vmatmul.mubr.f32.gmra.mrb[0].mxu0 %v2189
        %v4776 = vpop.f32.mrb[0].mxu0
        %v4777 = vadd.f32 0.0, %v4776
        %v4778 = vpop.f32.mrb[0].mxu0
        %4779 = vmatprep.mubr.f32.mxu0 0.0
        %4780 = vmatmul.mubr.f32.gmra.mrb[0].mxu0 %v2192
        %v4781 = vpop.f32.mrb[0].mxu0
        %v4782 = vadd.f32 0.0, %v4781
        %v4783 = vpop.f32.mrb[0].mxu0
        %4784 = vmatprep.mubr.f32.mxu0 0.0
        %4785 = vmatmul.mubr.f32.gmra.mrb[0].mxu0 %v2195
        %v4786 = vpop.f32.mrb[0].mxu0
        %v4787 = vadd.f32 0.0, %v4786
        %v4788 = vpop.f32.mrb[0].mxu0
        %4789 = vmatprep.mubr.f32.mxu0 0.0
        %4790 = vmatmul.mubr.f32.gmra.mrb[0].mxu0 %v2198
        %v4791 = vpop.f32.mrb[0].mxu0
        %v4792 = vadd.f32 0.0, %v4791
        %v4793 = vpop.f32.mrb[0].mxu0
        %4794 = vmatprep.mubr.f32.mxu0 0.0
        %4795 = vmatmul.mubr.f32.gmra.mrb[0].mxu0 %v2201
        %v4796 = vpop.f32.mrb[0].mxu0
        %v4797 = vadd.f32 0.0, %v4796
        %v4798 = vpop.f32.mrb[0].mxu0
        %4799 = vmatprep.mubr.f32.mxu0 0.0
        %4800 = vmatmul.mubr.f32.gmra.mrb[0].mxu0 %v2204
        %v4801 = vpop.f32.mrb[0].mxu0
        %v4802 = vadd.f32 0.0, %v4801
        %v4803 = vpop.f32.mrb[0].mxu0
        %4804 = vmatprep.mubr.f32.mxu0 0.0
        %4805 = vmatmul.mubr.f32.gmra.mrb[0].mxu0 %v2207
        %v4806 = vpop.f32.mrb[0].mxu0
        %v4807 = vadd.f32 0.0, %v4806
        %v4808 = vpop.f32.mrb[0].mxu0
        %4809 = vmatprep.mubr.f32.mxu0 0.0
        %4810 = vmatmul.mubr.f32.gmra.mrb[0].mxu0 %v2210
        %v4811 = vpop.f32.mrb[0].mxu0
        %v4812 = vadd.f32 0.0, %v4811
        %v4813 = vpop.f32.mrb[0].mxu0
        %4814 = vmatprep.mubr.f32.mxu0 0.0
        %4815 = vmatmul.mubr.f32.gmra.mrb[0].mxu0 %v2213
        %v4816 = vpop.f32.mrb[0].mxu0
        %v4817 = vadd.f32 0.0, %v4816
        %v4818 = vpop.f32.mrb[0].mxu0
        %4819 = vmatprep.mubr.f32.mxu0 0.0
        %4820 = vmatmul.mubr.f32.gmra.mrb[0].mxu0 %v2216
        %v4821 = vpop.f32.mrb[0].mxu0
        %v4822 = vadd.f32 0.0, %v4821
        %v4823 = vpop.f32.mrb[0].mxu0
        %4824 = vmatprep.mubr.f32.mxu0 0.0
        %4825 = vmatmul.mubr.f32.gmra.mrb[0].mxu0 %v2219
        %v4826 = vpop.f32.mrb[0].mxu0
        %v4827 = vadd.f32 0.0, %v4826
        %v4828 = vpop.f32.mrb[0].mxu0
        %4829 = vmatprep.mubr.f32.mxu0 0.0
        %4830 = vmatmul.mubr.f32.gmra.mrb[0].mxu0 %v2222
        %v4831 = vpop.f32.mrb[0].mxu0
        %v4832 = vadd.f32 0.0, %v4831
        %v4833 = vpop.f32.mrb[0].mxu0
        %4834 = vmatprep.mubr.f32.mxu0 0.0
        %4835 = vmatmul.mubr.f32.gmra.mrb[0].mxu0 %v2225
        %v4836 = vpop.f32.mrb[0].mxu0
        %v4837 = vadd.f32 0.0, %v4836
        %v4838 = vpop.f32.mrb[0].mxu0
        %4839 = vmatprep.mubr.f32.mxu0 0.0
        %4840 = vmatmul.mubr.f32.gmra.mrb[0].mxu0 %v2228
        %v4841 = vpop.f32.mrb[0].mxu0
        %v4842 = vadd.f32 0.0, %v4841
        %v4843 = vpop.f32.mrb[0].mxu0
        %4844 = vmatprep.mubr.f32.mxu0 0.0
        %4845 = vmatmul.mubr.f32.gmra.mrb[0].mxu0 %v2231
        %v4846 = vpop.f32.mrb[0].mxu0
        %v4847 = vadd.f32 0.0, %v4846
        %v4848 = vpop.f32.mrb[0].mxu0
        %4849 = vmatprep.mubr.f32.mxu0 0.0
        %4850 = vmatmul.mubr.f32.gmra.mrb[0].mxu0 %v2234
        %v4851 = vpop.f32.mrb[0].mxu0
        %v4852 = vadd.f32 0.0, %v4851
        %v4853 = vpop.f32.mrb[0].mxu0
        %4854 = vmatprep.mubr.f32.mxu0 0.0
        %4855 = vmatmul.mubr.f32.gmra.mrb[0].mxu0 %v2237
        %v4856 = vpop.f32.mrb[0].mxu0
        %v4857 = vadd.f32 0.0, %v4856
        %v4858 = vpop.f32.mrb[0].mxu0
        %4859 = vmatprep.mubr.f32.mxu0 0.0
        %4860 = vmatmul.mubr.f32.gmra.mrb[0].mxu0 %v2240
        %v4861 = vpop.f32.mrb[0].mxu0
        %v4862 = vadd.f32 0.0, %v4861
        %v4863 = vpop.f32.mrb[0].mxu0
        %4864 = vmatprep.mubr.f32.mxu0 0.0
        %4865 = vmatmul.mubr.f32.gmra.mrb[0].mxu0 %v2243
        %v4866 = vpop.f32.mrb[0].mxu0
        %v4867 = vadd.f32 0.0, %v4866
        %v4868 = vpop.f32.mrb[0].mxu0
        %4869 = vdwg.mxu0
        %v4870 = vld [vmem:[%s191] sm:$0xff]
        %v4871 = vld [vmem:[%s191 + $0x8] sm:$0xff]
        %v4872 = vld [vmem:[%s191 + $0x10] sm:$0xff]
        %v4873 = vld [vmem:[%s191 + $0x18] sm:$0xff]
        %v4874 = vld [vmem:[%s191 + $0x20] sm:$0xff]
        %v4875 = vld [vmem:[%s191 + $0x28] sm:$0xff]
        %v4876 = vld [vmem:[%s191 + $0x30] sm:$0xff]
        %v4877 = vld [vmem:[%s191 + $0x38] sm:$0xff]
        %v4878 = vld [vmem:[%s191 + $0x40] sm:$0xff]
        %v4879 = vld [vmem:[%s191 + $0x48] sm:$0xff]
        %v4880 = vld [vmem:[%s191 + $0x50] sm:$0xff]
        %v4881 = vld [vmem:[%s191 + $0x58] sm:$0xff]
        %v4882 = vld [vmem:[%s191 + $0x60] sm:$0xff]
        %v4883 = vld [vmem:[%s191 + $0x68] sm:$0xff]
        %v4884 = vld [vmem:[%s191 + $0x70] sm:$0xff]
        %v4885 = vld [vmem:[%s191 + $0x78] sm:$0xff]
        %v4886 = vld [vmem:[%s191 + $0x80] sm:$0xff]
        %v4887 = vld [vmem:[%s191 + $0x88] sm:$0xff]
        %v4888 = vld [vmem:[%s191 + $0x90] sm:$0xff]
        %v4889 = vld [vmem:[%s191 + $0x98] sm:$0xff]
        %v4890 = vld [vmem:[%s191 + $0xa0] sm:$0xff]
        %v4891 = vld [vmem:[%s191 + $0xa8] sm:$0xff]
        %v4892 = vld [vmem:[%s191 + $0xb0] sm:$0xff]
        %v4893 = vld [vmem:[%s191 + $0xb8] sm:$0xff]
        %v4894 = vld [vmem:[%s191 + $0xc0] sm:$0xff]
        %v4895 = vld [vmem:[%s191 + $0xc8] sm:$0xff]
        %v4896 = vld [vmem:[%s191 + $0xd0] sm:$0xff]
        %v4897 = vld [vmem:[%s191 + $0xd8] sm:$0xff]
        %v4898 = vld [vmem:[%s191 + $0xe0] sm:$0xff]
        %v4899 = vld [vmem:[%s191 + $0xe8] sm:$0xff]
        %v4900 = vld [vmem:[%s191 + $0xf0] sm:$0xff]
        %v4901 = vld [vmem:[%s191 + $0xf8] sm:$0xff]
        %v4902 = vld [vmem:[%s191 + $0x100] sm:$0xff]
        %v4903 = vld [vmem:[%s191 + $0x108] sm:$0xff]
        %v4904 = vld [vmem:[%s191 + $0x110] sm:$0xff]
        %v4905 = vld [vmem:[%s191 + $0x118] sm:$0xff]
        %v4906 = vld [vmem:[%s191 + $0x120] sm:$0xff]
        %v4907 = vld [vmem:[%s191 + $0x128] sm:$0xff]
        %v4908 = vld [vmem:[%s191 + $0x130] sm:$0xff]
        %v4909 = vld [vmem:[%s191 + $0x138] sm:$0xff]
        %v4910 = vld [vmem:[%s191 + $0x140] sm:$0xff]
        %v4911 = vld [vmem:[%s191 + $0x148] sm:$0xff]
        %v4912 = vld [vmem:[%s191 + $0x150] sm:$0xff]
        %v4913 = vld [vmem:[%s191 + $0x158] sm:$0xff]
        %v4914 = vld [vmem:[%s191 + $0x160] sm:$0xff]
        %v4915 = vld [vmem:[%s191 + $0x168] sm:$0xff]
        %v4916 = vld [vmem:[%s191 + $0x170] sm:$0xff]
        %v4917 = vld [vmem:[%s191 + $0x178] sm:$0xff]
        %v4918 = vld [vmem:[%s191 + $0x180] sm:$0xff]
        %v4919 = vld [vmem:[%s191 + $0x188] sm:$0xff]
        %v4920 = vld [vmem:[%s191 + $0x190] sm:$0xff]
        %v4921 = vld [vmem:[%s191 + $0x198] sm:$0xff]
        %v4922 = vld [vmem:[%s191 + $0x1a0] sm:$0xff]
        %v4923 = vld [vmem:[%s191 + $0x1a8] sm:$0xff]
        %v4924 = vld [vmem:[%s191 + $0x1b0] sm:$0xff]
        %v4925 = vld [vmem:[%s191 + $0x1b8] sm:$0xff]
        %v4926 = vld [vmem:[%s191 + $0x1c0] sm:$0xff]
        %v4927 = vld [vmem:[%s191 + $0x1c8] sm:$0xff]
        %v4928 = vld [vmem:[%s191 + $0x1d0] sm:$0xff]
        %v4929 = vld [vmem:[%s191 + $0x1d8] sm:$0xff]
        %v4930 = vld [vmem:[%s191 + $0x1e0] sm:$0xff]
        %v4931 = vld [vmem:[%s191 + $0x1e8] sm:$0xff]
        %v4932 = vld [vmem:[%s191 + $0x1f0] sm:$0xff]
        %v4933 = vld [vmem:[%s191 + $0x1f8] sm:$0xff]
        %v4934 = vld [vmem:[%s191 + $0x200] sm:$0xff]
        %v4935 = vld [vmem:[%s191 + $0x208] sm:$0xff]
        %v4936 = vld [vmem:[%s191 + $0x210] sm:$0xff]
        %v4937 = vld [vmem:[%s191 + $0x218] sm:$0xff]
        %v4938 = vld [vmem:[%s191 + $0x220] sm:$0xff]
        %v4939 = vld [vmem:[%s191 + $0x228] sm:$0xff]
        %v4940 = vld [vmem:[%s191 + $0x230] sm:$0xff]
        %v4941 = vld [vmem:[%s191 + $0x238] sm:$0xff]
        %v4942 = vld [vmem:[%s191 + $0x240] sm:$0xff]
        %v4943 = vld [vmem:[%s191 + $0x248] sm:$0xff]
        %v4944 = vld [vmem:[%s191 + $0x250] sm:$0xff]
        %v4945 = vld [vmem:[%s191 + $0x258] sm:$0xff]
        %v4946 = vld [vmem:[%s191 + $0x260] sm:$0xff]
        %v4947 = vld [vmem:[%s191 + $0x268] sm:$0xff]
        %v4948 = vld [vmem:[%s191 + $0x270] sm:$0xff]
        %v4949 = vld [vmem:[%s191 + $0x278] sm:$0xff]
        %v4950 = vld [vmem:[%s191 + $0x280] sm:$0xff]
        %v4951 = vld [vmem:[%s191 + $0x288] sm:$0xff]
        %v4952 = vld [vmem:[%s191 + $0x290] sm:$0xff]
        %v4953 = vld [vmem:[%s191 + $0x298] sm:$0xff]
        %v4954 = vld [vmem:[%s191 + $0x2a0] sm:$0xff]
        %v4955 = vld [vmem:[%s191 + $0x2a8] sm:$0xff]
        %v4956 = vld [vmem:[%s191 + $0x2b0] sm:$0xff]
        %v4957 = vld [vmem:[%s191 + $0x2b8] sm:$0xff]
        %v4958 = vld [vmem:[%s191 + $0x2c0] sm:$0xff]
        %v4959 = vld [vmem:[%s191 + $0x2c8] sm:$0xff]
        %v4960 = vld [vmem:[%s191 + $0x2d0] sm:$0xff]
        %v4961 = vld [vmem:[%s191 + $0x2d8] sm:$0xff]
        %v4962 = vld [vmem:[%s191 + $0x2e0] sm:$0xff]
        %v4963 = vld [vmem:[%s191 + $0x2e8] sm:$0xff]
        %v4964 = vld [vmem:[%s191 + $0x2f0] sm:$0xff]
        %v4965 = vld [vmem:[%s191 + $0x2f8] sm:$0xff]
        %v4966 = vld [vmem:[%s191 + $0x300] sm:$0xff]
        %v4967 = vld [vmem:[%s191 + $0x308] sm:$0xff]
        %v4968 = vld [vmem:[%s191 + $0x310] sm:$0xff]
        %v4969 = vld [vmem:[%s191 + $0x318] sm:$0xff]
        %v4970 = vld [vmem:[%s191 + $0x320] sm:$0xff]
        %v4971 = vld [vmem:[%s191 + $0x328] sm:$0xff]
        %v4972 = vld [vmem:[%s191 + $0x330] sm:$0xff]
        %v4973 = vld [vmem:[%s191 + $0x338] sm:$0xff]
        %v4974 = vld [vmem:[%s191 + $0x340] sm:$0xff]
        %v4975 = vld [vmem:[%s191 + $0x348] sm:$0xff]
        %v4976 = vld [vmem:[%s191 + $0x350] sm:$0xff]
        %v4977 = vld [vmem:[%s191 + $0x358] sm:$0xff]
        %v4978 = vld [vmem:[%s191 + $0x360] sm:$0xff]
        %v4979 = vld [vmem:[%s191 + $0x368] sm:$0xff]
        %v4980 = vld [vmem:[%s191 + $0x370] sm:$0xff]
        %v4981 = vld [vmem:[%s191 + $0x378] sm:$0xff]
        %v4982 = vld [vmem:[%s191 + $0x380] sm:$0xff]
        %v4983 = vld [vmem:[%s191 + $0x388] sm:$0xff]
        %v4984 = vld [vmem:[%s191 + $0x390] sm:$0xff]
        %v4985 = vld [vmem:[%s191 + $0x398] sm:$0xff]
        %v4986 = vld [vmem:[%s191 + $0x3a0] sm:$0xff]
        %v4987 = vld [vmem:[%s191 + $0x3a8] sm:$0xff]
        %v4988 = vld [vmem:[%s191 + $0x3b0] sm:$0xff]
        %v4989 = vld [vmem:[%s191 + $0x3b8] sm:$0xff]
        %v4990 = vld [vmem:[%s191 + $0x3c0] sm:$0xff]
        %v4991 = vld [vmem:[%s191 + $0x3c8] sm:$0xff]
        %v4992 = vld [vmem:[%s191 + $0x3d0] sm:$0xff]
        %v4993 = vld [vmem:[%s191 + $0x3d8] sm:$0xff]
        %v4994 = vld [vmem:[%s191 + $0x3e0] sm:$0xff]
        %v4995 = vld [vmem:[%s191 + $0x3e8] sm:$0xff]
        %v4996 = vld [vmem:[%s191 + $0x3f0] sm:$0xff]
        %v4997 = vld [vmem:[%s191 + $0x3f8] sm:$0xff]
        %v4998 = vld [vmem:[%s191 + $0x400] sm:$0xff]
        %v4999 = vld [vmem:[%s191 + $0x408] sm:$0xff]
        %v5000 = vld [vmem:[%s191 + $0x410] sm:$0xff]
        %v5001 = vld [vmem:[%s191 + $0x418] sm:$0xff]
        %v5002 = vld [vmem:[%s191 + $0x420] sm:$0xff]
        %v5003 = vld [vmem:[%s191 + $0x428] sm:$0xff]
        %v5004 = vld [vmem:[%s191 + $0x430] sm:$0xff]
        %v5005 = vld [vmem:[%s191 + $0x438] sm:$0xff]
        %v5006 = vld [vmem:[%s191 + $0x440] sm:$0xff]
        %v5007 = vld [vmem:[%s191 + $0x448] sm:$0xff]
        %v5008 = vld [vmem:[%s191 + $0x450] sm:$0xff]
        %v5009 = vld [vmem:[%s191 + $0x458] sm:$0xff]
        %v5010 = vld [vmem:[%s191 + $0x460] sm:$0xff]
        %v5011 = vld [vmem:[%s191 + $0x468] sm:$0xff]
        %v5012 = vld [vmem:[%s191 + $0x470] sm:$0xff]
        %v5013 = vld [vmem:[%s191 + $0x478] sm:$0xff]
        %v5014 = vld [vmem:[%s191 + $0x480] sm:$0xff]
        %v5015 = vld [vmem:[%s191 + $0x488] sm:$0xff]
        %v5016 = vld [vmem:[%s191 + $0x490] sm:$0xff]
        %v5017 = vld [vmem:[%s191 + $0x498] sm:$0xff]
        %v5018 = vld [vmem:[%s191 + $0x4a0] sm:$0xff]
        %v5019 = vld [vmem:[%s191 + $0x4a8] sm:$0xff]
        %v5020 = vld [vmem:[%s191 + $0x4b0] sm:$0xff]
        %v5021 = vld [vmem:[%s191 + $0x4b8] sm:$0xff]
        %v5022 = vld [vmem:[%s191 + $0x4c0] sm:$0xff]
        %v5023 = vld [vmem:[%s191 + $0x4c8] sm:$0xff]
        %v5024 = vld [vmem:[%s191 + $0x4d0] sm:$0xff]
        %v5025 = vld [vmem:[%s191 + $0x4d8] sm:$0xff]
        %v5026 = vld [vmem:[%s191 + $0x4e0] sm:$0xff]
        %v5027 = vld [vmem:[%s191 + $0x4e8] sm:$0xff]
        %v5028 = vld [vmem:[%s191 + $0x4f0] sm:$0xff]
        %v5029 = vld [vmem:[%s191 + $0x4f8] sm:$0xff]
        %v5030 = vld [vmem:[%s191 + $0x500] sm:$0xff]
        %v5031 = vld [vmem:[%s191 + $0x508] sm:$0xff]
        %v5032 = vld [vmem:[%s191 + $0x510] sm:$0xff]
        %v5033 = vld [vmem:[%s191 + $0x518] sm:$0xff]
        %v5034 = vld [vmem:[%s191 + $0x520] sm:$0xff]
        %v5035 = vld [vmem:[%s191 + $0x528] sm:$0xff]
        %v5036 = vld [vmem:[%s191 + $0x530] sm:$0xff]
        %v5037 = vld [vmem:[%s191 + $0x538] sm:$0xff]
        %v5038 = vld [vmem:[%s191 + $0x540] sm:$0xff]
        %v5039 = vld [vmem:[%s191 + $0x548] sm:$0xff]
        %v5040 = vld [vmem:[%s191 + $0x550] sm:$0xff]
        %v5041 = vld [vmem:[%s191 + $0x558] sm:$0xff]
        %v5042 = vld [vmem:[%s191 + $0x560] sm:$0xff]
        %v5043 = vld [vmem:[%s191 + $0x568] sm:$0xff]
        %v5044 = vld [vmem:[%s191 + $0x570] sm:$0xff]
        %v5045 = vld [vmem:[%s191 + $0x578] sm:$0xff]
        %v5046 = vld [vmem:[%s191 + $0x580] sm:$0xff]
        %v5047 = vld [vmem:[%s191 + $0x588] sm:$0xff]
        %v5048 = vld [vmem:[%s191 + $0x590] sm:$0xff]
        %v5049 = vld [vmem:[%s191 + $0x598] sm:$0xff]
        %v5050 = vld [vmem:[%s191 + $0x5a0] sm:$0xff]
        %v5051 = vld [vmem:[%s191 + $0x5a8] sm:$0xff]
        %v5052 = vld [vmem:[%s191 + $0x5b0] sm:$0xff]
        %v5053 = vld [vmem:[%s191 + $0x5b8] sm:$0xff]
        %v5054 = vld [vmem:[%s191 + $0x5c0] sm:$0xff]
        %v5055 = vld [vmem:[%s191 + $0x5c8] sm:$0xff]
        %v5056 = vld [vmem:[%s191 + $0x5d0] sm:$0xff]
        %v5057 = vld [vmem:[%s191 + $0x5d8] sm:$0xff]
        %v5058 = vld [vmem:[%s191 + $0x5e0] sm:$0xff]
        %v5059 = vld [vmem:[%s191 + $0x5e8] sm:$0xff]
        %v5060 = vld [vmem:[%s191 + $0x5f0] sm:$0xff]
        %v5061 = vld [vmem:[%s191 + $0x5f8] sm:$0xff]
        %v5062 = vld [vmem:[%s191 + $0x600] sm:$0xff]
        %v5063 = vld [vmem:[%s191 + $0x608] sm:$0xff]
        %v5064 = vld [vmem:[%s191 + $0x610] sm:$0xff]
        %v5065 = vld [vmem:[%s191 + $0x618] sm:$0xff]
        %v5066 = vld [vmem:[%s191 + $0x620] sm:$0xff]
        %v5067 = vld [vmem:[%s191 + $0x628] sm:$0xff]
        %v5068 = vld [vmem:[%s191 + $0x630] sm:$0xff]
        %v5069 = vld [vmem:[%s191 + $0x638] sm:$0xff]
        %v5070 = vld [vmem:[%s191 + $0x640] sm:$0xff]
        %v5071 = vld [vmem:[%s191 + $0x648] sm:$0xff]
        %v5072 = vld [vmem:[%s191 + $0x650] sm:$0xff]
        %v5073 = vld [vmem:[%s191 + $0x658] sm:$0xff]
        %v5074 = vld [vmem:[%s191 + $0x660] sm:$0xff]
        %v5075 = vld [vmem:[%s191 + $0x668] sm:$0xff]
        %v5076 = vld [vmem:[%s191 + $0x670] sm:$0xff]
        %v5077 = vld [vmem:[%s191 + $0x678] sm:$0xff]
        %v5078 = vld [vmem:[%s191 + $0x680] sm:$0xff]
        %v5079 = vld [vmem:[%s191 + $0x688] sm:$0xff]
        %v5080 = vld [vmem:[%s191 + $0x690] sm:$0xff]
        %v5081 = vld [vmem:[%s191 + $0x698] sm:$0xff]
        %v5082 = vld [vmem:[%s191 + $0x6a0] sm:$0xff]
        %v5083 = vld [vmem:[%s191 + $0x6a8] sm:$0xff]
        %v5084 = vld [vmem:[%s191 + $0x6b0] sm:$0xff]
        %v5085 = vld [vmem:[%s191 + $0x6b8] sm:$0xff]
        %v5086 = vld [vmem:[%s191 + $0x6c0] sm:$0xff]
        %v5087 = vld [vmem:[%s191 + $0x6c8] sm:$0xff]
        %v5088 = vld [vmem:[%s191 + $0x6d0] sm:$0xff]
        %v5089 = vld [vmem:[%s191 + $0x6d8] sm:$0xff]
        %v5090 = vld [vmem:[%s191 + $0x6e0] sm:$0xff]
        %v5091 = vld [vmem:[%s191 + $0x6e8] sm:$0xff]
        %v5092 = vld [vmem:[%s191 + $0x6f0] sm:$0xff]
        %v5093 = vld [vmem:[%s191 + $0x6f8] sm:$0xff]
        %v5094 = vld [vmem:[%s191 + $0x700] sm:$0xff]
        %v5095 = vld [vmem:[%s191 + $0x708] sm:$0xff]
        %v5096 = vld [vmem:[%s191 + $0x710] sm:$0xff]
        %v5097 = vld [vmem:[%s191 + $0x718] sm:$0xff]
        %v5098 = vld [vmem:[%s191 + $0x720] sm:$0xff]
        %v5099 = vld [vmem:[%s191 + $0x728] sm:$0xff]
        %v5100 = vld [vmem:[%s191 + $0x730] sm:$0xff]
        %v5101 = vld [vmem:[%s191 + $0x738] sm:$0xff]
        %v5102 = vld [vmem:[%s191 + $0x740] sm:$0xff]
        %v5103 = vld [vmem:[%s191 + $0x748] sm:$0xff]
        %v5104 = vld [vmem:[%s191 + $0x750] sm:$0xff]
        %v5105 = vld [vmem:[%s191 + $0x758] sm:$0xff]
        %v5106 = vld [vmem:[%s191 + $0x760] sm:$0xff]
        %v5107 = vld [vmem:[%s191 + $0x768] sm:$0xff]
        %v5108 = vld [vmem:[%s191 + $0x770] sm:$0xff]
        %v5109 = vld [vmem:[%s191 + $0x778] sm:$0xff]
        %v5110 = vld [vmem:[%s191 + $0x780] sm:$0xff]
        %v5111 = vld [vmem:[%s191 + $0x788] sm:$0xff]
        %v5112 = vld [vmem:[%s191 + $0x790] sm:$0xff]
        %v5113 = vld [vmem:[%s191 + $0x798] sm:$0xff]
        %v5114 = vld [vmem:[%s191 + $0x7a0] sm:$0xff]
        %v5115 = vld [vmem:[%s191 + $0x7a8] sm:$0xff]
        %v5116 = vld [vmem:[%s191 + $0x7b0] sm:$0xff]
        %v5117 = vld [vmem:[%s191 + $0x7b8] sm:$0xff]
        %v5118 = vld [vmem:[%s191 + $0x7c0] sm:$0xff]
        %v5119 = vld [vmem:[%s191 + $0x7c8] sm:$0xff]
        %v5120 = vld [vmem:[%s191 + $0x7d0] sm:$0xff]
        %v5121 = vld [vmem:[%s191 + $0x7d8] sm:$0xff]
        %v5122 = vld [vmem:[%s191 + $0x7e0] sm:$0xff]
        %v5123 = vld [vmem:[%s191 + $0x7e8] sm:$0xff]
        %v5124 = vld [vmem:[%s191 + $0x7f0] sm:$0xff]
        %v5125 = vld [vmem:[%s191 + $0x7f8] sm:$0xff]
        %v5126 = vld [vmem:[%s191 + $0x800] sm:$0xff]
        %v5127 = vld [vmem:[%s191 + $0x808] sm:$0xff]
        %v5128 = vld [vmem:[%s191 + $0x810] sm:$0xff]
        %v5129 = vld [vmem:[%s191 + $0x818] sm:$0xff]
        %v5130 = vld [vmem:[%s191 + $0x820] sm:$0xff]
        %v5131 = vld [vmem:[%s191 + $0x828] sm:$0xff]
        %v5132 = vld [vmem:[%s191 + $0x830] sm:$0xff]
        %v5133 = vld [vmem:[%s191 + $0x838] sm:$0xff]
        %v5134 = vld [vmem:[%s191 + $0x840] sm:$0xff]
        %v5135 = vld [vmem:[%s191 + $0x848] sm:$0xff]
        %v5136 = vld [vmem:[%s191 + $0x850] sm:$0xff]
        %v5137 = vld [vmem:[%s191 + $0x858] sm:$0xff]
        %v5138 = vld [vmem:[%s191 + $0x860] sm:$0xff]
        %v5139 = vld [vmem:[%s191 + $0x868] sm:$0xff]
        %v5140 = vld [vmem:[%s191 + $0x870] sm:$0xff]
        %v5141 = vld [vmem:[%s191 + $0x878] sm:$0xff]
        %v5142 = vld [vmem:[%s191 + $0x880] sm:$0xff]
        %v5143 = vld [vmem:[%s191 + $0x888] sm:$0xff]
        %v5144 = vld [vmem:[%s191 + $0x890] sm:$0xff]
        %v5145 = vld [vmem:[%s191 + $0x898] sm:$0xff]
        %v5146 = vld [vmem:[%s191 + $0x8a0] sm:$0xff]
        %v5147 = vld [vmem:[%s191 + $0x8a8] sm:$0xff]
        %v5148 = vld [vmem:[%s191 + $0x8b0] sm:$0xff]
        %v5149 = vld [vmem:[%s191 + $0x8b8] sm:$0xff]
        %v5150 = vld [vmem:[%s191 + $0x8c0] sm:$0xff]
        %v5151 = vld [vmem:[%s191 + $0x8c8] sm:$0xff]
        %v5152 = vld [vmem:[%s191 + $0x8d0] sm:$0xff]
        %v5153 = vld [vmem:[%s191 + $0x8d8] sm:$0xff]
        %v5154 = vld [vmem:[%s191 + $0x8e0] sm:$0xff]
        %v5155 = vld [vmem:[%s191 + $0x8e8] sm:$0xff]
        %v5156 = vld [vmem:[%s191 + $0x8f0] sm:$0xff]
        %v5157 = vld [vmem:[%s191 + $0x8f8] sm:$0xff]
        %v5158 = vld [vmem:[%s191 + $0x900] sm:$0xff]
        %v5159 = vld [vmem:[%s191 + $0x908] sm:$0xff]
        %v5160 = vld [vmem:[%s191 + $0x910] sm:$0xff]
        %v5161 = vld [vmem:[%s191 + $0x918] sm:$0xff]
        %v5162 = vld [vmem:[%s191 + $0x920] sm:$0xff]
        %v5163 = vld [vmem:[%s191 + $0x928] sm:$0xff]
        %v5164 = vld [vmem:[%s191 + $0x930] sm:$0xff]
        %v5165 = vld [vmem:[%s191 + $0x938] sm:$0xff]
        %v5166 = vld [vmem:[%s191 + $0x940] sm:$0xff]
        %v5167 = vld [vmem:[%s191 + $0x948] sm:$0xff]
        %v5168 = vld [vmem:[%s191 + $0x950] sm:$0xff]
        %v5169 = vld [vmem:[%s191 + $0x958] sm:$0xff]
        %v5170 = vld [vmem:[%s191 + $0x960] sm:$0xff]
        %v5171 = vld [vmem:[%s191 + $0x968] sm:$0xff]
        %v5172 = vld [vmem:[%s191 + $0x970] sm:$0xff]
        %v5173 = vld [vmem:[%s191 + $0x978] sm:$0xff]
        %v5174 = vld [vmem:[%s191 + $0x980] sm:$0xff]
        %v5175 = vld [vmem:[%s191 + $0x988] sm:$0xff]
        %v5176 = vld [vmem:[%s191 + $0x990] sm:$0xff]
        %v5177 = vld [vmem:[%s191 + $0x998] sm:$0xff]
        %v5178 = vld [vmem:[%s191 + $0x9a0] sm:$0xff]
        %v5179 = vld [vmem:[%s191 + $0x9a8] sm:$0xff]
        %v5180 = vld [vmem:[%s191 + $0x9b0] sm:$0xff]
        %v5181 = vld [vmem:[%s191 + $0x9b8] sm:$0xff]
        %v5182 = vld [vmem:[%s191 + $0x9c0] sm:$0xff]
        %v5183 = vld [vmem:[%s191 + $0x9c8] sm:$0xff]
        %v5184 = vld [vmem:[%s191 + $0x9d0] sm:$0xff]
        %v5185 = vld [vmem:[%s191 + $0x9d8] sm:$0xff]
        %v5186 = vld [vmem:[%s191 + $0x9e0] sm:$0xff]
        %v5187 = vld [vmem:[%s191 + $0x9e8] sm:$0xff]
        %v5188 = vld [vmem:[%s191 + $0x9f0] sm:$0xff]
        %v5189 = vld [vmem:[%s191 + $0x9f8] sm:$0xff]
        %v5190 = vld [vmem:[%s191 + $0xa00] sm:$0xff]
        %v5191 = vld [vmem:[%s191 + $0xa08] sm:$0xff]
        %v5192 = vld [vmem:[%s191 + $0xa10] sm:$0xff]
        %v5193 = vld [vmem:[%s191 + $0xa18] sm:$0xff]
        %v5194 = vld [vmem:[%s191 + $0xa20] sm:$0xff]
        %v5195 = vld [vmem:[%s191 + $0xa28] sm:$0xff]
        %v5196 = vld [vmem:[%s191 + $0xa30] sm:$0xff]
        %v5197 = vld [vmem:[%s191 + $0xa38] sm:$0xff]
        %v5198 = vld [vmem:[%s191 + $0xa40] sm:$0xff]
        %v5199 = vld [vmem:[%s191 + $0xa48] sm:$0xff]
        %v5200 = vld [vmem:[%s191 + $0xa50] sm:$0xff]
        %v5201 = vld [vmem:[%s191 + $0xa58] sm:$0xff]
        %v5202 = vld [vmem:[%s191 + $0xa60] sm:$0xff]
        %v5203 = vld [vmem:[%s191 + $0xa68] sm:$0xff]
        %v5204 = vld [vmem:[%s191 + $0xa70] sm:$0xff]
        %v5205 = vld [vmem:[%s191 + $0xa78] sm:$0xff]
        %v5206 = vld [vmem:[%s191 + $0xa80] sm:$0xff]
        %v5207 = vld [vmem:[%s191 + $0xa88] sm:$0xff]
        %v5208 = vld [vmem:[%s191 + $0xa90] sm:$0xff]
        %v5209 = vld [vmem:[%s191 + $0xa98] sm:$0xff]
        %v5210 = vld [vmem:[%s191 + $0xaa0] sm:$0xff]
        %v5211 = vld [vmem:[%s191 + $0xaa8] sm:$0xff]
        %v5212 = vld [vmem:[%s191 + $0xab0] sm:$0xff]
        %v5213 = vld [vmem:[%s191 + $0xab8] sm:$0xff]
        %v5214 = vld [vmem:[%s191 + $0xac0] sm:$0xff]
        %v5215 = vld [vmem:[%s191 + $0xac8] sm:$0xff]
        %v5216 = vld [vmem:[%s191 + $0xad0] sm:$0xff]
        %v5217 = vld [vmem:[%s191 + $0xad8] sm:$0xff]
        %v5218 = vld [vmem:[%s191 + $0xae0] sm:$0xff]
        %v5219 = vld [vmem:[%s191 + $0xae8] sm:$0xff]
        %v5220 = vld [vmem:[%s191 + $0xaf0] sm:$0xff]
        %v5221 = vld [vmem:[%s191 + $0xaf8] sm:$0xff]
        %v5222 = vld [vmem:[%s191 + $0xb00] sm:$0xff]
        %v5223 = vld [vmem:[%s191 + $0xb08] sm:$0xff]
        %v5224 = vld [vmem:[%s191 + $0xb10] sm:$0xff]
        %v5225 = vld [vmem:[%s191 + $0xb18] sm:$0xff]
        %v5226 = vld [vmem:[%s191 + $0xb20] sm:$0xff]
        %v5227 = vld [vmem:[%s191 + $0xb28] sm:$0xff]
        %v5228 = vld [vmem:[%s191 + $0xb30] sm:$0xff]
        %v5229 = vld [vmem:[%s191 + $0xb38] sm:$0xff]
        %v5230 = vld [vmem:[%s191 + $0xb40] sm:$0xff]
        %v5231 = vld [vmem:[%s191 + $0xb48] sm:$0xff]
        %v5232 = vld [vmem:[%s191 + $0xb50] sm:$0xff]
        %v5233 = vld [vmem:[%s191 + $0xb58] sm:$0xff]
        %v5234 = vld [vmem:[%s191 + $0xb60] sm:$0xff]
        %v5235 = vld [vmem:[%s191 + $0xb68] sm:$0xff]
        %v5236 = vld [vmem:[%s191 + $0xb70] sm:$0xff]
        %v5237 = vld [vmem:[%s191 + $0xb78] sm:$0xff]
        %v5238 = vld [vmem:[%s191 + $0xb80] sm:$0xff]
        %v5239 = vld [vmem:[%s191 + $0xb88] sm:$0xff]
        %v5240 = vld [vmem:[%s191 + $0xb90] sm:$0xff]
        %v5241 = vld [vmem:[%s191 + $0xb98] sm:$0xff]
        %v5242 = vld [vmem:[%s191 + $0xba0] sm:$0xff]
        %v5243 = vld [vmem:[%s191 + $0xba8] sm:$0xff]
        %v5244 = vld [vmem:[%s191 + $0xbb0] sm:$0xff]
        %v5245 = vld [vmem:[%s191 + $0xbb8] sm:$0xff]
        %v5246 = vld [vmem:[%s191 + $0xbc0] sm:$0xff]
        %v5247 = vld [vmem:[%s191 + $0xbc8] sm:$0xff]
        %v5248 = vld [vmem:[%s191 + $0xbd0] sm:$0xff]
        %v5249 = vld [vmem:[%s191 + $0xbd8] sm:$0xff]
        %v5250 = vld [vmem:[%s191 + $0xbe0] sm:$0xff]
        %v5251 = vld [vmem:[%s191 + $0xbe8] sm:$0xff]
        %v5252 = vld [vmem:[%s191 + $0xbf0] sm:$0xff]
        %v5253 = vld [vmem:[%s191 + $0xbf8] sm:$0xff]
        %v5254 = vld [vmem:[%s191 + $0xc00] sm:$0xff]
        %v5255 = vld [vmem:[%s191 + $0xc08] sm:$0xff]
        %v5256 = vld [vmem:[%s191 + $0xc10] sm:$0xff]
        %v5257 = vld [vmem:[%s191 + $0xc18] sm:$0xff]
        %v5258 = vld [vmem:[%s191 + $0xc20] sm:$0xff]
        %v5259 = vld [vmem:[%s191 + $0xc28] sm:$0xff]
        %v5260 = vld [vmem:[%s191 + $0xc30] sm:$0xff]
        %v5261 = vld [vmem:[%s191 + $0xc38] sm:$0xff]
        %v5262 = vld [vmem:[%s191 + $0xc40] sm:$0xff]
        %v5263 = vld [vmem:[%s191 + $0xc48] sm:$0xff]
        %v5264 = vld [vmem:[%s191 + $0xc50] sm:$0xff]
        %v5265 = vld [vmem:[%s191 + $0xc58] sm:$0xff]
        %v5266 = vld [vmem:[%s191 + $0xc60] sm:$0xff]
        %v5267 = vld [vmem:[%s191 + $0xc68] sm:$0xff]
        %v5268 = vld [vmem:[%s191 + $0xc70] sm:$0xff]
        %v5269 = vld [vmem:[%s191 + $0xc78] sm:$0xff]
        %v5270 = vld [vmem:[%s191 + $0xc80] sm:$0xff]
        %v5271 = vld [vmem:[%s191 + $0xc88] sm:$0xff]
        %v5272 = vld [vmem:[%s191 + $0xc90] sm:$0xff]
        %v5273 = vld [vmem:[%s191 + $0xc98] sm:$0xff]
        %v5274 = vld [vmem:[%s191 + $0xca0] sm:$0xff]
        %v5275 = vld [vmem:[%s191 + $0xca8] sm:$0xff]
        %v5276 = vld [vmem:[%s191 + $0xcb0] sm:$0xff]
        %v5277 = vld [vmem:[%s191 + $0xcb8] sm:$0xff]
        %v5278 = vld [vmem:[%s191 + $0xcc0] sm:$0xff]
        %v5279 = vld [vmem:[%s191 + $0xcc8] sm:$0xff]
        %v5280 = vld [vmem:[%s191 + $0xcd0] sm:$0xff]
        %v5281 = vld [vmem:[%s191 + $0xcd8] sm:$0xff]
        %v5282 = vld [vmem:[%s191 + $0xce0] sm:$0xff]
        %v5283 = vld [vmem:[%s191 + $0xce8] sm:$0xff]
        %v5284 = vld [vmem:[%s191 + $0xcf0] sm:$0xff]
        %v5285 = vld [vmem:[%s191 + $0xcf8] sm:$0xff]
        %v5286 = vld [vmem:[%s191 + $0xd00] sm:$0xff]
        %v5287 = vld [vmem:[%s191 + $0xd08] sm:$0xff]
        %v5288 = vld [vmem:[%s191 + $0xd10] sm:$0xff]
        %v5289 = vld [vmem:[%s191 + $0xd18] sm:$0xff]
        %v5290 = vld [vmem:[%s191 + $0xd20] sm:$0xff]
        %v5291 = vld [vmem:[%s191 + $0xd28] sm:$0xff]
        %v5292 = vld [vmem:[%s191 + $0xd30] sm:$0xff]
        %v5293 = vld [vmem:[%s191 + $0xd38] sm:$0xff]
        %v5294 = vld [vmem:[%s191 + $0xd40] sm:$0xff]
        %v5295 = vld [vmem:[%s191 + $0xd48] sm:$0xff]
        %v5296 = vld [vmem:[%s191 + $0xd50] sm:$0xff]
        %v5297 = vld [vmem:[%s191 + $0xd58] sm:$0xff]
        %v5298 = vld [vmem:[%s191 + $0xd60] sm:$0xff]
        %v5299 = vld [vmem:[%s191 + $0xd68] sm:$0xff]
        %v5300 = vld [vmem:[%s191 + $0xd70] sm:$0xff]
        %v5301 = vld [vmem:[%s191 + $0xd78] sm:$0xff]
        %v5302 = vld [vmem:[%s191 + $0xd80] sm:$0xff]
        %v5303 = vld [vmem:[%s191 + $0xd88] sm:$0xff]
        %v5304 = vld [vmem:[%s191 + $0xd90] sm:$0xff]
        %v5305 = vld [vmem:[%s191 + $0xd98] sm:$0xff]
        %v5306 = vld [vmem:[%s191 + $0xda0] sm:$0xff]
        %v5307 = vld [vmem:[%s191 + $0xda8] sm:$0xff]
        %v5308 = vld [vmem:[%s191 + $0xdb0] sm:$0xff]
        %v5309 = vld [vmem:[%s191 + $0xdb8] sm:$0xff]
        %v5310 = vld [vmem:[%s191 + $0xdc0] sm:$0xff]
        %v5311 = vld [vmem:[%s191 + $0xdc8] sm:$0xff]
        %v5312 = vld [vmem:[%s191 + $0xdd0] sm:$0xff]
        %v5313 = vld [vmem:[%s191 + $0xdd8] sm:$0xff]
        %v5314 = vld [vmem:[%s191 + $0xde0] sm:$0xff]
        %v5315 = vld [vmem:[%s191 + $0xde8] sm:$0xff]
        %v5316 = vld [vmem:[%s191 + $0xdf0] sm:$0xff]
        %v5317 = vld [vmem:[%s191 + $0xdf8] sm:$0xff]
        %v5318 = vld [vmem:[%s191 + $0xe00] sm:$0xff]
        %v5319 = vld [vmem:[%s191 + $0xe08] sm:$0xff]
        %v5320 = vld [vmem:[%s191 + $0xe10] sm:$0xff]
        %v5321 = vld [vmem:[%s191 + $0xe18] sm:$0xff]
        %v5322 = vld [vmem:[%s191 + $0xe20] sm:$0xff]
        %v5323 = vld [vmem:[%s191 + $0xe28] sm:$0xff]
        %v5324 = vld [vmem:[%s191 + $0xe30] sm:$0xff]
        %v5325 = vld [vmem:[%s191 + $0xe38] sm:$0xff]
        %v5326 = vld [vmem:[%s191 + $0xe40] sm:$0xff]
        %v5327 = vld [vmem:[%s191 + $0xe48] sm:$0xff]
        %v5328 = vld [vmem:[%s191 + $0xe50] sm:$0xff]
        %v5329 = vld [vmem:[%s191 + $0xe58] sm:$0xff]
        %v5330 = vld [vmem:[%s191 + $0xe60] sm:$0xff]
        %v5331 = vld [vmem:[%s191 + $0xe68] sm:$0xff]
        %v5332 = vld [vmem:[%s191 + $0xe70] sm:$0xff]
        %v5333 = vld [vmem:[%s191 + $0xe78] sm:$0xff]
        %v5334 = vld [vmem:[%s191 + $0xe80] sm:$0xff]
        %v5335 = vld [vmem:[%s191 + $0xe88] sm:$0xff]
        %v5336 = vld [vmem:[%s191 + $0xe90] sm:$0xff]
        %v5337 = vld [vmem:[%s191 + $0xe98] sm:$0xff]
        %v5338 = vld [vmem:[%s191 + $0xea0] sm:$0xff]
        %v5339 = vld [vmem:[%s191 + $0xea8] sm:$0xff]
        %v5340 = vld [vmem:[%s191 + $0xeb0] sm:$0xff]
        %v5341 = vld [vmem:[%s191 + $0xeb8] sm:$0xff]
        %v5342 = vld [vmem:[%s191 + $0xec0] sm:$0xff]
        %v5343 = vld [vmem:[%s191 + $0xec8] sm:$0xff]
        %v5344 = vld [vmem:[%s191 + $0xed0] sm:$0xff]
        %v5345 = vld [vmem:[%s191 + $0xed8] sm:$0xff]
        %v5346 = vld [vmem:[%s191 + $0xee0] sm:$0xff]
        %v5347 = vld [vmem:[%s191 + $0xee8] sm:$0xff]
        %v5348 = vld [vmem:[%s191 + $0xef0] sm:$0xff]
        %v5349 = vld [vmem:[%s191 + $0xef8] sm:$0xff]
        %v5350 = vld [vmem:[%s191 + $0xf00] sm:$0xff]
        %v5351 = vld [vmem:[%s191 + $0xf08] sm:$0xff]
        %v5352 = vld [vmem:[%s191 + $0xf10] sm:$0xff]
        %v5353 = vld [vmem:[%s191 + $0xf18] sm:$0xff]
        %v5354 = vld [vmem:[%s191 + $0xf20] sm:$0xff]
        %v5355 = vld [vmem:[%s191 + $0xf28] sm:$0xff]
        %v5356 = vld [vmem:[%s191 + $0xf30] sm:$0xff]
        %v5357 = vld [vmem:[%s191 + $0xf38] sm:$0xff]
        %v5358 = vld [vmem:[%s191 + $0xf40] sm:$0xff]
        %v5359 = vld [vmem:[%s191 + $0xf48] sm:$0xff]
        %v5360 = vld [vmem:[%s191 + $0xf50] sm:$0xff]
        %v5361 = vld [vmem:[%s191 + $0xf58] sm:$0xff]
        %v5362 = vld [vmem:[%s191 + $0xf60] sm:$0xff]
        %v5363 = vld [vmem:[%s191 + $0xf68] sm:$0xff]
        %v5364 = vld [vmem:[%s191 + $0xf70] sm:$0xff]
        %v5365 = vld [vmem:[%s191 + $0xf78] sm:$0xff]
        %v5366 = vld [vmem:[%s191 + $0xf80] sm:$0xff]
        %v5367 = vld [vmem:[%s191 + $0xf88] sm:$0xff]
        %v5368 = vld [vmem:[%s191 + $0xf90] sm:$0xff]
        %v5369 = vld [vmem:[%s191 + $0xf98] sm:$0xff]
        %v5370 = vld [vmem:[%s191 + $0xfa0] sm:$0xff]
        %v5371 = vld [vmem:[%s191 + $0xfa8] sm:$0xff]
        %v5372 = vld [vmem:[%s191 + $0xfb0] sm:$0xff]
        %v5373 = vld [vmem:[%s191 + $0xfb8] sm:$0xff]
        %v5374 = vld [vmem:[%s191 + $0xfc0] sm:$0xff]
        %v5375 = vld [vmem:[%s191 + $0xfc8] sm:$0xff]
        %v5376 = vld [vmem:[%s191 + $0xfd0] sm:$0xff]
        %v5377 = vld [vmem:[%s191 + $0xfd8] sm:$0xff]
        %v5378 = vld [vmem:[%s191 + $0xfe0] sm:$0xff]
        %v5379 = vld [vmem:[%s191 + $0xfe8] sm:$0xff]
        %v5380 = vld [vmem:[%s191 + $0xff0] sm:$0xff]
        %v5381 = vld [vmem:[%s191 + $0xff8] sm:$0xff]
        %v5382 = vmul.f32 %v4870, %v2312
        %v5383 = vmul.f32 %v4871, %v2317
        %v5384 = vmul.f32 %v4872, %v2322
        %v5385 = vmul.f32 %v4873, %v2327
        %v5386 = vmul.f32 %v4874, %v2332
        %v5387 = vmul.f32 %v4875, %v2337
        %v5388 = vmul.f32 %v4876, %v2342
        %v5389 = vmul.f32 %v4877, %v2347
        %v5390 = vmul.f32 %v4878, %v2352
        %v5391 = vmul.f32 %v4879, %v2357
        %v5392 = vmul.f32 %v4880, %v2362
        %v5393 = vmul.f32 %v4881, %v2367
        %v5394 = vmul.f32 %v4882, %v2372
        %v5395 = vmul.f32 %v4883, %v2377
        %v5396 = vmul.f32 %v4884, %v2382
        %v5397 = vmul.f32 %v4885, %v2387
        %v5398 = vmul.f32 %v4886, %v2392
        %v5399 = vmul.f32 %v4887, %v2397
        %v5400 = vmul.f32 %v4888, %v2402
        %v5401 = vmul.f32 %v4889, %v2407
        %v5402 = vmul.f32 %v4890, %v2412
        %v5403 = vmul.f32 %v4891, %v2417
        %v5404 = vmul.f32 %v4892, %v2422
        %v5405 = vmul.f32 %v4893, %v2427
        %v5406 = vmul.f32 %v4894, %v2432
        %v5407 = vmul.f32 %v4895, %v2437
        %v5408 = vmul.f32 %v4896, %v2442
        %v5409 = vmul.f32 %v4897, %v2447
        %v5410 = vmul.f32 %v4898, %v2452
        %v5411 = vmul.f32 %v4899, %v2457
        %v5412 = vmul.f32 %v4900, %v2462
        %v5413 = vmul.f32 %v4901, %v2467
        %v5414 = vmul.f32 %v4902, %v2472
        %v5415 = vmul.f32 %v4903, %v2477
        %v5416 = vmul.f32 %v4904, %v2482
        %v5417 = vmul.f32 %v4905, %v2487
        %v5418 = vmul.f32 %v4906, %v2492
        %v5419 = vmul.f32 %v4907, %v2497
        %v5420 = vmul.f32 %v4908, %v2502
        %v5421 = vmul.f32 %v4909, %v2507
        %v5422 = vmul.f32 %v4910, %v2512
        %v5423 = vmul.f32 %v4911, %v2517
        %v5424 = vmul.f32 %v4912, %v2522
        %v5425 = vmul.f32 %v4913, %v2527
        %v5426 = vmul.f32 %v4914, %v2532
        %v5427 = vmul.f32 %v4915, %v2537
        %v5428 = vmul.f32 %v4916, %v2542
        %v5429 = vmul.f32 %v4917, %v2547
        %v5430 = vmul.f32 %v4918, %v2552
        %v5431 = vmul.f32 %v4919, %v2557
        %v5432 = vmul.f32 %v4920, %v2562
        %v5433 = vmul.f32 %v4921, %v2567
        %v5434 = vmul.f32 %v4922, %v2572
        %v5435 = vmul.f32 %v4923, %v2577
        %v5436 = vmul.f32 %v4924, %v2582
        %v5437 = vmul.f32 %v4925, %v2587
        %v5438 = vmul.f32 %v4926, %v2592
        %v5439 = vmul.f32 %v4927, %v2597
        %v5440 = vmul.f32 %v4928, %v2602
        %v5441 = vmul.f32 %v4929, %v2607
        %v5442 = vmul.f32 %v4930, %v2612
        %v5443 = vmul.f32 %v4931, %v2617
        %v5444 = vmul.f32 %v4932, %v2622
        %v5445 = vmul.f32 %v4933, %v2627
        %v5446 = vmul.f32 %v4934, %v2632
        %v5447 = vmul.f32 %v4935, %v2637
        %v5448 = vmul.f32 %v4936, %v2642
        %v5449 = vmul.f32 %v4937, %v2647
        %v5450 = vmul.f32 %v4938, %v2652
        %v5451 = vmul.f32 %v4939, %v2657
        %v5452 = vmul.f32 %v4940, %v2662
        %v5453 = vmul.f32 %v4941, %v2667
        %v5454 = vmul.f32 %v4942, %v2672
        %v5455 = vmul.f32 %v4943, %v2677
        %v5456 = vmul.f32 %v4944, %v2682
        %v5457 = vmul.f32 %v4945, %v2687
        %v5458 = vmul.f32 %v4946, %v2692
        %v5459 = vmul.f32 %v4947, %v2697
        %v5460 = vmul.f32 %v4948, %v2702
        %v5461 = vmul.f32 %v4949, %v2707
        %v5462 = vmul.f32 %v4950, %v2712
        %v5463 = vmul.f32 %v4951, %v2717
        %v5464 = vmul.f32 %v4952, %v2722
        %v5465 = vmul.f32 %v4953, %v2727
        %v5466 = vmul.f32 %v4954, %v2732
        %v5467 = vmul.f32 %v4955, %v2737
        %v5468 = vmul.f32 %v4956, %v2742
        %v5469 = vmul.f32 %v4957, %v2747
        %v5470 = vmul.f32 %v4958, %v2752
        %v5471 = vmul.f32 %v4959, %v2757
        %v5472 = vmul.f32 %v4960, %v2762
        %v5473 = vmul.f32 %v4961, %v2767
        %v5474 = vmul.f32 %v4962, %v2772
        %v5475 = vmul.f32 %v4963, %v2777
        %v5476 = vmul.f32 %v4964, %v2782
        %v5477 = vmul.f32 %v4965, %v2787
        %v5478 = vmul.f32 %v4966, %v2792
        %v5479 = vmul.f32 %v4967, %v2797
        %v5480 = vmul.f32 %v4968, %v2802
        %v5481 = vmul.f32 %v4969, %v2807
        %v5482 = vmul.f32 %v4970, %v2812
        %v5483 = vmul.f32 %v4971, %v2817
        %v5484 = vmul.f32 %v4972, %v2822
        %v5485 = vmul.f32 %v4973, %v2827
        %v5486 = vmul.f32 %v4974, %v2832
        %v5487 = vmul.f32 %v4975, %v2837
        %v5488 = vmul.f32 %v4976, %v2842
        %v5489 = vmul.f32 %v4977, %v2847
        %v5490 = vmul.f32 %v4978, %v2852
        %v5491 = vmul.f32 %v4979, %v2857
        %v5492 = vmul.f32 %v4980, %v2862
        %v5493 = vmul.f32 %v4981, %v2867
        %v5494 = vmul.f32 %v4982, %v2872
        %v5495 = vmul.f32 %v4983, %v2877
        %v5496 = vmul.f32 %v4984, %v2882
        %v5497 = vmul.f32 %v4985, %v2887
        %v5498 = vmul.f32 %v4986, %v2892
        %v5499 = vmul.f32 %v4987, %v2897
        %v5500 = vmul.f32 %v4988, %v2902
        %v5501 = vmul.f32 %v4989, %v2907
        %v5502 = vmul.f32 %v4990, %v2912
        %v5503 = vmul.f32 %v4991, %v2917
        %v5504 = vmul.f32 %v4992, %v2922
        %v5505 = vmul.f32 %v4993, %v2927
        %v5506 = vmul.f32 %v4994, %v2932
        %v5507 = vmul.f32 %v4995, %v2937
        %v5508 = vmul.f32 %v4996, %v2942
        %v5509 = vmul.f32 %v4997, %v2947
        %v5510 = vmul.f32 %v4998, %v2952
        %v5511 = vmul.f32 %v4999, %v2957
        %v5512 = vmul.f32 %v5000, %v2962
        %v5513 = vmul.f32 %v5001, %v2967
        %v5514 = vmul.f32 %v5002, %v2972
        %v5515 = vmul.f32 %v5003, %v2977
        %v5516 = vmul.f32 %v5004, %v2982
        %v5517 = vmul.f32 %v5005, %v2987
        %v5518 = vmul.f32 %v5006, %v2992
        %v5519 = vmul.f32 %v5007, %v2997
        %v5520 = vmul.f32 %v5008, %v3002
        %v5521 = vmul.f32 %v5009, %v3007
        %v5522 = vmul.f32 %v5010, %v3012
        %v5523 = vmul.f32 %v5011, %v3017
        %v5524 = vmul.f32 %v5012, %v3022
        %v5525 = vmul.f32 %v5013, %v3027
        %v5526 = vmul.f32 %v5014, %v3032
        %v5527 = vmul.f32 %v5015, %v3037
        %v5528 = vmul.f32 %v5016, %v3042
        %v5529 = vmul.f32 %v5017, %v3047
        %v5530 = vmul.f32 %v5018, %v3052
        %v5531 = vmul.f32 %v5019, %v3057
        %v5532 = vmul.f32 %v5020, %v3062
        %v5533 = vmul.f32 %v5021, %v3067
        %v5534 = vmul.f32 %v5022, %v3072
        %v5535 = vmul.f32 %v5023, %v3077
        %v5536 = vmul.f32 %v5024, %v3082
        %v5537 = vmul.f32 %v5025, %v3087
        %v5538 = vmul.f32 %v5026, %v3092
        %v5539 = vmul.f32 %v5027, %v3097
        %v5540 = vmul.f32 %v5028, %v3102
        %v5541 = vmul.f32 %v5029, %v3107
        %v5542 = vmul.f32 %v5030, %v3112
        %v5543 = vmul.f32 %v5031, %v3117
        %v5544 = vmul.f32 %v5032, %v3122
        %v5545 = vmul.f32 %v5033, %v3127
        %v5546 = vmul.f32 %v5034, %v3132
        %v5547 = vmul.f32 %v5035, %v3137
        %v5548 = vmul.f32 %v5036, %v3142
        %v5549 = vmul.f32 %v5037, %v3147
        %v5550 = vmul.f32 %v5038, %v3152
        %v5551 = vmul.f32 %v5039, %v3157
        %v5552 = vmul.f32 %v5040, %v3162
        %v5553 = vmul.f32 %v5041, %v3167
        %v5554 = vmul.f32 %v5042, %v3172
        %v5555 = vmul.f32 %v5043, %v3177
        %v5556 = vmul.f32 %v5044, %v3182
        %v5557 = vmul.f32 %v5045, %v3187
        %v5558 = vmul.f32 %v5046, %v3192
        %v5559 = vmul.f32 %v5047, %v3197
        %v5560 = vmul.f32 %v5048, %v3202
        %v5561 = vmul.f32 %v5049, %v3207
        %v5562 = vmul.f32 %v5050, %v3212
        %v5563 = vmul.f32 %v5051, %v3217
        %v5564 = vmul.f32 %v5052, %v3222
        %v5565 = vmul.f32 %v5053, %v3227
        %v5566 = vmul.f32 %v5054, %v3232
        %v5567 = vmul.f32 %v5055, %v3237
        %v5568 = vmul.f32 %v5056, %v3242
        %v5569 = vmul.f32 %v5057, %v3247
        %v5570 = vmul.f32 %v5058, %v3252
        %v5571 = vmul.f32 %v5059, %v3257
        %v5572 = vmul.f32 %v5060, %v3262
        %v5573 = vmul.f32 %v5061, %v3267
        %v5574 = vmul.f32 %v5062, %v3272
        %v5575 = vmul.f32 %v5063, %v3277
        %v5576 = vmul.f32 %v5064, %v3282
        %v5577 = vmul.f32 %v5065, %v3287
        %v5578 = vmul.f32 %v5066, %v3292
        %v5579 = vmul.f32 %v5067, %v3297
        %v5580 = vmul.f32 %v5068, %v3302
        %v5581 = vmul.f32 %v5069, %v3307
        %v5582 = vmul.f32 %v5070, %v3312
        %v5583 = vmul.f32 %v5071, %v3317
        %v5584 = vmul.f32 %v5072, %v3322
        %v5585 = vmul.f32 %v5073, %v3327
        %v5586 = vmul.f32 %v5074, %v3332
        %v5587 = vmul.f32 %v5075, %v3337
        %v5588 = vmul.f32 %v5076, %v3342
        %v5589 = vmul.f32 %v5077, %v3347
        %v5590 = vmul.f32 %v5078, %v3352
        %v5591 = vmul.f32 %v5079, %v3357
        %v5592 = vmul.f32 %v5080, %v3362
        %v5593 = vmul.f32 %v5081, %v3367
        %v5594 = vmul.f32 %v5082, %v3372
        %v5595 = vmul.f32 %v5083, %v3377
        %v5596 = vmul.f32 %v5084, %v3382
        %v5597 = vmul.f32 %v5085, %v3387
        %v5598 = vmul.f32 %v5086, %v3392
        %v5599 = vmul.f32 %v5087, %v3397
        %v5600 = vmul.f32 %v5088, %v3402
        %v5601 = vmul.f32 %v5089, %v3407
        %v5602 = vmul.f32 %v5090, %v3412
        %v5603 = vmul.f32 %v5091, %v3417
        %v5604 = vmul.f32 %v5092, %v3422
        %v5605 = vmul.f32 %v5093, %v3427
        %v5606 = vmul.f32 %v5094, %v3432
        %v5607 = vmul.f32 %v5095, %v3437
        %v5608 = vmul.f32 %v5096, %v3442
        %v5609 = vmul.f32 %v5097, %v3447
        %v5610 = vmul.f32 %v5098, %v3452
        %v5611 = vmul.f32 %v5099, %v3457
        %v5612 = vmul.f32 %v5100, %v3462
        %v5613 = vmul.f32 %v5101, %v3467
        %v5614 = vmul.f32 %v5102, %v3472
        %v5615 = vmul.f32 %v5103, %v3477
        %v5616 = vmul.f32 %v5104, %v3482
        %v5617 = vmul.f32 %v5105, %v3487
        %v5618 = vmul.f32 %v5106, %v3492
        %v5619 = vmul.f32 %v5107, %v3497
        %v5620 = vmul.f32 %v5108, %v3502
        %v5621 = vmul.f32 %v5109, %v3507
        %v5622 = vmul.f32 %v5110, %v3512
        %v5623 = vmul.f32 %v5111, %v3517
        %v5624 = vmul.f32 %v5112, %v3522
        %v5625 = vmul.f32 %v5113, %v3527
        %v5626 = vmul.f32 %v5114, %v3532
        %v5627 = vmul.f32 %v5115, %v3537
        %v5628 = vmul.f32 %v5116, %v3542
        %v5629 = vmul.f32 %v5117, %v3547
        %v5630 = vmul.f32 %v5118, %v3552
        %v5631 = vmul.f32 %v5119, %v3557
        %v5632 = vmul.f32 %v5120, %v3562
        %v5633 = vmul.f32 %v5121, %v3567
        %v5634 = vmul.f32 %v5122, %v3572
        %v5635 = vmul.f32 %v5123, %v3577
        %v5636 = vmul.f32 %v5124, %v3582
        %v5637 = vmul.f32 %v5125, %v3587
        %v5638 = vmul.f32 %v5126, %v3592
        %v5639 = vmul.f32 %v5127, %v3597
        %v5640 = vmul.f32 %v5128, %v3602
        %v5641 = vmul.f32 %v5129, %v3607
        %v5642 = vmul.f32 %v5130, %v3612
        %v5643 = vmul.f32 %v5131, %v3617
        %v5644 = vmul.f32 %v5132, %v3622
        %v5645 = vmul.f32 %v5133, %v3627
        %v5646 = vmul.f32 %v5134, %v3632
        %v5647 = vmul.f32 %v5135, %v3637
        %v5648 = vmul.f32 %v5136, %v3642
        %v5649 = vmul.f32 %v5137, %v3647
        %v5650 = vmul.f32 %v5138, %v3652
        %v5651 = vmul.f32 %v5139, %v3657
        %v5652 = vmul.f32 %v5140, %v3662
        %v5653 = vmul.f32 %v5141, %v3667
        %v5654 = vmul.f32 %v5142, %v3672
        %v5655 = vmul.f32 %v5143, %v3677
        %v5656 = vmul.f32 %v5144, %v3682
        %v5657 = vmul.f32 %v5145, %v3687
        %v5658 = vmul.f32 %v5146, %v3692
        %v5659 = vmul.f32 %v5147, %v3697
        %v5660 = vmul.f32 %v5148, %v3702
        %v5661 = vmul.f32 %v5149, %v3707
        %v5662 = vmul.f32 %v5150, %v3712
        %v5663 = vmul.f32 %v5151, %v3717
        %v5664 = vmul.f32 %v5152, %v3722
        %v5665 = vmul.f32 %v5153, %v3727
        %v5666 = vmul.f32 %v5154, %v3732
        %v5667 = vmul.f32 %v5155, %v3737
        %v5668 = vmul.f32 %v5156, %v3742
        %v5669 = vmul.f32 %v5157, %v3747
        %v5670 = vmul.f32 %v5158, %v3752
        %v5671 = vmul.f32 %v5159, %v3757
        %v5672 = vmul.f32 %v5160, %v3762
        %v5673 = vmul.f32 %v5161, %v3767
        %v5674 = vmul.f32 %v5162, %v3772
        %v5675 = vmul.f32 %v5163, %v3777
        %v5676 = vmul.f32 %v5164, %v3782
        %v5677 = vmul.f32 %v5165, %v3787
        %v5678 = vmul.f32 %v5166, %v3792
        %v5679 = vmul.f32 %v5167, %v3797
        %v5680 = vmul.f32 %v5168, %v3802
        %v5681 = vmul.f32 %v5169, %v3807
        %v5682 = vmul.f32 %v5170, %v3812
        %v5683 = vmul.f32 %v5171, %v3817
        %v5684 = vmul.f32 %v5172, %v3822
        %v5685 = vmul.f32 %v5173, %v3827
        %v5686 = vmul.f32 %v5174, %v3832
        %v5687 = vmul.f32 %v5175, %v3837
        %v5688 = vmul.f32 %v5176, %v3842
        %v5689 = vmul.f32 %v5177, %v3847
        %v5690 = vmul.f32 %v5178, %v3852
        %v5691 = vmul.f32 %v5179, %v3857
        %v5692 = vmul.f32 %v5180, %v3862
        %v5693 = vmul.f32 %v5181, %v3867
        %v5694 = vmul.f32 %v5182, %v3872
        %v5695 = vmul.f32 %v5183, %v3877
        %v5696 = vmul.f32 %v5184, %v3882
        %v5697 = vmul.f32 %v5185, %v3887
        %v5698 = vmul.f32 %v5186, %v3892
        %v5699 = vmul.f32 %v5187, %v3897
        %v5700 = vmul.f32 %v5188, %v3902
        %v5701 = vmul.f32 %v5189, %v3907
        %v5702 = vmul.f32 %v5190, %v3912
        %v5703 = vmul.f32 %v5191, %v3917
        %v5704 = vmul.f32 %v5192, %v3922
        %v5705 = vmul.f32 %v5193, %v3927
        %v5706 = vmul.f32 %v5194, %v3932
        %v5707 = vmul.f32 %v5195, %v3937
        %v5708 = vmul.f32 %v5196, %v3942
        %v5709 = vmul.f32 %v5197, %v3947
        %v5710 = vmul.f32 %v5198, %v3952
        %v5711 = vmul.f32 %v5199, %v3957
        %v5712 = vmul.f32 %v5200, %v3962
        %v5713 = vmul.f32 %v5201, %v3967
        %v5714 = vmul.f32 %v5202, %v3972
        %v5715 = vmul.f32 %v5203, %v3977
        %v5716 = vmul.f32 %v5204, %v3982
        %v5717 = vmul.f32 %v5205, %v3987
        %v5718 = vmul.f32 %v5206, %v3992
        %v5719 = vmul.f32 %v5207, %v3997
        %v5720 = vmul.f32 %v5208, %v4002
        %v5721 = vmul.f32 %v5209, %v4007
        %v5722 = vmul.f32 %v5210, %v4012
        %v5723 = vmul.f32 %v5211, %v4017
        %v5724 = vmul.f32 %v5212, %v4022
        %v5725 = vmul.f32 %v5213, %v4027
        %v5726 = vmul.f32 %v5214, %v4032
        %v5727 = vmul.f32 %v5215, %v4037
        %v5728 = vmul.f32 %v5216, %v4042
        %v5729 = vmul.f32 %v5217, %v4047
        %v5730 = vmul.f32 %v5218, %v4052
        %v5731 = vmul.f32 %v5219, %v4057
        %v5732 = vmul.f32 %v5220, %v4062
        %v5733 = vmul.f32 %v5221, %v4067
        %v5734 = vmul.f32 %v5222, %v4072
        %v5735 = vmul.f32 %v5223, %v4077
        %v5736 = vmul.f32 %v5224, %v4082
        %v5737 = vmul.f32 %v5225, %v4087
        %v5738 = vmul.f32 %v5226, %v4092
        %v5739 = vmul.f32 %v5227, %v4097
        %v5740 = vmul.f32 %v5228, %v4102
        %v5741 = vmul.f32 %v5229, %v4107
        %v5742 = vmul.f32 %v5230, %v4112
        %v5743 = vmul.f32 %v5231, %v4117
        %v5744 = vmul.f32 %v5232, %v4122
        %v5745 = vmul.f32 %v5233, %v4127
        %v5746 = vmul.f32 %v5234, %v4132
        %v5747 = vmul.f32 %v5235, %v4137
        %v5748 = vmul.f32 %v5236, %v4142
        %v5749 = vmul.f32 %v5237, %v4147
        %v5750 = vmul.f32 %v5238, %v4152
        %v5751 = vmul.f32 %v5239, %v4157
        %v5752 = vmul.f32 %v5240, %v4162
        %v5753 = vmul.f32 %v5241, %v4167
        %v5754 = vmul.f32 %v5242, %v4172
        %v5755 = vmul.f32 %v5243, %v4177
        %v5756 = vmul.f32 %v5244, %v4182
        %v5757 = vmul.f32 %v5245, %v4187
        %v5758 = vmul.f32 %v5246, %v4192
        %v5759 = vmul.f32 %v5247, %v4197
        %v5760 = vmul.f32 %v5248, %v4202
        %v5761 = vmul.f32 %v5249, %v4207
        %v5762 = vmul.f32 %v5250, %v4212
        %v5763 = vmul.f32 %v5251, %v4217
        %v5764 = vmul.f32 %v5252, %v4222
        %v5765 = vmul.f32 %v5253, %v4227
        %v5766 = vmul.f32 %v5254, %v4232
        %v5767 = vmul.f32 %v5255, %v4237
        %v5768 = vmul.f32 %v5256, %v4242
        %v5769 = vmul.f32 %v5257, %v4247
        %v5770 = vmul.f32 %v5258, %v4252
        %v5771 = vmul.f32 %v5259, %v4257
        %v5772 = vmul.f32 %v5260, %v4262
        %v5773 = vmul.f32 %v5261, %v4267
        %v5774 = vmul.f32 %v5262, %v4272
        %v5775 = vmul.f32 %v5263, %v4277
        %v5776 = vmul.f32 %v5264, %v4282
        %v5777 = vmul.f32 %v5265, %v4287
        %v5778 = vmul.f32 %v5266, %v4292
        %v5779 = vmul.f32 %v5267, %v4297
        %v5780 = vmul.f32 %v5268, %v4302
        %v5781 = vmul.f32 %v5269, %v4307
        %v5782 = vmul.f32 %v5270, %v4312
        %v5783 = vmul.f32 %v5271, %v4317
        %v5784 = vmul.f32 %v5272, %v4322
        %v5785 = vmul.f32 %v5273, %v4327
        %v5786 = vmul.f32 %v5274, %v4332
        %v5787 = vmul.f32 %v5275, %v4337
        %v5788 = vmul.f32 %v5276, %v4342
        %v5789 = vmul.f32 %v5277, %v4347
        %v5790 = vmul.f32 %v5278, %v4352
        %v5791 = vmul.f32 %v5279, %v4357
        %v5792 = vmul.f32 %v5280, %v4362
        %v5793 = vmul.f32 %v5281, %v4367
        %v5794 = vmul.f32 %v5282, %v4372
        %v5795 = vmul.f32 %v5283, %v4377
        %v5796 = vmul.f32 %v5284, %v4382
        %v5797 = vmul.f32 %v5285, %v4387
        %v5798 = vmul.f32 %v5286, %v4392
        %v5799 = vmul.f32 %v5287, %v4397
        %v5800 = vmul.f32 %v5288, %v4402
        %v5801 = vmul.f32 %v5289, %v4407
        %v5802 = vmul.f32 %v5290, %v4412
        %v5803 = vmul.f32 %v5291, %v4417
        %v5804 = vmul.f32 %v5292, %v4422
        %v5805 = vmul.f32 %v5293, %v4427
        %v5806 = vmul.f32 %v5294, %v4432
        %v5807 = vmul.f32 %v5295, %v4437
        %v5808 = vmul.f32 %v5296, %v4442
        %v5809 = vmul.f32 %v5297, %v4447
        %v5810 = vmul.f32 %v5298, %v4452
        %v5811 = vmul.f32 %v5299, %v4457
        %v5812 = vmul.f32 %v5300, %v4462
        %v5813 = vmul.f32 %v5301, %v4467
        %v5814 = vmul.f32 %v5302, %v4472
        %v5815 = vmul.f32 %v5303, %v4477
        %v5816 = vmul.f32 %v5304, %v4482
        %v5817 = vmul.f32 %v5305, %v4487
        %v5818 = vmul.f32 %v5306, %v4492
        %v5819 = vmul.f32 %v5307, %v4497
        %v5820 = vmul.f32 %v5308, %v4502
        %v5821 = vmul.f32 %v5309, %v4507
        %v5822 = vmul.f32 %v5310, %v4512
        %v5823 = vmul.f32 %v5311, %v4517
        %v5824 = vmul.f32 %v5312, %v4522
        %v5825 = vmul.f32 %v5313, %v4527
        %v5826 = vmul.f32 %v5314, %v4532
        %v5827 = vmul.f32 %v5315, %v4537
        %v5828 = vmul.f32 %v5316, %v4542
        %v5829 = vmul.f32 %v5317, %v4547
        %v5830 = vmul.f32 %v5318, %v4552
        %v5831 = vmul.f32 %v5319, %v4557
        %v5832 = vmul.f32 %v5320, %v4562
        %v5833 = vmul.f32 %v5321, %v4567
        %v5834 = vmul.f32 %v5322, %v4572
        %v5835 = vmul.f32 %v5323, %v4577
        %v5836 = vmul.f32 %v5324, %v4582
        %v5837 = vmul.f32 %v5325, %v4587
        %v5838 = vmul.f32 %v5326, %v4592
        %v5839 = vmul.f32 %v5327, %v4597
        %v5840 = vmul.f32 %v5328, %v4602
        %v5841 = vmul.f32 %v5329, %v4607
        %v5842 = vmul.f32 %v5330, %v4612
        %v5843 = vmul.f32 %v5331, %v4617
        %v5844 = vmul.f32 %v5332, %v4622
        %v5845 = vmul.f32 %v5333, %v4627
        %v5846 = vmul.f32 %v5334, %v4632
        %v5847 = vmul.f32 %v5335, %v4637
        %v5848 = vmul.f32 %v5336, %v4642
        %v5849 = vmul.f32 %v5337, %v4647
        %v5850 = vmul.f32 %v5338, %v4652
        %v5851 = vmul.f32 %v5339, %v4657
        %v5852 = vmul.f32 %v5340, %v4662
        %v5853 = vmul.f32 %v5341, %v4667
        %v5854 = vmul.f32 %v5342, %v4672
        %v5855 = vmul.f32 %v5343, %v4677
        %v5856 = vmul.f32 %v5344, %v4682
        %v5857 = vmul.f32 %v5345, %v4687
        %v5858 = vmul.f32 %v5346, %v4692
        %v5859 = vmul.f32 %v5347, %v4697
        %v5860 = vmul.f32 %v5348, %v4702
        %v5861 = vmul.f32 %v5349, %v4707
        %v5862 = vmul.f32 %v5350, %v4712
        %v5863 = vmul.f32 %v5351, %v4717
        %v5864 = vmul.f32 %v5352, %v4722
        %v5865 = vmul.f32 %v5353, %v4727
        %v5866 = vmul.f32 %v5354, %v4732
        %v5867 = vmul.f32 %v5355, %v4737
        %v5868 = vmul.f32 %v5356, %v4742
        %v5869 = vmul.f32 %v5357, %v4747
        %v5870 = vmul.f32 %v5358, %v4752
        %v5871 = vmul.f32 %v5359, %v4757
        %v5872 = vmul.f32 %v5360, %v4762
        %v5873 = vmul.f32 %v5361, %v4767
        %v5874 = vmul.f32 %v5362, %v4772
        %v5875 = vmul.f32 %v5363, %v4777
        %v5876 = vmul.f32 %v5364, %v4782
        %v5877 = vmul.f32 %v5365, %v4787
        %v5878 = vmul.f32 %v5366, %v4792
        %v5879 = vmul.f32 %v5367, %v4797
        %v5880 = vmul.f32 %v5368, %v4802
        %v5881 = vmul.f32 %v5369, %v4807
        %v5882 = vmul.f32 %v5370, %v4812
        %v5883 = vmul.f32 %v5371, %v4817
        %v5884 = vmul.f32 %v5372, %v4822
        %v5885 = vmul.f32 %v5373, %v4827
        %v5886 = vmul.f32 %v5374, %v4832
        %v5887 = vmul.f32 %v5375, %v4837
        %v5888 = vmul.f32 %v5376, %v4842
        %v5889 = vmul.f32 %v5377, %v4847
        %v5890 = vmul.f32 %v5378, %v4852
        %v5891 = vmul.f32 %v5379, %v4857
        %v5892 = vmul.f32 %v5380, %v4862
        %v5893 = vmul.f32 %v5381, %v4867
        %v5894 = vrot.slane %v5382, 4
        %v5895 = vadd.f32 %v5382, %v5894
        %v5896 = vrot.slane %v5895, 2
        %v5897 = vadd.f32 %v5895, %v5896
        %v5898 = vrot.slane %v5897, 1
        %v5899 = vadd.f32 %v5897, %v5898
        %v5900 = vrot.slane %v5383, 4
        %v5901 = vadd.f32 %v5383, %v5900
        %v5902 = vrot.slane %v5901, 2
        %v5903 = vadd.f32 %v5901, %v5902
        %v5904 = vrot.slane %v5903, 1
        %v5905 = vadd.f32 %v5903, %v5904
        %v5906 = vrot.slane %v5384, 4
        %v5907 = vadd.f32 %v5384, %v5906
        %v5908 = vrot.slane %v5907, 2
        %v5909 = vadd.f32 %v5907, %v5908
        %v5910 = vrot.slane %v5909, 1
        %v5911 = vadd.f32 %v5909, %v5910
        %v5912 = vrot.slane %v5385, 4
        %v5913 = vadd.f32 %v5385, %v5912
        %v5914 = vrot.slane %v5913, 2
        %v5915 = vadd.f32 %v5913, %v5914
        %v5916 = vrot.slane %v5915, 1
        %v5917 = vadd.f32 %v5915, %v5916
        %v5918 = vrot.slane %v5386, 4
        %v5919 = vadd.f32 %v5386, %v5918
        %v5920 = vrot.slane %v5919, 2
        %v5921 = vadd.f32 %v5919, %v5920
        %v5922 = vrot.slane %v5921, 1
        %v5923 = vadd.f32 %v5921, %v5922
        %v5924 = vrot.slane %v5387, 4
        %v5925 = vadd.f32 %v5387, %v5924
        %v5926 = vrot.slane %v5925, 2
        %v5927 = vadd.f32 %v5925, %v5926
        %v5928 = vrot.slane %v5927, 1
        %v5929 = vadd.f32 %v5927, %v5928
        %v5930 = vrot.slane %v5388, 4
        %v5931 = vadd.f32 %v5388, %v5930
        %v5932 = vrot.slane %v5931, 2
        %v5933 = vadd.f32 %v5931, %v5932
        %v5934 = vrot.slane %v5933, 1
        %v5935 = vadd.f32 %v5933, %v5934
        %v5936 = vrot.slane %v5389, 4
        %v5937 = vadd.f32 %v5389, %v5936
        %v5938 = vrot.slane %v5937, 2
        %v5939 = vadd.f32 %v5937, %v5938
        %v5940 = vrot.slane %v5939, 1
        %v5941 = vadd.f32 %v5939, %v5940
        %v5942 = vrot.slane %v5390, 4
        %v5943 = vadd.f32 %v5390, %v5942
        %v5944 = vrot.slane %v5943, 2
        %v5945 = vadd.f32 %v5943, %v5944
        %v5946 = vrot.slane %v5945, 1
        %v5947 = vadd.f32 %v5945, %v5946
        %v5948 = vrot.slane %v5391, 4
        %v5949 = vadd.f32 %v5391, %v5948
        %v5950 = vrot.slane %v5949, 2
        %v5951 = vadd.f32 %v5949, %v5950
        %v5952 = vrot.slane %v5951, 1
        %v5953 = vadd.f32 %v5951, %v5952
        %v5954 = vrot.slane %v5392, 4
        %v5955 = vadd.f32 %v5392, %v5954
        %v5956 = vrot.slane %v5955, 2
        %v5957 = vadd.f32 %v5955, %v5956
        %v5958 = vrot.slane %v5957, 1
        %v5959 = vadd.f32 %v5957, %v5958
        %v5960 = vrot.slane %v5393, 4
        %v5961 = vadd.f32 %v5393, %v5960
        %v5962 = vrot.slane %v5961, 2
        %v5963 = vadd.f32 %v5961, %v5962
        %v5964 = vrot.slane %v5963, 1
        %v5965 = vadd.f32 %v5963, %v5964
        %v5966 = vrot.slane %v5394, 4
        %v5967 = vadd.f32 %v5394, %v5966
        %v5968 = vrot.slane %v5967, 2
        %v5969 = vadd.f32 %v5967, %v5968
        %v5970 = vrot.slane %v5969, 1
        %v5971 = vadd.f32 %v5969, %v5970
        %v5972 = vrot.slane %v5395, 4
        %v5973 = vadd.f32 %v5395, %v5972
        %v5974 = vrot.slane %v5973, 2
        %v5975 = vadd.f32 %v5973, %v5974
        %v5976 = vrot.slane %v5975, 1
        %v5977 = vadd.f32 %v5975, %v5976
        %v5978 = vrot.slane %v5396, 4
        %v5979 = vadd.f32 %v5396, %v5978
        %v5980 = vrot.slane %v5979, 2
        %v5981 = vadd.f32 %v5979, %v5980
        %v5982 = vrot.slane %v5981, 1
        %v5983 = vadd.f32 %v5981, %v5982
        %v5984 = vrot.slane %v5397, 4
        %v5985 = vadd.f32 %v5397, %v5984
        %v5986 = vrot.slane %v5985, 2
        %v5987 = vadd.f32 %v5985, %v5986
        %v5988 = vrot.slane %v5987, 1
        %v5989 = vadd.f32 %v5987, %v5988
        %v5990 = vrot.slane %v5398, 4
        %v5991 = vadd.f32 %v5398, %v5990
        %v5992 = vrot.slane %v5991, 2
        %v5993 = vadd.f32 %v5991, %v5992
        %v5994 = vrot.slane %v5993, 1
        %v5995 = vadd.f32 %v5993, %v5994
        %v5996 = vrot.slane %v5399, 4
        %v5997 = vadd.f32 %v5399, %v5996
        %v5998 = vrot.slane %v5997, 2
        %v5999 = vadd.f32 %v5997, %v5998
        %v6000 = vrot.slane %v5999, 1
        %v6001 = vadd.f32 %v5999, %v6000
        %v6002 = vrot.slane %v5400, 4
        %v6003 = vadd.f32 %v5400, %v6002
        %v6004 = vrot.slane %v6003, 2
        %v6005 = vadd.f32 %v6003, %v6004
        %v6006 = vrot.slane %v6005, 1
        %v6007 = vadd.f32 %v6005, %v6006
        %v6008 = vrot.slane %v5401, 4
        %v6009 = vadd.f32 %v5401, %v6008
        %v6010 = vrot.slane %v6009, 2
        %v6011 = vadd.f32 %v6009, %v6010
        %v6012 = vrot.slane %v6011, 1
        %v6013 = vadd.f32 %v6011, %v6012
        %v6014 = vrot.slane %v5402, 4
        %v6015 = vadd.f32 %v5402, %v6014
        %v6016 = vrot.slane %v6015, 2
        %v6017 = vadd.f32 %v6015, %v6016
        %v6018 = vrot.slane %v6017, 1
        %v6019 = vadd.f32 %v6017, %v6018
        %v6020 = vrot.slane %v5403, 4
        %v6021 = vadd.f32 %v5403, %v6020
        %v6022 = vrot.slane %v6021, 2
        %v6023 = vadd.f32 %v6021, %v6022
        %v6024 = vrot.slane %v6023, 1
        %v6025 = vadd.f32 %v6023, %v6024
        %v6026 = vrot.slane %v5404, 4
        %v6027 = vadd.f32 %v5404, %v6026
        %v6028 = vrot.slane %v6027, 2
        %v6029 = vadd.f32 %v6027, %v6028
        %v6030 = vrot.slane %v6029, 1
        %v6031 = vadd.f32 %v6029, %v6030
        %v6032 = vrot.slane %v5405, 4
        %v6033 = vadd.f32 %v5405, %v6032
        %v6034 = vrot.slane %v6033, 2
        %v6035 = vadd.f32 %v6033, %v6034
        %v6036 = vrot.slane %v6035, 1
        %v6037 = vadd.f32 %v6035, %v6036
        %v6038 = vrot.slane %v5406, 4
        %v6039 = vadd.f32 %v5406, %v6038
        %v6040 = vrot.slane %v6039, 2
        %v6041 = vadd.f32 %v6039, %v6040
        %v6042 = vrot.slane %v6041, 1
        %v6043 = vadd.f32 %v6041, %v6042
        %v6044 = vrot.slane %v5407, 4
        %v6045 = vadd.f32 %v5407, %v6044
        %v6046 = vrot.slane %v6045, 2
        %v6047 = vadd.f32 %v6045, %v6046
        %v6048 = vrot.slane %v6047, 1
        %v6049 = vadd.f32 %v6047, %v6048
        %v6050 = vrot.slane %v5408, 4
        %v6051 = vadd.f32 %v5408, %v6050
        %v6052 = vrot.slane %v6051, 2
        %v6053 = vadd.f32 %v6051, %v6052
        %v6054 = vrot.slane %v6053, 1
        %v6055 = vadd.f32 %v6053, %v6054
        %v6056 = vrot.slane %v5409, 4
        %v6057 = vadd.f32 %v5409, %v6056
        %v6058 = vrot.slane %v6057, 2
        %v6059 = vadd.f32 %v6057, %v6058
        %v6060 = vrot.slane %v6059, 1
        %v6061 = vadd.f32 %v6059, %v6060
        %v6062 = vrot.slane %v5410, 4
        %v6063 = vadd.f32 %v5410, %v6062
        %v6064 = vrot.slane %v6063, 2
        %v6065 = vadd.f32 %v6063, %v6064
        %v6066 = vrot.slane %v6065, 1
        %v6067 = vadd.f32 %v6065, %v6066
        %v6068 = vrot.slane %v5411, 4
        %v6069 = vadd.f32 %v5411, %v6068
        %v6070 = vrot.slane %v6069, 2
        %v6071 = vadd.f32 %v6069, %v6070
        %v6072 = vrot.slane %v6071, 1
        %v6073 = vadd.f32 %v6071, %v6072
        %v6074 = vrot.slane %v5412, 4
        %v6075 = vadd.f32 %v5412, %v6074
        %v6076 = vrot.slane %v6075, 2
        %v6077 = vadd.f32 %v6075, %v6076
        %v6078 = vrot.slane %v6077, 1
        %v6079 = vadd.f32 %v6077, %v6078
        %v6080 = vrot.slane %v5413, 4
        %v6081 = vadd.f32 %v5413, %v6080
        %v6082 = vrot.slane %v6081, 2
        %v6083 = vadd.f32 %v6081, %v6082
        %v6084 = vrot.slane %v6083, 1
        %v6085 = vadd.f32 %v6083, %v6084
        %v6086 = vrot.slane %v5414, 4
        %v6087 = vadd.f32 %v5414, %v6086
        %v6088 = vrot.slane %v6087, 2
        %v6089 = vadd.f32 %v6087, %v6088
        %v6090 = vrot.slane %v6089, 1
        %v6091 = vadd.f32 %v6089, %v6090
        %v6092 = vrot.slane %v5415, 4
        %v6093 = vadd.f32 %v5415, %v6092
        %v6094 = vrot.slane %v6093, 2
        %v6095 = vadd.f32 %v6093, %v6094
        %v6096 = vrot.slane %v6095, 1
        %v6097 = vadd.f32 %v6095, %v6096
        %v6098 = vrot.slane %v5416, 4
        %v6099 = vadd.f32 %v5416, %v6098
        %v6100 = vrot.slane %v6099, 2
        %v6101 = vadd.f32 %v6099, %v6100
        %v6102 = vrot.slane %v6101, 1
        %v6103 = vadd.f32 %v6101, %v6102
        %v6104 = vrot.slane %v5417, 4
        %v6105 = vadd.f32 %v5417, %v6104
        %v6106 = vrot.slane %v6105, 2
        %v6107 = vadd.f32 %v6105, %v6106
        %v6108 = vrot.slane %v6107, 1
        %v6109 = vadd.f32 %v6107, %v6108
        %v6110 = vrot.slane %v5418, 4
        %v6111 = vadd.f32 %v5418, %v6110
        %v6112 = vrot.slane %v6111, 2
        %v6113 = vadd.f32 %v6111, %v6112
        %v6114 = vrot.slane %v6113, 1
        %v6115 = vadd.f32 %v6113, %v6114
        %v6116 = vrot.slane %v5419, 4
        %v6117 = vadd.f32 %v5419, %v6116
        %v6118 = vrot.slane %v6117, 2
        %v6119 = vadd.f32 %v6117, %v6118
        %v6120 = vrot.slane %v6119, 1
        %v6121 = vadd.f32 %v6119, %v6120
        %v6122 = vrot.slane %v5420, 4
        %v6123 = vadd.f32 %v5420, %v6122
        %v6124 = vrot.slane %v6123, 2
        %v6125 = vadd.f32 %v6123, %v6124
        %v6126 = vrot.slane %v6125, 1
        %v6127 = vadd.f32 %v6125, %v6126
        %v6128 = vrot.slane %v5421, 4
        %v6129 = vadd.f32 %v5421, %v6128
        %v6130 = vrot.slane %v6129, 2
        %v6131 = vadd.f32 %v6129, %v6130
        %v6132 = vrot.slane %v6131, 1
        %v6133 = vadd.f32 %v6131, %v6132
        %v6134 = vrot.slane %v5422, 4
        %v6135 = vadd.f32 %v5422, %v6134
        %v6136 = vrot.slane %v6135, 2
        %v6137 = vadd.f32 %v6135, %v6136
        %v6138 = vrot.slane %v6137, 1
        %v6139 = vadd.f32 %v6137, %v6138
        %v6140 = vrot.slane %v5423, 4
        %v6141 = vadd.f32 %v5423, %v6140
        %v6142 = vrot.slane %v6141, 2
        %v6143 = vadd.f32 %v6141, %v6142
        %v6144 = vrot.slane %v6143, 1
        %v6145 = vadd.f32 %v6143, %v6144
        %v6146 = vrot.slane %v5424, 4
        %v6147 = vadd.f32 %v5424, %v6146
        %v6148 = vrot.slane %v6147, 2
        %v6149 = vadd.f32 %v6147, %v6148
        %v6150 = vrot.slane %v6149, 1
        %v6151 = vadd.f32 %v6149, %v6150
        %v6152 = vrot.slane %v5425, 4
        %v6153 = vadd.f32 %v5425, %v6152
        %v6154 = vrot.slane %v6153, 2
        %v6155 = vadd.f32 %v6153, %v6154
        %v6156 = vrot.slane %v6155, 1
        %v6157 = vadd.f32 %v6155, %v6156
        %v6158 = vrot.slane %v5426, 4
        %v6159 = vadd.f32 %v5426, %v6158
        %v6160 = vrot.slane %v6159, 2
        %v6161 = vadd.f32 %v6159, %v6160
        %v6162 = vrot.slane %v6161, 1
        %v6163 = vadd.f32 %v6161, %v6162
        %v6164 = vrot.slane %v5427, 4
        %v6165 = vadd.f32 %v5427, %v6164
        %v6166 = vrot.slane %v6165, 2
        %v6167 = vadd.f32 %v6165, %v6166
        %v6168 = vrot.slane %v6167, 1
        %v6169 = vadd.f32 %v6167, %v6168
        %v6170 = vrot.slane %v5428, 4
        %v6171 = vadd.f32 %v5428, %v6170
        %v6172 = vrot.slane %v6171, 2
        %v6173 = vadd.f32 %v6171, %v6172
        %v6174 = vrot.slane %v6173, 1
        %v6175 = vadd.f32 %v6173, %v6174
        %v6176 = vrot.slane %v5429, 4
        %v6177 = vadd.f32 %v5429, %v6176
        %v6178 = vrot.slane %v6177, 2
        %v6179 = vadd.f32 %v6177, %v6178
        %v6180 = vrot.slane %v6179, 1
        %v6181 = vadd.f32 %v6179, %v6180
        %v6182 = vrot.slane %v5430, 4
        %v6183 = vadd.f32 %v5430, %v6182
        %v6184 = vrot.slane %v6183, 2
        %v6185 = vadd.f32 %v6183, %v6184
        %v6186 = vrot.slane %v6185, 1
        %v6187 = vadd.f32 %v6185, %v6186
        %v6188 = vrot.slane %v5431, 4
        %v6189 = vadd.f32 %v5431, %v6188
        %v6190 = vrot.slane %v6189, 2
        %v6191 = vadd.f32 %v6189, %v6190
        %v6192 = vrot.slane %v6191, 1
        %v6193 = vadd.f32 %v6191, %v6192
        %v6194 = vrot.slane %v5432, 4
        %v6195 = vadd.f32 %v5432, %v6194
        %v6196 = vrot.slane %v6195, 2
        %v6197 = vadd.f32 %v6195, %v6196
        %v6198 = vrot.slane %v6197, 1
        %v6199 = vadd.f32 %v6197, %v6198
        %v6200 = vrot.slane %v5433, 4
        %v6201 = vadd.f32 %v5433, %v6200
        %v6202 = vrot.slane %v6201, 2
        %v6203 = vadd.f32 %v6201, %v6202
        %v6204 = vrot.slane %v6203, 1
        %v6205 = vadd.f32 %v6203, %v6204
        %v6206 = vrot.slane %v5434, 4
        %v6207 = vadd.f32 %v5434, %v6206
        %v6208 = vrot.slane %v6207, 2
        %v6209 = vadd.f32 %v6207, %v6208
        %v6210 = vrot.slane %v6209, 1
        %v6211 = vadd.f32 %v6209, %v6210
        %v6212 = vrot.slane %v5435, 4
        %v6213 = vadd.f32 %v5435, %v6212
        %v6214 = vrot.slane %v6213, 2
        %v6215 = vadd.f32 %v6213, %v6214
        %v6216 = vrot.slane %v6215, 1
        %v6217 = vadd.f32 %v6215, %v6216
        %v6218 = vrot.slane %v5436, 4
        %v6219 = vadd.f32 %v5436, %v6218
        %v6220 = vrot.slane %v6219, 2
        %v6221 = vadd.f32 %v6219, %v6220
        %v6222 = vrot.slane %v6221, 1
        %v6223 = vadd.f32 %v6221, %v6222
        %v6224 = vrot.slane %v5437, 4
        %v6225 = vadd.f32 %v5437, %v6224
        %v6226 = vrot.slane %v6225, 2
        %v6227 = vadd.f32 %v6225, %v6226
        %v6228 = vrot.slane %v6227, 1
        %v6229 = vadd.f32 %v6227, %v6228
        %v6230 = vrot.slane %v5438, 4
        %v6231 = vadd.f32 %v5438, %v6230
        %v6232 = vrot.slane %v6231, 2
        %v6233 = vadd.f32 %v6231, %v6232
        %v6234 = vrot.slane %v6233, 1
        %v6235 = vadd.f32 %v6233, %v6234
        %v6236 = vrot.slane %v5439, 4
        %v6237 = vadd.f32 %v5439, %v6236
        %v6238 = vrot.slane %v6237, 2
        %v6239 = vadd.f32 %v6237, %v6238
        %v6240 = vrot.slane %v6239, 1
        %v6241 = vadd.f32 %v6239, %v6240
        %v6242 = vrot.slane %v5440, 4
        %v6243 = vadd.f32 %v5440, %v6242
        %v6244 = vrot.slane %v6243, 2
        %v6245 = vadd.f32 %v6243, %v6244
        %v6246 = vrot.slane %v6245, 1
        %v6247 = vadd.f32 %v6245, %v6246
        %v6248 = vrot.slane %v5441, 4
        %v6249 = vadd.f32 %v5441, %v6248
        %v6250 = vrot.slane %v6249, 2
        %v6251 = vadd.f32 %v6249, %v6250
        %v6252 = vrot.slane %v6251, 1
        %v6253 = vadd.f32 %v6251, %v6252
        %v6254 = vrot.slane %v5442, 4
        %v6255 = vadd.f32 %v5442, %v6254
        %v6256 = vrot.slane %v6255, 2
        %v6257 = vadd.f32 %v6255, %v6256
        %v6258 = vrot.slane %v6257, 1
        %v6259 = vadd.f32 %v6257, %v6258
        %v6260 = vrot.slane %v5443, 4
        %v6261 = vadd.f32 %v5443, %v6260
        %v6262 = vrot.slane %v6261, 2
        %v6263 = vadd.f32 %v6261, %v6262
        %v6264 = vrot.slane %v6263, 1
        %v6265 = vadd.f32 %v6263, %v6264
        %v6266 = vrot.slane %v5444, 4
        %v6267 = vadd.f32 %v5444, %v6266
        %v6268 = vrot.slane %v6267, 2
        %v6269 = vadd.f32 %v6267, %v6268
        %v6270 = vrot.slane %v6269, 1
        %v6271 = vadd.f32 %v6269, %v6270
        %v6272 = vrot.slane %v5445, 4
        %v6273 = vadd.f32 %v5445, %v6272
        %v6274 = vrot.slane %v6273, 2
        %v6275 = vadd.f32 %v6273, %v6274
        %v6276 = vrot.slane %v6275, 1
        %v6277 = vadd.f32 %v6275, %v6276
        %v6278 = vrot.slane %v5446, 4
        %v6279 = vadd.f32 %v5446, %v6278
        %v6280 = vrot.slane %v6279, 2
        %v6281 = vadd.f32 %v6279, %v6280
        %v6282 = vrot.slane %v6281, 1
        %v6283 = vadd.f32 %v6281, %v6282
        %v6284 = vrot.slane %v5447, 4
        %v6285 = vadd.f32 %v5447, %v6284
        %v6286 = vrot.slane %v6285, 2
        %v6287 = vadd.f32 %v6285, %v6286
        %v6288 = vrot.slane %v6287, 1
        %v6289 = vadd.f32 %v6287, %v6288
        %v6290 = vrot.slane %v5448, 4
        %v6291 = vadd.f32 %v5448, %v6290
        %v6292 = vrot.slane %v6291, 2
        %v6293 = vadd.f32 %v6291, %v6292
        %v6294 = vrot.slane %v6293, 1
        %v6295 = vadd.f32 %v6293, %v6294
        %v6296 = vrot.slane %v5449, 4
        %v6297 = vadd.f32 %v5449, %v6296
        %v6298 = vrot.slane %v6297, 2
        %v6299 = vadd.f32 %v6297, %v6298
        %v6300 = vrot.slane %v6299, 1
        %v6301 = vadd.f32 %v6299, %v6300
        %v6302 = vrot.slane %v5450, 4
        %v6303 = vadd.f32 %v5450, %v6302
        %v6304 = vrot.slane %v6303, 2
        %v6305 = vadd.f32 %v6303, %v6304
        %v6306 = vrot.slane %v6305, 1
        %v6307 = vadd.f32 %v6305, %v6306
        %v6308 = vrot.slane %v5451, 4
        %v6309 = vadd.f32 %v5451, %v6308
        %v6310 = vrot.slane %v6309, 2
        %v6311 = vadd.f32 %v6309, %v6310
        %v6312 = vrot.slane %v6311, 1
        %v6313 = vadd.f32 %v6311, %v6312
        %v6314 = vrot.slane %v5452, 4
        %v6315 = vadd.f32 %v5452, %v6314
        %v6316 = vrot.slane %v6315, 2
        %v6317 = vadd.f32 %v6315, %v6316
        %v6318 = vrot.slane %v6317, 1
        %v6319 = vadd.f32 %v6317, %v6318
        %v6320 = vrot.slane %v5453, 4
        %v6321 = vadd.f32 %v5453, %v6320
        %v6322 = vrot.slane %v6321, 2
        %v6323 = vadd.f32 %v6321, %v6322
        %v6324 = vrot.slane %v6323, 1
        %v6325 = vadd.f32 %v6323, %v6324
        %v6326 = vrot.slane %v5454, 4
        %v6327 = vadd.f32 %v5454, %v6326
        %v6328 = vrot.slane %v6327, 2
        %v6329 = vadd.f32 %v6327, %v6328
        %v6330 = vrot.slane %v6329, 1
        %v6331 = vadd.f32 %v6329, %v6330
        %v6332 = vrot.slane %v5455, 4
        %v6333 = vadd.f32 %v5455, %v6332
        %v6334 = vrot.slane %v6333, 2
        %v6335 = vadd.f32 %v6333, %v6334
        %v6336 = vrot.slane %v6335, 1
        %v6337 = vadd.f32 %v6335, %v6336
        %v6338 = vrot.slane %v5456, 4
        %v6339 = vadd.f32 %v5456, %v6338
        %v6340 = vrot.slane %v6339, 2
        %v6341 = vadd.f32 %v6339, %v6340
        %v6342 = vrot.slane %v6341, 1
        %v6343 = vadd.f32 %v6341, %v6342
        %v6344 = vrot.slane %v5457, 4
        %v6345 = vadd.f32 %v5457, %v6344
        %v6346 = vrot.slane %v6345, 2
        %v6347 = vadd.f32 %v6345, %v6346
        %v6348 = vrot.slane %v6347, 1
        %v6349 = vadd.f32 %v6347, %v6348
        %v6350 = vrot.slane %v5458, 4
        %v6351 = vadd.f32 %v5458, %v6350
        %v6352 = vrot.slane %v6351, 2
        %v6353 = vadd.f32 %v6351, %v6352
        %v6354 = vrot.slane %v6353, 1
        %v6355 = vadd.f32 %v6353, %v6354
        %v6356 = vrot.slane %v5459, 4
        %v6357 = vadd.f32 %v5459, %v6356
        %v6358 = vrot.slane %v6357, 2
        %v6359 = vadd.f32 %v6357, %v6358
        %v6360 = vrot.slane %v6359, 1
        %v6361 = vadd.f32 %v6359, %v6360
        %v6362 = vrot.slane %v5460, 4
        %v6363 = vadd.f32 %v5460, %v6362
        %v6364 = vrot.slane %v6363, 2
        %v6365 = vadd.f32 %v6363, %v6364
        %v6366 = vrot.slane %v6365, 1
        %v6367 = vadd.f32 %v6365, %v6366
        %v6368 = vrot.slane %v5461, 4
        %v6369 = vadd.f32 %v5461, %v6368
        %v6370 = vrot.slane %v6369, 2
        %v6371 = vadd.f32 %v6369, %v6370
        %v6372 = vrot.slane %v6371, 1
        %v6373 = vadd.f32 %v6371, %v6372
        %v6374 = vrot.slane %v5462, 4
        %v6375 = vadd.f32 %v5462, %v6374
        %v6376 = vrot.slane %v6375, 2
        %v6377 = vadd.f32 %v6375, %v6376
        %v6378 = vrot.slane %v6377, 1
        %v6379 = vadd.f32 %v6377, %v6378
        %v6380 = vrot.slane %v5463, 4
        %v6381 = vadd.f32 %v5463, %v6380
        %v6382 = vrot.slane %v6381, 2
        %v6383 = vadd.f32 %v6381, %v6382
        %v6384 = vrot.slane %v6383, 1
        %v6385 = vadd.f32 %v6383, %v6384
        %v6386 = vrot.slane %v5464, 4
        %v6387 = vadd.f32 %v5464, %v6386
        %v6388 = vrot.slane %v6387, 2
        %v6389 = vadd.f32 %v6387, %v6388
        %v6390 = vrot.slane %v6389, 1
        %v6391 = vadd.f32 %v6389, %v6390
        %v6392 = vrot.slane %v5465, 4
        %v6393 = vadd.f32 %v5465, %v6392
        %v6394 = vrot.slane %v6393, 2
        %v6395 = vadd.f32 %v6393, %v6394
        %v6396 = vrot.slane %v6395, 1
        %v6397 = vadd.f32 %v6395, %v6396
        %v6398 = vrot.slane %v5466, 4
        %v6399 = vadd.f32 %v5466, %v6398
        %v6400 = vrot.slane %v6399, 2
        %v6401 = vadd.f32 %v6399, %v6400
        %v6402 = vrot.slane %v6401, 1
        %v6403 = vadd.f32 %v6401, %v6402
        %v6404 = vrot.slane %v5467, 4
        %v6405 = vadd.f32 %v5467, %v6404
        %v6406 = vrot.slane %v6405, 2
        %v6407 = vadd.f32 %v6405, %v6406
        %v6408 = vrot.slane %v6407, 1
        %v6409 = vadd.f32 %v6407, %v6408
        %v6410 = vrot.slane %v5468, 4
        %v6411 = vadd.f32 %v5468, %v6410
        %v6412 = vrot.slane %v6411, 2
        %v6413 = vadd.f32 %v6411, %v6412
        %v6414 = vrot.slane %v6413, 1
        %v6415 = vadd.f32 %v6413, %v6414
        %v6416 = vrot.slane %v5469, 4
        %v6417 = vadd.f32 %v5469, %v6416
        %v6418 = vrot.slane %v6417, 2
        %v6419 = vadd.f32 %v6417, %v6418
        %v6420 = vrot.slane %v6419, 1
        %v6421 = vadd.f32 %v6419, %v6420
        %v6422 = vrot.slane %v5470, 4
        %v6423 = vadd.f32 %v5470, %v6422
        %v6424 = vrot.slane %v6423, 2
        %v6425 = vadd.f32 %v6423, %v6424
        %v6426 = vrot.slane %v6425, 1
        %v6427 = vadd.f32 %v6425, %v6426
        %v6428 = vrot.slane %v5471, 4
        %v6429 = vadd.f32 %v5471, %v6428
        %v6430 = vrot.slane %v6429, 2
        %v6431 = vadd.f32 %v6429, %v6430
        %v6432 = vrot.slane %v6431, 1
        %v6433 = vadd.f32 %v6431, %v6432
        %v6434 = vrot.slane %v5472, 4
        %v6435 = vadd.f32 %v5472, %v6434
        %v6436 = vrot.slane %v6435, 2
        %v6437 = vadd.f32 %v6435, %v6436
        %v6438 = vrot.slane %v6437, 1
        %v6439 = vadd.f32 %v6437, %v6438
        %v6440 = vrot.slane %v5473, 4
        %v6441 = vadd.f32 %v5473, %v6440
        %v6442 = vrot.slane %v6441, 2
        %v6443 = vadd.f32 %v6441, %v6442
        %v6444 = vrot.slane %v6443, 1
        %v6445 = vadd.f32 %v6443, %v6444
        %v6446 = vrot.slane %v5474, 4
        %v6447 = vadd.f32 %v5474, %v6446
        %v6448 = vrot.slane %v6447, 2
        %v6449 = vadd.f32 %v6447, %v6448
        %v6450 = vrot.slane %v6449, 1
        %v6451 = vadd.f32 %v6449, %v6450
        %v6452 = vrot.slane %v5475, 4
        %v6453 = vadd.f32 %v5475, %v6452
        %v6454 = vrot.slane %v6453, 2
        %v6455 = vadd.f32 %v6453, %v6454
        %v6456 = vrot.slane %v6455, 1
        %v6457 = vadd.f32 %v6455, %v6456
        %v6458 = vrot.slane %v5476, 4
        %v6459 = vadd.f32 %v5476, %v6458
        %v6460 = vrot.slane %v6459, 2
        %v6461 = vadd.f32 %v6459, %v6460
        %v6462 = vrot.slane %v6461, 1
        %v6463 = vadd.f32 %v6461, %v6462
        %v6464 = vrot.slane %v5477, 4
        %v6465 = vadd.f32 %v5477, %v6464
        %v6466 = vrot.slane %v6465, 2
        %v6467 = vadd.f32 %v6465, %v6466
        %v6468 = vrot.slane %v6467, 1
        %v6469 = vadd.f32 %v6467, %v6468
        %v6470 = vrot.slane %v5478, 4
        %v6471 = vadd.f32 %v5478, %v6470
        %v6472 = vrot.slane %v6471, 2
        %v6473 = vadd.f32 %v6471, %v6472
        %v6474 = vrot.slane %v6473, 1
        %v6475 = vadd.f32 %v6473, %v6474
        %v6476 = vrot.slane %v5479, 4
        %v6477 = vadd.f32 %v5479, %v6476
        %v6478 = vrot.slane %v6477, 2
        %v6479 = vadd.f32 %v6477, %v6478
        %v6480 = vrot.slane %v6479, 1
        %v6481 = vadd.f32 %v6479, %v6480
        %v6482 = vrot.slane %v5480, 4
        %v6483 = vadd.f32 %v5480, %v6482
        %v6484 = vrot.slane %v6483, 2
        %v6485 = vadd.f32 %v6483, %v6484
        %v6486 = vrot.slane %v6485, 1
        %v6487 = vadd.f32 %v6485, %v6486
        %v6488 = vrot.slane %v5481, 4
        %v6489 = vadd.f32 %v5481, %v6488
        %v6490 = vrot.slane %v6489, 2
        %v6491 = vadd.f32 %v6489, %v6490
        %v6492 = vrot.slane %v6491, 1
        %v6493 = vadd.f32 %v6491, %v6492
        %v6494 = vrot.slane %v5482, 4
        %v6495 = vadd.f32 %v5482, %v6494
        %v6496 = vrot.slane %v6495, 2
        %v6497 = vadd.f32 %v6495, %v6496
        %v6498 = vrot.slane %v6497, 1
        %v6499 = vadd.f32 %v6497, %v6498
        %v6500 = vrot.slane %v5483, 4
        %v6501 = vadd.f32 %v5483, %v6500
        %v6502 = vrot.slane %v6501, 2
        %v6503 = vadd.f32 %v6501, %v6502
        %v6504 = vrot.slane %v6503, 1
        %v6505 = vadd.f32 %v6503, %v6504
        %v6506 = vrot.slane %v5484, 4
        %v6507 = vadd.f32 %v5484, %v6506
        %v6508 = vrot.slane %v6507, 2
        %v6509 = vadd.f32 %v6507, %v6508
        %v6510 = vrot.slane %v6509, 1
        %v6511 = vadd.f32 %v6509, %v6510
        %v6512 = vrot.slane %v5485, 4
        %v6513 = vadd.f32 %v5485, %v6512
        %v6514 = vrot.slane %v6513, 2
        %v6515 = vadd.f32 %v6513, %v6514
        %v6516 = vrot.slane %v6515, 1
        %v6517 = vadd.f32 %v6515, %v6516
        %v6518 = vrot.slane %v5486, 4
        %v6519 = vadd.f32 %v5486, %v6518
        %v6520 = vrot.slane %v6519, 2
        %v6521 = vadd.f32 %v6519, %v6520
        %v6522 = vrot.slane %v6521, 1
        %v6523 = vadd.f32 %v6521, %v6522
        %v6524 = vrot.slane %v5487, 4
        %v6525 = vadd.f32 %v5487, %v6524
        %v6526 = vrot.slane %v6525, 2
        %v6527 = vadd.f32 %v6525, %v6526
        %v6528 = vrot.slane %v6527, 1
        %v6529 = vadd.f32 %v6527, %v6528
        %v6530 = vrot.slane %v5488, 4
        %v6531 = vadd.f32 %v5488, %v6530
        %v6532 = vrot.slane %v6531, 2
        %v6533 = vadd.f32 %v6531, %v6532
        %v6534 = vrot.slane %v6533, 1
        %v6535 = vadd.f32 %v6533, %v6534
        %v6536 = vrot.slane %v5489, 4
        %v6537 = vadd.f32 %v5489, %v6536
        %v6538 = vrot.slane %v6537, 2
        %v6539 = vadd.f32 %v6537, %v6538
        %v6540 = vrot.slane %v6539, 1
        %v6541 = vadd.f32 %v6539, %v6540
        %v6542 = vrot.slane %v5490, 4
        %v6543 = vadd.f32 %v5490, %v6542
        %v6544 = vrot.slane %v6543, 2
        %v6545 = vadd.f32 %v6543, %v6544
        %v6546 = vrot.slane %v6545, 1
        %v6547 = vadd.f32 %v6545, %v6546
        %v6548 = vrot.slane %v5491, 4
        %v6549 = vadd.f32 %v5491, %v6548
        %v6550 = vrot.slane %v6549, 2
        %v6551 = vadd.f32 %v6549, %v6550
        %v6552 = vrot.slane %v6551, 1
        %v6553 = vadd.f32 %v6551, %v6552
        %v6554 = vrot.slane %v5492, 4
        %v6555 = vadd.f32 %v5492, %v6554
        %v6556 = vrot.slane %v6555, 2
        %v6557 = vadd.f32 %v6555, %v6556
        %v6558 = vrot.slane %v6557, 1
        %v6559 = vadd.f32 %v6557, %v6558
        %v6560 = vrot.slane %v5493, 4
        %v6561 = vadd.f32 %v5493, %v6560
        %v6562 = vrot.slane %v6561, 2
        %v6563 = vadd.f32 %v6561, %v6562
        %v6564 = vrot.slane %v6563, 1
        %v6565 = vadd.f32 %v6563, %v6564
        %v6566 = vrot.slane %v5494, 4
        %v6567 = vadd.f32 %v5494, %v6566
        %v6568 = vrot.slane %v6567, 2
        %v6569 = vadd.f32 %v6567, %v6568
        %v6570 = vrot.slane %v6569, 1
        %v6571 = vadd.f32 %v6569, %v6570
        %v6572 = vrot.slane %v5495, 4
        %v6573 = vadd.f32 %v5495, %v6572
        %v6574 = vrot.slane %v6573, 2
        %v6575 = vadd.f32 %v6573, %v6574
        %v6576 = vrot.slane %v6575, 1
        %v6577 = vadd.f32 %v6575, %v6576
        %v6578 = vrot.slane %v5496, 4
        %v6579 = vadd.f32 %v5496, %v6578
        %v6580 = vrot.slane %v6579, 2
        %v6581 = vadd.f32 %v6579, %v6580
        %v6582 = vrot.slane %v6581, 1
        %v6583 = vadd.f32 %v6581, %v6582
        %v6584 = vrot.slane %v5497, 4
        %v6585 = vadd.f32 %v5497, %v6584
        %v6586 = vrot.slane %v6585, 2
        %v6587 = vadd.f32 %v6585, %v6586
        %v6588 = vrot.slane %v6587, 1
        %v6589 = vadd.f32 %v6587, %v6588
        %v6590 = vrot.slane %v5498, 4
        %v6591 = vadd.f32 %v5498, %v6590
        %v6592 = vrot.slane %v6591, 2
        %v6593 = vadd.f32 %v6591, %v6592
        %v6594 = vrot.slane %v6593, 1
        %v6595 = vadd.f32 %v6593, %v6594
        %v6596 = vrot.slane %v5499, 4
        %v6597 = vadd.f32 %v5499, %v6596
        %v6598 = vrot.slane %v6597, 2
        %v6599 = vadd.f32 %v6597, %v6598
        %v6600 = vrot.slane %v6599, 1
        %v6601 = vadd.f32 %v6599, %v6600
        %v6602 = vrot.slane %v5500, 4
        %v6603 = vadd.f32 %v5500, %v6602
        %v6604 = vrot.slane %v6603, 2
        %v6605 = vadd.f32 %v6603, %v6604
        %v6606 = vrot.slane %v6605, 1
        %v6607 = vadd.f32 %v6605, %v6606
        %v6608 = vrot.slane %v5501, 4
        %v6609 = vadd.f32 %v5501, %v6608
        %v6610 = vrot.slane %v6609, 2
        %v6611 = vadd.f32 %v6609, %v6610
        %v6612 = vrot.slane %v6611, 1
        %v6613 = vadd.f32 %v6611, %v6612
        %v6614 = vrot.slane %v5502, 4
        %v6615 = vadd.f32 %v5502, %v6614
        %v6616 = vrot.slane %v6615, 2
        %v6617 = vadd.f32 %v6615, %v6616
        %v6618 = vrot.slane %v6617, 1
        %v6619 = vadd.f32 %v6617, %v6618
        %v6620 = vrot.slane %v5503, 4
        %v6621 = vadd.f32 %v5503, %v6620
        %v6622 = vrot.slane %v6621, 2
        %v6623 = vadd.f32 %v6621, %v6622
        %v6624 = vrot.slane %v6623, 1
        %v6625 = vadd.f32 %v6623, %v6624
        %v6626 = vrot.slane %v5504, 4
        %v6627 = vadd.f32 %v5504, %v6626
        %v6628 = vrot.slane %v6627, 2
        %v6629 = vadd.f32 %v6627, %v6628
        %v6630 = vrot.slane %v6629, 1
        %v6631 = vadd.f32 %v6629, %v6630
        %v6632 = vrot.slane %v5505, 4
        %v6633 = vadd.f32 %v5505, %v6632
        %v6634 = vrot.slane %v6633, 2
        %v6635 = vadd.f32 %v6633, %v6634
        %v6636 = vrot.slane %v6635, 1
        %v6637 = vadd.f32 %v6635, %v6636
        %v6638 = vrot.slane %v5506, 4
        %v6639 = vadd.f32 %v5506, %v6638
        %v6640 = vrot.slane %v6639, 2
        %v6641 = vadd.f32 %v6639, %v6640
        %v6642 = vrot.slane %v6641, 1
        %v6643 = vadd.f32 %v6641, %v6642
        %v6644 = vrot.slane %v5507, 4
        %v6645 = vadd.f32 %v5507, %v6644
        %v6646 = vrot.slane %v6645, 2
        %v6647 = vadd.f32 %v6645, %v6646
        %v6648 = vrot.slane %v6647, 1
        %v6649 = vadd.f32 %v6647, %v6648
        %v6650 = vrot.slane %v5508, 4
        %v6651 = vadd.f32 %v5508, %v6650
        %v6652 = vrot.slane %v6651, 2
        %v6653 = vadd.f32 %v6651, %v6652
        %v6654 = vrot.slane %v6653, 1
        %v6655 = vadd.f32 %v6653, %v6654
        %v6656 = vrot.slane %v5509, 4
        %v6657 = vadd.f32 %v5509, %v6656
        %v6658 = vrot.slane %v6657, 2
        %v6659 = vadd.f32 %v6657, %v6658
        %v6660 = vrot.slane %v6659, 1
        %v6661 = vadd.f32 %v6659, %v6660
        %v6662 = vrot.slane %v5510, 4
        %v6663 = vadd.f32 %v5510, %v6662
        %v6664 = vrot.slane %v6663, 2
        %v6665 = vadd.f32 %v6663, %v6664
        %v6666 = vrot.slane %v6665, 1
        %v6667 = vadd.f32 %v6665, %v6666
        %v6668 = vrot.slane %v5511, 4
        %v6669 = vadd.f32 %v5511, %v6668
        %v6670 = vrot.slane %v6669, 2
        %v6671 = vadd.f32 %v6669, %v6670
        %v6672 = vrot.slane %v6671, 1
        %v6673 = vadd.f32 %v6671, %v6672
        %v6674 = vrot.slane %v5512, 4
        %v6675 = vadd.f32 %v5512, %v6674
        %v6676 = vrot.slane %v6675, 2
        %v6677 = vadd.f32 %v6675, %v6676
        %v6678 = vrot.slane %v6677, 1
        %v6679 = vadd.f32 %v6677, %v6678
        %v6680 = vrot.slane %v5513, 4
        %v6681 = vadd.f32 %v5513, %v6680
        %v6682 = vrot.slane %v6681, 2
        %v6683 = vadd.f32 %v6681, %v6682
        %v6684 = vrot.slane %v6683, 1
        %v6685 = vadd.f32 %v6683, %v6684
        %v6686 = vrot.slane %v5514, 4
        %v6687 = vadd.f32 %v5514, %v6686
        %v6688 = vrot.slane %v6687, 2
        %v6689 = vadd.f32 %v6687, %v6688
        %v6690 = vrot.slane %v6689, 1
        %v6691 = vadd.f32 %v6689, %v6690
        %v6692 = vrot.slane %v5515, 4
        %v6693 = vadd.f32 %v5515, %v6692
        %v6694 = vrot.slane %v6693, 2
        %v6695 = vadd.f32 %v6693, %v6694
        %v6696 = vrot.slane %v6695, 1
        %v6697 = vadd.f32 %v6695, %v6696
        %v6698 = vrot.slane %v5516, 4
        %v6699 = vadd.f32 %v5516, %v6698
        %v6700 = vrot.slane %v6699, 2
        %v6701 = vadd.f32 %v6699, %v6700
        %v6702 = vrot.slane %v6701, 1
        %v6703 = vadd.f32 %v6701, %v6702
        %v6704 = vrot.slane %v5517, 4
        %v6705 = vadd.f32 %v5517, %v6704
        %v6706 = vrot.slane %v6705, 2
        %v6707 = vadd.f32 %v6705, %v6706
        %v6708 = vrot.slane %v6707, 1
        %v6709 = vadd.f32 %v6707, %v6708
        %v6710 = vrot.slane %v5518, 4
        %v6711 = vadd.f32 %v5518, %v6710
        %v6712 = vrot.slane %v6711, 2
        %v6713 = vadd.f32 %v6711, %v6712
        %v6714 = vrot.slane %v6713, 1
        %v6715 = vadd.f32 %v6713, %v6714
        %v6716 = vrot.slane %v5519, 4
        %v6717 = vadd.f32 %v5519, %v6716
        %v6718 = vrot.slane %v6717, 2
        %v6719 = vadd.f32 %v6717, %v6718
        %v6720 = vrot.slane %v6719, 1
        %v6721 = vadd.f32 %v6719, %v6720
        %v6722 = vrot.slane %v5520, 4
        %v6723 = vadd.f32 %v5520, %v6722
        %v6724 = vrot.slane %v6723, 2
        %v6725 = vadd.f32 %v6723, %v6724
        %v6726 = vrot.slane %v6725, 1
        %v6727 = vadd.f32 %v6725, %v6726
        %v6728 = vrot.slane %v5521, 4
        %v6729 = vadd.f32 %v5521, %v6728
        %v6730 = vrot.slane %v6729, 2
        %v6731 = vadd.f32 %v6729, %v6730
        %v6732 = vrot.slane %v6731, 1
        %v6733 = vadd.f32 %v6731, %v6732
        %v6734 = vrot.slane %v5522, 4
        %v6735 = vadd.f32 %v5522, %v6734
        %v6736 = vrot.slane %v6735, 2
        %v6737 = vadd.f32 %v6735, %v6736
        %v6738 = vrot.slane %v6737, 1
        %v6739 = vadd.f32 %v6737, %v6738
        %v6740 = vrot.slane %v5523, 4
        %v6741 = vadd.f32 %v5523, %v6740
        %v6742 = vrot.slane %v6741, 2
        %v6743 = vadd.f32 %v6741, %v6742
        %v6744 = vrot.slane %v6743, 1
        %v6745 = vadd.f32 %v6743, %v6744
        %v6746 = vrot.slane %v5524, 4
        %v6747 = vadd.f32 %v5524, %v6746
        %v6748 = vrot.slane %v6747, 2
        %v6749 = vadd.f32 %v6747, %v6748
        %v6750 = vrot.slane %v6749, 1
        %v6751 = vadd.f32 %v6749, %v6750
        %v6752 = vrot.slane %v5525, 4
        %v6753 = vadd.f32 %v5525, %v6752
        %v6754 = vrot.slane %v6753, 2
        %v6755 = vadd.f32 %v6753, %v6754
        %v6756 = vrot.slane %v6755, 1
        %v6757 = vadd.f32 %v6755, %v6756
        %v6758 = vrot.slane %v5526, 4
        %v6759 = vadd.f32 %v5526, %v6758
        %v6760 = vrot.slane %v6759, 2
        %v6761 = vadd.f32 %v6759, %v6760
        %v6762 = vrot.slane %v6761, 1
        %v6763 = vadd.f32 %v6761, %v6762
        %v6764 = vrot.slane %v5527, 4
        %v6765 = vadd.f32 %v5527, %v6764
        %v6766 = vrot.slane %v6765, 2
        %v6767 = vadd.f32 %v6765, %v6766
        %v6768 = vrot.slane %v6767, 1
        %v6769 = vadd.f32 %v6767, %v6768
        %v6770 = vrot.slane %v5528, 4
        %v6771 = vadd.f32 %v5528, %v6770
        %v6772 = vrot.slane %v6771, 2
        %v6773 = vadd.f32 %v6771, %v6772
        %v6774 = vrot.slane %v6773, 1
        %v6775 = vadd.f32 %v6773, %v6774
        %v6776 = vrot.slane %v5529, 4
        %v6777 = vadd.f32 %v5529, %v6776
        %v6778 = vrot.slane %v6777, 2
        %v6779 = vadd.f32 %v6777, %v6778
        %v6780 = vrot.slane %v6779, 1
        %v6781 = vadd.f32 %v6779, %v6780
        %v6782 = vrot.slane %v5530, 4
        %v6783 = vadd.f32 %v5530, %v6782
        %v6784 = vrot.slane %v6783, 2
        %v6785 = vadd.f32 %v6783, %v6784
        %v6786 = vrot.slane %v6785, 1
        %v6787 = vadd.f32 %v6785, %v6786
        %v6788 = vrot.slane %v5531, 4
        %v6789 = vadd.f32 %v5531, %v6788
        %v6790 = vrot.slane %v6789, 2
        %v6791 = vadd.f32 %v6789, %v6790
        %v6792 = vrot.slane %v6791, 1
        %v6793 = vadd.f32 %v6791, %v6792
        %v6794 = vrot.slane %v5532, 4
        %v6795 = vadd.f32 %v5532, %v6794
        %v6796 = vrot.slane %v6795, 2
        %v6797 = vadd.f32 %v6795, %v6796
        %v6798 = vrot.slane %v6797, 1
        %v6799 = vadd.f32 %v6797, %v6798
        %v6800 = vrot.slane %v5533, 4
        %v6801 = vadd.f32 %v5533, %v6800
        %v6802 = vrot.slane %v6801, 2
        %v6803 = vadd.f32 %v6801, %v6802
        %v6804 = vrot.slane %v6803, 1
        %v6805 = vadd.f32 %v6803, %v6804
        %v6806 = vrot.slane %v5534, 4
        %v6807 = vadd.f32 %v5534, %v6806
        %v6808 = vrot.slane %v6807, 2
        %v6809 = vadd.f32 %v6807, %v6808
        %v6810 = vrot.slane %v6809, 1
        %v6811 = vadd.f32 %v6809, %v6810
        %v6812 = vrot.slane %v5535, 4
        %v6813 = vadd.f32 %v5535, %v6812
        %v6814 = vrot.slane %v6813, 2
        %v6815 = vadd.f32 %v6813, %v6814
        %v6816 = vrot.slane %v6815, 1
        %v6817 = vadd.f32 %v6815, %v6816
        %v6818 = vrot.slane %v5536, 4
        %v6819 = vadd.f32 %v5536, %v6818
        %v6820 = vrot.slane %v6819, 2
        %v6821 = vadd.f32 %v6819, %v6820
        %v6822 = vrot.slane %v6821, 1
        %v6823 = vadd.f32 %v6821, %v6822
        %v6824 = vrot.slane %v5537, 4
        %v6825 = vadd.f32 %v5537, %v6824
        %v6826 = vrot.slane %v6825, 2
        %v6827 = vadd.f32 %v6825, %v6826
        %v6828 = vrot.slane %v6827, 1
        %v6829 = vadd.f32 %v6827, %v6828
        %v6830 = vrot.slane %v5538, 4
        %v6831 = vadd.f32 %v5538, %v6830
        %v6832 = vrot.slane %v6831, 2
        %v6833 = vadd.f32 %v6831, %v6832
        %v6834 = vrot.slane %v6833, 1
        %v6835 = vadd.f32 %v6833, %v6834
        %v6836 = vrot.slane %v5539, 4
        %v6837 = vadd.f32 %v5539, %v6836
        %v6838 = vrot.slane %v6837, 2
        %v6839 = vadd.f32 %v6837, %v6838
        %v6840 = vrot.slane %v6839, 1
        %v6841 = vadd.f32 %v6839, %v6840
        %v6842 = vrot.slane %v5540, 4
        %v6843 = vadd.f32 %v5540, %v6842
        %v6844 = vrot.slane %v6843, 2
        %v6845 = vadd.f32 %v6843, %v6844
        %v6846 = vrot.slane %v6845, 1
        %v6847 = vadd.f32 %v6845, %v6846
        %v6848 = vrot.slane %v5541, 4
        %v6849 = vadd.f32 %v5541, %v6848
        %v6850 = vrot.slane %v6849, 2
        %v6851 = vadd.f32 %v6849, %v6850
        %v6852 = vrot.slane %v6851, 1
        %v6853 = vadd.f32 %v6851, %v6852
        %v6854 = vrot.slane %v5542, 4
        %v6855 = vadd.f32 %v5542, %v6854
        %v6856 = vrot.slane %v6855, 2
        %v6857 = vadd.f32 %v6855, %v6856
        %v6858 = vrot.slane %v6857, 1
        %v6859 = vadd.f32 %v6857, %v6858
        %v6860 = vrot.slane %v5543, 4
        %v6861 = vadd.f32 %v5543, %v6860
        %v6862 = vrot.slane %v6861, 2
        %v6863 = vadd.f32 %v6861, %v6862
        %v6864 = vrot.slane %v6863, 1
        %v6865 = vadd.f32 %v6863, %v6864
        %v6866 = vrot.slane %v5544, 4
        %v6867 = vadd.f32 %v5544, %v6866
        %v6868 = vrot.slane %v6867, 2
        %v6869 = vadd.f32 %v6867, %v6868
        %v6870 = vrot.slane %v6869, 1
        %v6871 = vadd.f32 %v6869, %v6870
        %v6872 = vrot.slane %v5545, 4
        %v6873 = vadd.f32 %v5545, %v6872
        %v6874 = vrot.slane %v6873, 2
        %v6875 = vadd.f32 %v6873, %v6874
        %v6876 = vrot.slane %v6875, 1
        %v6877 = vadd.f32 %v6875, %v6876
        %v6878 = vrot.slane %v5546, 4
        %v6879 = vadd.f32 %v5546, %v6878
        %v6880 = vrot.slane %v6879, 2
        %v6881 = vadd.f32 %v6879, %v6880
        %v6882 = vrot.slane %v6881, 1
        %v6883 = vadd.f32 %v6881, %v6882
        %v6884 = vrot.slane %v5547, 4
        %v6885 = vadd.f32 %v5547, %v6884
        %v6886 = vrot.slane %v6885, 2
        %v6887 = vadd.f32 %v6885, %v6886
        %v6888 = vrot.slane %v6887, 1
        %v6889 = vadd.f32 %v6887, %v6888
        %v6890 = vrot.slane %v5548, 4
        %v6891 = vadd.f32 %v5548, %v6890
        %v6892 = vrot.slane %v6891, 2
        %v6893 = vadd.f32 %v6891, %v6892
        %v6894 = vrot.slane %v6893, 1
        %v6895 = vadd.f32 %v6893, %v6894
        %v6896 = vrot.slane %v5549, 4
        %v6897 = vadd.f32 %v5549, %v6896
        %v6898 = vrot.slane %v6897, 2
        %v6899 = vadd.f32 %v6897, %v6898
        %v6900 = vrot.slane %v6899, 1
        %v6901 = vadd.f32 %v6899, %v6900
        %v6902 = vrot.slane %v5550, 4
        %v6903 = vadd.f32 %v5550, %v6902
        %v6904 = vrot.slane %v6903, 2
        %v6905 = vadd.f32 %v6903, %v6904
        %v6906 = vrot.slane %v6905, 1
        %v6907 = vadd.f32 %v6905, %v6906
        %v6908 = vrot.slane %v5551, 4
        %v6909 = vadd.f32 %v5551, %v6908
        %v6910 = vrot.slane %v6909, 2
        %v6911 = vadd.f32 %v6909, %v6910
        %v6912 = vrot.slane %v6911, 1
        %v6913 = vadd.f32 %v6911, %v6912
        %v6914 = vrot.slane %v5552, 4
        %v6915 = vadd.f32 %v5552, %v6914
        %v6916 = vrot.slane %v6915, 2
        %v6917 = vadd.f32 %v6915, %v6916
        %v6918 = vrot.slane %v6917, 1
        %v6919 = vadd.f32 %v6917, %v6918
        %v6920 = vrot.slane %v5553, 4
        %v6921 = vadd.f32 %v5553, %v6920
        %v6922 = vrot.slane %v6921, 2
        %v6923 = vadd.f32 %v6921, %v6922
        %v6924 = vrot.slane %v6923, 1
        %v6925 = vadd.f32 %v6923, %v6924
        %v6926 = vrot.slane %v5554, 4
        %v6927 = vadd.f32 %v5554, %v6926
        %v6928 = vrot.slane %v6927, 2
        %v6929 = vadd.f32 %v6927, %v6928
        %v6930 = vrot.slane %v6929, 1
        %v6931 = vadd.f32 %v6929, %v6930
        %v6932 = vrot.slane %v5555, 4
        %v6933 = vadd.f32 %v5555, %v6932
        %v6934 = vrot.slane %v6933, 2
        %v6935 = vadd.f32 %v6933, %v6934
        %v6936 = vrot.slane %v6935, 1
        %v6937 = vadd.f32 %v6935, %v6936
        %v6938 = vrot.slane %v5556, 4
        %v6939 = vadd.f32 %v5556, %v6938
        %v6940 = vrot.slane %v6939, 2
        %v6941 = vadd.f32 %v6939, %v6940
        %v6942 = vrot.slane %v6941, 1
        %v6943 = vadd.f32 %v6941, %v6942
        %v6944 = vrot.slane %v5557, 4
        %v6945 = vadd.f32 %v5557, %v6944
        %v6946 = vrot.slane %v6945, 2
        %v6947 = vadd.f32 %v6945, %v6946
        %v6948 = vrot.slane %v6947, 1
        %v6949 = vadd.f32 %v6947, %v6948
        %v6950 = vrot.slane %v5558, 4
        %v6951 = vadd.f32 %v5558, %v6950
        %v6952 = vrot.slane %v6951, 2
        %v6953 = vadd.f32 %v6951, %v6952
        %v6954 = vrot.slane %v6953, 1
        %v6955 = vadd.f32 %v6953, %v6954
        %v6956 = vrot.slane %v5559, 4
        %v6957 = vadd.f32 %v5559, %v6956
        %v6958 = vrot.slane %v6957, 2
        %v6959 = vadd.f32 %v6957, %v6958
        %v6960 = vrot.slane %v6959, 1
        %v6961 = vadd.f32 %v6959, %v6960
        %v6962 = vrot.slane %v5560, 4
        %v6963 = vadd.f32 %v5560, %v6962
        %v6964 = vrot.slane %v6963, 2
        %v6965 = vadd.f32 %v6963, %v6964
        %v6966 = vrot.slane %v6965, 1
        %v6967 = vadd.f32 %v6965, %v6966
        %v6968 = vrot.slane %v5561, 4
        %v6969 = vadd.f32 %v5561, %v6968
        %v6970 = vrot.slane %v6969, 2
        %v6971 = vadd.f32 %v6969, %v6970
        %v6972 = vrot.slane %v6971, 1
        %v6973 = vadd.f32 %v6971, %v6972
        %v6974 = vrot.slane %v5562, 4
        %v6975 = vadd.f32 %v5562, %v6974
        %v6976 = vrot.slane %v6975, 2
        %v6977 = vadd.f32 %v6975, %v6976
        %v6978 = vrot.slane %v6977, 1
        %v6979 = vadd.f32 %v6977, %v6978
        %v6980 = vrot.slane %v5563, 4
        %v6981 = vadd.f32 %v5563, %v6980
        %v6982 = vrot.slane %v6981, 2
        %v6983 = vadd.f32 %v6981, %v6982
        %v6984 = vrot.slane %v6983, 1
        %v6985 = vadd.f32 %v6983, %v6984
        %v6986 = vrot.slane %v5564, 4
        %v6987 = vadd.f32 %v5564, %v6986
        %v6988 = vrot.slane %v6987, 2
        %v6989 = vadd.f32 %v6987, %v6988
        %v6990 = vrot.slane %v6989, 1
        %v6991 = vadd.f32 %v6989, %v6990
        %v6992 = vrot.slane %v5565, 4
        %v6993 = vadd.f32 %v5565, %v6992
        %v6994 = vrot.slane %v6993, 2
        %v6995 = vadd.f32 %v6993, %v6994
        %v6996 = vrot.slane %v6995, 1
        %v6997 = vadd.f32 %v6995, %v6996
        %v6998 = vrot.slane %v5566, 4
        %v6999 = vadd.f32 %v5566, %v6998
        %v7000 = vrot.slane %v6999, 2
        %v7001 = vadd.f32 %v6999, %v7000
        %v7002 = vrot.slane %v7001, 1
        %v7003 = vadd.f32 %v7001, %v7002
        %v7004 = vrot.slane %v5567, 4
        %v7005 = vadd.f32 %v5567, %v7004
        %v7006 = vrot.slane %v7005, 2
        %v7007 = vadd.f32 %v7005, %v7006
        %v7008 = vrot.slane %v7007, 1
        %v7009 = vadd.f32 %v7007, %v7008
        %v7010 = vrot.slane %v5568, 4
        %v7011 = vadd.f32 %v5568, %v7010
        %v7012 = vrot.slane %v7011, 2
        %v7013 = vadd.f32 %v7011, %v7012
        %v7014 = vrot.slane %v7013, 1
        %v7015 = vadd.f32 %v7013, %v7014
        %v7016 = vrot.slane %v5569, 4
        %v7017 = vadd.f32 %v5569, %v7016
        %v7018 = vrot.slane %v7017, 2
        %v7019 = vadd.f32 %v7017, %v7018
        %v7020 = vrot.slane %v7019, 1
        %v7021 = vadd.f32 %v7019, %v7020
        %v7022 = vrot.slane %v5570, 4
        %v7023 = vadd.f32 %v5570, %v7022
        %v7024 = vrot.slane %v7023, 2
        %v7025 = vadd.f32 %v7023, %v7024
        %v7026 = vrot.slane %v7025, 1
        %v7027 = vadd.f32 %v7025, %v7026
        %v7028 = vrot.slane %v5571, 4
        %v7029 = vadd.f32 %v5571, %v7028
        %v7030 = vrot.slane %v7029, 2
        %v7031 = vadd.f32 %v7029, %v7030
        %v7032 = vrot.slane %v7031, 1
        %v7033 = vadd.f32 %v7031, %v7032
        %v7034 = vrot.slane %v5572, 4
        %v7035 = vadd.f32 %v5572, %v7034
        %v7036 = vrot.slane %v7035, 2
        %v7037 = vadd.f32 %v7035, %v7036
        %v7038 = vrot.slane %v7037, 1
        %v7039 = vadd.f32 %v7037, %v7038
        %v7040 = vrot.slane %v5573, 4
        %v7041 = vadd.f32 %v5573, %v7040
        %v7042 = vrot.slane %v7041, 2
        %v7043 = vadd.f32 %v7041, %v7042
        %v7044 = vrot.slane %v7043, 1
        %v7045 = vadd.f32 %v7043, %v7044
        %v7046 = vrot.slane %v5574, 4
        %v7047 = vadd.f32 %v5574, %v7046
        %v7048 = vrot.slane %v7047, 2
        %v7049 = vadd.f32 %v7047, %v7048
        %v7050 = vrot.slane %v7049, 1
        %v7051 = vadd.f32 %v7049, %v7050
        %v7052 = vrot.slane %v5575, 4
        %v7053 = vadd.f32 %v5575, %v7052
        %v7054 = vrot.slane %v7053, 2
        %v7055 = vadd.f32 %v7053, %v7054
        %v7056 = vrot.slane %v7055, 1
        %v7057 = vadd.f32 %v7055, %v7056
        %v7058 = vrot.slane %v5576, 4
        %v7059 = vadd.f32 %v5576, %v7058
        %v7060 = vrot.slane %v7059, 2
        %v7061 = vadd.f32 %v7059, %v7060
        %v7062 = vrot.slane %v7061, 1
        %v7063 = vadd.f32 %v7061, %v7062
        %v7064 = vrot.slane %v5577, 4
        %v7065 = vadd.f32 %v5577, %v7064
        %v7066 = vrot.slane %v7065, 2
        %v7067 = vadd.f32 %v7065, %v7066
        %v7068 = vrot.slane %v7067, 1
        %v7069 = vadd.f32 %v7067, %v7068
        %v7070 = vrot.slane %v5578, 4
        %v7071 = vadd.f32 %v5578, %v7070
        %v7072 = vrot.slane %v7071, 2
        %v7073 = vadd.f32 %v7071, %v7072
        %v7074 = vrot.slane %v7073, 1
        %v7075 = vadd.f32 %v7073, %v7074
        %v7076 = vrot.slane %v5579, 4
        %v7077 = vadd.f32 %v5579, %v7076
        %v7078 = vrot.slane %v7077, 2
        %v7079 = vadd.f32 %v7077, %v7078
        %v7080 = vrot.slane %v7079, 1
        %v7081 = vadd.f32 %v7079, %v7080
        %v7082 = vrot.slane %v5580, 4
        %v7083 = vadd.f32 %v5580, %v7082
        %v7084 = vrot.slane %v7083, 2
        %v7085 = vadd.f32 %v7083, %v7084
        %v7086 = vrot.slane %v7085, 1
        %v7087 = vadd.f32 %v7085, %v7086
        %v7088 = vrot.slane %v5581, 4
        %v7089 = vadd.f32 %v5581, %v7088
        %v7090 = vrot.slane %v7089, 2
        %v7091 = vadd.f32 %v7089, %v7090
        %v7092 = vrot.slane %v7091, 1
        %v7093 = vadd.f32 %v7091, %v7092
        %v7094 = vrot.slane %v5582, 4
        %v7095 = vadd.f32 %v5582, %v7094
        %v7096 = vrot.slane %v7095, 2
        %v7097 = vadd.f32 %v7095, %v7096
        %v7098 = vrot.slane %v7097, 1
        %v7099 = vadd.f32 %v7097, %v7098
        %v7100 = vrot.slane %v5583, 4
        %v7101 = vadd.f32 %v5583, %v7100
        %v7102 = vrot.slane %v7101, 2
        %v7103 = vadd.f32 %v7101, %v7102
        %v7104 = vrot.slane %v7103, 1
        %v7105 = vadd.f32 %v7103, %v7104
        %v7106 = vrot.slane %v5584, 4
        %v7107 = vadd.f32 %v5584, %v7106
        %v7108 = vrot.slane %v7107, 2
        %v7109 = vadd.f32 %v7107, %v7108
        %v7110 = vrot.slane %v7109, 1
        %v7111 = vadd.f32 %v7109, %v7110
        %v7112 = vrot.slane %v5585, 4
        %v7113 = vadd.f32 %v5585, %v7112
        %v7114 = vrot.slane %v7113, 2
        %v7115 = vadd.f32 %v7113, %v7114
        %v7116 = vrot.slane %v7115, 1
        %v7117 = vadd.f32 %v7115, %v7116
        %v7118 = vrot.slane %v5586, 4
        %v7119 = vadd.f32 %v5586, %v7118
        %v7120 = vrot.slane %v7119, 2
        %v7121 = vadd.f32 %v7119, %v7120
        %v7122 = vrot.slane %v7121, 1
        %v7123 = vadd.f32 %v7121, %v7122
        %v7124 = vrot.slane %v5587, 4
        %v7125 = vadd.f32 %v5587, %v7124
        %v7126 = vrot.slane %v7125, 2
        %v7127 = vadd.f32 %v7125, %v7126
        %v7128 = vrot.slane %v7127, 1
        %v7129 = vadd.f32 %v7127, %v7128
        %v7130 = vrot.slane %v5588, 4
        %v7131 = vadd.f32 %v5588, %v7130
        %v7132 = vrot.slane %v7131, 2
        %v7133 = vadd.f32 %v7131, %v7132
        %v7134 = vrot.slane %v7133, 1
        %v7135 = vadd.f32 %v7133, %v7134
        %v7136 = vrot.slane %v5589, 4
        %v7137 = vadd.f32 %v5589, %v7136
        %v7138 = vrot.slane %v7137, 2
        %v7139 = vadd.f32 %v7137, %v7138
        %v7140 = vrot.slane %v7139, 1
        %v7141 = vadd.f32 %v7139, %v7140
        %v7142 = vrot.slane %v5590, 4
        %v7143 = vadd.f32 %v5590, %v7142
        %v7144 = vrot.slane %v7143, 2
        %v7145 = vadd.f32 %v7143, %v7144
        %v7146 = vrot.slane %v7145, 1
        %v7147 = vadd.f32 %v7145, %v7146
        %v7148 = vrot.slane %v5591, 4
        %v7149 = vadd.f32 %v5591, %v7148
        %v7150 = vrot.slane %v7149, 2
        %v7151 = vadd.f32 %v7149, %v7150
        %v7152 = vrot.slane %v7151, 1
        %v7153 = vadd.f32 %v7151, %v7152
        %v7154 = vrot.slane %v5592, 4
        %v7155 = vadd.f32 %v5592, %v7154
        %v7156 = vrot.slane %v7155, 2
        %v7157 = vadd.f32 %v7155, %v7156
        %v7158 = vrot.slane %v7157, 1
        %v7159 = vadd.f32 %v7157, %v7158
        %v7160 = vrot.slane %v5593, 4
        %v7161 = vadd.f32 %v5593, %v7160
        %v7162 = vrot.slane %v7161, 2
        %v7163 = vadd.f32 %v7161, %v7162
        %v7164 = vrot.slane %v7163, 1
        %v7165 = vadd.f32 %v7163, %v7164
        %v7166 = vrot.slane %v5594, 4
        %v7167 = vadd.f32 %v5594, %v7166
        %v7168 = vrot.slane %v7167, 2
        %v7169 = vadd.f32 %v7167, %v7168
        %v7170 = vrot.slane %v7169, 1
        %v7171 = vadd.f32 %v7169, %v7170
        %v7172 = vrot.slane %v5595, 4
        %v7173 = vadd.f32 %v5595, %v7172
        %v7174 = vrot.slane %v7173, 2
        %v7175 = vadd.f32 %v7173, %v7174
        %v7176 = vrot.slane %v7175, 1
        %v7177 = vadd.f32 %v7175, %v7176
        %v7178 = vrot.slane %v5596, 4
        %v7179 = vadd.f32 %v5596, %v7178
        %v7180 = vrot.slane %v7179, 2
        %v7181 = vadd.f32 %v7179, %v7180
        %v7182 = vrot.slane %v7181, 1
        %v7183 = vadd.f32 %v7181, %v7182
        %v7184 = vrot.slane %v5597, 4
        %v7185 = vadd.f32 %v5597, %v7184
        %v7186 = vrot.slane %v7185, 2
        %v7187 = vadd.f32 %v7185, %v7186
        %v7188 = vrot.slane %v7187, 1
        %v7189 = vadd.f32 %v7187, %v7188
        %v7190 = vrot.slane %v5598, 4
        %v7191 = vadd.f32 %v5598, %v7190
        %v7192 = vrot.slane %v7191, 2
        %v7193 = vadd.f32 %v7191, %v7192
        %v7194 = vrot.slane %v7193, 1
        %v7195 = vadd.f32 %v7193, %v7194
        %v7196 = vrot.slane %v5599, 4
        %v7197 = vadd.f32 %v5599, %v7196
        %v7198 = vrot.slane %v7197, 2
        %v7199 = vadd.f32 %v7197, %v7198
        %v7200 = vrot.slane %v7199, 1
        %v7201 = vadd.f32 %v7199, %v7200
        %v7202 = vrot.slane %v5600, 4
        %v7203 = vadd.f32 %v5600, %v7202
        %v7204 = vrot.slane %v7203, 2
        %v7205 = vadd.f32 %v7203, %v7204
        %v7206 = vrot.slane %v7205, 1
        %v7207 = vadd.f32 %v7205, %v7206
        %v7208 = vrot.slane %v5601, 4
        %v7209 = vadd.f32 %v5601, %v7208
        %v7210 = vrot.slane %v7209, 2
        %v7211 = vadd.f32 %v7209, %v7210
        %v7212 = vrot.slane %v7211, 1
        %v7213 = vadd.f32 %v7211, %v7212
        %v7214 = vrot.slane %v5602, 4
        %v7215 = vadd.f32 %v5602, %v7214
        %v7216 = vrot.slane %v7215, 2
        %v7217 = vadd.f32 %v7215, %v7216
        %v7218 = vrot.slane %v7217, 1
        %v7219 = vadd.f32 %v7217, %v7218
        %v7220 = vrot.slane %v5603, 4
        %v7221 = vadd.f32 %v5603, %v7220
        %v7222 = vrot.slane %v7221, 2
        %v7223 = vadd.f32 %v7221, %v7222
        %v7224 = vrot.slane %v7223, 1
        %v7225 = vadd.f32 %v7223, %v7224
        %v7226 = vrot.slane %v5604, 4
        %v7227 = vadd.f32 %v5604, %v7226
        %v7228 = vrot.slane %v7227, 2
        %v7229 = vadd.f32 %v7227, %v7228
        %v7230 = vrot.slane %v7229, 1
        %v7231 = vadd.f32 %v7229, %v7230
        %v7232 = vrot.slane %v5605, 4
        %v7233 = vadd.f32 %v5605, %v7232
        %v7234 = vrot.slane %v7233, 2
        %v7235 = vadd.f32 %v7233, %v7234
        %v7236 = vrot.slane %v7235, 1
        %v7237 = vadd.f32 %v7235, %v7236
        %v7238 = vrot.slane %v5606, 4
        %v7239 = vadd.f32 %v5606, %v7238
        %v7240 = vrot.slane %v7239, 2
        %v7241 = vadd.f32 %v7239, %v7240
        %v7242 = vrot.slane %v7241, 1
        %v7243 = vadd.f32 %v7241, %v7242
        %v7244 = vrot.slane %v5607, 4
        %v7245 = vadd.f32 %v5607, %v7244
        %v7246 = vrot.slane %v7245, 2
        %v7247 = vadd.f32 %v7245, %v7246
        %v7248 = vrot.slane %v7247, 1
        %v7249 = vadd.f32 %v7247, %v7248
        %v7250 = vrot.slane %v5608, 4
        %v7251 = vadd.f32 %v5608, %v7250
        %v7252 = vrot.slane %v7251, 2
        %v7253 = vadd.f32 %v7251, %v7252
        %v7254 = vrot.slane %v7253, 1
        %v7255 = vadd.f32 %v7253, %v7254
        %v7256 = vrot.slane %v5609, 4
        %v7257 = vadd.f32 %v5609, %v7256
        %v7258 = vrot.slane %v7257, 2
        %v7259 = vadd.f32 %v7257, %v7258
        %v7260 = vrot.slane %v7259, 1
        %v7261 = vadd.f32 %v7259, %v7260
        %v7262 = vrot.slane %v5610, 4
        %v7263 = vadd.f32 %v5610, %v7262
        %v7264 = vrot.slane %v7263, 2
        %v7265 = vadd.f32 %v7263, %v7264
        %v7266 = vrot.slane %v7265, 1
        %v7267 = vadd.f32 %v7265, %v7266
        %v7268 = vrot.slane %v5611, 4
        %v7269 = vadd.f32 %v5611, %v7268
        %v7270 = vrot.slane %v7269, 2
        %v7271 = vadd.f32 %v7269, %v7270
        %v7272 = vrot.slane %v7271, 1
        %v7273 = vadd.f32 %v7271, %v7272
        %v7274 = vrot.slane %v5612, 4
        %v7275 = vadd.f32 %v5612, %v7274
        %v7276 = vrot.slane %v7275, 2
        %v7277 = vadd.f32 %v7275, %v7276
        %v7278 = vrot.slane %v7277, 1
        %v7279 = vadd.f32 %v7277, %v7278
        %v7280 = vrot.slane %v5613, 4
        %v7281 = vadd.f32 %v5613, %v7280
        %v7282 = vrot.slane %v7281, 2
        %v7283 = vadd.f32 %v7281, %v7282
        %v7284 = vrot.slane %v7283, 1
        %v7285 = vadd.f32 %v7283, %v7284
        %v7286 = vrot.slane %v5614, 4
        %v7287 = vadd.f32 %v5614, %v7286
        %v7288 = vrot.slane %v7287, 2
        %v7289 = vadd.f32 %v7287, %v7288
        %v7290 = vrot.slane %v7289, 1
        %v7291 = vadd.f32 %v7289, %v7290
        %v7292 = vrot.slane %v5615, 4
        %v7293 = vadd.f32 %v5615, %v7292
        %v7294 = vrot.slane %v7293, 2
        %v7295 = vadd.f32 %v7293, %v7294
        %v7296 = vrot.slane %v7295, 1
        %v7297 = vadd.f32 %v7295, %v7296
        %v7298 = vrot.slane %v5616, 4
        %v7299 = vadd.f32 %v5616, %v7298
        %v7300 = vrot.slane %v7299, 2
        %v7301 = vadd.f32 %v7299, %v7300
        %v7302 = vrot.slane %v7301, 1
        %v7303 = vadd.f32 %v7301, %v7302
        %v7304 = vrot.slane %v5617, 4
        %v7305 = vadd.f32 %v5617, %v7304
        %v7306 = vrot.slane %v7305, 2
        %v7307 = vadd.f32 %v7305, %v7306
        %v7308 = vrot.slane %v7307, 1
        %v7309 = vadd.f32 %v7307, %v7308
        %v7310 = vrot.slane %v5618, 4
        %v7311 = vadd.f32 %v5618, %v7310
        %v7312 = vrot.slane %v7311, 2
        %v7313 = vadd.f32 %v7311, %v7312
        %v7314 = vrot.slane %v7313, 1
        %v7315 = vadd.f32 %v7313, %v7314
        %v7316 = vrot.slane %v5619, 4
        %v7317 = vadd.f32 %v5619, %v7316
        %v7318 = vrot.slane %v7317, 2
        %v7319 = vadd.f32 %v7317, %v7318
        %v7320 = vrot.slane %v7319, 1
        %v7321 = vadd.f32 %v7319, %v7320
        %v7322 = vrot.slane %v5620, 4
        %v7323 = vadd.f32 %v5620, %v7322
        %v7324 = vrot.slane %v7323, 2
        %v7325 = vadd.f32 %v7323, %v7324
        %v7326 = vrot.slane %v7325, 1
        %v7327 = vadd.f32 %v7325, %v7326
        %v7328 = vrot.slane %v5621, 4
        %v7329 = vadd.f32 %v5621, %v7328
        %v7330 = vrot.slane %v7329, 2
        %v7331 = vadd.f32 %v7329, %v7330
        %v7332 = vrot.slane %v7331, 1
        %v7333 = vadd.f32 %v7331, %v7332
        %v7334 = vrot.slane %v5622, 4
        %v7335 = vadd.f32 %v5622, %v7334
        %v7336 = vrot.slane %v7335, 2
        %v7337 = vadd.f32 %v7335, %v7336
        %v7338 = vrot.slane %v7337, 1
        %v7339 = vadd.f32 %v7337, %v7338
        %v7340 = vrot.slane %v5623, 4
        %v7341 = vadd.f32 %v5623, %v7340
        %v7342 = vrot.slane %v7341, 2
        %v7343 = vadd.f32 %v7341, %v7342
        %v7344 = vrot.slane %v7343, 1
        %v7345 = vadd.f32 %v7343, %v7344
        %v7346 = vrot.slane %v5624, 4
        %v7347 = vadd.f32 %v5624, %v7346
        %v7348 = vrot.slane %v7347, 2
        %v7349 = vadd.f32 %v7347, %v7348
        %v7350 = vrot.slane %v7349, 1
        %v7351 = vadd.f32 %v7349, %v7350
        %v7352 = vrot.slane %v5625, 4
        %v7353 = vadd.f32 %v5625, %v7352
        %v7354 = vrot.slane %v7353, 2
        %v7355 = vadd.f32 %v7353, %v7354
        %v7356 = vrot.slane %v7355, 1
        %v7357 = vadd.f32 %v7355, %v7356
        %v7358 = vrot.slane %v5626, 4
        %v7359 = vadd.f32 %v5626, %v7358
        %v7360 = vrot.slane %v7359, 2
        %v7361 = vadd.f32 %v7359, %v7360
        %v7362 = vrot.slane %v7361, 1
        %v7363 = vadd.f32 %v7361, %v7362
        %v7364 = vrot.slane %v5627, 4
        %v7365 = vadd.f32 %v5627, %v7364
        %v7366 = vrot.slane %v7365, 2
        %v7367 = vadd.f32 %v7365, %v7366
        %v7368 = vrot.slane %v7367, 1
        %v7369 = vadd.f32 %v7367, %v7368
        %v7370 = vrot.slane %v5628, 4
        %v7371 = vadd.f32 %v5628, %v7370
        %v7372 = vrot.slane %v7371, 2
        %v7373 = vadd.f32 %v7371, %v7372
        %v7374 = vrot.slane %v7373, 1
        %v7375 = vadd.f32 %v7373, %v7374
        %v7376 = vrot.slane %v5629, 4
        %v7377 = vadd.f32 %v5629, %v7376
        %v7378 = vrot.slane %v7377, 2
        %v7379 = vadd.f32 %v7377, %v7378
        %v7380 = vrot.slane %v7379, 1
        %v7381 = vadd.f32 %v7379, %v7380
        %v7382 = vrot.slane %v5630, 4
        %v7383 = vadd.f32 %v5630, %v7382
        %v7384 = vrot.slane %v7383, 2
        %v7385 = vadd.f32 %v7383, %v7384
        %v7386 = vrot.slane %v7385, 1
        %v7387 = vadd.f32 %v7385, %v7386
        %v7388 = vrot.slane %v5631, 4
        %v7389 = vadd.f32 %v5631, %v7388
        %v7390 = vrot.slane %v7389, 2
        %v7391 = vadd.f32 %v7389, %v7390
        %v7392 = vrot.slane %v7391, 1
        %v7393 = vadd.f32 %v7391, %v7392
        %v7394 = vrot.slane %v5632, 4
        %v7395 = vadd.f32 %v5632, %v7394
        %v7396 = vrot.slane %v7395, 2
        %v7397 = vadd.f32 %v7395, %v7396
        %v7398 = vrot.slane %v7397, 1
        %v7399 = vadd.f32 %v7397, %v7398
        %v7400 = vrot.slane %v5633, 4
        %v7401 = vadd.f32 %v5633, %v7400
        %v7402 = vrot.slane %v7401, 2
        %v7403 = vadd.f32 %v7401, %v7402
        %v7404 = vrot.slane %v7403, 1
        %v7405 = vadd.f32 %v7403, %v7404
        %v7406 = vrot.slane %v5634, 4
        %v7407 = vadd.f32 %v5634, %v7406
        %v7408 = vrot.slane %v7407, 2
        %v7409 = vadd.f32 %v7407, %v7408
        %v7410 = vrot.slane %v7409, 1
        %v7411 = vadd.f32 %v7409, %v7410
        %v7412 = vrot.slane %v5635, 4
        %v7413 = vadd.f32 %v5635, %v7412
        %v7414 = vrot.slane %v7413, 2
        %v7415 = vadd.f32 %v7413, %v7414
        %v7416 = vrot.slane %v7415, 1
        %v7417 = vadd.f32 %v7415, %v7416
        %v7418 = vrot.slane %v5636, 4
        %v7419 = vadd.f32 %v5636, %v7418
        %v7420 = vrot.slane %v7419, 2
        %v7421 = vadd.f32 %v7419, %v7420
        %v7422 = vrot.slane %v7421, 1
        %v7423 = vadd.f32 %v7421, %v7422
        %v7424 = vrot.slane %v5637, 4
        %v7425 = vadd.f32 %v5637, %v7424
        %v7426 = vrot.slane %v7425, 2
        %v7427 = vadd.f32 %v7425, %v7426
        %v7428 = vrot.slane %v7427, 1
        %v7429 = vadd.f32 %v7427, %v7428
        %v7430 = vrot.slane %v5638, 4
        %v7431 = vadd.f32 %v5638, %v7430
        %v7432 = vrot.slane %v7431, 2
        %v7433 = vadd.f32 %v7431, %v7432
        %v7434 = vrot.slane %v7433, 1
        %v7435 = vadd.f32 %v7433, %v7434
        %v7436 = vrot.slane %v5639, 4
        %v7437 = vadd.f32 %v5639, %v7436
        %v7438 = vrot.slane %v7437, 2
        %v7439 = vadd.f32 %v7437, %v7438
        %v7440 = vrot.slane %v7439, 1
        %v7441 = vadd.f32 %v7439, %v7440
        %v7442 = vrot.slane %v5640, 4
        %v7443 = vadd.f32 %v5640, %v7442
        %v7444 = vrot.slane %v7443, 2
        %v7445 = vadd.f32 %v7443, %v7444
        %v7446 = vrot.slane %v7445, 1
        %v7447 = vadd.f32 %v7445, %v7446
        %v7448 = vrot.slane %v5641, 4
        %v7449 = vadd.f32 %v5641, %v7448
        %v7450 = vrot.slane %v7449, 2
        %v7451 = vadd.f32 %v7449, %v7450
        %v7452 = vrot.slane %v7451, 1
        %v7453 = vadd.f32 %v7451, %v7452
        %v7454 = vrot.slane %v5642, 4
        %v7455 = vadd.f32 %v5642, %v7454
        %v7456 = vrot.slane %v7455, 2
        %v7457 = vadd.f32 %v7455, %v7456
        %v7458 = vrot.slane %v7457, 1
        %v7459 = vadd.f32 %v7457, %v7458
        %v7460 = vrot.slane %v5643, 4
        %v7461 = vadd.f32 %v5643, %v7460
        %v7462 = vrot.slane %v7461, 2
        %v7463 = vadd.f32 %v7461, %v7462
        %v7464 = vrot.slane %v7463, 1
        %v7465 = vadd.f32 %v7463, %v7464
        %v7466 = vrot.slane %v5644, 4
        %v7467 = vadd.f32 %v5644, %v7466
        %v7468 = vrot.slane %v7467, 2
        %v7469 = vadd.f32 %v7467, %v7468
        %v7470 = vrot.slane %v7469, 1
        %v7471 = vadd.f32 %v7469, %v7470
        %v7472 = vrot.slane %v5645, 4
        %v7473 = vadd.f32 %v5645, %v7472
        %v7474 = vrot.slane %v7473, 2
        %v7475 = vadd.f32 %v7473, %v7474
        %v7476 = vrot.slane %v7475, 1
        %v7477 = vadd.f32 %v7475, %v7476
        %v7478 = vrot.slane %v5646, 4
        %v7479 = vadd.f32 %v5646, %v7478
        %v7480 = vrot.slane %v7479, 2
        %v7481 = vadd.f32 %v7479, %v7480
        %v7482 = vrot.slane %v7481, 1
        %v7483 = vadd.f32 %v7481, %v7482
        %v7484 = vrot.slane %v5647, 4
        %v7485 = vadd.f32 %v5647, %v7484
        %v7486 = vrot.slane %v7485, 2
        %v7487 = vadd.f32 %v7485, %v7486
        %v7488 = vrot.slane %v7487, 1
        %v7489 = vadd.f32 %v7487, %v7488
        %v7490 = vrot.slane %v5648, 4
        %v7491 = vadd.f32 %v5648, %v7490
        %v7492 = vrot.slane %v7491, 2
        %v7493 = vadd.f32 %v7491, %v7492
        %v7494 = vrot.slane %v7493, 1
        %v7495 = vadd.f32 %v7493, %v7494
        %v7496 = vrot.slane %v5649, 4
        %v7497 = vadd.f32 %v5649, %v7496
        %v7498 = vrot.slane %v7497, 2
        %v7499 = vadd.f32 %v7497, %v7498
        %v7500 = vrot.slane %v7499, 1
        %v7501 = vadd.f32 %v7499, %v7500
        %v7502 = vrot.slane %v5650, 4
        %v7503 = vadd.f32 %v5650, %v7502
        %v7504 = vrot.slane %v7503, 2
        %v7505 = vadd.f32 %v7503, %v7504
        %v7506 = vrot.slane %v7505, 1
        %v7507 = vadd.f32 %v7505, %v7506
        %v7508 = vrot.slane %v5651, 4
        %v7509 = vadd.f32 %v5651, %v7508
        %v7510 = vrot.slane %v7509, 2
        %v7511 = vadd.f32 %v7509, %v7510
        %v7512 = vrot.slane %v7511, 1
        %v7513 = vadd.f32 %v7511, %v7512
        %v7514 = vrot.slane %v5652, 4
        %v7515 = vadd.f32 %v5652, %v7514
        %v7516 = vrot.slane %v7515, 2
        %v7517 = vadd.f32 %v7515, %v7516
        %v7518 = vrot.slane %v7517, 1
        %v7519 = vadd.f32 %v7517, %v7518
        %v7520 = vrot.slane %v5653, 4
        %v7521 = vadd.f32 %v5653, %v7520
        %v7522 = vrot.slane %v7521, 2
        %v7523 = vadd.f32 %v7521, %v7522
        %v7524 = vrot.slane %v7523, 1
        %v7525 = vadd.f32 %v7523, %v7524
        %v7526 = vrot.slane %v5654, 4
        %v7527 = vadd.f32 %v5654, %v7526
        %v7528 = vrot.slane %v7527, 2
        %v7529 = vadd.f32 %v7527, %v7528
        %v7530 = vrot.slane %v7529, 1
        %v7531 = vadd.f32 %v7529, %v7530
        %v7532 = vrot.slane %v5655, 4
        %v7533 = vadd.f32 %v5655, %v7532
        %v7534 = vrot.slane %v7533, 2
        %v7535 = vadd.f32 %v7533, %v7534
        %v7536 = vrot.slane %v7535, 1
        %v7537 = vadd.f32 %v7535, %v7536
        %v7538 = vrot.slane %v5656, 4
        %v7539 = vadd.f32 %v5656, %v7538
        %v7540 = vrot.slane %v7539, 2
        %v7541 = vadd.f32 %v7539, %v7540
        %v7542 = vrot.slane %v7541, 1
        %v7543 = vadd.f32 %v7541, %v7542
        %v7544 = vrot.slane %v5657, 4
        %v7545 = vadd.f32 %v5657, %v7544
        %v7546 = vrot.slane %v7545, 2
        %v7547 = vadd.f32 %v7545, %v7546
        %v7548 = vrot.slane %v7547, 1
        %v7549 = vadd.f32 %v7547, %v7548
        %v7550 = vrot.slane %v5658, 4
        %v7551 = vadd.f32 %v5658, %v7550
        %v7552 = vrot.slane %v7551, 2
        %v7553 = vadd.f32 %v7551, %v7552
        %v7554 = vrot.slane %v7553, 1
        %v7555 = vadd.f32 %v7553, %v7554
        %v7556 = vrot.slane %v5659, 4
        %v7557 = vadd.f32 %v5659, %v7556
        %v7558 = vrot.slane %v7557, 2
        %v7559 = vadd.f32 %v7557, %v7558
        %v7560 = vrot.slane %v7559, 1
        %v7561 = vadd.f32 %v7559, %v7560
        %v7562 = vrot.slane %v5660, 4
        %v7563 = vadd.f32 %v5660, %v7562
        %v7564 = vrot.slane %v7563, 2
        %v7565 = vadd.f32 %v7563, %v7564
        %v7566 = vrot.slane %v7565, 1
        %v7567 = vadd.f32 %v7565, %v7566
        %v7568 = vrot.slane %v5661, 4
        %v7569 = vadd.f32 %v5661, %v7568
        %v7570 = vrot.slane %v7569, 2
        %v7571 = vadd.f32 %v7569, %v7570
        %v7572 = vrot.slane %v7571, 1
        %v7573 = vadd.f32 %v7571, %v7572
        %v7574 = vrot.slane %v5662, 4
        %v7575 = vadd.f32 %v5662, %v7574
        %v7576 = vrot.slane %v7575, 2
        %v7577 = vadd.f32 %v7575, %v7576
        %v7578 = vrot.slane %v7577, 1
        %v7579 = vadd.f32 %v7577, %v7578
        %v7580 = vrot.slane %v5663, 4
        %v7581 = vadd.f32 %v5663, %v7580
        %v7582 = vrot.slane %v7581, 2
        %v7583 = vadd.f32 %v7581, %v7582
        %v7584 = vrot.slane %v7583, 1
        %v7585 = vadd.f32 %v7583, %v7584
        %v7586 = vrot.slane %v5664, 4
        %v7587 = vadd.f32 %v5664, %v7586
        %v7588 = vrot.slane %v7587, 2
        %v7589 = vadd.f32 %v7587, %v7588
        %v7590 = vrot.slane %v7589, 1
        %v7591 = vadd.f32 %v7589, %v7590
        %v7592 = vrot.slane %v5665, 4
        %v7593 = vadd.f32 %v5665, %v7592
        %v7594 = vrot.slane %v7593, 2
        %v7595 = vadd.f32 %v7593, %v7594
        %v7596 = vrot.slane %v7595, 1
        %v7597 = vadd.f32 %v7595, %v7596
        %v7598 = vrot.slane %v5666, 4
        %v7599 = vadd.f32 %v5666, %v7598
        %v7600 = vrot.slane %v7599, 2
        %v7601 = vadd.f32 %v7599, %v7600
        %v7602 = vrot.slane %v7601, 1
        %v7603 = vadd.f32 %v7601, %v7602
        %v7604 = vrot.slane %v5667, 4
        %v7605 = vadd.f32 %v5667, %v7604
        %v7606 = vrot.slane %v7605, 2
        %v7607 = vadd.f32 %v7605, %v7606
        %v7608 = vrot.slane %v7607, 1
        %v7609 = vadd.f32 %v7607, %v7608
        %v7610 = vrot.slane %v5668, 4
        %v7611 = vadd.f32 %v5668, %v7610
        %v7612 = vrot.slane %v7611, 2
        %v7613 = vadd.f32 %v7611, %v7612
        %v7614 = vrot.slane %v7613, 1
        %v7615 = vadd.f32 %v7613, %v7614
        %v7616 = vrot.slane %v5669, 4
        %v7617 = vadd.f32 %v5669, %v7616
        %v7618 = vrot.slane %v7617, 2
        %v7619 = vadd.f32 %v7617, %v7618
        %v7620 = vrot.slane %v7619, 1
        %v7621 = vadd.f32 %v7619, %v7620
        %v7622 = vrot.slane %v5670, 4
        %v7623 = vadd.f32 %v5670, %v7622
        %v7624 = vrot.slane %v7623, 2
        %v7625 = vadd.f32 %v7623, %v7624
        %v7626 = vrot.slane %v7625, 1
        %v7627 = vadd.f32 %v7625, %v7626
        %v7628 = vrot.slane %v5671, 4
        %v7629 = vadd.f32 %v5671, %v7628
        %v7630 = vrot.slane %v7629, 2
        %v7631 = vadd.f32 %v7629, %v7630
        %v7632 = vrot.slane %v7631, 1
        %v7633 = vadd.f32 %v7631, %v7632
        %v7634 = vrot.slane %v5672, 4
        %v7635 = vadd.f32 %v5672, %v7634
        %v7636 = vrot.slane %v7635, 2
        %v7637 = vadd.f32 %v7635, %v7636
        %v7638 = vrot.slane %v7637, 1
        %v7639 = vadd.f32 %v7637, %v7638
        %v7640 = vrot.slane %v5673, 4
        %v7641 = vadd.f32 %v5673, %v7640
        %v7642 = vrot.slane %v7641, 2
        %v7643 = vadd.f32 %v7641, %v7642
        %v7644 = vrot.slane %v7643, 1
        %v7645 = vadd.f32 %v7643, %v7644
        %v7646 = vrot.slane %v5674, 4
        %v7647 = vadd.f32 %v5674, %v7646
        %v7648 = vrot.slane %v7647, 2
        %v7649 = vadd.f32 %v7647, %v7648
        %v7650 = vrot.slane %v7649, 1
        %v7651 = vadd.f32 %v7649, %v7650
        %v7652 = vrot.slane %v5675, 4
        %v7653 = vadd.f32 %v5675, %v7652
        %v7654 = vrot.slane %v7653, 2
        %v7655 = vadd.f32 %v7653, %v7654
        %v7656 = vrot.slane %v7655, 1
        %v7657 = vadd.f32 %v7655, %v7656
        %v7658 = vrot.slane %v5676, 4
        %v7659 = vadd.f32 %v5676, %v7658
        %v7660 = vrot.slane %v7659, 2
        %v7661 = vadd.f32 %v7659, %v7660
        %v7662 = vrot.slane %v7661, 1
        %v7663 = vadd.f32 %v7661, %v7662
        %v7664 = vrot.slane %v5677, 4
        %v7665 = vadd.f32 %v5677, %v7664
        %v7666 = vrot.slane %v7665, 2
        %v7667 = vadd.f32 %v7665, %v7666
        %v7668 = vrot.slane %v7667, 1
        %v7669 = vadd.f32 %v7667, %v7668
        %v7670 = vrot.slane %v5678, 4
        %v7671 = vadd.f32 %v5678, %v7670
        %v7672 = vrot.slane %v7671, 2
        %v7673 = vadd.f32 %v7671, %v7672
        %v7674 = vrot.slane %v7673, 1
        %v7675 = vadd.f32 %v7673, %v7674
        %v7676 = vrot.slane %v5679, 4
        %v7677 = vadd.f32 %v5679, %v7676
        %v7678 = vrot.slane %v7677, 2
        %v7679 = vadd.f32 %v7677, %v7678
        %v7680 = vrot.slane %v7679, 1
        %v7681 = vadd.f32 %v7679, %v7680
        %v7682 = vrot.slane %v5680, 4
        %v7683 = vadd.f32 %v5680, %v7682
        %v7684 = vrot.slane %v7683, 2
        %v7685 = vadd.f32 %v7683, %v7684
        %v7686 = vrot.slane %v7685, 1
        %v7687 = vadd.f32 %v7685, %v7686
        %v7688 = vrot.slane %v5681, 4
        %v7689 = vadd.f32 %v5681, %v7688
        %v7690 = vrot.slane %v7689, 2
        %v7691 = vadd.f32 %v7689, %v7690
        %v7692 = vrot.slane %v7691, 1
        %v7693 = vadd.f32 %v7691, %v7692
        %v7694 = vrot.slane %v5682, 4
        %v7695 = vadd.f32 %v5682, %v7694
        %v7696 = vrot.slane %v7695, 2
        %v7697 = vadd.f32 %v7695, %v7696
        %v7698 = vrot.slane %v7697, 1
        %v7699 = vadd.f32 %v7697, %v7698
        %v7700 = vrot.slane %v5683, 4
        %v7701 = vadd.f32 %v5683, %v7700
        %v7702 = vrot.slane %v7701, 2
        %v7703 = vadd.f32 %v7701, %v7702
        %v7704 = vrot.slane %v7703, 1
        %v7705 = vadd.f32 %v7703, %v7704
        %v7706 = vrot.slane %v5684, 4
        %v7707 = vadd.f32 %v5684, %v7706
        %v7708 = vrot.slane %v7707, 2
        %v7709 = vadd.f32 %v7707, %v7708
        %v7710 = vrot.slane %v7709, 1
        %v7711 = vadd.f32 %v7709, %v7710
        %v7712 = vrot.slane %v5685, 4
        %v7713 = vadd.f32 %v5685, %v7712
        %v7714 = vrot.slane %v7713, 2
        %v7715 = vadd.f32 %v7713, %v7714
        %v7716 = vrot.slane %v7715, 1
        %v7717 = vadd.f32 %v7715, %v7716
        %v7718 = vrot.slane %v5686, 4
        %v7719 = vadd.f32 %v5686, %v7718
        %v7720 = vrot.slane %v7719, 2
        %v7721 = vadd.f32 %v7719, %v7720
        %v7722 = vrot.slane %v7721, 1
        %v7723 = vadd.f32 %v7721, %v7722
        %v7724 = vrot.slane %v5687, 4
        %v7725 = vadd.f32 %v5687, %v7724
        %v7726 = vrot.slane %v7725, 2
        %v7727 = vadd.f32 %v7725, %v7726
        %v7728 = vrot.slane %v7727, 1
        %v7729 = vadd.f32 %v7727, %v7728
        %v7730 = vrot.slane %v5688, 4
        %v7731 = vadd.f32 %v5688, %v7730
        %v7732 = vrot.slane %v7731, 2
        %v7733 = vadd.f32 %v7731, %v7732
        %v7734 = vrot.slane %v7733, 1
        %v7735 = vadd.f32 %v7733, %v7734
        %v7736 = vrot.slane %v5689, 4
        %v7737 = vadd.f32 %v5689, %v7736
        %v7738 = vrot.slane %v7737, 2
        %v7739 = vadd.f32 %v7737, %v7738
        %v7740 = vrot.slane %v7739, 1
        %v7741 = vadd.f32 %v7739, %v7740
        %v7742 = vrot.slane %v5690, 4
        %v7743 = vadd.f32 %v5690, %v7742
        %v7744 = vrot.slane %v7743, 2
        %v7745 = vadd.f32 %v7743, %v7744
        %v7746 = vrot.slane %v7745, 1
        %v7747 = vadd.f32 %v7745, %v7746
        %v7748 = vrot.slane %v5691, 4
        %v7749 = vadd.f32 %v5691, %v7748
        %v7750 = vrot.slane %v7749, 2
        %v7751 = vadd.f32 %v7749, %v7750
        %v7752 = vrot.slane %v7751, 1
        %v7753 = vadd.f32 %v7751, %v7752
        %v7754 = vrot.slane %v5692, 4
        %v7755 = vadd.f32 %v5692, %v7754
        %v7756 = vrot.slane %v7755, 2
        %v7757 = vadd.f32 %v7755, %v7756
        %v7758 = vrot.slane %v7757, 1
        %v7759 = vadd.f32 %v7757, %v7758
        %v7760 = vrot.slane %v5693, 4
        %v7761 = vadd.f32 %v5693, %v7760
        %v7762 = vrot.slane %v7761, 2
        %v7763 = vadd.f32 %v7761, %v7762
        %v7764 = vrot.slane %v7763, 1
        %v7765 = vadd.f32 %v7763, %v7764
        %v7766 = vrot.slane %v5694, 4
        %v7767 = vadd.f32 %v5694, %v7766
        %v7768 = vrot.slane %v7767, 2
        %v7769 = vadd.f32 %v7767, %v7768
        %v7770 = vrot.slane %v7769, 1
        %v7771 = vadd.f32 %v7769, %v7770
        %v7772 = vrot.slane %v5695, 4
        %v7773 = vadd.f32 %v5695, %v7772
        %v7774 = vrot.slane %v7773, 2
        %v7775 = vadd.f32 %v7773, %v7774
        %v7776 = vrot.slane %v7775, 1
        %v7777 = vadd.f32 %v7775, %v7776
        %v7778 = vrot.slane %v5696, 4
        %v7779 = vadd.f32 %v5696, %v7778
        %v7780 = vrot.slane %v7779, 2
        %v7781 = vadd.f32 %v7779, %v7780
        %v7782 = vrot.slane %v7781, 1
        %v7783 = vadd.f32 %v7781, %v7782
        %v7784 = vrot.slane %v5697, 4
        %v7785 = vadd.f32 %v5697, %v7784
        %v7786 = vrot.slane %v7785, 2
        %v7787 = vadd.f32 %v7785, %v7786
        %v7788 = vrot.slane %v7787, 1
        %v7789 = vadd.f32 %v7787, %v7788
        %v7790 = vrot.slane %v5698, 4
        %v7791 = vadd.f32 %v5698, %v7790
        %v7792 = vrot.slane %v7791, 2
        %v7793 = vadd.f32 %v7791, %v7792
        %v7794 = vrot.slane %v7793, 1
        %v7795 = vadd.f32 %v7793, %v7794
        %v7796 = vrot.slane %v5699, 4
        %v7797 = vadd.f32 %v5699, %v7796
        %v7798 = vrot.slane %v7797, 2
        %v7799 = vadd.f32 %v7797, %v7798
        %v7800 = vrot.slane %v7799, 1
        %v7801 = vadd.f32 %v7799, %v7800
        %v7802 = vrot.slane %v5700, 4
        %v7803 = vadd.f32 %v5700, %v7802
        %v7804 = vrot.slane %v7803, 2
        %v7805 = vadd.f32 %v7803, %v7804
        %v7806 = vrot.slane %v7805, 1
        %v7807 = vadd.f32 %v7805, %v7806
        %v7808 = vrot.slane %v5701, 4
        %v7809 = vadd.f32 %v5701, %v7808
        %v7810 = vrot.slane %v7809, 2
        %v7811 = vadd.f32 %v7809, %v7810
        %v7812 = vrot.slane %v7811, 1
        %v7813 = vadd.f32 %v7811, %v7812
        %v7814 = vrot.slane %v5702, 4
        %v7815 = vadd.f32 %v5702, %v7814
        %v7816 = vrot.slane %v7815, 2
        %v7817 = vadd.f32 %v7815, %v7816
        %v7818 = vrot.slane %v7817, 1
        %v7819 = vadd.f32 %v7817, %v7818
        %v7820 = vrot.slane %v5703, 4
        %v7821 = vadd.f32 %v5703, %v7820
        %v7822 = vrot.slane %v7821, 2
        %v7823 = vadd.f32 %v7821, %v7822
        %v7824 = vrot.slane %v7823, 1
        %v7825 = vadd.f32 %v7823, %v7824
        %v7826 = vrot.slane %v5704, 4
        %v7827 = vadd.f32 %v5704, %v7826
        %v7828 = vrot.slane %v7827, 2
        %v7829 = vadd.f32 %v7827, %v7828
        %v7830 = vrot.slane %v7829, 1
        %v7831 = vadd.f32 %v7829, %v7830
        %v7832 = vrot.slane %v5705, 4
        %v7833 = vadd.f32 %v5705, %v7832
        %v7834 = vrot.slane %v7833, 2
        %v7835 = vadd.f32 %v7833, %v7834
        %v7836 = vrot.slane %v7835, 1
        %v7837 = vadd.f32 %v7835, %v7836
        %v7838 = vrot.slane %v5706, 4
        %v7839 = vadd.f32 %v5706, %v7838
        %v7840 = vrot.slane %v7839, 2
        %v7841 = vadd.f32 %v7839, %v7840
        %v7842 = vrot.slane %v7841, 1
        %v7843 = vadd.f32 %v7841, %v7842
        %v7844 = vrot.slane %v5707, 4
        %v7845 = vadd.f32 %v5707, %v7844
        %v7846 = vrot.slane %v7845, 2
        %v7847 = vadd.f32 %v7845, %v7846
        %v7848 = vrot.slane %v7847, 1
        %v7849 = vadd.f32 %v7847, %v7848
        %v7850 = vrot.slane %v5708, 4
        %v7851 = vadd.f32 %v5708, %v7850
        %v7852 = vrot.slane %v7851, 2
        %v7853 = vadd.f32 %v7851, %v7852
        %v7854 = vrot.slane %v7853, 1
        %v7855 = vadd.f32 %v7853, %v7854
        %v7856 = vrot.slane %v5709, 4
        %v7857 = vadd.f32 %v5709, %v7856
        %v7858 = vrot.slane %v7857, 2
        %v7859 = vadd.f32 %v7857, %v7858
        %v7860 = vrot.slane %v7859, 1
        %v7861 = vadd.f32 %v7859, %v7860
        %v7862 = vrot.slane %v5710, 4
        %v7863 = vadd.f32 %v5710, %v7862
        %v7864 = vrot.slane %v7863, 2
        %v7865 = vadd.f32 %v7863, %v7864
        %v7866 = vrot.slane %v7865, 1
        %v7867 = vadd.f32 %v7865, %v7866
        %v7868 = vrot.slane %v5711, 4
        %v7869 = vadd.f32 %v5711, %v7868
        %v7870 = vrot.slane %v7869, 2
        %v7871 = vadd.f32 %v7869, %v7870
        %v7872 = vrot.slane %v7871, 1
        %v7873 = vadd.f32 %v7871, %v7872
        %v7874 = vrot.slane %v5712, 4
        %v7875 = vadd.f32 %v5712, %v7874
        %v7876 = vrot.slane %v7875, 2
        %v7877 = vadd.f32 %v7875, %v7876
        %v7878 = vrot.slane %v7877, 1
        %v7879 = vadd.f32 %v7877, %v7878
        %v7880 = vrot.slane %v5713, 4
        %v7881 = vadd.f32 %v5713, %v7880
        %v7882 = vrot.slane %v7881, 2
        %v7883 = vadd.f32 %v7881, %v7882
        %v7884 = vrot.slane %v7883, 1
        %v7885 = vadd.f32 %v7883, %v7884
        %v7886 = vrot.slane %v5714, 4
        %v7887 = vadd.f32 %v5714, %v7886
        %v7888 = vrot.slane %v7887, 2
        %v7889 = vadd.f32 %v7887, %v7888
        %v7890 = vrot.slane %v7889, 1
        %v7891 = vadd.f32 %v7889, %v7890
        %v7892 = vrot.slane %v5715, 4
        %v7893 = vadd.f32 %v5715, %v7892
        %v7894 = vrot.slane %v7893, 2
        %v7895 = vadd.f32 %v7893, %v7894
        %v7896 = vrot.slane %v7895, 1
        %v7897 = vadd.f32 %v7895, %v7896
        %v7898 = vrot.slane %v5716, 4
        %v7899 = vadd.f32 %v5716, %v7898
        %v7900 = vrot.slane %v7899, 2
        %v7901 = vadd.f32 %v7899, %v7900
        %v7902 = vrot.slane %v7901, 1
        %v7903 = vadd.f32 %v7901, %v7902
        %v7904 = vrot.slane %v5717, 4
        %v7905 = vadd.f32 %v5717, %v7904
        %v7906 = vrot.slane %v7905, 2
        %v7907 = vadd.f32 %v7905, %v7906
        %v7908 = vrot.slane %v7907, 1
        %v7909 = vadd.f32 %v7907, %v7908
        %v7910 = vrot.slane %v5718, 4
        %v7911 = vadd.f32 %v5718, %v7910
        %v7912 = vrot.slane %v7911, 2
        %v7913 = vadd.f32 %v7911, %v7912
        %v7914 = vrot.slane %v7913, 1
        %v7915 = vadd.f32 %v7913, %v7914
        %v7916 = vrot.slane %v5719, 4
        %v7917 = vadd.f32 %v5719, %v7916
        %v7918 = vrot.slane %v7917, 2
        %v7919 = vadd.f32 %v7917, %v7918
        %v7920 = vrot.slane %v7919, 1
        %v7921 = vadd.f32 %v7919, %v7920
        %v7922 = vrot.slane %v5720, 4
        %v7923 = vadd.f32 %v5720, %v7922
        %v7924 = vrot.slane %v7923, 2
        %v7925 = vadd.f32 %v7923, %v7924
        %v7926 = vrot.slane %v7925, 1
        %v7927 = vadd.f32 %v7925, %v7926
        %v7928 = vrot.slane %v5721, 4
        %v7929 = vadd.f32 %v5721, %v7928
        %v7930 = vrot.slane %v7929, 2
        %v7931 = vadd.f32 %v7929, %v7930
        %v7932 = vrot.slane %v7931, 1
        %v7933 = vadd.f32 %v7931, %v7932
        %v7934 = vrot.slane %v5722, 4
        %v7935 = vadd.f32 %v5722, %v7934
        %v7936 = vrot.slane %v7935, 2
        %v7937 = vadd.f32 %v7935, %v7936
        %v7938 = vrot.slane %v7937, 1
        %v7939 = vadd.f32 %v7937, %v7938
        %v7940 = vrot.slane %v5723, 4
        %v7941 = vadd.f32 %v5723, %v7940
        %v7942 = vrot.slane %v7941, 2
        %v7943 = vadd.f32 %v7941, %v7942
        %v7944 = vrot.slane %v7943, 1
        %v7945 = vadd.f32 %v7943, %v7944
        %v7946 = vrot.slane %v5724, 4
        %v7947 = vadd.f32 %v5724, %v7946
        %v7948 = vrot.slane %v7947, 2
        %v7949 = vadd.f32 %v7947, %v7948
        %v7950 = vrot.slane %v7949, 1
        %v7951 = vadd.f32 %v7949, %v7950
        %v7952 = vrot.slane %v5725, 4
        %v7953 = vadd.f32 %v5725, %v7952
        %v7954 = vrot.slane %v7953, 2
        %v7955 = vadd.f32 %v7953, %v7954
        %v7956 = vrot.slane %v7955, 1
        %v7957 = vadd.f32 %v7955, %v7956
        %v7958 = vrot.slane %v5726, 4
        %v7959 = vadd.f32 %v5726, %v7958
        %v7960 = vrot.slane %v7959, 2
        %v7961 = vadd.f32 %v7959, %v7960
        %v7962 = vrot.slane %v7961, 1
        %v7963 = vadd.f32 %v7961, %v7962
        %v7964 = vrot.slane %v5727, 4
        %v7965 = vadd.f32 %v5727, %v7964
        %v7966 = vrot.slane %v7965, 2
        %v7967 = vadd.f32 %v7965, %v7966
        %v7968 = vrot.slane %v7967, 1
        %v7969 = vadd.f32 %v7967, %v7968
        %v7970 = vrot.slane %v5728, 4
        %v7971 = vadd.f32 %v5728, %v7970
        %v7972 = vrot.slane %v7971, 2
        %v7973 = vadd.f32 %v7971, %v7972
        %v7974 = vrot.slane %v7973, 1
        %v7975 = vadd.f32 %v7973, %v7974
        %v7976 = vrot.slane %v5729, 4
        %v7977 = vadd.f32 %v5729, %v7976
        %v7978 = vrot.slane %v7977, 2
        %v7979 = vadd.f32 %v7977, %v7978
        %v7980 = vrot.slane %v7979, 1
        %v7981 = vadd.f32 %v7979, %v7980
        %v7982 = vrot.slane %v5730, 4
        %v7983 = vadd.f32 %v5730, %v7982
        %v7984 = vrot.slane %v7983, 2
        %v7985 = vadd.f32 %v7983, %v7984
        %v7986 = vrot.slane %v7985, 1
        %v7987 = vadd.f32 %v7985, %v7986
        %v7988 = vrot.slane %v5731, 4
        %v7989 = vadd.f32 %v5731, %v7988
        %v7990 = vrot.slane %v7989, 2
        %v7991 = vadd.f32 %v7989, %v7990
        %v7992 = vrot.slane %v7991, 1
        %v7993 = vadd.f32 %v7991, %v7992
        %v7994 = vrot.slane %v5732, 4
        %v7995 = vadd.f32 %v5732, %v7994
        %v7996 = vrot.slane %v7995, 2
        %v7997 = vadd.f32 %v7995, %v7996
        %v7998 = vrot.slane %v7997, 1
        %v7999 = vadd.f32 %v7997, %v7998
        %v8000 = vrot.slane %v5733, 4
        %v8001 = vadd.f32 %v5733, %v8000
        %v8002 = vrot.slane %v8001, 2
        %v8003 = vadd.f32 %v8001, %v8002
        %v8004 = vrot.slane %v8003, 1
        %v8005 = vadd.f32 %v8003, %v8004
        %v8006 = vrot.slane %v5734, 4
        %v8007 = vadd.f32 %v5734, %v8006
        %v8008 = vrot.slane %v8007, 2
        %v8009 = vadd.f32 %v8007, %v8008
        %v8010 = vrot.slane %v8009, 1
        %v8011 = vadd.f32 %v8009, %v8010
        %v8012 = vrot.slane %v5735, 4
        %v8013 = vadd.f32 %v5735, %v8012
        %v8014 = vrot.slane %v8013, 2
        %v8015 = vadd.f32 %v8013, %v8014
        %v8016 = vrot.slane %v8015, 1
        %v8017 = vadd.f32 %v8015, %v8016
        %v8018 = vrot.slane %v5736, 4
        %v8019 = vadd.f32 %v5736, %v8018
        %v8020 = vrot.slane %v8019, 2
        %v8021 = vadd.f32 %v8019, %v8020
        %v8022 = vrot.slane %v8021, 1
        %v8023 = vadd.f32 %v8021, %v8022
        %v8024 = vrot.slane %v5737, 4
        %v8025 = vadd.f32 %v5737, %v8024
        %v8026 = vrot.slane %v8025, 2
        %v8027 = vadd.f32 %v8025, %v8026
        %v8028 = vrot.slane %v8027, 1
        %v8029 = vadd.f32 %v8027, %v8028
        %v8030 = vrot.slane %v5738, 4
        %v8031 = vadd.f32 %v5738, %v8030
        %v8032 = vrot.slane %v8031, 2
        %v8033 = vadd.f32 %v8031, %v8032
        %v8034 = vrot.slane %v8033, 1
        %v8035 = vadd.f32 %v8033, %v8034
        %v8036 = vrot.slane %v5739, 4
        %v8037 = vadd.f32 %v5739, %v8036
        %v8038 = vrot.slane %v8037, 2
        %v8039 = vadd.f32 %v8037, %v8038
        %v8040 = vrot.slane %v8039, 1
        %v8041 = vadd.f32 %v8039, %v8040
        %v8042 = vrot.slane %v5740, 4
        %v8043 = vadd.f32 %v5740, %v8042
        %v8044 = vrot.slane %v8043, 2
        %v8045 = vadd.f32 %v8043, %v8044
        %v8046 = vrot.slane %v8045, 1
        %v8047 = vadd.f32 %v8045, %v8046
        %v8048 = vrot.slane %v5741, 4
        %v8049 = vadd.f32 %v5741, %v8048
        %v8050 = vrot.slane %v8049, 2
        %v8051 = vadd.f32 %v8049, %v8050
        %v8052 = vrot.slane %v8051, 1
        %v8053 = vadd.f32 %v8051, %v8052
        %v8054 = vrot.slane %v5742, 4
        %v8055 = vadd.f32 %v5742, %v8054
        %v8056 = vrot.slane %v8055, 2
        %v8057 = vadd.f32 %v8055, %v8056
        %v8058 = vrot.slane %v8057, 1
        %v8059 = vadd.f32 %v8057, %v8058
        %v8060 = vrot.slane %v5743, 4
        %v8061 = vadd.f32 %v5743, %v8060
        %v8062 = vrot.slane %v8061, 2
        %v8063 = vadd.f32 %v8061, %v8062
        %v8064 = vrot.slane %v8063, 1
        %v8065 = vadd.f32 %v8063, %v8064
        %v8066 = vrot.slane %v5744, 4
        %v8067 = vadd.f32 %v5744, %v8066
        %v8068 = vrot.slane %v8067, 2
        %v8069 = vadd.f32 %v8067, %v8068
        %v8070 = vrot.slane %v8069, 1
        %v8071 = vadd.f32 %v8069, %v8070
        %v8072 = vrot.slane %v5745, 4
        %v8073 = vadd.f32 %v5745, %v8072
        %v8074 = vrot.slane %v8073, 2
        %v8075 = vadd.f32 %v8073, %v8074
        %v8076 = vrot.slane %v8075, 1
        %v8077 = vadd.f32 %v8075, %v8076
        %v8078 = vrot.slane %v5746, 4
        %v8079 = vadd.f32 %v5746, %v8078
        %v8080 = vrot.slane %v8079, 2
        %v8081 = vadd.f32 %v8079, %v8080
        %v8082 = vrot.slane %v8081, 1
        %v8083 = vadd.f32 %v8081, %v8082
        %v8084 = vrot.slane %v5747, 4
        %v8085 = vadd.f32 %v5747, %v8084
        %v8086 = vrot.slane %v8085, 2
        %v8087 = vadd.f32 %v8085, %v8086
        %v8088 = vrot.slane %v8087, 1
        %v8089 = vadd.f32 %v8087, %v8088
        %v8090 = vrot.slane %v5748, 4
        %v8091 = vadd.f32 %v5748, %v8090
        %v8092 = vrot.slane %v8091, 2
        %v8093 = vadd.f32 %v8091, %v8092
        %v8094 = vrot.slane %v8093, 1
        %v8095 = vadd.f32 %v8093, %v8094
        %v8096 = vrot.slane %v5749, 4
        %v8097 = vadd.f32 %v5749, %v8096
        %v8098 = vrot.slane %v8097, 2
        %v8099 = vadd.f32 %v8097, %v8098
        %v8100 = vrot.slane %v8099, 1
        %v8101 = vadd.f32 %v8099, %v8100
        %v8102 = vrot.slane %v5750, 4
        %v8103 = vadd.f32 %v5750, %v8102
        %v8104 = vrot.slane %v8103, 2
        %v8105 = vadd.f32 %v8103, %v8104
        %v8106 = vrot.slane %v8105, 1
        %v8107 = vadd.f32 %v8105, %v8106
        %v8108 = vrot.slane %v5751, 4
        %v8109 = vadd.f32 %v5751, %v8108
        %v8110 = vrot.slane %v8109, 2
        %v8111 = vadd.f32 %v8109, %v8110
        %v8112 = vrot.slane %v8111, 1
        %v8113 = vadd.f32 %v8111, %v8112
        %v8114 = vrot.slane %v5752, 4
        %v8115 = vadd.f32 %v5752, %v8114
        %v8116 = vrot.slane %v8115, 2
        %v8117 = vadd.f32 %v8115, %v8116
        %v8118 = vrot.slane %v8117, 1
        %v8119 = vadd.f32 %v8117, %v8118
        %v8120 = vrot.slane %v5753, 4
        %v8121 = vadd.f32 %v5753, %v8120
        %v8122 = vrot.slane %v8121, 2
        %v8123 = vadd.f32 %v8121, %v8122
        %v8124 = vrot.slane %v8123, 1
        %v8125 = vadd.f32 %v8123, %v8124
        %v8126 = vrot.slane %v5754, 4
        %v8127 = vadd.f32 %v5754, %v8126
        %v8128 = vrot.slane %v8127, 2
        %v8129 = vadd.f32 %v8127, %v8128
        %v8130 = vrot.slane %v8129, 1
        %v8131 = vadd.f32 %v8129, %v8130
        %v8132 = vrot.slane %v5755, 4
        %v8133 = vadd.f32 %v5755, %v8132
        %v8134 = vrot.slane %v8133, 2
        %v8135 = vadd.f32 %v8133, %v8134
        %v8136 = vrot.slane %v8135, 1
        %v8137 = vadd.f32 %v8135, %v8136
        %v8138 = vrot.slane %v5756, 4
        %v8139 = vadd.f32 %v5756, %v8138
        %v8140 = vrot.slane %v8139, 2
        %v8141 = vadd.f32 %v8139, %v8140
        %v8142 = vrot.slane %v8141, 1
        %v8143 = vadd.f32 %v8141, %v8142
        %v8144 = vrot.slane %v5757, 4
        %v8145 = vadd.f32 %v5757, %v8144
        %v8146 = vrot.slane %v8145, 2
        %v8147 = vadd.f32 %v8145, %v8146
        %v8148 = vrot.slane %v8147, 1
        %v8149 = vadd.f32 %v8147, %v8148
        %v8150 = vrot.slane %v5758, 4
        %v8151 = vadd.f32 %v5758, %v8150
        %v8152 = vrot.slane %v8151, 2
        %v8153 = vadd.f32 %v8151, %v8152
        %v8154 = vrot.slane %v8153, 1
        %v8155 = vadd.f32 %v8153, %v8154
        %v8156 = vrot.slane %v5759, 4
        %v8157 = vadd.f32 %v5759, %v8156
        %v8158 = vrot.slane %v8157, 2
        %v8159 = vadd.f32 %v8157, %v8158
        %v8160 = vrot.slane %v8159, 1
        %v8161 = vadd.f32 %v8159, %v8160
        %v8162 = vrot.slane %v5760, 4
        %v8163 = vadd.f32 %v5760, %v8162
        %v8164 = vrot.slane %v8163, 2
        %v8165 = vadd.f32 %v8163, %v8164
        %v8166 = vrot.slane %v8165, 1
        %v8167 = vadd.f32 %v8165, %v8166
        %v8168 = vrot.slane %v5761, 4
        %v8169 = vadd.f32 %v5761, %v8168
        %v8170 = vrot.slane %v8169, 2
        %v8171 = vadd.f32 %v8169, %v8170
        %v8172 = vrot.slane %v8171, 1
        %v8173 = vadd.f32 %v8171, %v8172
        %v8174 = vrot.slane %v5762, 4
        %v8175 = vadd.f32 %v5762, %v8174
        %v8176 = vrot.slane %v8175, 2
        %v8177 = vadd.f32 %v8175, %v8176
        %v8178 = vrot.slane %v8177, 1
        %v8179 = vadd.f32 %v8177, %v8178
        %v8180 = vrot.slane %v5763, 4
        %v8181 = vadd.f32 %v5763, %v8180
        %v8182 = vrot.slane %v8181, 2
        %v8183 = vadd.f32 %v8181, %v8182
        %v8184 = vrot.slane %v8183, 1
        %v8185 = vadd.f32 %v8183, %v8184
        %v8186 = vrot.slane %v5764, 4
        %v8187 = vadd.f32 %v5764, %v8186
        %v8188 = vrot.slane %v8187, 2
        %v8189 = vadd.f32 %v8187, %v8188
        %v8190 = vrot.slane %v8189, 1
        %v8191 = vadd.f32 %v8189, %v8190
        %v8192 = vrot.slane %v5765, 4
        %v8193 = vadd.f32 %v5765, %v8192
        %v8194 = vrot.slane %v8193, 2
        %v8195 = vadd.f32 %v8193, %v8194
        %v8196 = vrot.slane %v8195, 1
        %v8197 = vadd.f32 %v8195, %v8196
        %v8198 = vrot.slane %v5766, 4
        %v8199 = vadd.f32 %v5766, %v8198
        %v8200 = vrot.slane %v8199, 2
        %v8201 = vadd.f32 %v8199, %v8200
        %v8202 = vrot.slane %v8201, 1
        %v8203 = vadd.f32 %v8201, %v8202
        %v8204 = vrot.slane %v5767, 4
        %v8205 = vadd.f32 %v5767, %v8204
        %v8206 = vrot.slane %v8205, 2
        %v8207 = vadd.f32 %v8205, %v8206
        %v8208 = vrot.slane %v8207, 1
        %v8209 = vadd.f32 %v8207, %v8208
        %v8210 = vrot.slane %v5768, 4
        %v8211 = vadd.f32 %v5768, %v8210
        %v8212 = vrot.slane %v8211, 2
        %v8213 = vadd.f32 %v8211, %v8212
        %v8214 = vrot.slane %v8213, 1
        %v8215 = vadd.f32 %v8213, %v8214
        %v8216 = vrot.slane %v5769, 4
        %v8217 = vadd.f32 %v5769, %v8216
        %v8218 = vrot.slane %v8217, 2
        %v8219 = vadd.f32 %v8217, %v8218
        %v8220 = vrot.slane %v8219, 1
        %v8221 = vadd.f32 %v8219, %v8220
        %v8222 = vrot.slane %v5770, 4
        %v8223 = vadd.f32 %v5770, %v8222
        %v8224 = vrot.slane %v8223, 2
        %v8225 = vadd.f32 %v8223, %v8224
        %v8226 = vrot.slane %v8225, 1
        %v8227 = vadd.f32 %v8225, %v8226
        %v8228 = vrot.slane %v5771, 4
        %v8229 = vadd.f32 %v5771, %v8228
        %v8230 = vrot.slane %v8229, 2
        %v8231 = vadd.f32 %v8229, %v8230
        %v8232 = vrot.slane %v8231, 1
        %v8233 = vadd.f32 %v8231, %v8232
        %v8234 = vrot.slane %v5772, 4
        %v8235 = vadd.f32 %v5772, %v8234
        %v8236 = vrot.slane %v8235, 2
        %v8237 = vadd.f32 %v8235, %v8236
        %v8238 = vrot.slane %v8237, 1
        %v8239 = vadd.f32 %v8237, %v8238
        %v8240 = vrot.slane %v5773, 4
        %v8241 = vadd.f32 %v5773, %v8240
        %v8242 = vrot.slane %v8241, 2
        %v8243 = vadd.f32 %v8241, %v8242
        %v8244 = vrot.slane %v8243, 1
        %v8245 = vadd.f32 %v8243, %v8244
        %v8246 = vrot.slane %v5774, 4
        %v8247 = vadd.f32 %v5774, %v8246
        %v8248 = vrot.slane %v8247, 2
        %v8249 = vadd.f32 %v8247, %v8248
        %v8250 = vrot.slane %v8249, 1
        %v8251 = vadd.f32 %v8249, %v8250
        %v8252 = vrot.slane %v5775, 4
        %v8253 = vadd.f32 %v5775, %v8252
        %v8254 = vrot.slane %v8253, 2
        %v8255 = vadd.f32 %v8253, %v8254
        %v8256 = vrot.slane %v8255, 1
        %v8257 = vadd.f32 %v8255, %v8256
        %v8258 = vrot.slane %v5776, 4
        %v8259 = vadd.f32 %v5776, %v8258
        %v8260 = vrot.slane %v8259, 2
        %v8261 = vadd.f32 %v8259, %v8260
        %v8262 = vrot.slane %v8261, 1
        %v8263 = vadd.f32 %v8261, %v8262
        %v8264 = vrot.slane %v5777, 4
        %v8265 = vadd.f32 %v5777, %v8264
        %v8266 = vrot.slane %v8265, 2
        %v8267 = vadd.f32 %v8265, %v8266
        %v8268 = vrot.slane %v8267, 1
        %v8269 = vadd.f32 %v8267, %v8268
        %v8270 = vrot.slane %v5778, 4
        %v8271 = vadd.f32 %v5778, %v8270
        %v8272 = vrot.slane %v8271, 2
        %v8273 = vadd.f32 %v8271, %v8272
        %v8274 = vrot.slane %v8273, 1
        %v8275 = vadd.f32 %v8273, %v8274
        %v8276 = vrot.slane %v5779, 4
        %v8277 = vadd.f32 %v5779, %v8276
        %v8278 = vrot.slane %v8277, 2
        %v8279 = vadd.f32 %v8277, %v8278
        %v8280 = vrot.slane %v8279, 1
        %v8281 = vadd.f32 %v8279, %v8280
        %v8282 = vrot.slane %v5780, 4
        %v8283 = vadd.f32 %v5780, %v8282
        %v8284 = vrot.slane %v8283, 2
        %v8285 = vadd.f32 %v8283, %v8284
        %v8286 = vrot.slane %v8285, 1
        %v8287 = vadd.f32 %v8285, %v8286
        %v8288 = vrot.slane %v5781, 4
        %v8289 = vadd.f32 %v5781, %v8288
        %v8290 = vrot.slane %v8289, 2
        %v8291 = vadd.f32 %v8289, %v8290
        %v8292 = vrot.slane %v8291, 1
        %v8293 = vadd.f32 %v8291, %v8292
        %v8294 = vrot.slane %v5782, 4
        %v8295 = vadd.f32 %v5782, %v8294
        %v8296 = vrot.slane %v8295, 2
        %v8297 = vadd.f32 %v8295, %v8296
        %v8298 = vrot.slane %v8297, 1
        %v8299 = vadd.f32 %v8297, %v8298
        %v8300 = vrot.slane %v5783, 4
        %v8301 = vadd.f32 %v5783, %v8300
        %v8302 = vrot.slane %v8301, 2
        %v8303 = vadd.f32 %v8301, %v8302
        %v8304 = vrot.slane %v8303, 1
        %v8305 = vadd.f32 %v8303, %v8304
        %v8306 = vrot.slane %v5784, 4
        %v8307 = vadd.f32 %v5784, %v8306
        %v8308 = vrot.slane %v8307, 2
        %v8309 = vadd.f32 %v8307, %v8308
        %v8310 = vrot.slane %v8309, 1
        %v8311 = vadd.f32 %v8309, %v8310
        %v8312 = vrot.slane %v5785, 4
        %v8313 = vadd.f32 %v5785, %v8312
        %v8314 = vrot.slane %v8313, 2
        %v8315 = vadd.f32 %v8313, %v8314
        %v8316 = vrot.slane %v8315, 1
        %v8317 = vadd.f32 %v8315, %v8316
        %v8318 = vrot.slane %v5786, 4
        %v8319 = vadd.f32 %v5786, %v8318
        %v8320 = vrot.slane %v8319, 2
        %v8321 = vadd.f32 %v8319, %v8320
        %v8322 = vrot.slane %v8321, 1
        %v8323 = vadd.f32 %v8321, %v8322
        %v8324 = vrot.slane %v5787, 4
        %v8325 = vadd.f32 %v5787, %v8324
        %v8326 = vrot.slane %v8325, 2
        %v8327 = vadd.f32 %v8325, %v8326
        %v8328 = vrot.slane %v8327, 1
        %v8329 = vadd.f32 %v8327, %v8328
        %v8330 = vrot.slane %v5788, 4
        %v8331 = vadd.f32 %v5788, %v8330
        %v8332 = vrot.slane %v8331, 2
        %v8333 = vadd.f32 %v8331, %v8332
        %v8334 = vrot.slane %v8333, 1
        %v8335 = vadd.f32 %v8333, %v8334
        %v8336 = vrot.slane %v5789, 4
        %v8337 = vadd.f32 %v5789, %v8336
        %v8338 = vrot.slane %v8337, 2
        %v8339 = vadd.f32 %v8337, %v8338
        %v8340 = vrot.slane %v8339, 1
        %v8341 = vadd.f32 %v8339, %v8340
        %v8342 = vrot.slane %v5790, 4
        %v8343 = vadd.f32 %v5790, %v8342
        %v8344 = vrot.slane %v8343, 2
        %v8345 = vadd.f32 %v8343, %v8344
        %v8346 = vrot.slane %v8345, 1
        %v8347 = vadd.f32 %v8345, %v8346
        %v8348 = vrot.slane %v5791, 4
        %v8349 = vadd.f32 %v5791, %v8348
        %v8350 = vrot.slane %v8349, 2
        %v8351 = vadd.f32 %v8349, %v8350
        %v8352 = vrot.slane %v8351, 1
        %v8353 = vadd.f32 %v8351, %v8352
        %v8354 = vrot.slane %v5792, 4
        %v8355 = vadd.f32 %v5792, %v8354
        %v8356 = vrot.slane %v8355, 2
        %v8357 = vadd.f32 %v8355, %v8356
        %v8358 = vrot.slane %v8357, 1
        %v8359 = vadd.f32 %v8357, %v8358
        %v8360 = vrot.slane %v5793, 4
        %v8361 = vadd.f32 %v5793, %v8360
        %v8362 = vrot.slane %v8361, 2
        %v8363 = vadd.f32 %v8361, %v8362
        %v8364 = vrot.slane %v8363, 1
        %v8365 = vadd.f32 %v8363, %v8364
        %v8366 = vrot.slane %v5794, 4
        %v8367 = vadd.f32 %v5794, %v8366
        %v8368 = vrot.slane %v8367, 2
        %v8369 = vadd.f32 %v8367, %v8368
        %v8370 = vrot.slane %v8369, 1
        %v8371 = vadd.f32 %v8369, %v8370
        %v8372 = vrot.slane %v5795, 4
        %v8373 = vadd.f32 %v5795, %v8372
        %v8374 = vrot.slane %v8373, 2
        %v8375 = vadd.f32 %v8373, %v8374
        %v8376 = vrot.slane %v8375, 1
        %v8377 = vadd.f32 %v8375, %v8376
        %v8378 = vrot.slane %v5796, 4
        %v8379 = vadd.f32 %v5796, %v8378
        %v8380 = vrot.slane %v8379, 2
        %v8381 = vadd.f32 %v8379, %v8380
        %v8382 = vrot.slane %v8381, 1
        %v8383 = vadd.f32 %v8381, %v8382
        %v8384 = vrot.slane %v5797, 4
        %v8385 = vadd.f32 %v5797, %v8384
        %v8386 = vrot.slane %v8385, 2
        %v8387 = vadd.f32 %v8385, %v8386
        %v8388 = vrot.slane %v8387, 1
        %v8389 = vadd.f32 %v8387, %v8388
        %v8390 = vrot.slane %v5798, 4
        %v8391 = vadd.f32 %v5798, %v8390
        %v8392 = vrot.slane %v8391, 2
        %v8393 = vadd.f32 %v8391, %v8392
        %v8394 = vrot.slane %v8393, 1
        %v8395 = vadd.f32 %v8393, %v8394
        %v8396 = vrot.slane %v5799, 4
        %v8397 = vadd.f32 %v5799, %v8396
        %v8398 = vrot.slane %v8397, 2
        %v8399 = vadd.f32 %v8397, %v8398
        %v8400 = vrot.slane %v8399, 1
        %v8401 = vadd.f32 %v8399, %v8400
        %v8402 = vrot.slane %v5800, 4
        %v8403 = vadd.f32 %v5800, %v8402
        %v8404 = vrot.slane %v8403, 2
        %v8405 = vadd.f32 %v8403, %v8404
        %v8406 = vrot.slane %v8405, 1
        %v8407 = vadd.f32 %v8405, %v8406
        %v8408 = vrot.slane %v5801, 4
        %v8409 = vadd.f32 %v5801, %v8408
        %v8410 = vrot.slane %v8409, 2
        %v8411 = vadd.f32 %v8409, %v8410
        %v8412 = vrot.slane %v8411, 1
        %v8413 = vadd.f32 %v8411, %v8412
        %v8414 = vrot.slane %v5802, 4
        %v8415 = vadd.f32 %v5802, %v8414
        %v8416 = vrot.slane %v8415, 2
        %v8417 = vadd.f32 %v8415, %v8416
        %v8418 = vrot.slane %v8417, 1
        %v8419 = vadd.f32 %v8417, %v8418
        %v8420 = vrot.slane %v5803, 4
        %v8421 = vadd.f32 %v5803, %v8420
        %v8422 = vrot.slane %v8421, 2
        %v8423 = vadd.f32 %v8421, %v8422
        %v8424 = vrot.slane %v8423, 1
        %v8425 = vadd.f32 %v8423, %v8424
        %v8426 = vrot.slane %v5804, 4
        %v8427 = vadd.f32 %v5804, %v8426
        %v8428 = vrot.slane %v8427, 2
        %v8429 = vadd.f32 %v8427, %v8428
        %v8430 = vrot.slane %v8429, 1
        %v8431 = vadd.f32 %v8429, %v8430
        %v8432 = vrot.slane %v5805, 4
        %v8433 = vadd.f32 %v5805, %v8432
        %v8434 = vrot.slane %v8433, 2
        %v8435 = vadd.f32 %v8433, %v8434
        %v8436 = vrot.slane %v8435, 1
        %v8437 = vadd.f32 %v8435, %v8436
        %v8438 = vrot.slane %v5806, 4
        %v8439 = vadd.f32 %v5806, %v8438
        %v8440 = vrot.slane %v8439, 2
        %v8441 = vadd.f32 %v8439, %v8440
        %v8442 = vrot.slane %v8441, 1
        %v8443 = vadd.f32 %v8441, %v8442
        %v8444 = vrot.slane %v5807, 4
        %v8445 = vadd.f32 %v5807, %v8444
        %v8446 = vrot.slane %v8445, 2
        %v8447 = vadd.f32 %v8445, %v8446
        %v8448 = vrot.slane %v8447, 1
        %v8449 = vadd.f32 %v8447, %v8448
        %v8450 = vrot.slane %v5808, 4
        %v8451 = vadd.f32 %v5808, %v8450
        %v8452 = vrot.slane %v8451, 2
        %v8453 = vadd.f32 %v8451, %v8452
        %v8454 = vrot.slane %v8453, 1
        %v8455 = vadd.f32 %v8453, %v8454
        %v8456 = vrot.slane %v5809, 4
        %v8457 = vadd.f32 %v5809, %v8456
        %v8458 = vrot.slane %v8457, 2
        %v8459 = vadd.f32 %v8457, %v8458
        %v8460 = vrot.slane %v8459, 1
        %v8461 = vadd.f32 %v8459, %v8460
        %v8462 = vrot.slane %v5810, 4
        %v8463 = vadd.f32 %v5810, %v8462
        %v8464 = vrot.slane %v8463, 2
        %v8465 = vadd.f32 %v8463, %v8464
        %v8466 = vrot.slane %v8465, 1
        %v8467 = vadd.f32 %v8465, %v8466
        %v8468 = vrot.slane %v5811, 4
        %v8469 = vadd.f32 %v5811, %v8468
        %v8470 = vrot.slane %v8469, 2
        %v8471 = vadd.f32 %v8469, %v8470
        %v8472 = vrot.slane %v8471, 1
        %v8473 = vadd.f32 %v8471, %v8472
        %v8474 = vrot.slane %v5812, 4
        %v8475 = vadd.f32 %v5812, %v8474
        %v8476 = vrot.slane %v8475, 2
        %v8477 = vadd.f32 %v8475, %v8476
        %v8478 = vrot.slane %v8477, 1
        %v8479 = vadd.f32 %v8477, %v8478
        %v8480 = vrot.slane %v5813, 4
        %v8481 = vadd.f32 %v5813, %v8480
        %v8482 = vrot.slane %v8481, 2
        %v8483 = vadd.f32 %v8481, %v8482
        %v8484 = vrot.slane %v8483, 1
        %v8485 = vadd.f32 %v8483, %v8484
        %v8486 = vrot.slane %v5814, 4
        %v8487 = vadd.f32 %v5814, %v8486
        %v8488 = vrot.slane %v8487, 2
        %v8489 = vadd.f32 %v8487, %v8488
        %v8490 = vrot.slane %v8489, 1
        %v8491 = vadd.f32 %v8489, %v8490
        %v8492 = vrot.slane %v5815, 4
        %v8493 = vadd.f32 %v5815, %v8492
        %v8494 = vrot.slane %v8493, 2
        %v8495 = vadd.f32 %v8493, %v8494
        %v8496 = vrot.slane %v8495, 1
        %v8497 = vadd.f32 %v8495, %v8496
        %v8498 = vrot.slane %v5816, 4
        %v8499 = vadd.f32 %v5816, %v8498
        %v8500 = vrot.slane %v8499, 2
        %v8501 = vadd.f32 %v8499, %v8500
        %v8502 = vrot.slane %v8501, 1
        %v8503 = vadd.f32 %v8501, %v8502
        %v8504 = vrot.slane %v5817, 4
        %v8505 = vadd.f32 %v5817, %v8504
        %v8506 = vrot.slane %v8505, 2
        %v8507 = vadd.f32 %v8505, %v8506
        %v8508 = vrot.slane %v8507, 1
        %v8509 = vadd.f32 %v8507, %v8508
        %v8510 = vrot.slane %v5818, 4
        %v8511 = vadd.f32 %v5818, %v8510
        %v8512 = vrot.slane %v8511, 2
        %v8513 = vadd.f32 %v8511, %v8512
        %v8514 = vrot.slane %v8513, 1
        %v8515 = vadd.f32 %v8513, %v8514
        %v8516 = vrot.slane %v5819, 4
        %v8517 = vadd.f32 %v5819, %v8516
        %v8518 = vrot.slane %v8517, 2
        %v8519 = vadd.f32 %v8517, %v8518
        %v8520 = vrot.slane %v8519, 1
        %v8521 = vadd.f32 %v8519, %v8520
        %v8522 = vrot.slane %v5820, 4
        %v8523 = vadd.f32 %v5820, %v8522
        %v8524 = vrot.slane %v8523, 2
        %v8525 = vadd.f32 %v8523, %v8524
        %v8526 = vrot.slane %v8525, 1
        %v8527 = vadd.f32 %v8525, %v8526
        %v8528 = vrot.slane %v5821, 4
        %v8529 = vadd.f32 %v5821, %v8528
        %v8530 = vrot.slane %v8529, 2
        %v8531 = vadd.f32 %v8529, %v8530
        %v8532 = vrot.slane %v8531, 1
        %v8533 = vadd.f32 %v8531, %v8532
        %v8534 = vrot.slane %v5822, 4
        %v8535 = vadd.f32 %v5822, %v8534
        %v8536 = vrot.slane %v8535, 2
        %v8537 = vadd.f32 %v8535, %v8536
        %v8538 = vrot.slane %v8537, 1
        %v8539 = vadd.f32 %v8537, %v8538
        %v8540 = vrot.slane %v5823, 4
        %v8541 = vadd.f32 %v5823, %v8540
        %v8542 = vrot.slane %v8541, 2
        %v8543 = vadd.f32 %v8541, %v8542
        %v8544 = vrot.slane %v8543, 1
        %v8545 = vadd.f32 %v8543, %v8544
        %v8546 = vrot.slane %v5824, 4
        %v8547 = vadd.f32 %v5824, %v8546
        %v8548 = vrot.slane %v8547, 2
        %v8549 = vadd.f32 %v8547, %v8548
        %v8550 = vrot.slane %v8549, 1
        %v8551 = vadd.f32 %v8549, %v8550
        %v8552 = vrot.slane %v5825, 4
        %v8553 = vadd.f32 %v5825, %v8552
        %v8554 = vrot.slane %v8553, 2
        %v8555 = vadd.f32 %v8553, %v8554
        %v8556 = vrot.slane %v8555, 1
        %v8557 = vadd.f32 %v8555, %v8556
        %v8558 = vrot.slane %v5826, 4
        %v8559 = vadd.f32 %v5826, %v8558
        %v8560 = vrot.slane %v8559, 2
        %v8561 = vadd.f32 %v8559, %v8560
        %v8562 = vrot.slane %v8561, 1
        %v8563 = vadd.f32 %v8561, %v8562
        %v8564 = vrot.slane %v5827, 4
        %v8565 = vadd.f32 %v5827, %v8564
        %v8566 = vrot.slane %v8565, 2
        %v8567 = vadd.f32 %v8565, %v8566
        %v8568 = vrot.slane %v8567, 1
        %v8569 = vadd.f32 %v8567, %v8568
        %v8570 = vrot.slane %v5828, 4
        %v8571 = vadd.f32 %v5828, %v8570
        %v8572 = vrot.slane %v8571, 2
        %v8573 = vadd.f32 %v8571, %v8572
        %v8574 = vrot.slane %v8573, 1
        %v8575 = vadd.f32 %v8573, %v8574
        %v8576 = vrot.slane %v5829, 4
        %v8577 = vadd.f32 %v5829, %v8576
        %v8578 = vrot.slane %v8577, 2
        %v8579 = vadd.f32 %v8577, %v8578
        %v8580 = vrot.slane %v8579, 1
        %v8581 = vadd.f32 %v8579, %v8580
        %v8582 = vrot.slane %v5830, 4
        %v8583 = vadd.f32 %v5830, %v8582
        %v8584 = vrot.slane %v8583, 2
        %v8585 = vadd.f32 %v8583, %v8584
        %v8586 = vrot.slane %v8585, 1
        %v8587 = vadd.f32 %v8585, %v8586
        %v8588 = vrot.slane %v5831, 4
        %v8589 = vadd.f32 %v5831, %v8588
        %v8590 = vrot.slane %v8589, 2
        %v8591 = vadd.f32 %v8589, %v8590
        %v8592 = vrot.slane %v8591, 1
        %v8593 = vadd.f32 %v8591, %v8592
        %v8594 = vrot.slane %v5832, 4
        %v8595 = vadd.f32 %v5832, %v8594
        %v8596 = vrot.slane %v8595, 2
        %v8597 = vadd.f32 %v8595, %v8596
        %v8598 = vrot.slane %v8597, 1
        %v8599 = vadd.f32 %v8597, %v8598
        %v8600 = vrot.slane %v5833, 4
        %v8601 = vadd.f32 %v5833, %v8600
        %v8602 = vrot.slane %v8601, 2
        %v8603 = vadd.f32 %v8601, %v8602
        %v8604 = vrot.slane %v8603, 1
        %v8605 = vadd.f32 %v8603, %v8604
        %v8606 = vrot.slane %v5834, 4
        %v8607 = vadd.f32 %v5834, %v8606
        %v8608 = vrot.slane %v8607, 2
        %v8609 = vadd.f32 %v8607, %v8608
        %v8610 = vrot.slane %v8609, 1
        %v8611 = vadd.f32 %v8609, %v8610
        %v8612 = vrot.slane %v5835, 4
        %v8613 = vadd.f32 %v5835, %v8612
        %v8614 = vrot.slane %v8613, 2
        %v8615 = vadd.f32 %v8613, %v8614
        %v8616 = vrot.slane %v8615, 1
        %v8617 = vadd.f32 %v8615, %v8616
        %v8618 = vrot.slane %v5836, 4
        %v8619 = vadd.f32 %v5836, %v8618
        %v8620 = vrot.slane %v8619, 2
        %v8621 = vadd.f32 %v8619, %v8620
        %v8622 = vrot.slane %v8621, 1
        %v8623 = vadd.f32 %v8621, %v8622
        %v8624 = vrot.slane %v5837, 4
        %v8625 = vadd.f32 %v5837, %v8624
        %v8626 = vrot.slane %v8625, 2
        %v8627 = vadd.f32 %v8625, %v8626
        %v8628 = vrot.slane %v8627, 1
        %v8629 = vadd.f32 %v8627, %v8628
        %v8630 = vrot.slane %v5838, 4
        %v8631 = vadd.f32 %v5838, %v8630
        %v8632 = vrot.slane %v8631, 2
        %v8633 = vadd.f32 %v8631, %v8632
        %v8634 = vrot.slane %v8633, 1
        %v8635 = vadd.f32 %v8633, %v8634
        %v8636 = vrot.slane %v5839, 4
        %v8637 = vadd.f32 %v5839, %v8636
        %v8638 = vrot.slane %v8637, 2
        %v8639 = vadd.f32 %v8637, %v8638
        %v8640 = vrot.slane %v8639, 1
        %v8641 = vadd.f32 %v8639, %v8640
        %v8642 = vrot.slane %v5840, 4
        %v8643 = vadd.f32 %v5840, %v8642
        %v8644 = vrot.slane %v8643, 2
        %v8645 = vadd.f32 %v8643, %v8644
        %v8646 = vrot.slane %v8645, 1
        %v8647 = vadd.f32 %v8645, %v8646
        %v8648 = vrot.slane %v5841, 4
        %v8649 = vadd.f32 %v5841, %v8648
        %v8650 = vrot.slane %v8649, 2
        %v8651 = vadd.f32 %v8649, %v8650
        %v8652 = vrot.slane %v8651, 1
        %v8653 = vadd.f32 %v8651, %v8652
        %v8654 = vrot.slane %v5842, 4
        %v8655 = vadd.f32 %v5842, %v8654
        %v8656 = vrot.slane %v8655, 2
        %v8657 = vadd.f32 %v8655, %v8656
        %v8658 = vrot.slane %v8657, 1
        %v8659 = vadd.f32 %v8657, %v8658
        %v8660 = vrot.slane %v5843, 4
        %v8661 = vadd.f32 %v5843, %v8660
        %v8662 = vrot.slane %v8661, 2
        %v8663 = vadd.f32 %v8661, %v8662
        %v8664 = vrot.slane %v8663, 1
        %v8665 = vadd.f32 %v8663, %v8664
        %v8666 = vrot.slane %v5844, 4
        %v8667 = vadd.f32 %v5844, %v8666
        %v8668 = vrot.slane %v8667, 2
        %v8669 = vadd.f32 %v8667, %v8668
        %v8670 = vrot.slane %v8669, 1
        %v8671 = vadd.f32 %v8669, %v8670
        %v8672 = vrot.slane %v5845, 4
        %v8673 = vadd.f32 %v5845, %v8672
        %v8674 = vrot.slane %v8673, 2
        %v8675 = vadd.f32 %v8673, %v8674
        %v8676 = vrot.slane %v8675, 1
        %v8677 = vadd.f32 %v8675, %v8676
        %v8678 = vrot.slane %v5846, 4
        %v8679 = vadd.f32 %v5846, %v8678
        %v8680 = vrot.slane %v8679, 2
        %v8681 = vadd.f32 %v8679, %v8680
        %v8682 = vrot.slane %v8681, 1
        %v8683 = vadd.f32 %v8681, %v8682
        %v8684 = vrot.slane %v5847, 4
        %v8685 = vadd.f32 %v5847, %v8684
        %v8686 = vrot.slane %v8685, 2
        %v8687 = vadd.f32 %v8685, %v8686
        %v8688 = vrot.slane %v8687, 1
        %v8689 = vadd.f32 %v8687, %v8688
        %v8690 = vrot.slane %v5848, 4
        %v8691 = vadd.f32 %v5848, %v8690
        %v8692 = vrot.slane %v8691, 2
        %v8693 = vadd.f32 %v8691, %v8692
        %v8694 = vrot.slane %v8693, 1
        %v8695 = vadd.f32 %v8693, %v8694
        %v8696 = vrot.slane %v5849, 4
        %v8697 = vadd.f32 %v5849, %v8696
        %v8698 = vrot.slane %v8697, 2
        %v8699 = vadd.f32 %v8697, %v8698
        %v8700 = vrot.slane %v8699, 1
        %v8701 = vadd.f32 %v8699, %v8700
        %v8702 = vrot.slane %v5850, 4
        %v8703 = vadd.f32 %v5850, %v8702
        %v8704 = vrot.slane %v8703, 2
        %v8705 = vadd.f32 %v8703, %v8704
        %v8706 = vrot.slane %v8705, 1
        %v8707 = vadd.f32 %v8705, %v8706
        %v8708 = vrot.slane %v5851, 4
        %v8709 = vadd.f32 %v5851, %v8708
        %v8710 = vrot.slane %v8709, 2
        %v8711 = vadd.f32 %v8709, %v8710
        %v8712 = vrot.slane %v8711, 1
        %v8713 = vadd.f32 %v8711, %v8712
        %v8714 = vrot.slane %v5852, 4
        %v8715 = vadd.f32 %v5852, %v8714
        %v8716 = vrot.slane %v8715, 2
        %v8717 = vadd.f32 %v8715, %v8716
        %v8718 = vrot.slane %v8717, 1
        %v8719 = vadd.f32 %v8717, %v8718
        %v8720 = vrot.slane %v5853, 4
        %v8721 = vadd.f32 %v5853, %v8720
        %v8722 = vrot.slane %v8721, 2
        %v8723 = vadd.f32 %v8721, %v8722
        %v8724 = vrot.slane %v8723, 1
        %v8725 = vadd.f32 %v8723, %v8724
        %v8726 = vrot.slane %v5854, 4
        %v8727 = vadd.f32 %v5854, %v8726
        %v8728 = vrot.slane %v8727, 2
        %v8729 = vadd.f32 %v8727, %v8728
        %v8730 = vrot.slane %v8729, 1
        %v8731 = vadd.f32 %v8729, %v8730
        %v8732 = vrot.slane %v5855, 4
        %v8733 = vadd.f32 %v5855, %v8732
        %v8734 = vrot.slane %v8733, 2
        %v8735 = vadd.f32 %v8733, %v8734
        %v8736 = vrot.slane %v8735, 1
        %v8737 = vadd.f32 %v8735, %v8736
        %v8738 = vrot.slane %v5856, 4
        %v8739 = vadd.f32 %v5856, %v8738
        %v8740 = vrot.slane %v8739, 2
        %v8741 = vadd.f32 %v8739, %v8740
        %v8742 = vrot.slane %v8741, 1
        %v8743 = vadd.f32 %v8741, %v8742
        %v8744 = vrot.slane %v5857, 4
        %v8745 = vadd.f32 %v5857, %v8744
        %v8746 = vrot.slane %v8745, 2
        %v8747 = vadd.f32 %v8745, %v8746
        %v8748 = vrot.slane %v8747, 1
        %v8749 = vadd.f32 %v8747, %v8748
        %v8750 = vrot.slane %v5858, 4
        %v8751 = vadd.f32 %v5858, %v8750
        %v8752 = vrot.slane %v8751, 2
        %v8753 = vadd.f32 %v8751, %v8752
        %v8754 = vrot.slane %v8753, 1
        %v8755 = vadd.f32 %v8753, %v8754
        %v8756 = vrot.slane %v5859, 4
        %v8757 = vadd.f32 %v5859, %v8756
        %v8758 = vrot.slane %v8757, 2
        %v8759 = vadd.f32 %v8757, %v8758
        %v8760 = vrot.slane %v8759, 1
        %v8761 = vadd.f32 %v8759, %v8760
        %v8762 = vrot.slane %v5860, 4
        %v8763 = vadd.f32 %v5860, %v8762
        %v8764 = vrot.slane %v8763, 2
        %v8765 = vadd.f32 %v8763, %v8764
        %v8766 = vrot.slane %v8765, 1
        %v8767 = vadd.f32 %v8765, %v8766
        %v8768 = vrot.slane %v5861, 4
        %v8769 = vadd.f32 %v5861, %v8768
        %v8770 = vrot.slane %v8769, 2
        %v8771 = vadd.f32 %v8769, %v8770
        %v8772 = vrot.slane %v8771, 1
        %v8773 = vadd.f32 %v8771, %v8772
        %v8774 = vrot.slane %v5862, 4
        %v8775 = vadd.f32 %v5862, %v8774
        %v8776 = vrot.slane %v8775, 2
        %v8777 = vadd.f32 %v8775, %v8776
        %v8778 = vrot.slane %v8777, 1
        %v8779 = vadd.f32 %v8777, %v8778
        %v8780 = vrot.slane %v5863, 4
        %v8781 = vadd.f32 %v5863, %v8780
        %v8782 = vrot.slane %v8781, 2
        %v8783 = vadd.f32 %v8781, %v8782
        %v8784 = vrot.slane %v8783, 1
        %v8785 = vadd.f32 %v8783, %v8784
        %v8786 = vrot.slane %v5864, 4
        %v8787 = vadd.f32 %v5864, %v8786
        %v8788 = vrot.slane %v8787, 2
        %v8789 = vadd.f32 %v8787, %v8788
        %v8790 = vrot.slane %v8789, 1
        %v8791 = vadd.f32 %v8789, %v8790
        %v8792 = vrot.slane %v5865, 4
        %v8793 = vadd.f32 %v5865, %v8792
        %v8794 = vrot.slane %v8793, 2
        %v8795 = vadd.f32 %v8793, %v8794
        %v8796 = vrot.slane %v8795, 1
        %v8797 = vadd.f32 %v8795, %v8796
        %v8798 = vrot.slane %v5866, 4
        %v8799 = vadd.f32 %v5866, %v8798
        %v8800 = vrot.slane %v8799, 2
        %v8801 = vadd.f32 %v8799, %v8800
        %v8802 = vrot.slane %v8801, 1
        %v8803 = vadd.f32 %v8801, %v8802
        %v8804 = vrot.slane %v5867, 4
        %v8805 = vadd.f32 %v5867, %v8804
        %v8806 = vrot.slane %v8805, 2
        %v8807 = vadd.f32 %v8805, %v8806
        %v8808 = vrot.slane %v8807, 1
        %v8809 = vadd.f32 %v8807, %v8808
        %v8810 = vrot.slane %v5868, 4
        %v8811 = vadd.f32 %v5868, %v8810
        %v8812 = vrot.slane %v8811, 2
        %v8813 = vadd.f32 %v8811, %v8812
        %v8814 = vrot.slane %v8813, 1
        %v8815 = vadd.f32 %v8813, %v8814
        %v8816 = vrot.slane %v5869, 4
        %v8817 = vadd.f32 %v5869, %v8816
        %v8818 = vrot.slane %v8817, 2
        %v8819 = vadd.f32 %v8817, %v8818
        %v8820 = vrot.slane %v8819, 1
        %v8821 = vadd.f32 %v8819, %v8820
        %v8822 = vrot.slane %v5870, 4
        %v8823 = vadd.f32 %v5870, %v8822
        %v8824 = vrot.slane %v8823, 2
        %v8825 = vadd.f32 %v8823, %v8824
        %v8826 = vrot.slane %v8825, 1
        %v8827 = vadd.f32 %v8825, %v8826
        %v8828 = vrot.slane %v5871, 4
        %v8829 = vadd.f32 %v5871, %v8828
        %v8830 = vrot.slane %v8829, 2
        %v8831 = vadd.f32 %v8829, %v8830
        %v8832 = vrot.slane %v8831, 1
        %v8833 = vadd.f32 %v8831, %v8832
        %v8834 = vrot.slane %v5872, 4
        %v8835 = vadd.f32 %v5872, %v8834
        %v8836 = vrot.slane %v8835, 2
        %v8837 = vadd.f32 %v8835, %v8836
        %v8838 = vrot.slane %v8837, 1
        %v8839 = vadd.f32 %v8837, %v8838
        %v8840 = vrot.slane %v5873, 4
        %v8841 = vadd.f32 %v5873, %v8840
        %v8842 = vrot.slane %v8841, 2
        %v8843 = vadd.f32 %v8841, %v8842
        %v8844 = vrot.slane %v8843, 1
        %v8845 = vadd.f32 %v8843, %v8844
        %v8846 = vrot.slane %v5874, 4
        %v8847 = vadd.f32 %v5874, %v8846
        %v8848 = vrot.slane %v8847, 2
        %v8849 = vadd.f32 %v8847, %v8848
        %v8850 = vrot.slane %v8849, 1
        %v8851 = vadd.f32 %v8849, %v8850
        %v8852 = vrot.slane %v5875, 4
        %v8853 = vadd.f32 %v5875, %v8852
        %v8854 = vrot.slane %v8853, 2
        %v8855 = vadd.f32 %v8853, %v8854
        %v8856 = vrot.slane %v8855, 1
        %v8857 = vadd.f32 %v8855, %v8856
        %v8858 = vrot.slane %v5876, 4
        %v8859 = vadd.f32 %v5876, %v8858
        %v8860 = vrot.slane %v8859, 2
        %v8861 = vadd.f32 %v8859, %v8860
        %v8862 = vrot.slane %v8861, 1
        %v8863 = vadd.f32 %v8861, %v8862
        %v8864 = vrot.slane %v5877, 4
        %v8865 = vadd.f32 %v5877, %v8864
        %v8866 = vrot.slane %v8865, 2
        %v8867 = vadd.f32 %v8865, %v8866
        %v8868 = vrot.slane %v8867, 1
        %v8869 = vadd.f32 %v8867, %v8868
        %v8870 = vrot.slane %v5878, 4
        %v8871 = vadd.f32 %v5878, %v8870
        %v8872 = vrot.slane %v8871, 2
        %v8873 = vadd.f32 %v8871, %v8872
        %v8874 = vrot.slane %v8873, 1
        %v8875 = vadd.f32 %v8873, %v8874
        %v8876 = vrot.slane %v5879, 4
        %v8877 = vadd.f32 %v5879, %v8876
        %v8878 = vrot.slane %v8877, 2
        %v8879 = vadd.f32 %v8877, %v8878
        %v8880 = vrot.slane %v8879, 1
        %v8881 = vadd.f32 %v8879, %v8880
        %v8882 = vrot.slane %v5880, 4
        %v8883 = vadd.f32 %v5880, %v8882
        %v8884 = vrot.slane %v8883, 2
        %v8885 = vadd.f32 %v8883, %v8884
        %v8886 = vrot.slane %v8885, 1
        %v8887 = vadd.f32 %v8885, %v8886
        %v8888 = vrot.slane %v5881, 4
        %v8889 = vadd.f32 %v5881, %v8888
        %v8890 = vrot.slane %v8889, 2
        %v8891 = vadd.f32 %v8889, %v8890
        %v8892 = vrot.slane %v8891, 1
        %v8893 = vadd.f32 %v8891, %v8892
        %v8894 = vrot.slane %v5882, 4
        %v8895 = vadd.f32 %v5882, %v8894
        %v8896 = vrot.slane %v8895, 2
        %v8897 = vadd.f32 %v8895, %v8896
        %v8898 = vrot.slane %v8897, 1
        %v8899 = vadd.f32 %v8897, %v8898
        %v8900 = vrot.slane %v5883, 4
        %v8901 = vadd.f32 %v5883, %v8900
        %v8902 = vrot.slane %v8901, 2
        %v8903 = vadd.f32 %v8901, %v8902
        %v8904 = vrot.slane %v8903, 1
        %v8905 = vadd.f32 %v8903, %v8904
        %v8906 = vrot.slane %v5884, 4
        %v8907 = vadd.f32 %v5884, %v8906
        %v8908 = vrot.slane %v8907, 2
        %v8909 = vadd.f32 %v8907, %v8908
        %v8910 = vrot.slane %v8909, 1
        %v8911 = vadd.f32 %v8909, %v8910
        %v8912 = vrot.slane %v5885, 4
        %v8913 = vadd.f32 %v5885, %v8912
        %v8914 = vrot.slane %v8913, 2
        %v8915 = vadd.f32 %v8913, %v8914
        %v8916 = vrot.slane %v8915, 1
        %v8917 = vadd.f32 %v8915, %v8916
        %v8918 = vrot.slane %v5886, 4
        %v8919 = vadd.f32 %v5886, %v8918
        %v8920 = vrot.slane %v8919, 2
        %v8921 = vadd.f32 %v8919, %v8920
        %v8922 = vrot.slane %v8921, 1
        %v8923 = vadd.f32 %v8921, %v8922
        %v8924 = vrot.slane %v5887, 4
        %v8925 = vadd.f32 %v5887, %v8924
        %v8926 = vrot.slane %v8925, 2
        %v8927 = vadd.f32 %v8925, %v8926
        %v8928 = vrot.slane %v8927, 1
        %v8929 = vadd.f32 %v8927, %v8928
        %v8930 = vrot.slane %v5888, 4
        %v8931 = vadd.f32 %v5888, %v8930
        %v8932 = vrot.slane %v8931, 2
        %v8933 = vadd.f32 %v8931, %v8932
        %v8934 = vrot.slane %v8933, 1
        %v8935 = vadd.f32 %v8933, %v8934
        %v8936 = vrot.slane %v5889, 4
        %v8937 = vadd.f32 %v5889, %v8936
        %v8938 = vrot.slane %v8937, 2
        %v8939 = vadd.f32 %v8937, %v8938
        %v8940 = vrot.slane %v8939, 1
        %v8941 = vadd.f32 %v8939, %v8940
        %v8942 = vrot.slane %v5890, 4
        %v8943 = vadd.f32 %v5890, %v8942
        %v8944 = vrot.slane %v8943, 2
        %v8945 = vadd.f32 %v8943, %v8944
        %v8946 = vrot.slane %v8945, 1
        %v8947 = vadd.f32 %v8945, %v8946
        %v8948 = vrot.slane %v5891, 4
        %v8949 = vadd.f32 %v5891, %v8948
        %v8950 = vrot.slane %v8949, 2
        %v8951 = vadd.f32 %v8949, %v8950
        %v8952 = vrot.slane %v8951, 1
        %v8953 = vadd.f32 %v8951, %v8952
        %v8954 = vrot.slane %v5892, 4
        %v8955 = vadd.f32 %v5892, %v8954
        %v8956 = vrot.slane %v8955, 2
        %v8957 = vadd.f32 %v8955, %v8956
        %v8958 = vrot.slane %v8957, 1
        %v8959 = vadd.f32 %v8957, %v8958
        %v8960 = vrot.slane %v5893, 4
        %v8961 = vadd.f32 %v5893, %v8960
        %v8962 = vrot.slane %v8961, 2
        %v8963 = vadd.f32 %v8961, %v8962
        %v8964 = vrot.slane %v8963, 1
        %v8965 = vadd.f32 %v8963, %v8964
        %vm9478 = vcmask 1041409
        %v9479 = vsel %vm9478, %v5905, %v5899
        %vm9480 = vcmask 1042434
        %v9481 = vsel %vm9480, %v5911, %v9479
        %vm9482 = vcmask 1043459
        %v9483 = vsel %vm9482, %v5917, %v9481
        %vm9484 = vcmask 1044484
        %v9485 = vsel %vm9484, %v5923, %v9483
        %vm9486 = vcmask 1045509
        %v9487 = vsel %vm9486, %v5929, %v9485
        %vm9488 = vcmask 1046534
        %v9489 = vsel %vm9488, %v5935, %v9487
        %vm9490 = vcmask 1047559
        %v9491 = vsel %vm9490, %v5941, %v9489
        %v9492 = vsel %vm9478, %v5953, %v5947
        %v9493 = vsel %vm9480, %v5959, %v9492
        %v9494 = vsel %vm9482, %v5965, %v9493
        %v9495 = vsel %vm9484, %v5971, %v9494
        %v9496 = vsel %vm9486, %v5977, %v9495
        %v9497 = vsel %vm9488, %v5983, %v9496
        %v9498 = vsel %vm9490, %v5989, %v9497
        %v9499 = vsel %vm9478, %v6001, %v5995
        %v9500 = vsel %vm9480, %v6007, %v9499
        %v9501 = vsel %vm9482, %v6013, %v9500
        %v9502 = vsel %vm9484, %v6019, %v9501
        %v9503 = vsel %vm9486, %v6025, %v9502
        %v9504 = vsel %vm9488, %v6031, %v9503
        %v9505 = vsel %vm9490, %v6037, %v9504
        %v9506 = vsel %vm9478, %v6049, %v6043
        %v9507 = vsel %vm9480, %v6055, %v9506
        %v9508 = vsel %vm9482, %v6061, %v9507
        %v9509 = vsel %vm9484, %v6067, %v9508
        %v9510 = vsel %vm9486, %v6073, %v9509
        %v9511 = vsel %vm9488, %v6079, %v9510
        %v9512 = vsel %vm9490, %v6085, %v9511
        %v9513 = vsel %vm9478, %v6097, %v6091
        %v9514 = vsel %vm9480, %v6103, %v9513
        %v9515 = vsel %vm9482, %v6109, %v9514
        %v9516 = vsel %vm9484, %v6115, %v9515
        %v9517 = vsel %vm9486, %v6121, %v9516
        %v9518 = vsel %vm9488, %v6127, %v9517
        %v9519 = vsel %vm9490, %v6133, %v9518
        %v9520 = vsel %vm9478, %v6145, %v6139
        %v9521 = vsel %vm9480, %v6151, %v9520
        %v9522 = vsel %vm9482, %v6157, %v9521
        %v9523 = vsel %vm9484, %v6163, %v9522
        %v9524 = vsel %vm9486, %v6169, %v9523
        %v9525 = vsel %vm9488, %v6175, %v9524
        %v9526 = vsel %vm9490, %v6181, %v9525
        %v9527 = vsel %vm9478, %v6193, %v6187
        %v9528 = vsel %vm9480, %v6199, %v9527
        %v9529 = vsel %vm9482, %v6205, %v9528
        %v9530 = vsel %vm9484, %v6211, %v9529
        %v9531 = vsel %vm9486, %v6217, %v9530
        %v9532 = vsel %vm9488, %v6223, %v9531
        %v9533 = vsel %vm9490, %v6229, %v9532
        %v9534 = vsel %vm9478, %v6241, %v6235
        %v9535 = vsel %vm9480, %v6247, %v9534
        %v9536 = vsel %vm9482, %v6253, %v9535
        %v9537 = vsel %vm9484, %v6259, %v9536
        %v9538 = vsel %vm9486, %v6265, %v9537
        %v9539 = vsel %vm9488, %v6271, %v9538
        %v9540 = vsel %vm9490, %v6277, %v9539
        %v9541 = vsel %vm9478, %v6289, %v6283
        %v9542 = vsel %vm9480, %v6295, %v9541
        %v9543 = vsel %vm9482, %v6301, %v9542
        %v9544 = vsel %vm9484, %v6307, %v9543
        %v9545 = vsel %vm9486, %v6313, %v9544
        %v9546 = vsel %vm9488, %v6319, %v9545
        %v9547 = vsel %vm9490, %v6325, %v9546
        %v9548 = vsel %vm9478, %v6337, %v6331
        %v9549 = vsel %vm9480, %v6343, %v9548
        %v9550 = vsel %vm9482, %v6349, %v9549
        %v9551 = vsel %vm9484, %v6355, %v9550
        %v9552 = vsel %vm9486, %v6361, %v9551
        %v9553 = vsel %vm9488, %v6367, %v9552
        %v9554 = vsel %vm9490, %v6373, %v9553
        %v9555 = vsel %vm9478, %v6385, %v6379
        %v9556 = vsel %vm9480, %v6391, %v9555
        %v9557 = vsel %vm9482, %v6397, %v9556
        %v9558 = vsel %vm9484, %v6403, %v9557
        %v9559 = vsel %vm9486, %v6409, %v9558
        %v9560 = vsel %vm9488, %v6415, %v9559
        %v9561 = vsel %vm9490, %v6421, %v9560
        %v9562 = vsel %vm9478, %v6433, %v6427
        %v9563 = vsel %vm9480, %v6439, %v9562
        %v9564 = vsel %vm9482, %v6445, %v9563
        %v9565 = vsel %vm9484, %v6451, %v9564
        %v9566 = vsel %vm9486, %v6457, %v9565
        %v9567 = vsel %vm9488, %v6463, %v9566
        %v9568 = vsel %vm9490, %v6469, %v9567
        %v9569 = vsel %vm9478, %v6481, %v6475
        %v9570 = vsel %vm9480, %v6487, %v9569
        %v9571 = vsel %vm9482, %v6493, %v9570
        %v9572 = vsel %vm9484, %v6499, %v9571
        %v9573 = vsel %vm9486, %v6505, %v9572
        %v9574 = vsel %vm9488, %v6511, %v9573
        %v9575 = vsel %vm9490, %v6517, %v9574
        %v9576 = vsel %vm9478, %v6529, %v6523
        %v9577 = vsel %vm9480, %v6535, %v9576
        %v9578 = vsel %vm9482, %v6541, %v9577
        %v9579 = vsel %vm9484, %v6547, %v9578
        %v9580 = vsel %vm9486, %v6553, %v9579
        %v9581 = vsel %vm9488, %v6559, %v9580
        %v9582 = vsel %vm9490, %v6565, %v9581
        %v9583 = vsel %vm9478, %v6577, %v6571
        %v9584 = vsel %vm9480, %v6583, %v9583
        %v9585 = vsel %vm9482, %v6589, %v9584
        %v9586 = vsel %vm9484, %v6595, %v9585
        %v9587 = vsel %vm9486, %v6601, %v9586
        %v9588 = vsel %vm9488, %v6607, %v9587
        %v9589 = vsel %vm9490, %v6613, %v9588
        %v9590 = vsel %vm9478, %v6625, %v6619
        %v9591 = vsel %vm9480, %v6631, %v9590
        %v9592 = vsel %vm9482, %v6637, %v9591
        %v9593 = vsel %vm9484, %v6643, %v9592
        %v9594 = vsel %vm9486, %v6649, %v9593
        %v9595 = vsel %vm9488, %v6655, %v9594
        %v9596 = vsel %vm9490, %v6661, %v9595
        %v9597 = vsel %vm9478, %v6673, %v6667
        %v9598 = vsel %vm9480, %v6679, %v9597
        %v9599 = vsel %vm9482, %v6685, %v9598
        %v9600 = vsel %vm9484, %v6691, %v9599
        %v9601 = vsel %vm9486, %v6697, %v9600
        %v9602 = vsel %vm9488, %v6703, %v9601
        %v9603 = vsel %vm9490, %v6709, %v9602
        %v9604 = vsel %vm9478, %v6721, %v6715
        %v9605 = vsel %vm9480, %v6727, %v9604
        %v9606 = vsel %vm9482, %v6733, %v9605
        %v9607 = vsel %vm9484, %v6739, %v9606
        %v9608 = vsel %vm9486, %v6745, %v9607
        %v9609 = vsel %vm9488, %v6751, %v9608
        %v9610 = vsel %vm9490, %v6757, %v9609
        %v9611 = vsel %vm9478, %v6769, %v6763
        %v9612 = vsel %vm9480, %v6775, %v9611
        %v9613 = vsel %vm9482, %v6781, %v9612
        %v9614 = vsel %vm9484, %v6787, %v9613
        %v9615 = vsel %vm9486, %v6793, %v9614
        %v9616 = vsel %vm9488, %v6799, %v9615
        %v9617 = vsel %vm9490, %v6805, %v9616
        %v9618 = vsel %vm9478, %v6817, %v6811
        %v9619 = vsel %vm9480, %v6823, %v9618
        %v9620 = vsel %vm9482, %v6829, %v9619
        %v9621 = vsel %vm9484, %v6835, %v9620
        %v9622 = vsel %vm9486, %v6841, %v9621
        %v9623 = vsel %vm9488, %v6847, %v9622
        %v9624 = vsel %vm9490, %v6853, %v9623
        %v9625 = vsel %vm9478, %v6865, %v6859
        %v9626 = vsel %vm9480, %v6871, %v9625
        %v9627 = vsel %vm9482, %v6877, %v9626
        %v9628 = vsel %vm9484, %v6883, %v9627
        %v9629 = vsel %vm9486, %v6889, %v9628
        %v9630 = vsel %vm9488, %v6895, %v9629
        %v9631 = vsel %vm9490, %v6901, %v9630
        %v9632 = vsel %vm9478, %v6913, %v6907
        %v9633 = vsel %vm9480, %v6919, %v9632
        %v9634 = vsel %vm9482, %v6925, %v9633
        %v9635 = vsel %vm9484, %v6931, %v9634
        %v9636 = vsel %vm9486, %v6937, %v9635
        %v9637 = vsel %vm9488, %v6943, %v9636
        %v9638 = vsel %vm9490, %v6949, %v9637
        %v9639 = vsel %vm9478, %v6961, %v6955
        %v9640 = vsel %vm9480, %v6967, %v9639
        %v9641 = vsel %vm9482, %v6973, %v9640
        %v9642 = vsel %vm9484, %v6979, %v9641
        %v9643 = vsel %vm9486, %v6985, %v9642
        %v9644 = vsel %vm9488, %v6991, %v9643
        %v9645 = vsel %vm9490, %v6997, %v9644
        %v9646 = vsel %vm9478, %v7009, %v7003
        %v9647 = vsel %vm9480, %v7015, %v9646
        %v9648 = vsel %vm9482, %v7021, %v9647
        %v9649 = vsel %vm9484, %v7027, %v9648
        %v9650 = vsel %vm9486, %v7033, %v9649
        %v9651 = vsel %vm9488, %v7039, %v9650
        %v9652 = vsel %vm9490, %v7045, %v9651
        %v9653 = vsel %vm9478, %v7057, %v7051
        %v9654 = vsel %vm9480, %v7063, %v9653
        %v9655 = vsel %vm9482, %v7069, %v9654
        %v9656 = vsel %vm9484, %v7075, %v9655
        %v9657 = vsel %vm9486, %v7081, %v9656
        %v9658 = vsel %vm9488, %v7087, %v9657
        %v9659 = vsel %vm9490, %v7093, %v9658
        %v9660 = vsel %vm9478, %v7105, %v7099
        %v9661 = vsel %vm9480, %v7111, %v9660
        %v9662 = vsel %vm9482, %v7117, %v9661
        %v9663 = vsel %vm9484, %v7123, %v9662
        %v9664 = vsel %vm9486, %v7129, %v9663
        %v9665 = vsel %vm9488, %v7135, %v9664
        %v9666 = vsel %vm9490, %v7141, %v9665
        %v9667 = vsel %vm9478, %v7153, %v7147
        %v9668 = vsel %vm9480, %v7159, %v9667
        %v9669 = vsel %vm9482, %v7165, %v9668
        %v9670 = vsel %vm9484, %v7171, %v9669
        %v9671 = vsel %vm9486, %v7177, %v9670
        %v9672 = vsel %vm9488, %v7183, %v9671
        %v9673 = vsel %vm9490, %v7189, %v9672
        %v9674 = vsel %vm9478, %v7201, %v7195
        %v9675 = vsel %vm9480, %v7207, %v9674
        %v9676 = vsel %vm9482, %v7213, %v9675
        %v9677 = vsel %vm9484, %v7219, %v9676
        %v9678 = vsel %vm9486, %v7225, %v9677
        %v9679 = vsel %vm9488, %v7231, %v9678
        %v9680 = vsel %vm9490, %v7237, %v9679
        %v9681 = vsel %vm9478, %v7249, %v7243
        %v9682 = vsel %vm9480, %v7255, %v9681
        %v9683 = vsel %vm9482, %v7261, %v9682
        %v9684 = vsel %vm9484, %v7267, %v9683
        %v9685 = vsel %vm9486, %v7273, %v9684
        %v9686 = vsel %vm9488, %v7279, %v9685
        %v9687 = vsel %vm9490, %v7285, %v9686
        %v9688 = vsel %vm9478, %v7297, %v7291
        %v9689 = vsel %vm9480, %v7303, %v9688
        %v9690 = vsel %vm9482, %v7309, %v9689
        %v9691 = vsel %vm9484, %v7315, %v9690
        %v9692 = vsel %vm9486, %v7321, %v9691
        %v9693 = vsel %vm9488, %v7327, %v9692
        %v9694 = vsel %vm9490, %v7333, %v9693
        %v9695 = vsel %vm9478, %v7345, %v7339
        %v9696 = vsel %vm9480, %v7351, %v9695
        %v9697 = vsel %vm9482, %v7357, %v9696
        %v9698 = vsel %vm9484, %v7363, %v9697
        %v9699 = vsel %vm9486, %v7369, %v9698
        %v9700 = vsel %vm9488, %v7375, %v9699
        %v9701 = vsel %vm9490, %v7381, %v9700
        %v9702 = vsel %vm9478, %v7393, %v7387
        %v9703 = vsel %vm9480, %v7399, %v9702
        %v9704 = vsel %vm9482, %v7405, %v9703
        %v9705 = vsel %vm9484, %v7411, %v9704
        %v9706 = vsel %vm9486, %v7417, %v9705
        %v9707 = vsel %vm9488, %v7423, %v9706
        %v9708 = vsel %vm9490, %v7429, %v9707
        %v9709 = vsel %vm9478, %v7441, %v7435
        %v9710 = vsel %vm9480, %v7447, %v9709
        %v9711 = vsel %vm9482, %v7453, %v9710
        %v9712 = vsel %vm9484, %v7459, %v9711
        %v9713 = vsel %vm9486, %v7465, %v9712
        %v9714 = vsel %vm9488, %v7471, %v9713
        %v9715 = vsel %vm9490, %v7477, %v9714
        %v9716 = vsel %vm9478, %v7489, %v7483
        %v9717 = vsel %vm9480, %v7495, %v9716
        %v9718 = vsel %vm9482, %v7501, %v9717
        %v9719 = vsel %vm9484, %v7507, %v9718
        %v9720 = vsel %vm9486, %v7513, %v9719
        %v9721 = vsel %vm9488, %v7519, %v9720
        %v9722 = vsel %vm9490, %v7525, %v9721
        %v9723 = vsel %vm9478, %v7537, %v7531
        %v9724 = vsel %vm9480, %v7543, %v9723
        %v9725 = vsel %vm9482, %v7549, %v9724
        %v9726 = vsel %vm9484, %v7555, %v9725
        %v9727 = vsel %vm9486, %v7561, %v9726
        %v9728 = vsel %vm9488, %v7567, %v9727
        %v9729 = vsel %vm9490, %v7573, %v9728
        %v9730 = vsel %vm9478, %v7585, %v7579
        %v9731 = vsel %vm9480, %v7591, %v9730
        %v9732 = vsel %vm9482, %v7597, %v9731
        %v9733 = vsel %vm9484, %v7603, %v9732
        %v9734 = vsel %vm9486, %v7609, %v9733
        %v9735 = vsel %vm9488, %v7615, %v9734
        %v9736 = vsel %vm9490, %v7621, %v9735
        %v9737 = vsel %vm9478, %v7633, %v7627
        %v9738 = vsel %vm9480, %v7639, %v9737
        %v9739 = vsel %vm9482, %v7645, %v9738
        %v9740 = vsel %vm9484, %v7651, %v9739
        %v9741 = vsel %vm9486, %v7657, %v9740
        %v9742 = vsel %vm9488, %v7663, %v9741
        %v9743 = vsel %vm9490, %v7669, %v9742
        %v9744 = vsel %vm9478, %v7681, %v7675
        %v9745 = vsel %vm9480, %v7687, %v9744
        %v9746 = vsel %vm9482, %v7693, %v9745
        %v9747 = vsel %vm9484, %v7699, %v9746
        %v9748 = vsel %vm9486, %v7705, %v9747
        %v9749 = vsel %vm9488, %v7711, %v9748
        %v9750 = vsel %vm9490, %v7717, %v9749
        %v9751 = vsel %vm9478, %v7729, %v7723
        %v9752 = vsel %vm9480, %v7735, %v9751
        %v9753 = vsel %vm9482, %v7741, %v9752
        %v9754 = vsel %vm9484, %v7747, %v9753
        %v9755 = vsel %vm9486, %v7753, %v9754
        %v9756 = vsel %vm9488, %v7759, %v9755
        %v9757 = vsel %vm9490, %v7765, %v9756
        %v9758 = vsel %vm9478, %v7777, %v7771
        %v9759 = vsel %vm9480, %v7783, %v9758
        %v9760 = vsel %vm9482, %v7789, %v9759
        %v9761 = vsel %vm9484, %v7795, %v9760
        %v9762 = vsel %vm9486, %v7801, %v9761
        %v9763 = vsel %vm9488, %v7807, %v9762
        %v9764 = vsel %vm9490, %v7813, %v9763
        %v9765 = vsel %vm9478, %v7825, %v7819
        %v9766 = vsel %vm9480, %v7831, %v9765
        %v9767 = vsel %vm9482, %v7837, %v9766
        %v9768 = vsel %vm9484, %v7843, %v9767
        %v9769 = vsel %vm9486, %v7849, %v9768
        %v9770 = vsel %vm9488, %v7855, %v9769
        %v9771 = vsel %vm9490, %v7861, %v9770
        %v9772 = vsel %vm9478, %v7873, %v7867
        %v9773 = vsel %vm9480, %v7879, %v9772
        %v9774 = vsel %vm9482, %v7885, %v9773
        %v9775 = vsel %vm9484, %v7891, %v9774
        %v9776 = vsel %vm9486, %v7897, %v9775
        %v9777 = vsel %vm9488, %v7903, %v9776
        %v9778 = vsel %vm9490, %v7909, %v9777
        %v9779 = vsel %vm9478, %v7921, %v7915
        %v9780 = vsel %vm9480, %v7927, %v9779
        %v9781 = vsel %vm9482, %v7933, %v9780
        %v9782 = vsel %vm9484, %v7939, %v9781
        %v9783 = vsel %vm9486, %v7945, %v9782
        %v9784 = vsel %vm9488, %v7951, %v9783
        %v9785 = vsel %vm9490, %v7957, %v9784
        %v9786 = vsel %vm9478, %v7969, %v7963
        %v9787 = vsel %vm9480, %v7975, %v9786
        %v9788 = vsel %vm9482, %v7981, %v9787
        %v9789 = vsel %vm9484, %v7987, %v9788
        %v9790 = vsel %vm9486, %v7993, %v9789
        %v9791 = vsel %vm9488, %v7999, %v9790
        %v9792 = vsel %vm9490, %v8005, %v9791
        %v9793 = vsel %vm9478, %v8017, %v8011
        %v9794 = vsel %vm9480, %v8023, %v9793
        %v9795 = vsel %vm9482, %v8029, %v9794
        %v9796 = vsel %vm9484, %v8035, %v9795
        %v9797 = vsel %vm9486, %v8041, %v9796
        %v9798 = vsel %vm9488, %v8047, %v9797
        %v9799 = vsel %vm9490, %v8053, %v9798
        %v9800 = vsel %vm9478, %v8065, %v8059
        %v9801 = vsel %vm9480, %v8071, %v9800
        %v9802 = vsel %vm9482, %v8077, %v9801
        %v9803 = vsel %vm9484, %v8083, %v9802
        %v9804 = vsel %vm9486, %v8089, %v9803
        %v9805 = vsel %vm9488, %v8095, %v9804
        %v9806 = vsel %vm9490, %v8101, %v9805
        %v9807 = vsel %vm9478, %v8113, %v8107
        %v9808 = vsel %vm9480, %v8119, %v9807
        %v9809 = vsel %vm9482, %v8125, %v9808
        %v9810 = vsel %vm9484, %v8131, %v9809
        %v9811 = vsel %vm9486, %v8137, %v9810
        %v9812 = vsel %vm9488, %v8143, %v9811
        %v9813 = vsel %vm9490, %v8149, %v9812
        %v9814 = vsel %vm9478, %v8161, %v8155
        %v9815 = vsel %vm9480, %v8167, %v9814
        %v9816 = vsel %vm9482, %v8173, %v9815
        %v9817 = vsel %vm9484, %v8179, %v9816
        %v9818 = vsel %vm9486, %v8185, %v9817
        %v9819 = vsel %vm9488, %v8191, %v9818
        %v9820 = vsel %vm9490, %v8197, %v9819
        %v9821 = vsel %vm9478, %v8209, %v8203
        %v9822 = vsel %vm9480, %v8215, %v9821
        %v9823 = vsel %vm9482, %v8221, %v9822
        %v9824 = vsel %vm9484, %v8227, %v9823
        %v9825 = vsel %vm9486, %v8233, %v9824
        %v9826 = vsel %vm9488, %v8239, %v9825
        %v9827 = vsel %vm9490, %v8245, %v9826
        %v9828 = vsel %vm9478, %v8257, %v8251
        %v9829 = vsel %vm9480, %v8263, %v9828
        %v9830 = vsel %vm9482, %v8269, %v9829
        %v9831 = vsel %vm9484, %v8275, %v9830
        %v9832 = vsel %vm9486, %v8281, %v9831
        %v9833 = vsel %vm9488, %v8287, %v9832
        %v9834 = vsel %vm9490, %v8293, %v9833
        %v9835 = vsel %vm9478, %v8305, %v8299
        %v9836 = vsel %vm9480, %v8311, %v9835
        %v9837 = vsel %vm9482, %v8317, %v9836
        %v9838 = vsel %vm9484, %v8323, %v9837
        %v9839 = vsel %vm9486, %v8329, %v9838
        %v9840 = vsel %vm9488, %v8335, %v9839
        %v9841 = vsel %vm9490, %v8341, %v9840
        %v9842 = vsel %vm9478, %v8353, %v8347
        %v9843 = vsel %vm9480, %v8359, %v9842
        %v9844 = vsel %vm9482, %v8365, %v9843
        %v9845 = vsel %vm9484, %v8371, %v9844
        %v9846 = vsel %vm9486, %v8377, %v9845
        %v9847 = vsel %vm9488, %v8383, %v9846
        %v9848 = vsel %vm9490, %v8389, %v9847
        %v9849 = vsel %vm9478, %v8401, %v8395
        %v9850 = vsel %vm9480, %v8407, %v9849
        %v9851 = vsel %vm9482, %v8413, %v9850
        %v9852 = vsel %vm9484, %v8419, %v9851
        %v9853 = vsel %vm9486, %v8425, %v9852
        %v9854 = vsel %vm9488, %v8431, %v9853
        %v9855 = vsel %vm9490, %v8437, %v9854
        %v9856 = vsel %vm9478, %v8449, %v8443
        %v9857 = vsel %vm9480, %v8455, %v9856
        %v9858 = vsel %vm9482, %v8461, %v9857
        %v9859 = vsel %vm9484, %v8467, %v9858
        %v9860 = vsel %vm9486, %v8473, %v9859
        %v9861 = vsel %vm9488, %v8479, %v9860
        %v9862 = vsel %vm9490, %v8485, %v9861
        %v9863 = vsel %vm9478, %v8497, %v8491
        %v9864 = vsel %vm9480, %v8503, %v9863
        %v9865 = vsel %vm9482, %v8509, %v9864
        %v9866 = vsel %vm9484, %v8515, %v9865
        %v9867 = vsel %vm9486, %v8521, %v9866
        %v9868 = vsel %vm9488, %v8527, %v9867
        %v9869 = vsel %vm9490, %v8533, %v9868
        %v9870 = vsel %vm9478, %v8545, %v8539
        %v9871 = vsel %vm9480, %v8551, %v9870
        %v9872 = vsel %vm9482, %v8557, %v9871
        %v9873 = vsel %vm9484, %v8563, %v9872
        %v9874 = vsel %vm9486, %v8569, %v9873
        %v9875 = vsel %vm9488, %v8575, %v9874
        %v9876 = vsel %vm9490, %v8581, %v9875
        %v9877 = vsel %vm9478, %v8593, %v8587
        %v9878 = vsel %vm9480, %v8599, %v9877
        %v9879 = vsel %vm9482, %v8605, %v9878
        %v9880 = vsel %vm9484, %v8611, %v9879
        %v9881 = vsel %vm9486, %v8617, %v9880
        %v9882 = vsel %vm9488, %v8623, %v9881
        %v9883 = vsel %vm9490, %v8629, %v9882
        %v9884 = vsel %vm9478, %v8641, %v8635
        %v9885 = vsel %vm9480, %v8647, %v9884
        %v9886 = vsel %vm9482, %v8653, %v9885
        %v9887 = vsel %vm9484, %v8659, %v9886
        %v9888 = vsel %vm9486, %v8665, %v9887
        %v9889 = vsel %vm9488, %v8671, %v9888
        %v9890 = vsel %vm9490, %v8677, %v9889
        %v9891 = vsel %vm9478, %v8689, %v8683
        %v9892 = vsel %vm9480, %v8695, %v9891
        %v9893 = vsel %vm9482, %v8701, %v9892
        %v9894 = vsel %vm9484, %v8707, %v9893
        %v9895 = vsel %vm9486, %v8713, %v9894
        %v9896 = vsel %vm9488, %v8719, %v9895
        %v9897 = vsel %vm9490, %v8725, %v9896
        %v9898 = vsel %vm9478, %v8737, %v8731
        %v9899 = vsel %vm9480, %v8743, %v9898
        %v9900 = vsel %vm9482, %v8749, %v9899
        %v9901 = vsel %vm9484, %v8755, %v9900
        %v9902 = vsel %vm9486, %v8761, %v9901
        %v9903 = vsel %vm9488, %v8767, %v9902
        %v9904 = vsel %vm9490, %v8773, %v9903
        %v9905 = vsel %vm9478, %v8785, %v8779
        %v9906 = vsel %vm9480, %v8791, %v9905
        %v9907 = vsel %vm9482, %v8797, %v9906
        %v9908 = vsel %vm9484, %v8803, %v9907
        %v9909 = vsel %vm9486, %v8809, %v9908
        %v9910 = vsel %vm9488, %v8815, %v9909
        %v9911 = vsel %vm9490, %v8821, %v9910
        %v9912 = vsel %vm9478, %v8833, %v8827
        %v9913 = vsel %vm9480, %v8839, %v9912
        %v9914 = vsel %vm9482, %v8845, %v9913
        %v9915 = vsel %vm9484, %v8851, %v9914
        %v9916 = vsel %vm9486, %v8857, %v9915
        %v9917 = vsel %vm9488, %v8863, %v9916
        %v9918 = vsel %vm9490, %v8869, %v9917
        %v9919 = vsel %vm9478, %v8881, %v8875
        %v9920 = vsel %vm9480, %v8887, %v9919
        %v9921 = vsel %vm9482, %v8893, %v9920
        %v9922 = vsel %vm9484, %v8899, %v9921
        %v9923 = vsel %vm9486, %v8905, %v9922
        %v9924 = vsel %vm9488, %v8911, %v9923
        %v9925 = vsel %vm9490, %v8917, %v9924
        %v9926 = vsel %vm9478, %v8929, %v8923
        %v9927 = vsel %vm9480, %v8935, %v9926
        %v9928 = vsel %vm9482, %v8941, %v9927
        %v9929 = vsel %vm9484, %v8947, %v9928
        %v9930 = vsel %vm9486, %v8953, %v9929
        %v9931 = vsel %vm9488, %v8959, %v9930
        %v9932 = vsel %vm9490, %v8965, %v9931
        %9997 = vst [vmem:[%s180] sm:$0xff] %v9491
        %9998 = vst [vmem:[%s180 + $0x8] sm:$0xff] %v9498
        %9999 = vst [vmem:[%s180 + $0x10] sm:$0xff] %v9505
        %10000 = vst [vmem:[%s180 + $0x18] sm:$0xff] %v9512
        %10001 = vst [vmem:[%s180 + $0x20] sm:$0xff] %v9519
        %10002 = vst [vmem:[%s180 + $0x28] sm:$0xff] %v9526
        %10003 = vst [vmem:[%s180 + $0x30] sm:$0xff] %v9533
        %10004 = vst [vmem:[%s180 + $0x38] sm:$0xff] %v9540
        %10005 = vst [vmem:[%s180 + $0x40] sm:$0xff] %v9547
        %10006 = vst [vmem:[%s180 + $0x48] sm:$0xff] %v9554
        %10007 = vst [vmem:[%s180 + $0x50] sm:$0xff] %v9561
        %10008 = vst [vmem:[%s180 + $0x58] sm:$0xff] %v9568
        %10009 = vst [vmem:[%s180 + $0x60] sm:$0xff] %v9575
        %10010 = vst [vmem:[%s180 + $0x68] sm:$0xff] %v9582
        %10011 = vst [vmem:[%s180 + $0x70] sm:$0xff] %v9589
        %10012 = vst [vmem:[%s180 + $0x78] sm:$0xff] %v9596
        %10013 = vst [vmem:[%s180 + $0x80] sm:$0xff] %v9603
        %10014 = vst [vmem:[%s180 + $0x88] sm:$0xff] %v9610
        %10015 = vst [vmem:[%s180 + $0x90] sm:$0xff] %v9617
        %10016 = vst [vmem:[%s180 + $0x98] sm:$0xff] %v9624
        %10017 = vst [vmem:[%s180 + $0xa0] sm:$0xff] %v9631
        %10018 = vst [vmem:[%s180 + $0xa8] sm:$0xff] %v9638
        %10019 = vst [vmem:[%s180 + $0xb0] sm:$0xff] %v9645
        %10020 = vst [vmem:[%s180 + $0xb8] sm:$0xff] %v9652
        %10021 = vst [vmem:[%s180 + $0xc0] sm:$0xff] %v9659
        %10022 = vst [vmem:[%s180 + $0xc8] sm:$0xff] %v9666
        %10023 = vst [vmem:[%s180 + $0xd0] sm:$0xff] %v9673
        %10024 = vst [vmem:[%s180 + $0xd8] sm:$0xff] %v9680
        %10025 = vst [vmem:[%s180 + $0xe0] sm:$0xff] %v9687
        %10026 = vst [vmem:[%s180 + $0xe8] sm:$0xff] %v9694
        %10027 = vst [vmem:[%s180 + $0xf0] sm:$0xff] %v9701
        %10028 = vst [vmem:[%s180 + $0xf8] sm:$0xff] %v9708
        %10029 = vst [vmem:[%s180 + $0x100] sm:$0xff] %v9715
        %10030 = vst [vmem:[%s180 + $0x108] sm:$0xff] %v9722
        %10031 = vst [vmem:[%s180 + $0x110] sm:$0xff] %v9729
        %10032 = vst [vmem:[%s180 + $0x118] sm:$0xff] %v9736
        %10033 = vst [vmem:[%s180 + $0x120] sm:$0xff] %v9743
        %10034 = vst [vmem:[%s180 + $0x128] sm:$0xff] %v9750
        %10035 = vst [vmem:[%s180 + $0x130] sm:$0xff] %v9757
        %10036 = vst [vmem:[%s180 + $0x138] sm:$0xff] %v9764
        %10037 = vst [vmem:[%s180 + $0x140] sm:$0xff] %v9771
        %10038 = vst [vmem:[%s180 + $0x148] sm:$0xff] %v9778
        %10039 = vst [vmem:[%s180 + $0x150] sm:$0xff] %v9785
        %10040 = vst [vmem:[%s180 + $0x158] sm:$0xff] %v9792
        %10041 = vst [vmem:[%s180 + $0x160] sm:$0xff] %v9799
        %10042 = vst [vmem:[%s180 + $0x168] sm:$0xff] %v9806
        %10043 = vst [vmem:[%s180 + $0x170] sm:$0xff] %v9813
        %10044 = vst [vmem:[%s180 + $0x178] sm:$0xff] %v9820
        %10045 = vst [vmem:[%s180 + $0x180] sm:$0xff] %v9827
        %10046 = vst [vmem:[%s180 + $0x188] sm:$0xff] %v9834
        %10047 = vst [vmem:[%s180 + $0x190] sm:$0xff] %v9841
        %10048 = vst [vmem:[%s180 + $0x198] sm:$0xff] %v9848
        %10049 = vst [vmem:[%s180 + $0x1a0] sm:$0xff] %v9855
        %10050 = vst [vmem:[%s180 + $0x1a8] sm:$0xff] %v9862
        %10051 = vst [vmem:[%s180 + $0x1b0] sm:$0xff] %v9869
        %10052 = vst [vmem:[%s180 + $0x1b8] sm:$0xff] %v9876
        %10053 = vst [vmem:[%s180 + $0x1c0] sm:$0xff] %v9883
        %10054 = vst [vmem:[%s180 + $0x1c8] sm:$0xff] %v9890
        %10055 = vst [vmem:[%s180 + $0x1d0] sm:$0xff] %v9897
        %10056 = vst [vmem:[%s180 + $0x1d8] sm:$0xff] %v9904
        %10057 = vst [vmem:[%s180 + $0x1e0] sm:$0xff] %v9911
        %10058 = vst [vmem:[%s180 + $0x1e8] sm:$0xff] %v9918
        %10059 = vst [vmem:[%s180 + $0x1f0] sm:$0xff] %v9925
        %10060 = vst [vmem:[%s180 + $0x1f8] sm:$0xff] %v9932
        %s10061 = sand.u32 %s98, 1
        %s10062 = scalar_lea.sflag [#allocation3], %s10061
        %s10063 = sand.u32 %s98, 1
        %s10064 = smul.addr %s10063, 512
        %s10065 = scalar_lea.vmem [#allocation2], %s10064
        // Predicated region
        $region33: #{tpu_custom_call.1} parent=31 // pred_check
          %p10066 = pneg %p108
        $region34: #{tpu_custom_call.1} parent=31 // pred_check_branch
          %10068 = sbr.rel (%p10066) target = $region36
        $region35: #{tpu_custom_call.1} parent=31 // pred_region
          %s10069 = smul.u32 64, %s17
          %s10071 = ssub.s32 8192, 8192
          %10072 = vsyncadd %s10062, %s10071
          %s10073 = smul.addr %s10069, 128
          %s10074 = scalar_lea.hbm %s3, %s10073
          %s10075 = sshll.u32 %s10065, 4
          %s10076 = int_to_ptr.vmem [resolvable:$true] %s10075
          %10081 = dma.vmem_to_hbm [thread:$0]  %s10076, 8192, %s10074, %s10062, 128, 128, 8
        $region36: #{tpu_custom_call.1} parent=31 // pred_fallthru
          _
      $region32: #{tpu_custom_call.1} parent=5 // pred_fallthru
        _
      %p10082 = scmp.le.s32.totalorder 2, %s12
      // Predicated region
      $region37: #{tpu_custom_call.1} parent=5 // pred_check
        %p10083 = pneg %p10082
      $region38: #{tpu_custom_call.1} parent=5 // pred_check_branch
        %10085 = sbr.rel (%p10083) target = $region40
      $region39: #{tpu_custom_call.1} parent=5 // pred_region
        %s10086 = ssub.s32 %s12, 2
        // Predicated region
        $region41: #{tpu_custom_call.1} parent=39 // pred_check
          %p10087 = pneg %p114
        $region42: #{tpu_custom_call.1} parent=39 // pred_check_branch
          %10089 = sbr.rel (%p10087) target = $region44
        $region43: #{tpu_custom_call.1} parent=39 // pred_region
          %s10090 = sand.u32 %s99, 1
          %s10091 = scalar_lea.sflag [#allocation3], %s10090
          %s10092 = sand.u32 %s99, 1
          %s10093 = smul.addr %s10092, 512
          %s10094 = scalar_lea.vmem [#allocation2], %s10093
          %10095 = dma.done %s10091, 8192
        $region44: #{tpu_custom_call.1} parent=39 // pred_fallthru
          _
      $region40: #{tpu_custom_call.1} parent=5 // pred_fallthru
        _
    $region6: #{tpu_custom_call.1} parent=1 // loop_footer
      %s16 = sadd.s32 1, %s12
    $region7: #{tpu_custom_call.1} parent=1 // loop_footer_branch
      %11 = sbr.rel target = $region3
    $region8: #{tpu_custom_call.1} parent=1 // loop_exit
      _
    %10096 = vsyncpa [#allocation3], 1
    %s10097 = scalar_lea.sflag [#allocation3], 1
    %10098 = vsyncpa %s10097, 1

</llo_original>
